<compile_context>
chip_gen: v7x
topology: tpu7x:2x2x1
jax: 0.10.0
libtpu: 0.0.40
codegen_flags: <defaults>
</compile_context>

<pallas_src>
import functools

import numpy as np

import jax
import jax.numpy as jnp
from jax import lax
from jax.experimental import pallas as pl
from jax.experimental.pallas import tpu as pltpu


# ----------------------------------------------------------------------------
# Host-side constant operators (built ONCE at parameter-prep time)
# ----------------------------------------------------------------------------
def _conv2_gathers(H, W, stride):
    """0/1 gather operators for a 3x3 / pad=1 / `stride` conv.

    g[k] (k = dh*3+dw) maps the flattened (H*W) conv2-input pixels to the
    flattened (Ho*Wo) output pixels for tap (dh, dw); rows whose tap falls in
    the zero padding are all-zero.  In the kernel the 3x3 conv is then
    sum_k (g[k] @ y1) @ w2[k] -- fully VMEM resident.
    """
    Ho = (H + 2 - 3) // stride + 1
    Wo = (W + 2 - 3) // stride + 1
    g = np.zeros((9, Ho * Wo, H * W), np.float32)
    for dh in range(3):
        for dw in range(3):
            k = dh * 3 + dw
            for i in range(Ho):
                hi = stride * i + dh - 1
                if hi < 0 or hi >= H:
                    continue
                for j in range(Wo):
                    wi = stride * j + dw - 1
                    if wi < 0 or wi >= W:
                        continue
                    g[k, i * Wo + j, hi * W + wi] = 1.0
    return g, Ho, Wo


def _stride_select(H, W, stride):
    """0/1 operator picking every `stride`-th pixel (1x1 stride-s conv input)."""
    Ho = (H - 1) // stride + 1
    Wo = (W - 1) // stride + 1
    s = np.zeros((Ho * Wo, H * W), np.float32)
    for i in range(Ho):
        for j in range(Wo):
            s[i * Wo + j, (stride * i) * W + stride * j] = 1.0
    return s


# ----------------------------------------------------------------------------
# Raw (PyTorch-like) parameters
# ----------------------------------------------------------------------------
def _bn_params(key, c, eps=1e-5):
    k1, k2, k3, k4 = jax.random.split(key, 4)
    gamma = 1.0 + 0.1 * jax.random.normal(k1, (c,), jnp.float32)
    beta = 0.1 * jax.random.normal(k2, (c,), jnp.float32)
    mean = 0.1 * jax.random.normal(k3, (c,), jnp.float32)
    var = 1.0 + 0.1 * jnp.abs(jax.random.normal(k4, (c,), jnp.float32))
    scale = gamma / jnp.sqrt(var + eps)
    shift = beta - mean * scale
    return scale, shift


def _conv_w(key, cout, cin, kh, kw):
    fan_in = cin * kh * kw
    return jax.random.normal(key, (cout, cin, kh, kw), jnp.float32) / jnp.sqrt(fan_in)


def make_layer4_params(key, inplanes=16, planes=8, expansion=4):
    """Random-init analog of resnet50.layer4 (3 Bottlenecks, first stride 2)."""
    out_ch = planes * expansion
    blocks, in_c = [], inplanes
    for b in range(3):
        key, *ks = jax.random.split(key, 9)
        blk = {
            "w1": _conv_w(ks[0], planes, in_c, 1, 1),
            "bn1": _bn_params(ks[1], planes),
            "w2": _conv_w(ks[2], planes, planes, 3, 3),
            "bn2": _bn_params(ks[3], planes),
            "w3": _conv_w(ks[4], out_ch, planes, 1, 1),
            "bn3": _bn_params(ks[5], out_ch),
            "stride": 2 if b == 0 else 1,
        }
        if b == 0:
            blk["wd"] = _conv_w(ks[6], out_ch, in_c, 1, 1)
            blk["bnd"] = _bn_params(ks[7], out_ch)
        blocks.append(blk)
        in_c = out_ch
    return blocks


def prepare_encoder_params(raw_blocks, H, W):
    """Fold BN into bf16 weight matrices and build the in-VMEM conv operators.

    Done ONCE, outside the forward path: the forward pass only ships the
    prepared arrays into the single fused kernel.
    """
    prep, h, w = [], H, W
    for blk in raw_blocks:
        stride = blk["stride"]
        s1, t1 = blk["bn1"]
        s2, t2 = blk["bn2"]
        s3, t3 = blk["bn3"]
        planes = blk["w1"].shape[0]
        cout = blk["w3"].shape[0]
        g2, ho, wo = _conv2_gathers(h, w, stride)

        p = {
            "g2": jnp.asarray(g2, jnp.bfloat16),
            "w1": (jnp.transpose(blk["w1"][:, :, 0, 0]) * s1[None, :]
                   ).astype(jnp.bfloat16),
            "b1": t1.reshape(1, planes).astype(jnp.float32),
            "w2": (jnp.transpose(blk["w2"], (2, 3, 1, 0)).reshape(9, planes, planes)
                   * s2[None, None, :]).astype(jnp.bfloat16),
            "b2": t2.reshape(1, planes).astype(jnp.float32),
            "w3": (jnp.transpose(blk["w3"][:, :, 0, 0]) * s3[None, :]
                   ).astype(jnp.bfloat16),
            "b3": t3.reshape(1, cout).astype(jnp.float32),
        }
        if "wd" in blk:
            sd, td = blk["bnd"]
            p["seld"] = jnp.asarray(_stride_select(h, w, stride), jnp.bfloat16)
            p["wd"] = (jnp.transpose(blk["wd"][:, :, 0, 0]) * sd[None, :]
                       ).astype(jnp.bfloat16)
            p["bd"] = td.reshape(1, cout).astype(jnp.float32)
        prep.append(p)
        h, w = ho, wo
    return tuple(prep)


# ----------------------------------------------------------------------------
# The single fused Pallas kernel: layer4 (3 Bottlenecks) [+ avg-pool], 1 image
# ----------------------------------------------------------------------------
def _layer4_kernel(x_ref, *refs, blocks_meta, pool):
    out_ref = refs[-1]
    prefs = refs[:-1]

    y = x_ref[...].astype(jnp.float32)                 # (H*W, Cin) block input

    pos = 0
    for meta in blocks_meta:
        nref = 10 if meta["has_down"] else 7
        g2, w1, b1, w2, b2, w3, b3 = prefs[pos:pos + 7]
        down = prefs[pos + 7:pos + nref]
        pos += nref

        yb = y.astype(jnp.bfloat16)                    # bf16 on MXU, f32 accum

        # conv1 (1x1) + folded BN1 + ReLU  -> (H*W, planes)
        h1 = jnp.maximum(
            jnp.dot(yb, w1[...], preferred_element_type=jnp.float32) + b1[...],
            0.0)
        h1b = h1.astype(jnp.bfloat16)

        # conv2 (3x3, pad=1, stride s) as 9 in-VMEM gather + matmul taps
        acc = jnp.zeros((meta["hw_out"], meta["planes"]), jnp.float32)
        for k in range(9):
            tap = jnp.dot(g2[k], h1b, preferred_element_type=jnp.float32)
            acc = acc + jnp.dot(tap.astype(jnp.bfloat16), w2[k],
                                preferred_element_type=jnp.float32)
        h2 = jnp.maximum(acc + b2[...], 0.0)

        # residual branch (fused stride-2 1x1 downsample, or identity)
        if meta["has_down"]:
            seld, wd, bd = down
            xs = jnp.dot(seld[...], yb, preferred_element_type=jnp.float32)
            res = jnp.dot(xs.astype(jnp.bfloat16), wd[...],
                          preferred_element_type=jnp.float32) + bd[...]
        else:
            res = y                                    # identity (f32)

        # conv3 (1x1) + folded BN3 + residual add + ReLU
        y = jnp.maximum(
            jnp.dot(h2.astype(jnp.bfloat16), w3[...],
                    preferred_element_type=jnp.float32) + b3[...] + res,
            0.0)

    if pool:                                           # fused AvgPool2d((7,7))
        out_ref[...] = jnp.mean(y, axis=0, keepdims=True).astype(out_ref.dtype)
    else:
        out_ref[...] = y.astype(out_ref.dtype)


def _full_spec(arr):
    zeros = (0,) * arr.ndim
    return pl.BlockSpec(arr.shape, lambda n, _z=zeros: _z)


_PARAM_ORDER = ("g2", "w1", "b1", "w2", "b2", "w3", "b3")
_DOWN_ORDER = ("seld", "wd", "bd")


@functools.partial(jax.jit, static_argnames=("use_avg",))
def encoder_forward(x_nchw, prep, use_avg=False):
    """Matches Encoder.forward: feature = layer4(x); optional avgpool+flatten."""
    N, Cin, H, W = x_nchw.shape
    # NCHW -> NHWC -> (N, H*W, Cin); bf16 (every in-kernel use is behind a
    # bf16 cast anyway, so this only halves the activation DMA).
    x = jnp.transpose(x_nchw, (0, 2, 3, 1)).astype(jnp.float32)
    x = x.reshape(N, H * W, Cin).astype(jnp.bfloat16)

    flat, in_specs, blocks_meta = [], [], []
    in_specs.append(pl.BlockSpec((None, H * W, Cin), lambda n: (n, 0, 0)))
    for blk in prep:
        has_down = "wd" in blk
        for name in _PARAM_ORDER + (_DOWN_ORDER if has_down else ()):
            flat.append(blk[name])
            in_specs.append(_full_spec(blk[name]))
        blocks_meta.append(dict(has_down=has_down,
                                hw_out=blk["g2"].shape[1],
                                planes=blk["w2"].shape[2]))

    Cout = prep[-1]["w3"].shape[1]
    Ho = (H - 1) // 2 + 1                       # single stride-2 block in layer4
    Wo = (W - 1) // 2 + 1
    assert prep[-1]["g2"].shape[1] == Ho * Wo

    if use_avg:
        out_shape = jax.ShapeDtypeStruct((N, 1, Cout), jnp.float32)
        out_spec = pl.BlockSpec((None, 1, Cout), lambda n: (n, 0, 0))
    else:
        out_shape = jax.ShapeDtypeStruct((N, Ho * Wo, Cout), jnp.float32)
        out_spec = pl.BlockSpec((None, Ho * Wo, Cout), lambda n: (n, 0, 0))

    kernel = functools.partial(_layer4_kernel,
                               blocks_meta=tuple(blocks_meta), pool=use_avg)
    out = pl.pallas_call(
        kernel,
        out_shape=out_shape,
        grid=(N,),                                      # one image per grid step
        in_specs=in_specs,
        out_specs=out_spec,
        compiler_params=pltpu.CompilerParams(
            dimension_semantics=("parallel",)),         # shard images across TCs
    )(x, *flat)

    if use_avg:
        return out.reshape(N, Cout)
    return jnp.transpose(out.reshape(N, Ho, Wo, Cout), (0, 3, 1, 2))   # NCHW


# ----------------------------------------------------------------------------
# Pure-XLA reference (same bf16-on-MXU / f32-accumulate recipe) for validation
# ----------------------------------------------------------------------------
def _ref_conv_bn(x, w, bn, stride, pad):
    scale, shift = bn
    wf = jnp.transpose(w * scale[:, None, None, None], (2, 3, 1, 0))   # HWIO, folded
    y = lax.conv_general_dilated(
        x.astype(jnp.bfloat16), wf.astype(jnp.bfloat16),
        window_strides=(stride, stride), padding=[(pad, pad), (pad, pad)],
        dimension_numbers=("NHWC", "HWIO", "NHWC"),
        preferred_element_type=jnp.float32)
    return y + shift


def encoder_reference(x_nchw, raw_blocks, use_avg=False):
    x = jnp.transpose(x_nchw, (0, 2, 3, 1)).astype(jnp.float32)
    for blk in raw_blocks:
        s = blk["stride"]
        h = jnp.maximum(_ref_conv_bn(x, blk["w1"], blk["bn1"], 1, 0), 0.0)
        h = jnp.maximum(_ref_conv_bn(h, blk["w2"], blk["bn2"], s, 1), 0.0)
        h = _ref_conv_bn(h, blk["w3"], blk["bn3"], 1, 0)
        idn = _ref_conv_bn(x, blk["wd"], blk["bnd"], s, 0) if "wd" in blk else x
        x = jnp.maximum(h + idn, 0.0)
    if use_avg:
        return jnp.mean(x, axis=(1, 2))
    return jnp.transpose(x, (0, 3, 1, 2))


# ----------------------------------------------------------------------------
if __name__ == "__main__":
    key = jax.random.PRNGKey(0)
    k_x, k_p = jax.random.split(key)

    N, C_IN, H, W = 2, 16, 14, 14                       # small layer4 analog
    x = jax.random.normal(k_x, (N, C_IN, H, W), jnp.float32)        # NCHW
    raw = make_layer4_params(k_p, inplanes=C_IN, planes=8, expansion=4)
    prep = prepare_encoder_params(raw, H, W)

    feat = jax.block_until_ready(encoder_forward(x, prep, use_avg=False))
    assert feat.shape == (N, 32, 7, 7), feat.shape

    pooled = jax.block_until_ready(encoder_forward(x, prep, use_avg=True))
    assert pooled.shape == (N, 32), pooled.shape

    # numerics vs the pure-XLA reference (same bf16 weights, f32 accumulation)
    ref_feat = encoder_reference(x, raw, use_avg=False)
    ref_pool = encoder_reference(x, raw, use_avg=True)
    err_f = float(jnp.max(jnp.abs(feat - ref_feat)))
    err_p = float(jnp.max(jnp.abs(pooled - ref_pool)))
    assert err_f < 3e-2 and err_p < 3e-2, (err_f, err_p)

    print("KERNEL_OK")
</pallas_src>

<mosaic_0001>
module attributes {stable_mosaic.version = 11 : i64} {
  func.func @_layer4_kernel(%arg0: i32, %arg1: memref<1x196x16xbf16, #tpu.memory_space<vmem>>, %arg2: memref<9x49x196xbf16, #tpu.memory_space<vmem>>, %arg3: memref<16x8xbf16, #tpu.memory_space<vmem>>, %arg4: memref<1x8xf32, #tpu.memory_space<vmem>>, %arg5: memref<9x8x8xbf16, #tpu.memory_space<vmem>>, %arg6: memref<1x8xf32, #tpu.memory_space<vmem>>, %arg7: memref<8x32xbf16, #tpu.memory_space<vmem>>, %arg8: memref<1x32xf32, #tpu.memory_space<vmem>>, %arg9: memref<49x196xbf16, #tpu.memory_space<vmem>>, %arg10: memref<16x32xbf16, #tpu.memory_space<vmem>>, %arg11: memref<1x32xf32, #tpu.memory_space<vmem>>, %arg12: memref<9x49x49xbf16, #tpu.memory_space<vmem>>, %arg13: memref<32x8xbf16, #tpu.memory_space<vmem>>, %arg14: memref<1x8xf32, #tpu.memory_space<vmem>>, %arg15: memref<9x8x8xbf16, #tpu.memory_space<vmem>>, %arg16: memref<1x8xf32, #tpu.memory_space<vmem>>, %arg17: memref<8x32xbf16, #tpu.memory_space<vmem>>, %arg18: memref<1x32xf32, #tpu.memory_space<vmem>>, %arg19: memref<9x49x49xbf16, #tpu.memory_space<vmem>>, %arg20: memref<32x8xbf16, #tpu.memory_space<vmem>>, %arg21: memref<1x8xf32, #tpu.memory_space<vmem>>, %arg22: memref<9x8x8xbf16, #tpu.memory_space<vmem>>, %arg23: memref<1x8xf32, #tpu.memory_space<vmem>>, %arg24: memref<8x32xbf16, #tpu.memory_space<vmem>>, %arg25: memref<1x32xf32, #tpu.memory_space<vmem>>, %arg26: memref<1x49x32xf32, #tpu.memory_space<vmem>>) attributes {dimension_semantics = [#tpu.dimension_semantics<parallel>], iteration_bounds = array<i64: 2>, scalar_prefetch = 0 : i64, scratch_operands = 0 : i64, tpu.core_type = #tpu.core_type<tc>, window_params = [{transform_indices = @transform_0, window_bounds = array<i64: 1, 196, 16>}, {pipeline_mode = #tpu.pipeline_mode<synchronous>, transform_indices = @transform_1, window_bounds = array<i64: 9, 49, 196>}, {pipeline_mode = #tpu.pipeline_mode<synchronous>, transform_indices = @transform_2, window_bounds = array<i64: 16, 8>}, {pipeline_mode = #tpu.pipeline_mode<synchronous>, transform_indices = @transform_3, window_bounds = array<i64: 1, 8>}, {pipeline_mode = #tpu.pipeline_mode<synchronous>, transform_indices = @transform_4, window_bounds = array<i64: 9, 8, 8>}, {pipeline_mode = #tpu.pipeline_mode<synchronous>, transform_indices = @transform_5, window_bounds = array<i64: 1, 8>}, {pipeline_mode = #tpu.pipeline_mode<synchronous>, transform_indices = @transform_6, window_bounds = array<i64: 8, 32>}, {pipeline_mode = #tpu.pipeline_mode<synchronous>, transform_indices = @transform_7, window_bounds = array<i64: 1, 32>}, {pipeline_mode = #tpu.pipeline_mode<synchronous>, transform_indices = @transform_8, window_bounds = array<i64: 49, 196>}, {pipeline_mode = #tpu.pipeline_mode<synchronous>, transform_indices = @transform_9, window_bounds = array<i64: 16, 32>}, {pipeline_mode = #tpu.pipeline_mode<synchronous>, transform_indices = @transform_10, window_bounds = array<i64: 1, 32>}, {pipeline_mode = #tpu.pipeline_mode<synchronous>, transform_indices = @transform_11, window_bounds = array<i64: 9, 49, 49>}, {pipeline_mode = #tpu.pipeline_mode<synchronous>, transform_indices = @transform_12, window_bounds = array<i64: 32, 8>}, {pipeline_mode = #tpu.pipeline_mode<synchronous>, transform_indices = @transform_13, window_bounds = array<i64: 1, 8>}, {pipeline_mode = #tpu.pipeline_mode<synchronous>, transform_indices = @transform_14, window_bounds = array<i64: 9, 8, 8>}, {pipeline_mode = #tpu.pipeline_mode<synchronous>, transform_indices = @transform_15, window_bounds = array<i64: 1, 8>}, {pipeline_mode = #tpu.pipeline_mode<synchronous>, transform_indices = @transform_16, window_bounds = array<i64: 8, 32>}, {pipeline_mode = #tpu.pipeline_mode<synchronous>, transform_indices = @transform_17, window_bounds = array<i64: 1, 32>}, {pipeline_mode = #tpu.pipeline_mode<synchronous>, transform_indices = @transform_18, window_bounds = array<i64: 9, 49, 49>}, {pipeline_mode = #tpu.pipeline_mode<synchronous>, transform_indices = @transform_19, window_bounds = array<i64: 32, 8>}, {pipeline_mode = #tpu.pipeline_mode<synchronous>, transform_indices = @transform_20, window_bounds = array<i64: 1, 8>}, {pipeline_mode = #tpu.pipeline_mode<synchronous>, transform_indices = @transform_21, window_bounds = array<i64: 9, 8, 8>}, {pipeline_mode = #tpu.pipeline_mode<synchronous>, transform_indices = @transform_22, window_bounds = array<i64: 1, 8>}, {pipeline_mode = #tpu.pipeline_mode<synchronous>, transform_indices = @transform_23, window_bounds = array<i64: 8, 32>}, {pipeline_mode = #tpu.pipeline_mode<synchronous>, transform_indices = @transform_24, window_bounds = array<i64: 1, 32>}, {transform_indices = @transform_25, window_bounds = array<i64: 1, 49, 32>}]} {
    %c0 = arith.constant 0 : index
    %c0_0 = arith.constant 0 : index
    %c0_1 = arith.constant 0 : index
    %0 = vector.load %arg1[%c0, %c0_0, %c0_1] : memref<1x196x16xbf16, #tpu.memory_space<vmem>>, vector<1x196x16xbf16>
    %1 = vector.shape_cast %0 : vector<1x196x16xbf16> to vector<196x16xbf16>
    %2 = arith.extf %1 : vector<196x16xbf16> to vector<196x16xf32>
    %3 = arith.truncf %2 : vector<196x16xf32> to vector<196x16xbf16>
    %c0_2 = arith.constant 0 : index
    %c0_3 = arith.constant 0 : index
    %4 = vector.load %arg3[%c0_2, %c0_3] : memref<16x8xbf16, #tpu.memory_space<vmem>>, vector<16x8xbf16>
    %cst = arith.constant dense<0.000000e+00> : vector<196x8xf32>
    %5 = tpu.matmul %3, %4, %cst {dimension_numbers = #tpu.dot_dimension_numbers<[1], [0], [0], [1], [0, 0, 1, 1], [], []>} : vector<196x16xbf16>, vector<16x8xbf16>, vector<196x8xf32> -> vector<196x8xf32>
    %c0_4 = arith.constant 0 : index
    %c0_5 = arith.constant 0 : index
    %6 = vector.load %arg4[%c0_4, %c0_5] : memref<1x8xf32, #tpu.memory_space<vmem>>, vector<1x8xf32>
    %7 = vector.broadcast %6 : vector<1x8xf32> to vector<196x8xf32>
    %8 = arith.addf %5, %7 : vector<196x8xf32>
    %cst_6 = arith.constant 0.000000e+00 : f32
    %9 = vector.broadcast %cst_6 : f32 to vector<196x8xf32>
    %10 = arith.maximumf %8, %9 : vector<196x8xf32>
    %11 = arith.truncf %10 : vector<196x8xf32> to vector<196x8xbf16>
    %cst_7 = arith.constant 0.000000e+00 : f32
    %12 = vector.broadcast %cst_7 : f32 to vector<49x8xf32>
    %c0_8 = arith.constant 0 : index
    %c0_9 = arith.constant 0 : index
    %c0_10 = arith.constant 0 : index
    %13 = vector.load %arg2[%c0_8, %c0_9, %c0_10] : memref<9x49x196xbf16, #tpu.memory_space<vmem>>, vector<1x49x196xbf16>
    %14 = vector.shape_cast %13 : vector<1x49x196xbf16> to vector<49x196xbf16>
    %cst_11 = arith.constant dense<0.000000e+00> : vector<49x8xf32>
    %15 = tpu.matmul %14, %11, %cst_11 {dimension_numbers = #tpu.dot_dimension_numbers<[1], [0], [0], [1], [0, 0, 1, 1], [], []>} : vector<49x196xbf16>, vector<196x8xbf16>, vector<49x8xf32> -> vector<49x8xf32>
    %16 = arith.truncf %15 : vector<49x8xf32> to vector<49x8xbf16>
    %c0_12 = arith.constant 0 : index
    %c0_13 = arith.constant 0 : index
    %c0_14 = arith.constant 0 : index
    %17 = vector.load %arg5[%c0_12, %c0_13, %c0_14] : memref<9x8x8xbf16, #tpu.memory_space<vmem>>, vector<1x8x8xbf16>
    %18 = vector.shape_cast %17 : vector<1x8x8xbf16> to vector<8x8xbf16>
    %cst_15 = arith.constant dense<0.000000e+00> : vector<49x8xf32>
    %19 = tpu.matmul %16, %18, %cst_15 {dimension_numbers = #tpu.dot_dimension_numbers<[1], [0], [0], [1], [0, 0, 1, 1], [], []>} : vector<49x8xbf16>, vector<8x8xbf16>, vector<49x8xf32> -> vector<49x8xf32>
    %20 = arith.addf %12, %19 : vector<49x8xf32>
    %c1 = arith.constant 1 : index
    %c0_16 = arith.constant 0 : index
    %c0_17 = arith.constant 0 : index
    %21 = vector.load %arg2[%c1, %c0_16, %c0_17] : memref<9x49x196xbf16, #tpu.memory_space<vmem>>, vector<1x49x196xbf16>
    %22 = vector.shape_cast %21 : vector<1x49x196xbf16> to vector<49x196xbf16>
    %cst_18 = arith.constant dense<0.000000e+00> : vector<49x8xf32>
    %23 = tpu.matmul %22, %11, %cst_18 {dimension_numbers = #tpu.dot_dimension_numbers<[1], [0], [0], [1], [0, 0, 1, 1], [], []>} : vector<49x196xbf16>, vector<196x8xbf16>, vector<49x8xf32> -> vector<49x8xf32>
    %24 = arith.truncf %23 : vector<49x8xf32> to vector<49x8xbf16>
    %c1_19 = arith.constant 1 : index
    %c0_20 = arith.constant 0 : index
    %c0_21 = arith.constant 0 : index
    %25 = vector.load %arg5[%c1_19, %c0_20, %c0_21] : memref<9x8x8xbf16, #tpu.memory_space<vmem>>, vector<1x8x8xbf16>
    %26 = vector.shape_cast %25 : vector<1x8x8xbf16> to vector<8x8xbf16>
    %cst_22 = arith.constant dense<0.000000e+00> : vector<49x8xf32>
    %27 = tpu.matmul %24, %26, %cst_22 {dimension_numbers = #tpu.dot_dimension_numbers<[1], [0], [0], [1], [0, 0, 1, 1], [], []>} : vector<49x8xbf16>, vector<8x8xbf16>, vector<49x8xf32> -> vector<49x8xf32>
    %28 = arith.addf %20, %27 : vector<49x8xf32>
    %c2 = arith.constant 2 : index
    %c0_23 = arith.constant 0 : index
    %c0_24 = arith.constant 0 : index
    %29 = vector.load %arg2[%c2, %c0_23, %c0_24] : memref<9x49x196xbf16, #tpu.memory_space<vmem>>, vector<1x49x196xbf16>
    %30 = vector.shape_cast %29 : vector<1x49x196xbf16> to vector<49x196xbf16>
    %cst_25 = arith.constant dense<0.000000e+00> : vector<49x8xf32>
    %31 = tpu.matmul %30, %11, %cst_25 {dimension_numbers = #tpu.dot_dimension_numbers<[1], [0], [0], [1], [0, 0, 1, 1], [], []>} : vector<49x196xbf16>, vector<196x8xbf16>, vector<49x8xf32> -> vector<49x8xf32>
    %32 = arith.truncf %31 : vector<49x8xf32> to vector<49x8xbf16>
    %c2_26 = arith.constant 2 : index
    %c0_27 = arith.constant 0 : index
    %c0_28 = arith.constant 0 : index
    %33 = vector.load %arg5[%c2_26, %c0_27, %c0_28] : memref<9x8x8xbf16, #tpu.memory_space<vmem>>, vector<1x8x8xbf16>
    %34 = vector.shape_cast %33 : vector<1x8x8xbf16> to vector<8x8xbf16>
    %cst_29 = arith.constant dense<0.000000e+00> : vector<49x8xf32>
    %35 = tpu.matmul %32, %34, %cst_29 {dimension_numbers = #tpu.dot_dimension_numbers<[1], [0], [0], [1], [0, 0, 1, 1], [], []>} : vector<49x8xbf16>, vector<8x8xbf16>, vector<49x8xf32> -> vector<49x8xf32>
    %36 = arith.addf %28, %35 : vector<49x8xf32>
    %c3 = arith.constant 3 : index
    %c0_30 = arith.constant 0 : index
    %c0_31 = arith.constant 0 : index
    %37 = vector.load %arg2[%c3, %c0_30, %c0_31] : memref<9x49x196xbf16, #tpu.memory_space<vmem>>, vector<1x49x196xbf16>
    %38 = vector.shape_cast %37 : vector<1x49x196xbf16> to vector<49x196xbf16>
    %cst_32 = arith.constant dense<0.000000e+00> : vector<49x8xf32>
    %39 = tpu.matmul %38, %11, %cst_32 {dimension_numbers = #tpu.dot_dimension_numbers<[1], [0], [0], [1], [0, 0, 1, 1], [], []>} : vector<49x196xbf16>, vector<196x8xbf16>, vector<49x8xf32> -> vector<49x8xf32>
    %40 = arith.truncf %39 : vector<49x8xf32> to vector<49x8xbf16>
    %c3_33 = arith.constant 3 : index
    %c0_34 = arith.constant 0 : index
    %c0_35 = arith.constant 0 : index
    %41 = vector.load %arg5[%c3_33, %c0_34, %c0_35] : memref<9x8x8xbf16, #tpu.memory_space<vmem>>, vector<1x8x8xbf16>
    %42 = vector.shape_cast %41 : vector<1x8x8xbf16> to vector<8x8xbf16>
    %cst_36 = arith.constant dense<0.000000e+00> : vector<49x8xf32>
    %43 = tpu.matmul %40, %42, %cst_36 {dimension_numbers = #tpu.dot_dimension_numbers<[1], [0], [0], [1], [0, 0, 1, 1], [], []>} : vector<49x8xbf16>, vector<8x8xbf16>, vector<49x8xf32> -> vector<49x8xf32>
    %44 = arith.addf %36, %43 : vector<49x8xf32>
    %c4 = arith.constant 4 : index
    %c0_37 = arith.constant 0 : index
    %c0_38 = arith.constant 0 : index
    %45 = vector.load %arg2[%c4, %c0_37, %c0_38] : memref<9x49x196xbf16, #tpu.memory_space<vmem>>, vector<1x49x196xbf16>
    %46 = vector.shape_cast %45 : vector<1x49x196xbf16> to vector<49x196xbf16>
    %cst_39 = arith.constant dense<0.000000e+00> : vector<49x8xf32>
    %47 = tpu.matmul %46, %11, %cst_39 {dimension_numbers = #tpu.dot_dimension_numbers<[1], [0], [0], [1], [0, 0, 1, 1], [], []>} : vector<49x196xbf16>, vector<196x8xbf16>, vector<49x8xf32> -> vector<49x8xf32>
    %48 = arith.truncf %47 : vector<49x8xf32> to vector<49x8xbf16>
    %c4_40 = arith.constant 4 : index
    %c0_41 = arith.constant 0 : index
    %c0_42 = arith.constant 0 : index
    %49 = vector.load %arg5[%c4_40, %c0_41, %c0_42] : memref<9x8x8xbf16, #tpu.memory_space<vmem>>, vector<1x8x8xbf16>
    %50 = vector.shape_cast %49 : vector<1x8x8xbf16> to vector<8x8xbf16>
    %cst_43 = arith.constant dense<0.000000e+00> : vector<49x8xf32>
    %51 = tpu.matmul %48, %50, %cst_43 {dimension_numbers = #tpu.dot_dimension_numbers<[1], [0], [0], [1], [0, 0, 1, 1], [], []>} : vector<49x8xbf16>, vector<8x8xbf16>, vector<49x8xf32> -> vector<49x8xf32>
    %52 = arith.addf %44, %51 : vector<49x8xf32>
    %c5 = arith.constant 5 : index
    %c0_44 = arith.constant 0 : index
    %c0_45 = arith.constant 0 : index
    %53 = vector.load %arg2[%c5, %c0_44, %c0_45] : memref<9x49x196xbf16, #tpu.memory_space<vmem>>, vector<1x49x196xbf16>
    %54 = vector.shape_cast %53 : vector<1x49x196xbf16> to vector<49x196xbf16>
    %cst_46 = arith.constant dense<0.000000e+00> : vector<49x8xf32>
    %55 = tpu.matmul %54, %11, %cst_46 {dimension_numbers = #tpu.dot_dimension_numbers<[1], [0], [0], [1], [0, 0, 1, 1], [], []>} : vector<49x196xbf16>, vector<196x8xbf16>, vector<49x8xf32> -> vector<49x8xf32>
    %56 = arith.truncf %55 : vector<49x8xf32> to vector<49x8xbf16>
    %c5_47 = arith.constant 5 : index
    %c0_48 = arith.constant 0 : index
    %c0_49 = arith.constant 0 : index
    %57 = vector.load %arg5[%c5_47, %c0_48, %c0_49] : memref<9x8x8xbf16, #tpu.memory_space<vmem>>, vector<1x8x8xbf16>
    %58 = vector.shape_cast %57 : vector<1x8x8xbf16> to vector<8x8xbf16>
    %cst_50 = arith.constant dense<0.000000e+00> : vector<49x8xf32>
    %59 = tpu.matmul %56, %58, %cst_50 {dimension_numbers = #tpu.dot_dimension_numbers<[1], [0], [0], [1], [0, 0, 1, 1], [], []>} : vector<49x8xbf16>, vector<8x8xbf16>, vector<49x8xf32> -> vector<49x8xf32>
    %60 = arith.addf %52, %59 : vector<49x8xf32>
    %c6 = arith.constant 6 : index
    %c0_51 = arith.constant 0 : index
    %c0_52 = arith.constant 0 : index
    %61 = vector.load %arg2[%c6, %c0_51, %c0_52] : memref<9x49x196xbf16, #tpu.memory_space<vmem>>, vector<1x49x196xbf16>
    %62 = vector.shape_cast %61 : vector<1x49x196xbf16> to vector<49x196xbf16>
    %cst_53 = arith.constant dense<0.000000e+00> : vector<49x8xf32>
    %63 = tpu.matmul %62, %11, %cst_53 {dimension_numbers = #tpu.dot_dimension_numbers<[1], [0], [0], [1], [0, 0, 1, 1], [], []>} : vector<49x196xbf16>, vector<196x8xbf16>, vector<49x8xf32> -> vector<49x8xf32>
    %64 = arith.truncf %63 : vector<49x8xf32> to vector<49x8xbf16>
    %c6_54 = arith.constant 6 : index
    %c0_55 = arith.constant 0 : index
    %c0_56 = arith.constant 0 : index
    %65 = vector.load %arg5[%c6_54, %c0_55, %c0_56] : memref<9x8x8xbf16, #tpu.memory_space<vmem>>, vector<1x8x8xbf16>
    %66 = vector.shape_cast %65 : vector<1x8x8xbf16> to vector<8x8xbf16>
    %cst_57 = arith.constant dense<0.000000e+00> : vector<49x8xf32>
    %67 = tpu.matmul %64, %66, %cst_57 {dimension_numbers = #tpu.dot_dimension_numbers<[1], [0], [0], [1], [0, 0, 1, 1], [], []>} : vector<49x8xbf16>, vector<8x8xbf16>, vector<49x8xf32> -> vector<49x8xf32>
    %68 = arith.addf %60, %67 : vector<49x8xf32>
    %c7 = arith.constant 7 : index
    %c0_58 = arith.constant 0 : index
    %c0_59 = arith.constant 0 : index
    %69 = vector.load %arg2[%c7, %c0_58, %c0_59] : memref<9x49x196xbf16, #tpu.memory_space<vmem>>, vector<1x49x196xbf16>
    %70 = vector.shape_cast %69 : vector<1x49x196xbf16> to vector<49x196xbf16>
    %cst_60 = arith.constant dense<0.000000e+00> : vector<49x8xf32>
    %71 = tpu.matmul %70, %11, %cst_60 {dimension_numbers = #tpu.dot_dimension_numbers<[1], [0], [0], [1], [0, 0, 1, 1], [], []>} : vector<49x196xbf16>, vector<196x8xbf16>, vector<49x8xf32> -> vector<49x8xf32>
    %72 = arith.truncf %71 : vector<49x8xf32> to vector<49x8xbf16>
    %c7_61 = arith.constant 7 : index
    %c0_62 = arith.constant 0 : index
    %c0_63 = arith.constant 0 : index
    %73 = vector.load %arg5[%c7_61, %c0_62, %c0_63] : memref<9x8x8xbf16, #tpu.memory_space<vmem>>, vector<1x8x8xbf16>
    %74 = vector.shape_cast %73 : vector<1x8x8xbf16> to vector<8x8xbf16>
    %cst_64 = arith.constant dense<0.000000e+00> : vector<49x8xf32>
    %75 = tpu.matmul %72, %74, %cst_64 {dimension_numbers = #tpu.dot_dimension_numbers<[1], [0], [0], [1], [0, 0, 1, 1], [], []>} : vector<49x8xbf16>, vector<8x8xbf16>, vector<49x8xf32> -> vector<49x8xf32>
    %76 = arith.addf %68, %75 : vector<49x8xf32>
    %c8 = arith.constant 8 : index
    %c0_65 = arith.constant 0 : index
    %c0_66 = arith.constant 0 : index
    %77 = vector.load %arg2[%c8, %c0_65, %c0_66] : memref<9x49x196xbf16, #tpu.memory_space<vmem>>, vector<1x49x196xbf16>
    %78 = vector.shape_cast %77 : vector<1x49x196xbf16> to vector<49x196xbf16>
    %cst_67 = arith.constant dense<0.000000e+00> : vector<49x8xf32>
    %79 = tpu.matmul %78, %11, %cst_67 {dimension_numbers = #tpu.dot_dimension_numbers<[1], [0], [0], [1], [0, 0, 1, 1], [], []>} : vector<49x196xbf16>, vector<196x8xbf16>, vector<49x8xf32> -> vector<49x8xf32>
    %80 = arith.truncf %79 : vector<49x8xf32> to vector<49x8xbf16>
    %c8_68 = arith.constant 8 : index
    %c0_69 = arith.constant 0 : index
    %c0_70 = arith.constant 0 : index
    %81 = vector.load %arg5[%c8_68, %c0_69, %c0_70] : memref<9x8x8xbf16, #tpu.memory_space<vmem>>, vector<1x8x8xbf16>
    %82 = vector.shape_cast %81 : vector<1x8x8xbf16> to vector<8x8xbf16>
    %cst_71 = arith.constant dense<0.000000e+00> : vector<49x8xf32>
    %83 = tpu.matmul %80, %82, %cst_71 {dimension_numbers = #tpu.dot_dimension_numbers<[1], [0], [0], [1], [0, 0, 1, 1], [], []>} : vector<49x8xbf16>, vector<8x8xbf16>, vector<49x8xf32> -> vector<49x8xf32>
    %84 = arith.addf %76, %83 : vector<49x8xf32>
    %c0_72 = arith.constant 0 : index
    %c0_73 = arith.constant 0 : index
    %85 = vector.load %arg6[%c0_72, %c0_73] : memref<1x8xf32, #tpu.memory_space<vmem>>, vector<1x8xf32>
    %86 = vector.broadcast %85 : vector<1x8xf32> to vector<49x8xf32>
    %87 = arith.addf %84, %86 : vector<49x8xf32>
    %cst_74 = arith.constant 0.000000e+00 : f32
    %88 = vector.broadcast %cst_74 : f32 to vector<49x8xf32>
    %89 = arith.maximumf %87, %88 : vector<49x8xf32>
    %c0_75 = arith.constant 0 : index
    %c0_76 = arith.constant 0 : index
    %90 = vector.load %arg9[%c0_75, %c0_76] : memref<49x196xbf16, #tpu.memory_space<vmem>>, vector<49x196xbf16>
    %cst_77 = arith.constant dense<0.000000e+00> : vector<49x16xf32>
    %91 = tpu.matmul %90, %3, %cst_77 {dimension_numbers = #tpu.dot_dimension_numbers<[1], [0], [0], [1], [0, 0, 1, 1], [], []>} : vector<49x196xbf16>, vector<196x16xbf16>, vector<49x16xf32> -> vector<49x16xf32>
    %92 = arith.truncf %91 : vector<49x16xf32> to vector<49x16xbf16>
    %c0_78 = arith.constant 0 : index
    %c0_79 = arith.constant 0 : index
    %93 = vector.load %arg10[%c0_78, %c0_79] : memref<16x32xbf16, #tpu.memory_space<vmem>>, vector<16x32xbf16>
    %cst_80 = arith.constant dense<0.000000e+00> : vector<49x32xf32>
    %94 = tpu.matmul %92, %93, %cst_80 {dimension_numbers = #tpu.dot_dimension_numbers<[1], [0], [0], [1], [0, 0, 1, 1], [], []>} : vector<49x16xbf16>, vector<16x32xbf16>, vector<49x32xf32> -> vector<49x32xf32>
    %c0_81 = arith.constant 0 : index
    %c0_82 = arith.constant 0 : index
    %95 = vector.load %arg11[%c0_81, %c0_82] : memref<1x32xf32, #tpu.memory_space<vmem>>, vector<1x32xf32>
    %96 = vector.broadcast %95 : vector<1x32xf32> to vector<49x32xf32>
    %97 = arith.addf %94, %96 : vector<49x32xf32>
    %98 = arith.truncf %89 : vector<49x8xf32> to vector<49x8xbf16>
    %c0_83 = arith.constant 0 : index
    %c0_84 = arith.constant 0 : index
    %99 = vector.load %arg7[%c0_83, %c0_84] : memref<8x32xbf16, #tpu.memory_space<vmem>>, vector<8x32xbf16>
    %cst_85 = arith.constant dense<0.000000e+00> : vector<49x32xf32>
    %100 = tpu.matmul %98, %99, %cst_85 {dimension_numbers = #tpu.dot_dimension_numbers<[1], [0], [0], [1], [0, 0, 1, 1], [], []>} : vector<49x8xbf16>, vector<8x32xbf16>, vector<49x32xf32> -> vector<49x32xf32>
    %c0_86 = arith.constant 0 : index
    %c0_87 = arith.constant 0 : index
    %101 = vector.load %arg8[%c0_86, %c0_87] : memref<1x32xf32, #tpu.memory_space<vmem>>, vector<1x32xf32>
    %102 = vector.broadcast %101 : vector<1x32xf32> to vector<49x32xf32>
    %103 = arith.addf %100, %102 : vector<49x32xf32>
    %104 = arith.addf %103, %97 : vector<49x32xf32>
    %cst_88 = arith.constant 0.000000e+00 : f32
    %105 = vector.broadcast %cst_88 : f32 to vector<49x32xf32>
    %106 = arith.maximumf %104, %105 : vector<49x32xf32>
    %107 = arith.truncf %106 : vector<49x32xf32> to vector<49x32xbf16>
    %c0_89 = arith.constant 0 : index
    %c0_90 = arith.constant 0 : index
    %108 = vector.load %arg13[%c0_89, %c0_90] : memref<32x8xbf16, #tpu.memory_space<vmem>>, vector<32x8xbf16>
    %cst_91 = arith.constant dense<0.000000e+00> : vector<49x8xf32>
    %109 = tpu.matmul %107, %108, %cst_91 {dimension_numbers = #tpu.dot_dimension_numbers<[1], [0], [0], [1], [0, 0, 1, 1], [], []>} : vector<49x32xbf16>, vector<32x8xbf16>, vector<49x8xf32> -> vector<49x8xf32>
    %c0_92 = arith.constant 0 : index
    %c0_93 = arith.constant 0 : index
    %110 = vector.load %arg14[%c0_92, %c0_93] : memref<1x8xf32, #tpu.memory_space<vmem>>, vector<1x8xf32>
    %111 = vector.broadcast %110 : vector<1x8xf32> to vector<49x8xf32>
    %112 = arith.addf %109, %111 : vector<49x8xf32>
    %cst_94 = arith.constant 0.000000e+00 : f32
    %113 = vector.broadcast %cst_94 : f32 to vector<49x8xf32>
    %114 = arith.maximumf %112, %113 : vector<49x8xf32>
    %115 = arith.truncf %114 : vector<49x8xf32> to vector<49x8xbf16>
    %cst_95 = arith.constant 0.000000e+00 : f32
    %116 = vector.broadcast %cst_95 : f32 to vector<49x8xf32>
    %c0_96 = arith.constant 0 : index
    %c0_97 = arith.constant 0 : index
    %c0_98 = arith.constant 0 : index
    %117 = vector.load %arg12[%c0_96, %c0_97, %c0_98] : memref<9x49x49xbf16, #tpu.memory_space<vmem>>, vector<1x49x49xbf16>
    %118 = vector.shape_cast %117 : vector<1x49x49xbf16> to vector<49x49xbf16>
    %cst_99 = arith.constant dense<0.000000e+00> : vector<49x8xf32>
    %119 = tpu.matmul %118, %115, %cst_99 {dimension_numbers = #tpu.dot_dimension_numbers<[1], [0], [0], [1], [0, 0, 1, 1], [], []>} : vector<49x49xbf16>, vector<49x8xbf16>, vector<49x8xf32> -> vector<49x8xf32>
    %120 = arith.truncf %119 : vector<49x8xf32> to vector<49x8xbf16>
    %c0_100 = arith.constant 0 : index
    %c0_101 = arith.constant 0 : index
    %c0_102 = arith.constant 0 : index
    %121 = vector.load %arg15[%c0_100, %c0_101, %c0_102] : memref<9x8x8xbf16, #tpu.memory_space<vmem>>, vector<1x8x8xbf16>
    %122 = vector.shape_cast %121 : vector<1x8x8xbf16> to vector<8x8xbf16>
    %cst_103 = arith.constant dense<0.000000e+00> : vector<49x8xf32>
    %123 = tpu.matmul %120, %122, %cst_103 {dimension_numbers = #tpu.dot_dimension_numbers<[1], [0], [0], [1], [0, 0, 1, 1], [], []>} : vector<49x8xbf16>, vector<8x8xbf16>, vector<49x8xf32> -> vector<49x8xf32>
    %124 = arith.addf %116, %123 : vector<49x8xf32>
    %c1_104 = arith.constant 1 : index
    %c0_105 = arith.constant 0 : index
    %c0_106 = arith.constant 0 : index
    %125 = vector.load %arg12[%c1_104, %c0_105, %c0_106] : memref<9x49x49xbf16, #tpu.memory_space<vmem>>, vector<1x49x49xbf16>
    %126 = vector.shape_cast %125 : vector<1x49x49xbf16> to vector<49x49xbf16>
    %cst_107 = arith.constant dense<0.000000e+00> : vector<49x8xf32>
    %127 = tpu.matmul %126, %115, %cst_107 {dimension_numbers = #tpu.dot_dimension_numbers<[1], [0], [0], [1], [0, 0, 1, 1], [], []>} : vector<49x49xbf16>, vector<49x8xbf16>, vector<49x8xf32> -> vector<49x8xf32>
    %128 = arith.truncf %127 : vector<49x8xf32> to vector<49x8xbf16>
    %c1_108 = arith.constant 1 : index
    %c0_109 = arith.constant 0 : index
    %c0_110 = arith.constant 0 : index
    %129 = vector.load %arg15[%c1_108, %c0_109, %c0_110] : memref<9x8x8xbf16, #tpu.memory_space<vmem>>, vector<1x8x8xbf16>
    %130 = vector.shape_cast %129 : vector<1x8x8xbf16> to vector<8x8xbf16>
    %cst_111 = arith.constant dense<0.000000e+00> : vector<49x8xf32>
    %131 = tpu.matmul %128, %130, %cst_111 {dimension_numbers = #tpu.dot_dimension_numbers<[1], [0], [0], [1], [0, 0, 1, 1], [], []>} : vector<49x8xbf16>, vector<8x8xbf16>, vector<49x8xf32> -> vector<49x8xf32>
    %132 = arith.addf %124, %131 : vector<49x8xf32>
    %c2_112 = arith.constant 2 : index
    %c0_113 = arith.constant 0 : index
    %c0_114 = arith.constant 0 : index
    %133 = vector.load %arg12[%c2_112, %c0_113, %c0_114] : memref<9x49x49xbf16, #tpu.memory_space<vmem>>, vector<1x49x49xbf16>
    %134 = vector.shape_cast %133 : vector<1x49x49xbf16> to vector<49x49xbf16>
    %cst_115 = arith.constant dense<0.000000e+00> : vector<49x8xf32>
    %135 = tpu.matmul %134, %115, %cst_115 {dimension_numbers = #tpu.dot_dimension_numbers<[1], [0], [0], [1], [0, 0, 1, 1], [], []>} : vector<49x49xbf16>, vector<49x8xbf16>, vector<49x8xf32> -> vector<49x8xf32>
    %136 = arith.truncf %135 : vector<49x8xf32> to vector<49x8xbf16>
    %c2_116 = arith.constant 2 : index
    %c0_117 = arith.constant 0 : index
    %c0_118 = arith.constant 0 : index
    %137 = vector.load %arg15[%c2_116, %c0_117, %c0_118] : memref<9x8x8xbf16, #tpu.memory_space<vmem>>, vector<1x8x8xbf16>
    %138 = vector.shape_cast %137 : vector<1x8x8xbf16> to vector<8x8xbf16>
    %cst_119 = arith.constant dense<0.000000e+00> : vector<49x8xf32>
    %139 = tpu.matmul %136, %138, %cst_119 {dimension_numbers = #tpu.dot_dimension_numbers<[1], [0], [0], [1], [0, 0, 1, 1], [], []>} : vector<49x8xbf16>, vector<8x8xbf16>, vector<49x8xf32> -> vector<49x8xf32>
    %140 = arith.addf %132, %139 : vector<49x8xf32>
    %c3_120 = arith.constant 3 : index
    %c0_121 = arith.constant 0 : index
    %c0_122 = arith.constant 0 : index
    %141 = vector.load %arg12[%c3_120, %c0_121, %c0_122] : memref<9x49x49xbf16, #tpu.memory_space<vmem>>, vector<1x49x49xbf16>
    %142 = vector.shape_cast %141 : vector<1x49x49xbf16> to vector<49x49xbf16>
    %cst_123 = arith.constant dense<0.000000e+00> : vector<49x8xf32>
    %143 = tpu.matmul %142, %115, %cst_123 {dimension_numbers = #tpu.dot_dimension_numbers<[1], [0], [0], [1], [0, 0, 1, 1], [], []>} : vector<49x49xbf16>, vector<49x8xbf16>, vector<49x8xf32> -> vector<49x8xf32>
    %144 = arith.truncf %143 : vector<49x8xf32> to vector<49x8xbf16>
    %c3_124 = arith.constant 3 : index
    %c0_125 = arith.constant 0 : index
    %c0_126 = arith.constant 0 : index
    %145 = vector.load %arg15[%c3_124, %c0_125, %c0_126] : memref<9x8x8xbf16, #tpu.memory_space<vmem>>, vector<1x8x8xbf16>
    %146 = vector.shape_cast %145 : vector<1x8x8xbf16> to vector<8x8xbf16>
    %cst_127 = arith.constant dense<0.000000e+00> : vector<49x8xf32>
    %147 = tpu.matmul %144, %146, %cst_127 {dimension_numbers = #tpu.dot_dimension_numbers<[1], [0], [0], [1], [0, 0, 1, 1], [], []>} : vector<49x8xbf16>, vector<8x8xbf16>, vector<49x8xf32> -> vector<49x8xf32>
    %148 = arith.addf %140, %147 : vector<49x8xf32>
    %c4_128 = arith.constant 4 : index
    %c0_129 = arith.constant 0 : index
    %c0_130 = arith.constant 0 : index
    %149 = vector.load %arg12[%c4_128, %c0_129, %c0_130] : memref<9x49x49xbf16, #tpu.memory_space<vmem>>, vector<1x49x49xbf16>
    %150 = vector.shape_cast %149 : vector<1x49x49xbf16> to vector<49x49xbf16>
    %cst_131 = arith.constant dense<0.000000e+00> : vector<49x8xf32>
    %151 = tpu.matmul %150, %115, %cst_131 {dimension_numbers = #tpu.dot_dimension_numbers<[1], [0], [0], [1], [0, 0, 1, 1], [], []>} : vector<49x49xbf16>, vector<49x8xbf16>, vector<49x8xf32> -> vector<49x8xf32>
    %152 = arith.truncf %151 : vector<49x8xf32> to vector<49x8xbf16>
    %c4_132 = arith.constant 4 : index
    %c0_133 = arith.constant 0 : index
    %c0_134 = arith.constant 0 : index
    %153 = vector.load %arg15[%c4_132, %c0_133, %c0_134] : memref<9x8x8xbf16, #tpu.memory_space<vmem>>, vector<1x8x8xbf16>
    %154 = vector.shape_cast %153 : vector<1x8x8xbf16> to vector<8x8xbf16>
    %cst_135 = arith.constant dense<0.000000e+00> : vector<49x8xf32>
    %155 = tpu.matmul %152, %154, %cst_135 {dimension_numbers = #tpu.dot_dimension_numbers<[1], [0], [0], [1], [0, 0, 1, 1], [], []>} : vector<49x8xbf16>, vector<8x8xbf16>, vector<49x8xf32> -> vector<49x8xf32>
    %156 = arith.addf %148, %155 : vector<49x8xf32>
    %c5_136 = arith.constant 5 : index
    %c0_137 = arith.constant 0 : index
    %c0_138 = arith.constant 0 : index
    %157 = vector.load %arg12[%c5_136, %c0_137, %c0_138] : memref<9x49x49xbf16, #tpu.memory_space<vmem>>, vector<1x49x49xbf16>
    %158 = vector.shape_cast %157 : vector<1x49x49xbf16> to vector<49x49xbf16>
    %cst_139 = arith.constant dense<0.000000e+00> : vector<49x8xf32>
    %159 = tpu.matmul %158, %115, %cst_139 {dimension_numbers = #tpu.dot_dimension_numbers<[1], [0], [0], [1], [0, 0, 1, 1], [], []>} : vector<49x49xbf16>, vector<49x8xbf16>, vector<49x8xf32> -> vector<49x8xf32>
    %160 = arith.truncf %159 : vector<49x8xf32> to vector<49x8xbf16>
    %c5_140 = arith.constant 5 : index
    %c0_141 = arith.constant 0 : index
    %c0_142 = arith.constant 0 : index
    %161 = vector.load %arg15[%c5_140, %c0_141, %c0_142] : memref<9x8x8xbf16, #tpu.memory_space<vmem>>, vector<1x8x8xbf16>
    %162 = vector.shape_cast %161 : vector<1x8x8xbf16> to vector<8x8xbf16>
    %cst_143 = arith.constant dense<0.000000e+00> : vector<49x8xf32>
    %163 = tpu.matmul %160, %162, %cst_143 {dimension_numbers = #tpu.dot_dimension_numbers<[1], [0], [0], [1], [0, 0, 1, 1], [], []>} : vector<49x8xbf16>, vector<8x8xbf16>, vector<49x8xf32> -> vector<49x8xf32>
    %164 = arith.addf %156, %163 : vector<49x8xf32>
    %c6_144 = arith.constant 6 : index
    %c0_145 = arith.constant 0 : index
    %c0_146 = arith.constant 0 : index
    %165 = vector.load %arg12[%c6_144, %c0_145, %c0_146] : memref<9x49x49xbf16, #tpu.memory_space<vmem>>, vector<1x49x49xbf16>
    %166 = vector.shape_cast %165 : vector<1x49x49xbf16> to vector<49x49xbf16>
    %cst_147 = arith.constant dense<0.000000e+00> : vector<49x8xf32>
    %167 = tpu.matmul %166, %115, %cst_147 {dimension_numbers = #tpu.dot_dimension_numbers<[1], [0], [0], [1], [0, 0, 1, 1], [], []>} : vector<49x49xbf16>, vector<49x8xbf16>, vector<49x8xf32> -> vector<49x8xf32>
    %168 = arith.truncf %167 : vector<49x8xf32> to vector<49x8xbf16>
    %c6_148 = arith.constant 6 : index
    %c0_149 = arith.constant 0 : index
    %c0_150 = arith.constant 0 : index
    %169 = vector.load %arg15[%c6_148, %c0_149, %c0_150] : memref<9x8x8xbf16, #tpu.memory_space<vmem>>, vector<1x8x8xbf16>
    %170 = vector.shape_cast %169 : vector<1x8x8xbf16> to vector<8x8xbf16>
    %cst_151 = arith.constant dense<0.000000e+00> : vector<49x8xf32>
    %171 = tpu.matmul %168, %170, %cst_151 {dimension_numbers = #tpu.dot_dimension_numbers<[1], [0], [0], [1], [0, 0, 1, 1], [], []>} : vector<49x8xbf16>, vector<8x8xbf16>, vector<49x8xf32> -> vector<49x8xf32>
    %172 = arith.addf %164, %171 : vector<49x8xf32>
    %c7_152 = arith.constant 7 : index
    %c0_153 = arith.constant 0 : index
    %c0_154 = arith.constant 0 : index
    %173 = vector.load %arg12[%c7_152, %c0_153, %c0_154] : memref<9x49x49xbf16, #tpu.memory_space<vmem>>, vector<1x49x49xbf16>
    %174 = vector.shape_cast %173 : vector<1x49x49xbf16> to vector<49x49xbf16>
    %cst_155 = arith.constant dense<0.000000e+00> : vector<49x8xf32>
    %175 = tpu.matmul %174, %115, %cst_155 {dimension_numbers = #tpu.dot_dimension_numbers<[1], [0], [0], [1], [0, 0, 1, 1], [], []>} : vector<49x49xbf16>, vector<49x8xbf16>, vector<49x8xf32> -> vector<49x8xf32>
    %176 = arith.truncf %175 : vector<49x8xf32> to vector<49x8xbf16>
    %c7_156 = arith.constant 7 : index
    %c0_157 = arith.constant 0 : index
    %c0_158 = arith.constant 0 : index
    %177 = vector.load %arg15[%c7_156, %c0_157, %c0_158] : memref<9x8x8xbf16, #tpu.memory_space<vmem>>, vector<1x8x8xbf16>
    %178 = vector.shape_cast %177 : vector<1x8x8xbf16> to vector<8x8xbf16>
    %cst_159 = arith.constant dense<0.000000e+00> : vector<49x8xf32>
    %179 = tpu.matmul %176, %178, %cst_159 {dimension_numbers = #tpu.dot_dimension_numbers<[1], [0], [0], [1], [0, 0, 1, 1], [], []>} : vector<49x8xbf16>, vector<8x8xbf16>, vector<49x8xf32> -> vector<49x8xf32>
    %180 = arith.addf %172, %179 : vector<49x8xf32>
    %c8_160 = arith.constant 8 : index
    %c0_161 = arith.constant 0 : index
    %c0_162 = arith.constant 0 : index
    %181 = vector.load %arg12[%c8_160, %c0_161, %c0_162] : memref<9x49x49xbf16, #tpu.memory_space<vmem>>, vector<1x49x49xbf16>
    %182 = vector.shape_cast %181 : vector<1x49x49xbf16> to vector<49x49xbf16>
    %cst_163 = arith.constant dense<0.000000e+00> : vector<49x8xf32>
    %183 = tpu.matmul %182, %115, %cst_163 {dimension_numbers = #tpu.dot_dimension_numbers<[1], [0], [0], [1], [0, 0, 1, 1], [], []>} : vector<49x49xbf16>, vector<49x8xbf16>, vector<49x8xf32> -> vector<49x8xf32>
    %184 = arith.truncf %183 : vector<49x8xf32> to vector<49x8xbf16>
    %c8_164 = arith.constant 8 : index
    %c0_165 = arith.constant 0 : index
    %c0_166 = arith.constant 0 : index
    %185 = vector.load %arg15[%c8_164, %c0_165, %c0_166] : memref<9x8x8xbf16, #tpu.memory_space<vmem>>, vector<1x8x8xbf16>
    %186 = vector.shape_cast %185 : vector<1x8x8xbf16> to vector<8x8xbf16>
    %cst_167 = arith.constant dense<0.000000e+00> : vector<49x8xf32>
    %187 = tpu.matmul %184, %186, %cst_167 {dimension_numbers = #tpu.dot_dimension_numbers<[1], [0], [0], [1], [0, 0, 1, 1], [], []>} : vector<49x8xbf16>, vector<8x8xbf16>, vector<49x8xf32> -> vector<49x8xf32>
    %188 = arith.addf %180, %187 : vector<49x8xf32>
    %c0_168 = arith.constant 0 : index
    %c0_169 = arith.constant 0 : index
    %189 = vector.load %arg16[%c0_168, %c0_169] : memref<1x8xf32, #tpu.memory_space<vmem>>, vector<1x8xf32>
    %190 = vector.broadcast %189 : vector<1x8xf32> to vector<49x8xf32>
    %191 = arith.addf %188, %190 : vector<49x8xf32>
    %cst_170 = arith.constant 0.000000e+00 : f32
    %192 = vector.broadcast %cst_170 : f32 to vector<49x8xf32>
    %193 = arith.maximumf %191, %192 : vector<49x8xf32>
    %194 = arith.truncf %193 : vector<49x8xf32> to vector<49x8xbf16>
    %c0_171 = arith.constant 0 : index
    %c0_172 = arith.constant 0 : index
    %195 = vector.load %arg17[%c0_171, %c0_172] : memref<8x32xbf16, #tpu.memory_space<vmem>>, vector<8x32xbf16>
    %cst_173 = arith.constant dense<0.000000e+00> : vector<49x32xf32>
    %196 = tpu.matmul %194, %195, %cst_173 {dimension_numbers = #tpu.dot_dimension_numbers<[1], [0], [0], [1], [0, 0, 1, 1], [], []>} : vector<49x8xbf16>, vector<8x32xbf16>, vector<49x32xf32> -> vector<49x32xf32>
    %c0_174 = arith.constant 0 : index
    %c0_175 = arith.constant 0 : index
    %197 = vector.load %arg18[%c0_174, %c0_175] : memref<1x32xf32, #tpu.memory_space<vmem>>, vector<1x32xf32>
    %198 = vector.broadcast %197 : vector<1x32xf32> to vector<49x32xf32>
    %199 = arith.addf %196, %198 : vector<49x32xf32>
    %200 = arith.addf %199, %106 : vector<49x32xf32>
    %cst_176 = arith.constant 0.000000e+00 : f32
    %201 = vector.broadcast %cst_176 : f32 to vector<49x32xf32>
    %202 = arith.maximumf %200, %201 : vector<49x32xf32>
    %203 = arith.truncf %202 : vector<49x32xf32> to vector<49x32xbf16>
    %c0_177 = arith.constant 0 : index
    %c0_178 = arith.constant 0 : index
    %204 = vector.load %arg20[%c0_177, %c0_178] : memref<32x8xbf16, #tpu.memory_space<vmem>>, vector<32x8xbf16>
    %cst_179 = arith.constant dense<0.000000e+00> : vector<49x8xf32>
    %205 = tpu.matmul %203, %204, %cst_179 {dimension_numbers = #tpu.dot_dimension_numbers<[1], [0], [0], [1], [0, 0, 1, 1], [], []>} : vector<49x32xbf16>, vector<32x8xbf16>, vector<49x8xf32> -> vector<49x8xf32>
    %c0_180 = arith.constant 0 : index
    %c0_181 = arith.constant 0 : index
    %206 = vector.load %arg21[%c0_180, %c0_181] : memref<1x8xf32, #tpu.memory_space<vmem>>, vector<1x8xf32>
    %207 = vector.broadcast %206 : vector<1x8xf32> to vector<49x8xf32>
    %208 = arith.addf %205, %207 : vector<49x8xf32>
    %cst_182 = arith.constant 0.000000e+00 : f32
    %209 = vector.broadcast %cst_182 : f32 to vector<49x8xf32>
    %210 = arith.maximumf %208, %209 : vector<49x8xf32>
    %211 = arith.truncf %210 : vector<49x8xf32> to vector<49x8xbf16>
    %cst_183 = arith.constant 0.000000e+00 : f32
    %212 = vector.broadcast %cst_183 : f32 to vector<49x8xf32>
    %c0_184 = arith.constant 0 : index
    %c0_185 = arith.constant 0 : index
    %c0_186 = arith.constant 0 : index
    %213 = vector.load %arg19[%c0_184, %c0_185, %c0_186] : memref<9x49x49xbf16, #tpu.memory_space<vmem>>, vector<1x49x49xbf16>
    %214 = vector.shape_cast %213 : vector<1x49x49xbf16> to vector<49x49xbf16>
    %cst_187 = arith.constant dense<0.000000e+00> : vector<49x8xf32>
    %215 = tpu.matmul %214, %211, %cst_187 {dimension_numbers = #tpu.dot_dimension_numbers<[1], [0], [0], [1], [0, 0, 1, 1], [], []>} : vector<49x49xbf16>, vector<49x8xbf16>, vector<49x8xf32> -> vector<49x8xf32>
    %216 = arith.truncf %215 : vector<49x8xf32> to vector<49x8xbf16>
    %c0_188 = arith.constant 0 : index
    %c0_189 = arith.constant 0 : index
    %c0_190 = arith.constant 0 : index
    %217 = vector.load %arg22[%c0_188, %c0_189, %c0_190] : memref<9x8x8xbf16, #tpu.memory_space<vmem>>, vector<1x8x8xbf16>
    %218 = vector.shape_cast %217 : vector<1x8x8xbf16> to vector<8x8xbf16>
    %cst_191 = arith.constant dense<0.000000e+00> : vector<49x8xf32>
    %219 = tpu.matmul %216, %218, %cst_191 {dimension_numbers = #tpu.dot_dimension_numbers<[1], [0], [0], [1], [0, 0, 1, 1], [], []>} : vector<49x8xbf16>, vector<8x8xbf16>, vector<49x8xf32> -> vector<49x8xf32>
    %220 = arith.addf %212, %219 : vector<49x8xf32>
    %c1_192 = arith.constant 1 : index
    %c0_193 = arith.constant 0 : index
    %c0_194 = arith.constant 0 : index
    %221 = vector.load %arg19[%c1_192, %c0_193, %c0_194] : memref<9x49x49xbf16, #tpu.memory_space<vmem>>, vector<1x49x49xbf16>
    %222 = vector.shape_cast %221 : vector<1x49x49xbf16> to vector<49x49xbf16>
    %cst_195 = arith.constant dense<0.000000e+00> : vector<49x8xf32>
    %223 = tpu.matmul %222, %211, %cst_195 {dimension_numbers = #tpu.dot_dimension_numbers<[1], [0], [0], [1], [0, 0, 1, 1], [], []>} : vector<49x49xbf16>, vector<49x8xbf16>, vector<49x8xf32> -> vector<49x8xf32>
    %224 = arith.truncf %223 : vector<49x8xf32> to vector<49x8xbf16>
    %c1_196 = arith.constant 1 : index
    %c0_197 = arith.constant 0 : index
    %c0_198 = arith.constant 0 : index
    %225 = vector.load %arg22[%c1_196, %c0_197, %c0_198] : memref<9x8x8xbf16, #tpu.memory_space<vmem>>, vector<1x8x8xbf16>
    %226 = vector.shape_cast %225 : vector<1x8x8xbf16> to vector<8x8xbf16>
    %cst_199 = arith.constant dense<0.000000e+00> : vector<49x8xf32>
    %227 = tpu.matmul %224, %226, %cst_199 {dimension_numbers = #tpu.dot_dimension_numbers<[1], [0], [0], [1], [0, 0, 1, 1], [], []>} : vector<49x8xbf16>, vector<8x8xbf16>, vector<49x8xf32> -> vector<49x8xf32>
    %228 = arith.addf %220, %227 : vector<49x8xf32>
    %c2_200 = arith.constant 2 : index
    %c0_201 = arith.constant 0 : index
    %c0_202 = arith.constant 0 : index
    %229 = vector.load %arg19[%c2_200, %c0_201, %c0_202] : memref<9x49x49xbf16, #tpu.memory_space<vmem>>, vector<1x49x49xbf16>
    %230 = vector.shape_cast %229 : vector<1x49x49xbf16> to vector<49x49xbf16>
    %cst_203 = arith.constant dense<0.000000e+00> : vector<49x8xf32>
    %231 = tpu.matmul %230, %211, %cst_203 {dimension_numbers = #tpu.dot_dimension_numbers<[1], [0], [0], [1], [0, 0, 1, 1], [], []>} : vector<49x49xbf16>, vector<49x8xbf16>, vector<49x8xf32> -> vector<49x8xf32>
    %232 = arith.truncf %231 : vector<49x8xf32> to vector<49x8xbf16>
    %c2_204 = arith.constant 2 : index
    %c0_205 = arith.constant 0 : index
    %c0_206 = arith.constant 0 : index
    %233 = vector.load %arg22[%c2_204, %c0_205, %c0_206] : memref<9x8x8xbf16, #tpu.memory_space<vmem>>, vector<1x8x8xbf16>
    %234 = vector.shape_cast %233 : vector<1x8x8xbf16> to vector<8x8xbf16>
    %cst_207 = arith.constant dense<0.000000e+00> : vector<49x8xf32>
    %235 = tpu.matmul %232, %234, %cst_207 {dimension_numbers = #tpu.dot_dimension_numbers<[1], [0], [0], [1], [0, 0, 1, 1], [], []>} : vector<49x8xbf16>, vector<8x8xbf16>, vector<49x8xf32> -> vector<49x8xf32>
    %236 = arith.addf %228, %235 : vector<49x8xf32>
    %c3_208 = arith.constant 3 : index
    %c0_209 = arith.constant 0 : index
    %c0_210 = arith.constant 0 : index
    %237 = vector.load %arg19[%c3_208, %c0_209, %c0_210] : memref<9x49x49xbf16, #tpu.memory_space<vmem>>, vector<1x49x49xbf16>
    %238 = vector.shape_cast %237 : vector<1x49x49xbf16> to vector<49x49xbf16>
    %cst_211 = arith.constant dense<0.000000e+00> : vector<49x8xf32>
    %239 = tpu.matmul %238, %211, %cst_211 {dimension_numbers = #tpu.dot_dimension_numbers<[1], [0], [0], [1], [0, 0, 1, 1], [], []>} : vector<49x49xbf16>, vector<49x8xbf16>, vector<49x8xf32> -> vector<49x8xf32>
    %240 = arith.truncf %239 : vector<49x8xf32> to vector<49x8xbf16>
    %c3_212 = arith.constant 3 : index
    %c0_213 = arith.constant 0 : index
    %c0_214 = arith.constant 0 : index
    %241 = vector.load %arg22[%c3_212, %c0_213, %c0_214] : memref<9x8x8xbf16, #tpu.memory_space<vmem>>, vector<1x8x8xbf16>
    %242 = vector.shape_cast %241 : vector<1x8x8xbf16> to vector<8x8xbf16>
    %cst_215 = arith.constant dense<0.000000e+00> : vector<49x8xf32>
    %243 = tpu.matmul %240, %242, %cst_215 {dimension_numbers = #tpu.dot_dimension_numbers<[1], [0], [0], [1], [0, 0, 1, 1], [], []>} : vector<49x8xbf16>, vector<8x8xbf16>, vector<49x8xf32> -> vector<49x8xf32>
    %244 = arith.addf %236, %243 : vector<49x8xf32>
    %c4_216 = arith.constant 4 : index
    %c0_217 = arith.constant 0 : index
    %c0_218 = arith.constant 0 : index
    %245 = vector.load %arg19[%c4_216, %c0_217, %c0_218] : memref<9x49x49xbf16, #tpu.memory_space<vmem>>, vector<1x49x49xbf16>
    %246 = vector.shape_cast %245 : vector<1x49x49xbf16> to vector<49x49xbf16>
    %cst_219 = arith.constant dense<0.000000e+00> : vector<49x8xf32>
    %247 = tpu.matmul %246, %211, %cst_219 {dimension_numbers = #tpu.dot_dimension_numbers<[1], [0], [0], [1], [0, 0, 1, 1], [], []>} : vector<49x49xbf16>, vector<49x8xbf16>, vector<49x8xf32> -> vector<49x8xf32>
    %248 = arith.truncf %247 : vector<49x8xf32> to vector<49x8xbf16>
    %c4_220 = arith.constant 4 : index
    %c0_221 = arith.constant 0 : index
    %c0_222 = arith.constant 0 : index
    %249 = vector.load %arg22[%c4_220, %c0_221, %c0_222] : memref<9x8x8xbf16, #tpu.memory_space<vmem>>, vector<1x8x8xbf16>
    %250 = vector.shape_cast %249 : vector<1x8x8xbf16> to vector<8x8xbf16>
    %cst_223 = arith.constant dense<0.000000e+00> : vector<49x8xf32>
    %251 = tpu.matmul %248, %250, %cst_223 {dimension_numbers = #tpu.dot_dimension_numbers<[1], [0], [0], [1], [0, 0, 1, 1], [], []>} : vector<49x8xbf16>, vector<8x8xbf16>, vector<49x8xf32> -> vector<49x8xf32>
    %252 = arith.addf %244, %251 : vector<49x8xf32>
    %c5_224 = arith.constant 5 : index
    %c0_225 = arith.constant 0 : index
    %c0_226 = arith.constant 0 : index
    %253 = vector.load %arg19[%c5_224, %c0_225, %c0_226] : memref<9x49x49xbf16, #tpu.memory_space<vmem>>, vector<1x49x49xbf16>
    %254 = vector.shape_cast %253 : vector<1x49x49xbf16> to vector<49x49xbf16>
    %cst_227 = arith.constant dense<0.000000e+00> : vector<49x8xf32>
    %255 = tpu.matmul %254, %211, %cst_227 {dimension_numbers = #tpu.dot_dimension_numbers<[1], [0], [0], [1], [0, 0, 1, 1], [], []>} : vector<49x49xbf16>, vector<49x8xbf16>, vector<49x8xf32> -> vector<49x8xf32>
    %256 = arith.truncf %255 : vector<49x8xf32> to vector<49x8xbf16>
    %c5_228 = arith.constant 5 : index
    %c0_229 = arith.constant 0 : index
    %c0_230 = arith.constant 0 : index
    %257 = vector.load %arg22[%c5_228, %c0_229, %c0_230] : memref<9x8x8xbf16, #tpu.memory_space<vmem>>, vector<1x8x8xbf16>
    %258 = vector.shape_cast %257 : vector<1x8x8xbf16> to vector<8x8xbf16>
    %cst_231 = arith.constant dense<0.000000e+00> : vector<49x8xf32>
    %259 = tpu.matmul %256, %258, %cst_231 {dimension_numbers = #tpu.dot_dimension_numbers<[1], [0], [0], [1], [0, 0, 1, 1], [], []>} : vector<49x8xbf16>, vector<8x8xbf16>, vector<49x8xf32> -> vector<49x8xf32>
    %260 = arith.addf %252, %259 : vector<49x8xf32>
    %c6_232 = arith.constant 6 : index
    %c0_233 = arith.constant 0 : index
    %c0_234 = arith.constant 0 : index
    %261 = vector.load %arg19[%c6_232, %c0_233, %c0_234] : memref<9x49x49xbf16, #tpu.memory_space<vmem>>, vector<1x49x49xbf16>
    %262 = vector.shape_cast %261 : vector<1x49x49xbf16> to vector<49x49xbf16>
    %cst_235 = arith.constant dense<0.000000e+00> : vector<49x8xf32>
    %263 = tpu.matmul %262, %211, %cst_235 {dimension_numbers = #tpu.dot_dimension_numbers<[1], [0], [0], [1], [0, 0, 1, 1], [], []>} : vector<49x49xbf16>, vector<49x8xbf16>, vector<49x8xf32> -> vector<49x8xf32>
    %264 = arith.truncf %263 : vector<49x8xf32> to vector<49x8xbf16>
    %c6_236 = arith.constant 6 : index
    %c0_237 = arith.constant 0 : index
    %c0_238 = arith.constant 0 : index
    %265 = vector.load %arg22[%c6_236, %c0_237, %c0_238] : memref<9x8x8xbf16, #tpu.memory_space<vmem>>, vector<1x8x8xbf16>
    %266 = vector.shape_cast %265 : vector<1x8x8xbf16> to vector<8x8xbf16>
    %cst_239 = arith.constant dense<0.000000e+00> : vector<49x8xf32>
    %267 = tpu.matmul %264, %266, %cst_239 {dimension_numbers = #tpu.dot_dimension_numbers<[1], [0], [0], [1], [0, 0, 1, 1], [], []>} : vector<49x8xbf16>, vector<8x8xbf16>, vector<49x8xf32> -> vector<49x8xf32>
    %268 = arith.addf %260, %267 : vector<49x8xf32>
    %c7_240 = arith.constant 7 : index
    %c0_241 = arith.constant 0 : index
    %c0_242 = arith.constant 0 : index
    %269 = vector.load %arg19[%c7_240, %c0_241, %c0_242] : memref<9x49x49xbf16, #tpu.memory_space<vmem>>, vector<1x49x49xbf16>
    %270 = vector.shape_cast %269 : vector<1x49x49xbf16> to vector<49x49xbf16>
    %cst_243 = arith.constant dense<0.000000e+00> : vector<49x8xf32>
    %271 = tpu.matmul %270, %211, %cst_243 {dimension_numbers = #tpu.dot_dimension_numbers<[1], [0], [0], [1], [0, 0, 1, 1], [], []>} : vector<49x49xbf16>, vector<49x8xbf16>, vector<49x8xf32> -> vector<49x8xf32>
    %272 = arith.truncf %271 : vector<49x8xf32> to vector<49x8xbf16>
    %c7_244 = arith.constant 7 : index
    %c0_245 = arith.constant 0 : index
    %c0_246 = arith.constant 0 : index
    %273 = vector.load %arg22[%c7_244, %c0_245, %c0_246] : memref<9x8x8xbf16, #tpu.memory_space<vmem>>, vector<1x8x8xbf16>
    %274 = vector.shape_cast %273 : vector<1x8x8xbf16> to vector<8x8xbf16>
    %cst_247 = arith.constant dense<0.000000e+00> : vector<49x8xf32>
    %275 = tpu.matmul %272, %274, %cst_247 {dimension_numbers = #tpu.dot_dimension_numbers<[1], [0], [0], [1], [0, 0, 1, 1], [], []>} : vector<49x8xbf16>, vector<8x8xbf16>, vector<49x8xf32> -> vector<49x8xf32>
    %276 = arith.addf %268, %275 : vector<49x8xf32>
    %c8_248 = arith.constant 8 : index
    %c0_249 = arith.constant 0 : index
    %c0_250 = arith.constant 0 : index
    %277 = vector.load %arg19[%c8_248, %c0_249, %c0_250] : memref<9x49x49xbf16, #tpu.memory_space<vmem>>, vector<1x49x49xbf16>
    %278 = vector.shape_cast %277 : vector<1x49x49xbf16> to vector<49x49xbf16>
    %cst_251 = arith.constant dense<0.000000e+00> : vector<49x8xf32>
    %279 = tpu.matmul %278, %211, %cst_251 {dimension_numbers = #tpu.dot_dimension_numbers<[1], [0], [0], [1], [0, 0, 1, 1], [], []>} : vector<49x49xbf16>, vector<49x8xbf16>, vector<49x8xf32> -> vector<49x8xf32>
    %280 = arith.truncf %279 : vector<49x8xf32> to vector<49x8xbf16>
    %c8_252 = arith.constant 8 : index
    %c0_253 = arith.constant 0 : index
    %c0_254 = arith.constant 0 : index
    %281 = vector.load %arg22[%c8_252, %c0_253, %c0_254] : memref<9x8x8xbf16, #tpu.memory_space<vmem>>, vector<1x8x8xbf16>
    %282 = vector.shape_cast %281 : vector<1x8x8xbf16> to vector<8x8xbf16>
    %cst_255 = arith.constant dense<0.000000e+00> : vector<49x8xf32>
    %283 = tpu.matmul %280, %282, %cst_255 {dimension_numbers = #tpu.dot_dimension_numbers<[1], [0], [0], [1], [0, 0, 1, 1], [], []>} : vector<49x8xbf16>, vector<8x8xbf16>, vector<49x8xf32> -> vector<49x8xf32>
    %284 = arith.addf %276, %283 : vector<49x8xf32>
    %c0_256 = arith.constant 0 : index
    %c0_257 = arith.constant 0 : index
    %285 = vector.load %arg23[%c0_256, %c0_257] : memref<1x8xf32, #tpu.memory_space<vmem>>, vector<1x8xf32>
    %286 = vector.broadcast %285 : vector<1x8xf32> to vector<49x8xf32>
    %287 = arith.addf %284, %286 : vector<49x8xf32>
    %cst_258 = arith.constant 0.000000e+00 : f32
    %288 = vector.broadcast %cst_258 : f32 to vector<49x8xf32>
    %289 = arith.maximumf %287, %288 : vector<49x8xf32>
    %290 = arith.truncf %289 : vector<49x8xf32> to vector<49x8xbf16>
    %c0_259 = arith.constant 0 : index
    %c0_260 = arith.constant 0 : index
    %291 = vector.load %arg24[%c0_259, %c0_260] : memref<8x32xbf16, #tpu.memory_space<vmem>>, vector<8x32xbf16>
    %cst_261 = arith.constant dense<0.000000e+00> : vector<49x32xf32>
    %292 = tpu.matmul %290, %291, %cst_261 {dimension_numbers = #tpu.dot_dimension_numbers<[1], [0], [0], [1], [0, 0, 1, 1], [], []>} : vector<49x8xbf16>, vector<8x32xbf16>, vector<49x32xf32> -> vector<49x32xf32>
    %c0_262 = arith.constant 0 : index
    %c0_263 = arith.constant 0 : index
    %293 = vector.load %arg25[%c0_262, %c0_263] : memref<1x32xf32, #tpu.memory_space<vmem>>, vector<1x32xf32>
    %294 = vector.broadcast %293 : vector<1x32xf32> to vector<49x32xf32>
    %295 = arith.addf %292, %294 : vector<49x32xf32>
    %296 = arith.addf %295, %202 : vector<49x32xf32>
    %cst_264 = arith.constant 0.000000e+00 : f32
    %297 = vector.broadcast %cst_264 : f32 to vector<49x32xf32>
    %298 = arith.maximumf %296, %297 : vector<49x32xf32>
    %c0_265 = arith.constant 0 : index
    %c0_266 = arith.constant 0 : index
    %c0_267 = arith.constant 0 : index
    %299 = vector.load %arg26[%c0_265, %c0_266, %c0_267] : memref<1x49x32xf32, #tpu.memory_space<vmem>>, vector<1x49x32xf32>
    %300 = vector.shape_cast %299 : vector<1x49x32xf32> to vector<49x32xf32>
    %301 = vector.shape_cast %298 : vector<49x32xf32> to vector<1x49x32xf32>
    tpu.vector_store %arg26[%c0_265, %c0_266, %c0_267], %301 {strides = array<i32>} : memref<1x49x32xf32, #tpu.memory_space<vmem>>, vector<1x49x32xf32>,
    return
  }
  func.func @transform_0(%arg0: i32) -> (i32, i32, i32) {
    %c0_i32 = arith.constant 0 : i32
    %c0_i32_0 = arith.constant 0 : i32
    %c0_i32_1 = arith.constant 0 : i32
    return %arg0, %c0_i32, %c0_i32_0 : i32, i32, i32
  }
  func.func @transform_1(%arg0: i32) -> (i32, i32, i32) {
    %c0_i32 = arith.constant 0 : i32
    %c0_i32_0 = arith.constant 0 : i32
    %c0_i32_1 = arith.constant 0 : i32
    %c0_i32_2 = arith.constant 0 : i32
    return %c0_i32, %c0_i32_0, %c0_i32_1 : i32, i32, i32
  }
  func.func @transform_2(%arg0: i32) -> (i32, i32) {
    %c0_i32 = arith.constant 0 : i32
    %c0_i32_0 = arith.constant 0 : i32
    %c0_i32_1 = arith.constant 0 : i32
    return %c0_i32, %c0_i32_0 : i32, i32
  }
  func.func @transform_3(%arg0: i32) -> (i32, i32) {
    %c0_i32 = arith.constant 0 : i32
    %c0_i32_0 = arith.constant 0 : i32
    %c0_i32_1 = arith.constant 0 : i32
    return %c0_i32, %c0_i32_0 : i32, i32
  }
  func.func @transform_4(%arg0: i32) -> (i32, i32, i32) {
    %c0_i32 = arith.constant 0 : i32
    %c0_i32_0 = arith.constant 0 : i32
    %c0_i32_1 = arith.constant 0 : i32
    %c0_i32_2 = arith.constant 0 : i32
    return %c0_i32, %c0_i32_0, %c0_i32_1 : i32, i32, i32
  }
  func.func @transform_5(%arg0: i32) -> (i32, i32) {
    %c0_i32 = arith.constant 0 : i32
    %c0_i32_0 = arith.constant 0 : i32
    %c0_i32_1 = arith.constant 0 : i32
    return %c0_i32, %c0_i32_0 : i32, i32
  }
  func.func @transform_6(%arg0: i32) -> (i32, i32) {
    %c0_i32 = arith.constant 0 : i32
    %c0_i32_0 = arith.constant 0 : i32
    %c0_i32_1 = arith.constant 0 : i32
    return %c0_i32, %c0_i32_0 : i32, i32
  }
  func.func @transform_7(%arg0: i32) -> (i32, i32) {
    %c0_i32 = arith.constant 0 : i32
    %c0_i32_0 = arith.constant 0 : i32
    %c0_i32_1 = arith.constant 0 : i32
    return %c0_i32, %c0_i32_0 : i32, i32
  }
  func.func @transform_8(%arg0: i32) -> (i32, i32) {
    %c0_i32 = arith.constant 0 : i32
    %c0_i32_0 = arith.constant 0 : i32
    %c0_i32_1 = arith.constant 0 : i32
    return %c0_i32, %c0_i32_0 : i32, i32
  }
  func.func @transform_9(%arg0: i32) -> (i32, i32) {
    %c0_i32 = arith.constant 0 : i32
    %c0_i32_0 = arith.constant 0 : i32
    %c0_i32_1 = arith.constant 0 : i32
    return %c0_i32, %c0_i32_0 : i32, i32
  }
  func.func @transform_10(%arg0: i32) -> (i32, i32) {
    %c0_i32 = arith.constant 0 : i32
    %c0_i32_0 = arith.constant 0 : i32
    %c0_i32_1 = arith.constant 0 : i32
    return %c0_i32, %c0_i32_0 : i32, i32
  }
  func.func @transform_11(%arg0: i32) -> (i32, i32, i32) {
    %c0_i32 = arith.constant 0 : i32
    %c0_i32_0 = arith.constant 0 : i32
    %c0_i32_1 = arith.constant 0 : i32
    %c0_i32_2 = arith.constant 0 : i32
    return %c0_i32, %c0_i32_0, %c0_i32_1 : i32, i32, i32
  }
  func.func @transform_12(%arg0: i32) -> (i32, i32) {
    %c0_i32 = arith.constant 0 : i32
    %c0_i32_0 = arith.constant 0 : i32
    %c0_i32_1 = arith.constant 0 : i32
    return %c0_i32, %c0_i32_0 : i32, i32
  }
  func.func @transform_13(%arg0: i32) -> (i32, i32) {
    %c0_i32 = arith.constant 0 : i32
    %c0_i32_0 = arith.constant 0 : i32
    %c0_i32_1 = arith.constant 0 : i32
    return %c0_i32, %c0_i32_0 : i32, i32
  }
  func.func @transform_14(%arg0: i32) -> (i32, i32, i32) {
    %c0_i32 = arith.constant 0 : i32
    %c0_i32_0 = arith.constant 0 : i32
    %c0_i32_1 = arith.constant 0 : i32
    %c0_i32_2 = arith.constant 0 : i32
    return %c0_i32, %c0_i32_0, %c0_i32_1 : i32, i32, i32
  }
  func.func @transform_15(%arg0: i32) -> (i32, i32) {
    %c0_i32 = arith.constant 0 : i32
    %c0_i32_0 = arith.constant 0 : i32
    %c0_i32_1 = arith.constant 0 : i32
    return %c0_i32, %c0_i32_0 : i32, i32
  }
  func.func @transform_16(%arg0: i32) -> (i32, i32) {
    %c0_i32 = arith.constant 0 : i32
    %c0_i32_0 = arith.constant 0 : i32
    %c0_i32_1 = arith.constant 0 : i32
    return %c0_i32, %c0_i32_0 : i32, i32
  }
  func.func @transform_17(%arg0: i32) -> (i32, i32) {
    %c0_i32 = arith.constant 0 : i32
    %c0_i32_0 = arith.constant 0 : i32
    %c0_i32_1 = arith.constant 0 : i32
    return %c0_i32, %c0_i32_0 : i32, i32
  }
  func.func @transform_18(%arg0: i32) -> (i32, i32, i32) {
    %c0_i32 = arith.constant 0 : i32
    %c0_i32_0 = arith.constant 0 : i32
    %c0_i32_1 = arith.constant 0 : i32
    %c0_i32_2 = arith.constant 0 : i32
    return %c0_i32, %c0_i32_0, %c0_i32_1 : i32, i32, i32
  }
  func.func @transform_19(%arg0: i32) -> (i32, i32) {
    %c0_i32 = arith.constant 0 : i32
    %c0_i32_0 = arith.constant 0 : i32
    %c0_i32_1 = arith.constant 0 : i32
    return %c0_i32, %c0_i32_0 : i32, i32
  }
  func.func @transform_20(%arg0: i32) -> (i32, i32) {
    %c0_i32 = arith.constant 0 : i32
    %c0_i32_0 = arith.constant 0 : i32
    %c0_i32_1 = arith.constant 0 : i32
    return %c0_i32, %c0_i32_0 : i32, i32
  }
  func.func @transform_21(%arg0: i32) -> (i32, i32, i32) {
    %c0_i32 = arith.constant 0 : i32
    %c0_i32_0 = arith.constant 0 : i32
    %c0_i32_1 = arith.constant 0 : i32
    %c0_i32_2 = arith.constant 0 : i32
    return %c0_i32, %c0_i32_0, %c0_i32_1 : i32, i32, i32
  }
  func.func @transform_22(%arg0: i32) -> (i32, i32) {
    %c0_i32 = arith.constant 0 : i32
    %c0_i32_0 = arith.constant 0 : i32
    %c0_i32_1 = arith.constant 0 : i32
    return %c0_i32, %c0_i32_0 : i32, i32
  }
  func.func @transform_23(%arg0: i32) -> (i32, i32) {
    %c0_i32 = arith.constant 0 : i32
    %c0_i32_0 = arith.constant 0 : i32
    %c0_i32_1 = arith.constant 0 : i32
    return %c0_i32, %c0_i32_0 : i32, i32
  }
  func.func @transform_24(%arg0: i32) -> (i32, i32) {
    %c0_i32 = arith.constant 0 : i32
    %c0_i32_0 = arith.constant 0 : i32
    %c0_i32_1 = arith.constant 0 : i32
    return %c0_i32, %c0_i32_0 : i32, i32
  }
  func.func @transform_25(%arg0: i32) -> (i32, i32, i32) {
    %c0_i32 = arith.constant 0 : i32
    %c0_i32_0 = arith.constant 0 : i32
    %c0_i32_1 = arith.constant 0 : i32
    return %arg0, %c0_i32, %c0_i32_0 : i32, i32, i32
  }
}

</mosaic_0001>

<llo_original>
// kernel: encoder_forward.1
$region0: #{encoder_forward.1}
  #allocation0 [shape = 'u32[]', space=smem, size = 0x4, offset = 0x4, fixed_abs, tag = 'smem constant byte address 0x4 - core index']
  #allocation1 [shape = 'u32[144,128]{1,0:T(1,128)}', space=vmem, size = 0x12000, scoped, tag = 'internal scratch']
  %s0 = inlined_call_operand.vmem [shape: bf16[2,196,16], index: 0, kind: input, shape index: {}]
  %s1 = inlined_call_operand.vmem [shape: bf16[9,49,196], index: 1, kind: input, shape index: {}]
  %s2 = inlined_call_operand.vmem [shape: bf16[16,8], index: 2, kind: input, shape index: {}]
  %s3 = inlined_call_operand.vmem [shape: f32[1,8], index: 3, kind: input, shape index: {}]
  %s4 = inlined_call_operand.vmem [shape: bf16[9,8,8], index: 4, kind: input, shape index: {}]
  %s5 = inlined_call_operand.vmem [shape: f32[1,8], index: 5, kind: input, shape index: {}]
  %s6 = inlined_call_operand.vmem [shape: bf16[8,32], index: 6, kind: input, shape index: {}]
  %s7 = inlined_call_operand.vmem [shape: f32[1,32], index: 7, kind: input, shape index: {}]
  %s8 = inlined_call_operand.vmem [shape: bf16[49,196], index: 8, kind: input, shape index: {}]
  %s9 = inlined_call_operand.vmem [shape: bf16[16,32], index: 9, kind: input, shape index: {}]
  %s10 = inlined_call_operand.vmem [shape: f32[1,32], index: 10, kind: input, shape index: {}]
  %s11 = inlined_call_operand.vmem [shape: bf16[9,49,49], index: 11, kind: input, shape index: {}]
  %s12 = inlined_call_operand.vmem [shape: bf16[32,8], index: 12, kind: input, shape index: {}]
  %s13 = inlined_call_operand.vmem [shape: f32[1,8], index: 13, kind: input, shape index: {}]
  %s14 = inlined_call_operand.vmem [shape: bf16[9,8,8], index: 14, kind: input, shape index: {}]
  %s15 = inlined_call_operand.vmem [shape: f32[1,8], index: 15, kind: input, shape index: {}]
  %s16 = inlined_call_operand.vmem [shape: bf16[8,32], index: 16, kind: input, shape index: {}]
  %s17 = inlined_call_operand.vmem [shape: f32[1,32], index: 17, kind: input, shape index: {}]
  %s18 = inlined_call_operand.vmem [shape: bf16[9,49,49], index: 18, kind: input, shape index: {}]
  %s19 = inlined_call_operand.vmem [shape: bf16[32,8], index: 19, kind: input, shape index: {}]
  %s20 = inlined_call_operand.vmem [shape: f32[1,8], index: 20, kind: input, shape index: {}]
  %s21 = inlined_call_operand.vmem [shape: bf16[9,8,8], index: 21, kind: input, shape index: {}]
  %s22 = inlined_call_operand.vmem [shape: f32[1,8], index: 22, kind: input, shape index: {}]
  %s23 = inlined_call_operand.vmem [shape: bf16[8,32], index: 23, kind: input, shape index: {}]
  %s24 = inlined_call_operand.vmem [shape: f32[1,32], index: 24, kind: input, shape index: {}]
  %s25 = inlined_call_operand.vmem [shape: f32[2,49,32], index: 25, kind: output, shape index: {}]
  %s26 = sld [smem:[#allocation0]]
  $region133: #{encoder_forward.1} parent=0
    _
  %s28 = ssub.s32 1, %s26
  %s29 = scalar_select 0, %s28, %s26
  loop: start=0, step=1, limit=4
  $region2: #{encoder_forward.1} parent=0 // loop_pre_header
    _
  $region3: #{encoder_forward.1} parent=0 // loop_header
    %s31 = sphi 0, %s35
    %p32 = scmp.ge.s32.totalorder %s31, 4
    %s41 = sphi 0, %s43
    %s44 = sphi 0, %s41
    %s45 = sphi 0, %s44
    %s61 = sphi 0, %s45
    %s65 = sphi 0, %s65
    %s67 = sphi 0, %s65
    %s68 = sphi 0, %s67
    %s82 = sphi 0, %s68
    %s86 = sphi 0, %s86
    %s88 = sphi 0, %s86
    %s89 = sphi 0, %s88
    %s103 = sphi 0, %s89
    %s107 = sphi 0, %s107
    %s109 = sphi 0, %s107
    %s110 = sphi 0, %s109
    %s124 = sphi 0, %s110
    %s128 = sphi 0, %s128
    %s130 = sphi 0, %s128
    %s131 = sphi 0, %s130
    %s145 = sphi 0, %s131
    %s149 = sphi 0, %s149
    %s151 = sphi 0, %s149
    %s152 = sphi 0, %s151
    %s166 = sphi 0, %s152
    %s170 = sphi 0, %s170
    %s172 = sphi 0, %s170
    %s173 = sphi 0, %s172
    %s187 = sphi 0, %s173
    %s191 = sphi 0, %s191
    %s193 = sphi 0, %s191
    %s194 = sphi 0, %s193
    %s208 = sphi 0, %s194
    %s212 = sphi 0, %s212
    %s214 = sphi 0, %s212
    %s215 = sphi 0, %s214
    %s229 = sphi 0, %s215
    %s233 = sphi 0, %s233
    %s235 = sphi 0, %s233
    %s236 = sphi 0, %s235
    %s250 = sphi 0, %s236
    %s254 = sphi 0, %s254
    %s256 = sphi 0, %s254
    %s257 = sphi 0, %s256
    %s271 = sphi 0, %s257
    %s275 = sphi 0, %s275
    %s277 = sphi 0, %s275
    %s278 = sphi 0, %s277
    %s292 = sphi 0, %s278
    %s296 = sphi 0, %s296
    %s298 = sphi 0, %s296
    %s299 = sphi 0, %s298
    %s313 = sphi 0, %s299
    %s317 = sphi 0, %s317
    %s319 = sphi 0, %s317
    %s320 = sphi 0, %s319
    %s334 = sphi 0, %s320
    %s338 = sphi 0, %s338
    %s340 = sphi 0, %s338
    %s341 = sphi 0, %s340
    %s355 = sphi 0, %s341
    %s359 = sphi 0, %s359
    %s361 = sphi 0, %s359
    %s362 = sphi 0, %s361
    %s376 = sphi 0, %s362
    %s380 = sphi 0, %s380
    %s382 = sphi 0, %s380
    %s383 = sphi 0, %s382
    %s397 = sphi 0, %s383
    %s401 = sphi 0, %s401
    %s403 = sphi 0, %s401
    %s404 = sphi 0, %s403
    %s418 = sphi 0, %s404
    %s422 = sphi 0, %s422
    %s424 = sphi 0, %s422
    %s425 = sphi 0, %s424
    %s439 = sphi 0, %s425
    %s443 = sphi 0, %s443
    %s445 = sphi 0, %s443
    %s446 = sphi 0, %s445
    %s460 = sphi 0, %s446
    %s464 = sphi 0, %s464
    %s466 = sphi 0, %s464
    %s467 = sphi 0, %s466
    %s481 = sphi 0, %s467
    %s485 = sphi 0, %s485
    %s487 = sphi 0, %s485
    %s488 = sphi 0, %s487
    %s502 = sphi 0, %s488
    %s506 = sphi 0, %s506
    %s508 = sphi 0, %s506
    %s509 = sphi 0, %s508
    %s523 = sphi 0, %s509
    %s527 = sphi 0, %s527
    %s529 = sphi 0, %s527
    %s530 = sphi 0, %s529
    %s544 = sphi 0, %s530
    %s548 = sphi 0, %s548
    %s550 = sphi 0, %s548
    %s551 = sphi 0, %s550
    %s565 = sphi 0, %s551
    %s571 = sphi 0, %s573
    %s574 = sphi 0, %s571
    %s575 = sphi 0, %s574
    %s591 = sphi 0, %s575
  $region4: #{encoder_forward.1} parent=0 // loop_header_branch
    %34 = sbr.rel (%p32) target = $region8
  $region5: #{encoder_forward.1} parent=0 // loop_body
    %s36 = ssub.s32 %s31, 1
    %s37 = ssub.s32 %s31, 2
    %s38 = sadd.s32 %s31, 1
    %s39 = ssub.s32 %s31, %s38
    %p40 = scmp.eq.s32.totalorder %s39, 0
    %s42 = sadd.s32 %s41, 1
    %s43 = scalar_select %p40, %s41, %s42
    %p46 = pneg %p40
    %p47 = scmp.eq.s32.totalorder %s31, 1
    %p48 = por %p46, %p47
    %p49 = scmp.ne.s32.totalorder %s41, %s44
    %p50 = scmp.eq.s32.totalorder %s31, 0
    %p51 = por %p49, %p50
    %p52 = scmp.ne.s32.totalorder %s41, %s44
    %p53 = scmp.eq.s32.totalorder %s36, 1
    %p54 = por %p52, %p53
    %p55 = scmp.ne.s32.totalorder %s44, %s45
    %p56 = scmp.eq.s32.totalorder %s36, 0
    %p57 = por %p55, %p56
    %p58 = scmp.ne.s32.totalorder %s44, %s45
    %p59 = scmp.eq.s32.totalorder %s37, 1
    %p60 = por %p58, %p59
    %p62 = scmp.ne.s32.totalorder %s45, %s61
    %p63 = scmp.eq.s32.totalorder %s37, 0
    %p64 = por %p62, %p63
    %s66 = sadd.s32 %s65, 1
    %p69 = scmp.eq.s32.totalorder %s31, 1
    %p70 = scmp.ne.s32.totalorder %s65, %s67
    %p71 = scmp.eq.s32.totalorder %s31, 0
    %p72 = por %p70, %p71
    %p73 = scmp.ne.s32.totalorder %s65, %s67
    %p74 = scmp.eq.s32.totalorder %s36, 1
    %p75 = por %p73, %p74
    %p76 = scmp.ne.s32.totalorder %s67, %s68
    %p77 = scmp.eq.s32.totalorder %s36, 0
    %p78 = por %p76, %p77
    %p79 = scmp.ne.s32.totalorder %s67, %s68
    %p80 = scmp.eq.s32.totalorder %s37, 1
    %p81 = por %p79, %p80
    %p83 = scmp.ne.s32.totalorder %s68, %s82
    %p84 = scmp.eq.s32.totalorder %s37, 0
    %p85 = por %p83, %p84
    %s87 = sadd.s32 %s86, 1
    %p90 = scmp.eq.s32.totalorder %s31, 1
    %p91 = scmp.ne.s32.totalorder %s86, %s88
    %p92 = scmp.eq.s32.totalorder %s31, 0
    %p93 = por %p91, %p92
    %p94 = scmp.ne.s32.totalorder %s86, %s88
    %p95 = scmp.eq.s32.totalorder %s36, 1
    %p96 = por %p94, %p95
    %p97 = scmp.ne.s32.totalorder %s88, %s89
    %p98 = scmp.eq.s32.totalorder %s36, 0
    %p99 = por %p97, %p98
    %p100 = scmp.ne.s32.totalorder %s88, %s89
    %p101 = scmp.eq.s32.totalorder %s37, 1
    %p102 = por %p100, %p101
    %p104 = scmp.ne.s32.totalorder %s89, %s103
    %p105 = scmp.eq.s32.totalorder %s37, 0
    %p106 = por %p104, %p105
    %s108 = sadd.s32 %s107, 1
    %p111 = scmp.eq.s32.totalorder %s31, 1
    %p112 = scmp.ne.s32.totalorder %s107, %s109
    %p113 = scmp.eq.s32.totalorder %s31, 0
    %p114 = por %p112, %p113
    %p115 = scmp.ne.s32.totalorder %s107, %s109
    %p116 = scmp.eq.s32.totalorder %s36, 1
    %p117 = por %p115, %p116
    %p118 = scmp.ne.s32.totalorder %s109, %s110
    %p119 = scmp.eq.s32.totalorder %s36, 0
    %p120 = por %p118, %p119
    %p121 = scmp.ne.s32.totalorder %s109, %s110
    %p122 = scmp.eq.s32.totalorder %s37, 1
    %p123 = por %p121, %p122
    %p125 = scmp.ne.s32.totalorder %s110, %s124
    %p126 = scmp.eq.s32.totalorder %s37, 0
    %p127 = por %p125, %p126
    %s129 = sadd.s32 %s128, 1
    %p132 = scmp.eq.s32.totalorder %s31, 1
    %p133 = scmp.ne.s32.totalorder %s128, %s130
    %p134 = scmp.eq.s32.totalorder %s31, 0
    %p135 = por %p133, %p134
    %p136 = scmp.ne.s32.totalorder %s128, %s130
    %p137 = scmp.eq.s32.totalorder %s36, 1
    %p138 = por %p136, %p137
    %p139 = scmp.ne.s32.totalorder %s130, %s131
    %p140 = scmp.eq.s32.totalorder %s36, 0
    %p141 = por %p139, %p140
    %p142 = scmp.ne.s32.totalorder %s130, %s131
    %p143 = scmp.eq.s32.totalorder %s37, 1
    %p144 = por %p142, %p143
    %p146 = scmp.ne.s32.totalorder %s131, %s145
    %p147 = scmp.eq.s32.totalorder %s37, 0
    %p148 = por %p146, %p147
    %s150 = sadd.s32 %s149, 1
    %p153 = scmp.eq.s32.totalorder %s31, 1
    %p154 = scmp.ne.s32.totalorder %s149, %s151
    %p155 = scmp.eq.s32.totalorder %s31, 0
    %p156 = por %p154, %p155
    %p157 = scmp.ne.s32.totalorder %s149, %s151
    %p158 = scmp.eq.s32.totalorder %s36, 1
    %p159 = por %p157, %p158
    %p160 = scmp.ne.s32.totalorder %s151, %s152
    %p161 = scmp.eq.s32.totalorder %s36, 0
    %p162 = por %p160, %p161
    %p163 = scmp.ne.s32.totalorder %s151, %s152
    %p164 = scmp.eq.s32.totalorder %s37, 1
    %p165 = por %p163, %p164
    %p167 = scmp.ne.s32.totalorder %s152, %s166
    %p168 = scmp.eq.s32.totalorder %s37, 0
    %p169 = por %p167, %p168
    %s171 = sadd.s32 %s170, 1
    %p174 = scmp.eq.s32.totalorder %s31, 1
    %p175 = scmp.ne.s32.totalorder %s170, %s172
    %p176 = scmp.eq.s32.totalorder %s31, 0
    %p177 = por %p175, %p176
    %p178 = scmp.ne.s32.totalorder %s170, %s172
    %p179 = scmp.eq.s32.totalorder %s36, 1
    %p180 = por %p178, %p179
    %p181 = scmp.ne.s32.totalorder %s172, %s173
    %p182 = scmp.eq.s32.totalorder %s36, 0
    %p183 = por %p181, %p182
    %p184 = scmp.ne.s32.totalorder %s172, %s173
    %p185 = scmp.eq.s32.totalorder %s37, 1
    %p186 = por %p184, %p185
    %p188 = scmp.ne.s32.totalorder %s173, %s187
    %p189 = scmp.eq.s32.totalorder %s37, 0
    %p190 = por %p188, %p189
    %s192 = sadd.s32 %s191, 1
    %p195 = scmp.eq.s32.totalorder %s31, 1
    %p196 = scmp.ne.s32.totalorder %s191, %s193
    %p197 = scmp.eq.s32.totalorder %s31, 0
    %p198 = por %p196, %p197
    %p199 = scmp.ne.s32.totalorder %s191, %s193
    %p200 = scmp.eq.s32.totalorder %s36, 1
    %p201 = por %p199, %p200
    %p202 = scmp.ne.s32.totalorder %s193, %s194
    %p203 = scmp.eq.s32.totalorder %s36, 0
    %p204 = por %p202, %p203
    %p205 = scmp.ne.s32.totalorder %s193, %s194
    %p206 = scmp.eq.s32.totalorder %s37, 1
    %p207 = por %p205, %p206
    %p209 = scmp.ne.s32.totalorder %s194, %s208
    %p210 = scmp.eq.s32.totalorder %s37, 0
    %p211 = por %p209, %p210
    %s213 = sadd.s32 %s212, 1
    %p216 = scmp.eq.s32.totalorder %s31, 1
    %p217 = scmp.ne.s32.totalorder %s212, %s214
    %p218 = scmp.eq.s32.totalorder %s31, 0
    %p219 = por %p217, %p218
    %p220 = scmp.ne.s32.totalorder %s212, %s214
    %p221 = scmp.eq.s32.totalorder %s36, 1
    %p222 = por %p220, %p221
    %p223 = scmp.ne.s32.totalorder %s214, %s215
    %p224 = scmp.eq.s32.totalorder %s36, 0
    %p225 = por %p223, %p224
    %p226 = scmp.ne.s32.totalorder %s214, %s215
    %p227 = scmp.eq.s32.totalorder %s37, 1
    %p228 = por %p226, %p227
    %p230 = scmp.ne.s32.totalorder %s215, %s229
    %p231 = scmp.eq.s32.totalorder %s37, 0
    %p232 = por %p230, %p231
    %s234 = sadd.s32 %s233, 1
    %p237 = scmp.eq.s32.totalorder %s31, 1
    %p238 = scmp.ne.s32.totalorder %s233, %s235
    %p239 = scmp.eq.s32.totalorder %s31, 0
    %p240 = por %p238, %p239
    %p241 = scmp.ne.s32.totalorder %s233, %s235
    %p242 = scmp.eq.s32.totalorder %s36, 1
    %p243 = por %p241, %p242
    %p244 = scmp.ne.s32.totalorder %s235, %s236
    %p245 = scmp.eq.s32.totalorder %s36, 0
    %p246 = por %p244, %p245
    %p247 = scmp.ne.s32.totalorder %s235, %s236
    %p248 = scmp.eq.s32.totalorder %s37, 1
    %p249 = por %p247, %p248
    %p251 = scmp.ne.s32.totalorder %s236, %s250
    %p252 = scmp.eq.s32.totalorder %s37, 0
    %p253 = por %p251, %p252
    %s255 = sadd.s32 %s254, 1
    %p258 = scmp.eq.s32.totalorder %s31, 1
    %p259 = scmp.ne.s32.totalorder %s254, %s256
    %p260 = scmp.eq.s32.totalorder %s31, 0
    %p261 = por %p259, %p260
    %p262 = scmp.ne.s32.totalorder %s254, %s256
    %p263 = scmp.eq.s32.totalorder %s36, 1
    %p264 = por %p262, %p263
    %p265 = scmp.ne.s32.totalorder %s256, %s257
    %p266 = scmp.eq.s32.totalorder %s36, 0
    %p267 = por %p265, %p266
    %p268 = scmp.ne.s32.totalorder %s256, %s257
    %p269 = scmp.eq.s32.totalorder %s37, 1
    %p270 = por %p268, %p269
    %p272 = scmp.ne.s32.totalorder %s257, %s271
    %p273 = scmp.eq.s32.totalorder %s37, 0
    %p274 = por %p272, %p273
    %s276 = sadd.s32 %s275, 1
    %p279 = scmp.eq.s32.totalorder %s31, 1
    %p280 = scmp.ne.s32.totalorder %s275, %s277
    %p281 = scmp.eq.s32.totalorder %s31, 0
    %p282 = por %p280, %p281
    %p283 = scmp.ne.s32.totalorder %s275, %s277
    %p284 = scmp.eq.s32.totalorder %s36, 1
    %p285 = por %p283, %p284
    %p286 = scmp.ne.s32.totalorder %s277, %s278
    %p287 = scmp.eq.s32.totalorder %s36, 0
    %p288 = por %p286, %p287
    %p289 = scmp.ne.s32.totalorder %s277, %s278
    %p290 = scmp.eq.s32.totalorder %s37, 1
    %p291 = por %p289, %p290
    %p293 = scmp.ne.s32.totalorder %s278, %s292
    %p294 = scmp.eq.s32.totalorder %s37, 0
    %p295 = por %p293, %p294
    %s297 = sadd.s32 %s296, 1
    %p300 = scmp.eq.s32.totalorder %s31, 1
    %p301 = scmp.ne.s32.totalorder %s296, %s298
    %p302 = scmp.eq.s32.totalorder %s31, 0
    %p303 = por %p301, %p302
    %p304 = scmp.ne.s32.totalorder %s296, %s298
    %p305 = scmp.eq.s32.totalorder %s36, 1
    %p306 = por %p304, %p305
    %p307 = scmp.ne.s32.totalorder %s298, %s299
    %p308 = scmp.eq.s32.totalorder %s36, 0
    %p309 = por %p307, %p308
    %p310 = scmp.ne.s32.totalorder %s298, %s299
    %p311 = scmp.eq.s32.totalorder %s37, 1
    %p312 = por %p310, %p311
    %p314 = scmp.ne.s32.totalorder %s299, %s313
    %p315 = scmp.eq.s32.totalorder %s37, 0
    %p316 = por %p314, %p315
    %s318 = sadd.s32 %s317, 1
    %p321 = scmp.eq.s32.totalorder %s31, 1
    %p322 = scmp.ne.s32.totalorder %s317, %s319
    %p323 = scmp.eq.s32.totalorder %s31, 0
    %p324 = por %p322, %p323
    %p325 = scmp.ne.s32.totalorder %s317, %s319
    %p326 = scmp.eq.s32.totalorder %s36, 1
    %p327 = por %p325, %p326
    %p328 = scmp.ne.s32.totalorder %s319, %s320
    %p329 = scmp.eq.s32.totalorder %s36, 0
    %p330 = por %p328, %p329
    %p331 = scmp.ne.s32.totalorder %s319, %s320
    %p332 = scmp.eq.s32.totalorder %s37, 1
    %p333 = por %p331, %p332
    %p335 = scmp.ne.s32.totalorder %s320, %s334
    %p336 = scmp.eq.s32.totalorder %s37, 0
    %p337 = por %p335, %p336
    %s339 = sadd.s32 %s338, 1
    %p342 = scmp.eq.s32.totalorder %s31, 1
    %p343 = scmp.ne.s32.totalorder %s338, %s340
    %p344 = scmp.eq.s32.totalorder %s31, 0
    %p345 = por %p343, %p344
    %p346 = scmp.ne.s32.totalorder %s338, %s340
    %p347 = scmp.eq.s32.totalorder %s36, 1
    %p348 = por %p346, %p347
    %p349 = scmp.ne.s32.totalorder %s340, %s341
    %p350 = scmp.eq.s32.totalorder %s36, 0
    %p351 = por %p349, %p350
    %p352 = scmp.ne.s32.totalorder %s340, %s341
    %p353 = scmp.eq.s32.totalorder %s37, 1
    %p354 = por %p352, %p353
    %p356 = scmp.ne.s32.totalorder %s341, %s355
    %p357 = scmp.eq.s32.totalorder %s37, 0
    %p358 = por %p356, %p357
    %s360 = sadd.s32 %s359, 1
    %p363 = scmp.eq.s32.totalorder %s31, 1
    %p364 = scmp.ne.s32.totalorder %s359, %s361
    %p365 = scmp.eq.s32.totalorder %s31, 0
    %p366 = por %p364, %p365
    %p367 = scmp.ne.s32.totalorder %s359, %s361
    %p368 = scmp.eq.s32.totalorder %s36, 1
    %p369 = por %p367, %p368
    %p370 = scmp.ne.s32.totalorder %s361, %s362
    %p371 = scmp.eq.s32.totalorder %s36, 0
    %p372 = por %p370, %p371
    %p373 = scmp.ne.s32.totalorder %s361, %s362
    %p374 = scmp.eq.s32.totalorder %s37, 1
    %p375 = por %p373, %p374
    %p377 = scmp.ne.s32.totalorder %s362, %s376
    %p378 = scmp.eq.s32.totalorder %s37, 0
    %p379 = por %p377, %p378
    %s381 = sadd.s32 %s380, 1
    %p384 = scmp.eq.s32.totalorder %s31, 1
    %p385 = scmp.ne.s32.totalorder %s380, %s382
    %p386 = scmp.eq.s32.totalorder %s31, 0
    %p387 = por %p385, %p386
    %p388 = scmp.ne.s32.totalorder %s380, %s382
    %p389 = scmp.eq.s32.totalorder %s36, 1
    %p390 = por %p388, %p389
    %p391 = scmp.ne.s32.totalorder %s382, %s383
    %p392 = scmp.eq.s32.totalorder %s36, 0
    %p393 = por %p391, %p392
    %p394 = scmp.ne.s32.totalorder %s382, %s383
    %p395 = scmp.eq.s32.totalorder %s37, 1
    %p396 = por %p394, %p395
    %p398 = scmp.ne.s32.totalorder %s383, %s397
    %p399 = scmp.eq.s32.totalorder %s37, 0
    %p400 = por %p398, %p399
    %s402 = sadd.s32 %s401, 1
    %p405 = scmp.eq.s32.totalorder %s31, 1
    %p406 = scmp.ne.s32.totalorder %s401, %s403
    %p407 = scmp.eq.s32.totalorder %s31, 0
    %p408 = por %p406, %p407
    %p409 = scmp.ne.s32.totalorder %s401, %s403
    %p410 = scmp.eq.s32.totalorder %s36, 1
    %p411 = por %p409, %p410
    %p412 = scmp.ne.s32.totalorder %s403, %s404
    %p413 = scmp.eq.s32.totalorder %s36, 0
    %p414 = por %p412, %p413
    %p415 = scmp.ne.s32.totalorder %s403, %s404
    %p416 = scmp.eq.s32.totalorder %s37, 1
    %p417 = por %p415, %p416
    %p419 = scmp.ne.s32.totalorder %s404, %s418
    %p420 = scmp.eq.s32.totalorder %s37, 0
    %p421 = por %p419, %p420
    %s423 = sadd.s32 %s422, 1
    %p426 = scmp.eq.s32.totalorder %s31, 1
    %p427 = scmp.ne.s32.totalorder %s422, %s424
    %p428 = scmp.eq.s32.totalorder %s31, 0
    %p429 = por %p427, %p428
    %p430 = scmp.ne.s32.totalorder %s422, %s424
    %p431 = scmp.eq.s32.totalorder %s36, 1
    %p432 = por %p430, %p431
    %p433 = scmp.ne.s32.totalorder %s424, %s425
    %p434 = scmp.eq.s32.totalorder %s36, 0
    %p435 = por %p433, %p434
    %p436 = scmp.ne.s32.totalorder %s424, %s425
    %p437 = scmp.eq.s32.totalorder %s37, 1
    %p438 = por %p436, %p437
    %p440 = scmp.ne.s32.totalorder %s425, %s439
    %p441 = scmp.eq.s32.totalorder %s37, 0
    %p442 = por %p440, %p441
    %s444 = sadd.s32 %s443, 1
    %p447 = scmp.eq.s32.totalorder %s31, 1
    %p448 = scmp.ne.s32.totalorder %s443, %s445
    %p449 = scmp.eq.s32.totalorder %s31, 0
    %p450 = por %p448, %p449
    %p451 = scmp.ne.s32.totalorder %s443, %s445
    %p452 = scmp.eq.s32.totalorder %s36, 1
    %p453 = por %p451, %p452
    %p454 = scmp.ne.s32.totalorder %s445, %s446
    %p455 = scmp.eq.s32.totalorder %s36, 0
    %p456 = por %p454, %p455
    %p457 = scmp.ne.s32.totalorder %s445, %s446
    %p458 = scmp.eq.s32.totalorder %s37, 1
    %p459 = por %p457, %p458
    %p461 = scmp.ne.s32.totalorder %s446, %s460
    %p462 = scmp.eq.s32.totalorder %s37, 0
    %p463 = por %p461, %p462
    %s465 = sadd.s32 %s464, 1
    %p468 = scmp.eq.s32.totalorder %s31, 1
    %p469 = scmp.ne.s32.totalorder %s464, %s466
    %p470 = scmp.eq.s32.totalorder %s31, 0
    %p471 = por %p469, %p470
    %p472 = scmp.ne.s32.totalorder %s464, %s466
    %p473 = scmp.eq.s32.totalorder %s36, 1
    %p474 = por %p472, %p473
    %p475 = scmp.ne.s32.totalorder %s466, %s467
    %p476 = scmp.eq.s32.totalorder %s36, 0
    %p477 = por %p475, %p476
    %p478 = scmp.ne.s32.totalorder %s466, %s467
    %p479 = scmp.eq.s32.totalorder %s37, 1
    %p480 = por %p478, %p479
    %p482 = scmp.ne.s32.totalorder %s467, %s481
    %p483 = scmp.eq.s32.totalorder %s37, 0
    %p484 = por %p482, %p483
    %s486 = sadd.s32 %s485, 1
    %p489 = scmp.eq.s32.totalorder %s31, 1
    %p490 = scmp.ne.s32.totalorder %s485, %s487
    %p491 = scmp.eq.s32.totalorder %s31, 0
    %p492 = por %p490, %p491
    %p493 = scmp.ne.s32.totalorder %s485, %s487
    %p494 = scmp.eq.s32.totalorder %s36, 1
    %p495 = por %p493, %p494
    %p496 = scmp.ne.s32.totalorder %s487, %s488
    %p497 = scmp.eq.s32.totalorder %s36, 0
    %p498 = por %p496, %p497
    %p499 = scmp.ne.s32.totalorder %s487, %s488
    %p500 = scmp.eq.s32.totalorder %s37, 1
    %p501 = por %p499, %p500
    %p503 = scmp.ne.s32.totalorder %s488, %s502
    %p504 = scmp.eq.s32.totalorder %s37, 0
    %p505 = por %p503, %p504
    %s507 = sadd.s32 %s506, 1
    %p510 = scmp.eq.s32.totalorder %s31, 1
    %p511 = scmp.ne.s32.totalorder %s506, %s508
    %p512 = scmp.eq.s32.totalorder %s31, 0
    %p513 = por %p511, %p512
    %p514 = scmp.ne.s32.totalorder %s506, %s508
    %p515 = scmp.eq.s32.totalorder %s36, 1
    %p516 = por %p514, %p515
    %p517 = scmp.ne.s32.totalorder %s508, %s509
    %p518 = scmp.eq.s32.totalorder %s36, 0
    %p519 = por %p517, %p518
    %p520 = scmp.ne.s32.totalorder %s508, %s509
    %p521 = scmp.eq.s32.totalorder %s37, 1
    %p522 = por %p520, %p521
    %p524 = scmp.ne.s32.totalorder %s509, %s523
    %p525 = scmp.eq.s32.totalorder %s37, 0
    %p526 = por %p524, %p525
    %s528 = sadd.s32 %s527, 1
    %p531 = scmp.eq.s32.totalorder %s31, 1
    %p532 = scmp.ne.s32.totalorder %s527, %s529
    %p533 = scmp.eq.s32.totalorder %s31, 0
    %p534 = por %p532, %p533
    %p535 = scmp.ne.s32.totalorder %s527, %s529
    %p536 = scmp.eq.s32.totalorder %s36, 1
    %p537 = por %p535, %p536
    %p538 = scmp.ne.s32.totalorder %s529, %s530
    %p539 = scmp.eq.s32.totalorder %s36, 0
    %p540 = por %p538, %p539
    %p541 = scmp.ne.s32.totalorder %s529, %s530
    %p542 = scmp.eq.s32.totalorder %s37, 1
    %p543 = por %p541, %p542
    %p545 = scmp.ne.s32.totalorder %s530, %s544
    %p546 = scmp.eq.s32.totalorder %s37, 0
    %p547 = por %p545, %p546
    %s549 = sadd.s32 %s548, 1
    %p552 = scmp.eq.s32.totalorder %s31, 1
    %p553 = scmp.ne.s32.totalorder %s548, %s550
    %p554 = scmp.eq.s32.totalorder %s31, 0
    %p555 = por %p553, %p554
    %p556 = scmp.ne.s32.totalorder %s548, %s550
    %p557 = scmp.eq.s32.totalorder %s36, 1
    %p558 = por %p556, %p557
    %p559 = scmp.ne.s32.totalorder %s550, %s551
    %p560 = scmp.eq.s32.totalorder %s36, 0
    %p561 = por %p559, %p560
    %p562 = scmp.ne.s32.totalorder %s550, %s551
    %p563 = scmp.eq.s32.totalorder %s37, 1
    %p564 = por %p562, %p563
    %p566 = scmp.ne.s32.totalorder %s551, %s565
    %p567 = scmp.eq.s32.totalorder %s37, 0
    %p568 = por %p566, %p567
    %s569 = ssub.s32 %s31, %s38
    %p570 = scmp.eq.s32.totalorder %s569, 0
    %s572 = sadd.s32 %s571, 1
    %s573 = scalar_select %p570, %s571, %s572
    %p576 = pneg %p570
    %p577 = scmp.eq.s32.totalorder %s31, 1
    %p578 = por %p576, %p577
    %p579 = scmp.ne.s32.totalorder %s571, %s574
    %p580 = scmp.eq.s32.totalorder %s31, 0
    %p581 = por %p579, %p580
    %p582 = scmp.ne.s32.totalorder %s571, %s574
    %p583 = scmp.eq.s32.totalorder %s36, 1
    %p584 = por %p582, %p583
    %p585 = scmp.ne.s32.totalorder %s574, %s575
    %p586 = scmp.eq.s32.totalorder %s36, 0
    %p587 = por %p585, %p586
    %p588 = scmp.ne.s32.totalorder %s574, %s575
    %p589 = scmp.eq.s32.totalorder %s37, 1
    %p590 = por %p588, %p589
    %p592 = scmp.ne.s32.totalorder %s575, %s591
    %p593 = scmp.eq.s32.totalorder %s37, 0
    %p594 = por %p592, %p593
    %p595 = scmp.le.s32.totalorder 1, %s31
    %p596 = scmp.lt.s32.totalorder %s31, 3
    %p597 = pnand %p595, %p596
    %p598 = pneg %p597
    // Predicated region
    $region9: #{encoder_forward.1} parent=5 // pred_check
      _
    $region10: #{encoder_forward.1} parent=5 // pred_check_branch
      %600 = sbr.rel (%p597) target = $region12
    $region11: #{encoder_forward.1} parent=5 // pred_region
      %s601 = ssub.s32 %s31, 1
      // Predicated region
      $region13: #{encoder_forward.1} parent=11 // pred_check
        %p602 = pneg %p78
      $region14: #{encoder_forward.1} parent=11 // pred_check_branch
        %604 = sbr.rel (%p602) target = $region16
      $region15: #{encoder_forward.1} parent=11 // pred_region
        _
      $region16: #{encoder_forward.1} parent=11 // pred_fallthru
        _
      // Predicated region
      $region17: #{encoder_forward.1} parent=11 // pred_check
        %p605 = pneg %p99
      $region18: #{encoder_forward.1} parent=11 // pred_check_branch
        %607 = sbr.rel (%p605) target = $region20
      $region19: #{encoder_forward.1} parent=11 // pred_region
        _
      $region20: #{encoder_forward.1} parent=11 // pred_fallthru
        _
      // Predicated region
      $region21: #{encoder_forward.1} parent=11 // pred_check
        %p608 = pneg %p120
      $region22: #{encoder_forward.1} parent=11 // pred_check_branch
        %610 = sbr.rel (%p608) target = $region24
      $region23: #{encoder_forward.1} parent=11 // pred_region
        _
      $region24: #{encoder_forward.1} parent=11 // pred_fallthru
        _
      // Predicated region
      $region25: #{encoder_forward.1} parent=11 // pred_check
        %p611 = pneg %p141
      $region26: #{encoder_forward.1} parent=11 // pred_check_branch
        %613 = sbr.rel (%p611) target = $region28
      $region27: #{encoder_forward.1} parent=11 // pred_region
        _
      $region28: #{encoder_forward.1} parent=11 // pred_fallthru
        _
      // Predicated region
      $region29: #{encoder_forward.1} parent=11 // pred_check
        %p614 = pneg %p162
      $region30: #{encoder_forward.1} parent=11 // pred_check_branch
        %616 = sbr.rel (%p614) target = $region32
      $region31: #{encoder_forward.1} parent=11 // pred_region
        _
      $region32: #{encoder_forward.1} parent=11 // pred_fallthru
        _
      // Predicated region
      $region33: #{encoder_forward.1} parent=11 // pred_check
        %p617 = pneg %p183
      $region34: #{encoder_forward.1} parent=11 // pred_check_branch
        %619 = sbr.rel (%p617) target = $region36
      $region35: #{encoder_forward.1} parent=11 // pred_region
        _
      $region36: #{encoder_forward.1} parent=11 // pred_fallthru
        _
      // Predicated region
      $region37: #{encoder_forward.1} parent=11 // pred_check
        %p620 = pneg %p204
      $region38: #{encoder_forward.1} parent=11 // pred_check_branch
        %622 = sbr.rel (%p620) target = $region40
      $region39: #{encoder_forward.1} parent=11 // pred_region
        _
      $region40: #{encoder_forward.1} parent=11 // pred_fallthru
        _
      // Predicated region
      $region41: #{encoder_forward.1} parent=11 // pred_check
        %p623 = pneg %p225
      $region42: #{encoder_forward.1} parent=11 // pred_check_branch
        %625 = sbr.rel (%p623) target = $region44
      $region43: #{encoder_forward.1} parent=11 // pred_region
        _
      $region44: #{encoder_forward.1} parent=11 // pred_fallthru
        _
      // Predicated region
      $region45: #{encoder_forward.1} parent=11 // pred_check
        %p626 = pneg %p246
      $region46: #{encoder_forward.1} parent=11 // pred_check_branch
        %628 = sbr.rel (%p626) target = $region48
      $region47: #{encoder_forward.1} parent=11 // pred_region
        _
      $region48: #{encoder_forward.1} parent=11 // pred_fallthru
        _
      // Predicated region
      $region49: #{encoder_forward.1} parent=11 // pred_check
        %p629 = pneg %p267
      $region50: #{encoder_forward.1} parent=11 // pred_check_branch
        %631 = sbr.rel (%p629) target = $region52
      $region51: #{encoder_forward.1} parent=11 // pred_region
        _
      $region52: #{encoder_forward.1} parent=11 // pred_fallthru
        _
      // Predicated region
      $region53: #{encoder_forward.1} parent=11 // pred_check
        %p632 = pneg %p288
      $region54: #{encoder_forward.1} parent=11 // pred_check_branch
        %634 = sbr.rel (%p632) target = $region56
      $region55: #{encoder_forward.1} parent=11 // pred_region
        _
      $region56: #{encoder_forward.1} parent=11 // pred_fallthru
        _
      // Predicated region
      $region57: #{encoder_forward.1} parent=11 // pred_check
        %p635 = pneg %p309
      $region58: #{encoder_forward.1} parent=11 // pred_check_branch
        %637 = sbr.rel (%p635) target = $region60
      $region59: #{encoder_forward.1} parent=11 // pred_region
        _
      $region60: #{encoder_forward.1} parent=11 // pred_fallthru
        _
      // Predicated region
      $region61: #{encoder_forward.1} parent=11 // pred_check
        %p638 = pneg %p330
      $region62: #{encoder_forward.1} parent=11 // pred_check_branch
        %640 = sbr.rel (%p638) target = $region64
      $region63: #{encoder_forward.1} parent=11 // pred_region
        _
      $region64: #{encoder_forward.1} parent=11 // pred_fallthru
        _
      // Predicated region
      $region65: #{encoder_forward.1} parent=11 // pred_check
        %p641 = pneg %p351
      $region66: #{encoder_forward.1} parent=11 // pred_check_branch
        %643 = sbr.rel (%p641) target = $region68
      $region67: #{encoder_forward.1} parent=11 // pred_region
        _
      $region68: #{encoder_forward.1} parent=11 // pred_fallthru
        _
      // Predicated region
      $region69: #{encoder_forward.1} parent=11 // pred_check
        %p644 = pneg %p372
      $region70: #{encoder_forward.1} parent=11 // pred_check_branch
        %646 = sbr.rel (%p644) target = $region72
      $region71: #{encoder_forward.1} parent=11 // pred_region
        _
      $region72: #{encoder_forward.1} parent=11 // pred_fallthru
        _
      // Predicated region
      $region73: #{encoder_forward.1} parent=11 // pred_check
        %p647 = pneg %p393
      $region74: #{encoder_forward.1} parent=11 // pred_check_branch
        %649 = sbr.rel (%p647) target = $region76
      $region75: #{encoder_forward.1} parent=11 // pred_region
        _
      $region76: #{encoder_forward.1} parent=11 // pred_fallthru
        _
      // Predicated region
      $region77: #{encoder_forward.1} parent=11 // pred_check
        %p650 = pneg %p414
      $region78: #{encoder_forward.1} parent=11 // pred_check_branch
        %652 = sbr.rel (%p650) target = $region80
      $region79: #{encoder_forward.1} parent=11 // pred_region
        _
      $region80: #{encoder_forward.1} parent=11 // pred_fallthru
        _
      // Predicated region
      $region81: #{encoder_forward.1} parent=11 // pred_check
        %p653 = pneg %p435
      $region82: #{encoder_forward.1} parent=11 // pred_check_branch
        %655 = sbr.rel (%p653) target = $region84
      $region83: #{encoder_forward.1} parent=11 // pred_region
        _
      $region84: #{encoder_forward.1} parent=11 // pred_fallthru
        _
      // Predicated region
      $region85: #{encoder_forward.1} parent=11 // pred_check
        %p656 = pneg %p456
      $region86: #{encoder_forward.1} parent=11 // pred_check_branch
        %658 = sbr.rel (%p656) target = $region88
      $region87: #{encoder_forward.1} parent=11 // pred_region
        _
      $region88: #{encoder_forward.1} parent=11 // pred_fallthru
        _
      // Predicated region
      $region89: #{encoder_forward.1} parent=11 // pred_check
        %p659 = pneg %p477
      $region90: #{encoder_forward.1} parent=11 // pred_check_branch
        %661 = sbr.rel (%p659) target = $region92
      $region91: #{encoder_forward.1} parent=11 // pred_region
        _
      $region92: #{encoder_forward.1} parent=11 // pred_fallthru
        _
      // Predicated region
      $region93: #{encoder_forward.1} parent=11 // pred_check
        %p662 = pneg %p498
      $region94: #{encoder_forward.1} parent=11 // pred_check_branch
        %664 = sbr.rel (%p662) target = $region96
      $region95: #{encoder_forward.1} parent=11 // pred_region
        _
      $region96: #{encoder_forward.1} parent=11 // pred_fallthru
        _
      // Predicated region
      $region97: #{encoder_forward.1} parent=11 // pred_check
        %p665 = pneg %p519
      $region98: #{encoder_forward.1} parent=11 // pred_check_branch
        %667 = sbr.rel (%p665) target = $region100
      $region99: #{encoder_forward.1} parent=11 // pred_region
        _
      $region100: #{encoder_forward.1} parent=11 // pred_fallthru
        _
      // Predicated region
      $region101: #{encoder_forward.1} parent=11 // pred_check
        %p668 = pneg %p540
      $region102: #{encoder_forward.1} parent=11 // pred_check_branch
        %670 = sbr.rel (%p668) target = $region104
      $region103: #{encoder_forward.1} parent=11 // pred_region
        _
      $region104: #{encoder_forward.1} parent=11 // pred_fallthru
        _
      // Predicated region
      $region105: #{encoder_forward.1} parent=11 // pred_check
        %p671 = pneg %p561
      $region106: #{encoder_forward.1} parent=11 // pred_check_branch
        %673 = sbr.rel (%p671) target = $region108
      $region107: #{encoder_forward.1} parent=11 // pred_region
        _
      $region108: #{encoder_forward.1} parent=11 // pred_fallthru
        _
    $region12: #{encoder_forward.1} parent=5 // pred_fallthru
      _
    %p674 = scmp.lt.s32.totalorder %s31, 2
    // Predicated region
    $region109: #{encoder_forward.1} parent=5 // pred_check
      %p675 = pneg %p674
    $region110: #{encoder_forward.1} parent=5 // pred_check_branch
      %677 = sbr.rel (%p675) target = $region112
    $region111: #{encoder_forward.1} parent=5 // pred_region
      // Predicated region
      $region113: #{encoder_forward.1} parent=111 // pred_check
        %p678 = pneg %p51
      $region114: #{encoder_forward.1} parent=111 // pred_check_branch
        %680 = sbr.rel (%p678) target = $region116
      $region115: #{encoder_forward.1} parent=111 // pred_region
        %p681 = scmp.lt.s32.totalorder %s31, 1
        %s682 = scalar_select %p681, %s31, 1
        %s683 = smul.addr %s682, 25
        %s684 = smul.addr %s683, 4
        %s685 = scalar_lea.vmem %s0, %s684
      $region116: #{encoder_forward.1} parent=111 // pred_fallthru
        _
    $region112: #{encoder_forward.1} parent=5 // pred_fallthru
      _
    %p686 = scmp.le.s32.totalorder 1, %s31
    %p687 = scmp.lt.s32.totalorder %s31, 3
    %p688 = pnand %p686, %p687
    %p689 = pneg %p688
    // Predicated region
    $region117: #{encoder_forward.1} parent=5 // pred_check
      _
    $region118: #{encoder_forward.1} parent=5 // pred_check_branch
      %691 = sbr.rel (%p688) target = $region120
    $region119: #{encoder_forward.1} parent=5 // pred_region
      %s692 = ssub.s32 %s31, 1
      %p693 = scmp.lt.s32.totalorder %s36, 1
      %s694 = scalar_select %p693, %s36, 1
      %s695 = smul.addr %s694, 25
      %s696 = smul.addr %s695, 4
      %s697 = scalar_lea.vmem %s0, %s696
      %p698 = pneg %p57
      %p699 = pneg %p54
      %p700 = pneg %p78
      %p701 = pneg %p75
      %p702 = pneg %p99
      %p703 = pneg %p96
      %p704 = pneg %p120
      %p705 = pneg %p117
      %p706 = pneg %p141
      %p707 = pneg %p138
      %p708 = pneg %p162
      %p709 = pneg %p159
      %p710 = pneg %p183
      %p711 = pneg %p180
      %p712 = pneg %p204
      %p713 = pneg %p201
      %p714 = pneg %p225
      %p715 = pneg %p222
      %p716 = pneg %p246
      %p717 = pneg %p243
      %p718 = pneg %p267
      %p719 = pneg %p264
      %p720 = pneg %p288
      %p721 = pneg %p285
      %p722 = pneg %p309
      %p723 = pneg %p306
      %p724 = pneg %p330
      %p725 = pneg %p327
      %p726 = pneg %p351
      %p727 = pneg %p348
      %p728 = pneg %p372
      %p729 = pneg %p369
      %p730 = pneg %p393
      %p731 = pneg %p390
      %p732 = pneg %p414
      %p733 = pneg %p411
      %p734 = pneg %p435
      %p735 = pneg %p432
      %p736 = pneg %p456
      %p737 = pneg %p453
      %p738 = pneg %p477
      %p739 = pneg %p474
      %p740 = pneg %p498
      %p741 = pneg %p495
      %p742 = pneg %p519
      %p743 = pneg %p516
      %p744 = pneg %p540
      %p745 = pneg %p537
      %p746 = pneg %p561
      %p747 = pneg %p558
      %p748 = pneg %p587
      %p749 = pneg %p584
      %p750 = scmp.lt.s32.totalorder %s36, 1
      %s751 = scalar_select %p750, %s36, 1
      %s752 = smul.addr %s751, 7
      %s753 = smul.addr %s752, 8
      %s754 = scalar_lea.vmem %s25, %s753
      %p755 = scmp.lt.s32.totalorder %s36, 1
      %s756 = scalar_select %p755, %s36, 1
      %s757 = smul.addr %s756, 25
      %s758 = smul.addr %s757, 4
      %s759 = scalar_lea.vmem %s0, %s758
      %p760 = scmp.lt.s32.totalorder %s36, 1
      %s761 = scalar_select %p760, %s36, 1
      %s762 = smul.addr %s761, 7
      %s763 = smul.addr %s762, 8
      %s764 = scalar_lea.vmem %s25, %s763
      %v766 = vld [vmem:[%s759] sm:$0xf]
      %v767 = vld [vmem:[%s759 + $0x4] sm:$0xf]
      %v768 = vld [vmem:[%s759 + $0x8] sm:$0xf]
      %v769 = vld [vmem:[%s759 + $0xc] sm:$0xf]
      %v770 = vld [vmem:[%s759 + $0x10] sm:$0xf]
      %v771 = vld [vmem:[%s759 + $0x14] sm:$0xf]
      %v772 = vld [vmem:[%s759 + $0x18] sm:$0xf]
      %v773 = vld [vmem:[%s759 + $0x1c] sm:$0xf]
      %v774 = vld [vmem:[%s759 + $0x20] sm:$0xf]
      %v775 = vld [vmem:[%s759 + $0x24] sm:$0xf]
      %v776 = vld [vmem:[%s759 + $0x28] sm:$0xf]
      %v777 = vld [vmem:[%s759 + $0x2c] sm:$0xf]
      %v778 = vld [vmem:[%s759 + $0x30] sm:$0xf]
      %v779 = vld [vmem:[%s759 + $0x34] sm:$0xf]
      %v780 = vld [vmem:[%s759 + $0x38] sm:$0xf]
      %v781 = vld [vmem:[%s759 + $0x3c] sm:$0xf]
      %v782 = vld [vmem:[%s759 + $0x40] sm:$0xf]
      %v783 = vld [vmem:[%s759 + $0x44] sm:$0xf]
      %v784 = vld [vmem:[%s759 + $0x48] sm:$0xf]
      %v785 = vld [vmem:[%s759 + $0x4c] sm:$0xf]
      %v786 = vld [vmem:[%s759 + $0x50] sm:$0xf]
      %v787 = vld [vmem:[%s759 + $0x54] sm:$0xf]
      %v788 = vld [vmem:[%s759 + $0x58] sm:$0xf]
      %v789 = vld [vmem:[%s759 + $0x5c] sm:$0xf]
      %v790 = vld [vmem:[%s759 + $0x60] sm:$0x3]
      %v791 = vld [vmem:[%s2] sm:$0xf]
      %v792 = vld [vmem:[%s2 + $0x4] sm:$0xf]
      %v793 = vld [vmem:[%s3] sm:$0x1]
      %v795 = vlaneseq
      %v796 = vshrl.u32 %v795, 7
      %v797 = vsub.s32 0, %v796
      %v798 = vrot.slane %v793, %v797
      %v825 = vunpack.c.l.b16 %v766
      %v826 = vunpack.c.l.b16 %v767
      %v827 = vunpack.c.l.b16 %v768
      %v828 = vunpack.c.l.b16 %v769
      %v829 = vunpack.c.l.b16 %v770
      %v830 = vunpack.c.l.b16 %v771
      %v831 = vunpack.c.l.b16 %v772
      %v832 = vunpack.c.l.b16 %v773
      %v833 = vunpack.c.l.b16 %v774
      %v834 = vunpack.c.l.b16 %v775
      %v835 = vunpack.c.l.b16 %v776
      %v836 = vunpack.c.l.b16 %v777
      %v837 = vunpack.c.l.b16 %v778
      %v838 = vunpack.c.l.b16 %v779
      %v839 = vunpack.c.l.b16 %v780
      %v840 = vunpack.c.l.b16 %v781
      %v841 = vunpack.c.l.b16 %v782
      %v842 = vunpack.c.l.b16 %v783
      %v843 = vunpack.c.l.b16 %v784
      %v844 = vunpack.c.l.b16 %v785
      %v845 = vunpack.c.l.b16 %v786
      %v846 = vunpack.c.l.b16 %v787
      %v847 = vunpack.c.l.b16 %v788
      %v848 = vunpack.c.l.b16 %v789
      %v849 = vunpack.c.l.b16 %v790
      %v850 = vpack.c.b16 %v826, %v825
      %v851 = vpack.c.b16 %v828, %v827
      %v852 = vpack.c.b16 %v830, %v829
      %v853 = vpack.c.b16 %v832, %v831
      %v854 = vpack.c.b16 %v834, %v833
      %v855 = vpack.c.b16 %v836, %v835
      %v856 = vpack.c.b16 %v838, %v837
      %v857 = vpack.c.b16 %v840, %v839
      %v858 = vpack.c.b16 %v842, %v841
      %v859 = vpack.c.b16 %v844, %v843
      %v860 = vpack.c.b16 %v846, %v845
      %v861 = vpack.c.b16 %v848, %v847
      %v862 = vpack.c.b16 %v849, %v849
      %v865 = vunpack.c.l.b16 %v791
      %v866 = vunpack.c.l.b16 %v792
      %v867 = vpack.c.b16 %v866, %v865
      %vm869 = vcmask 130048
      %v871 = vsel %vm869, %v850, 0
      %v874 = vsel %vm869, %v851, 0
      %v877 = vsel %vm869, %v852, 0
      %v880 = vsel %vm869, %v853, 0
      %v883 = vsel %vm869, %v854, 0
      %v886 = vsel %vm869, %v855, 0
      %v889 = vsel %vm869, %v856, 0
      %v892 = vsel %vm869, %v857, 0
      %v895 = vsel %vm869, %v858, 0
      %v898 = vsel %vm869, %v859, 0
      %v901 = vsel %vm869, %v860, 0
      %v904 = vsel %vm869, %v861, 0
      %v907 = vsel %vm869, %v862, 0
      %909 = vmatprep.subr.bf16.mxu0 0
      %910 = vmatpush1.bf16.msra.mxu0 %v867
      %911 = vmatprep.subr.bf16.mxu0 0
      %912 = vmatpush1.bf16.msra.mxu0 0
      %913 = vmatprep.subr.bf16.mxu0 0
      %914 = vmatpush1.bf16.msra.mxu0 0
      %915 = vmatprep.subr.bf16.mxu0 0
      %916 = vmatpush1.bf16.msra.mxu0 0
      %917 = vmatprep.subr.bf16.mxu0 0
      %918 = vmatpush1.bf16.msra.mxu0 0
      %919 = vmatprep.subr.bf16.mxu0 0
      %920 = vmatpush1.bf16.msra.mxu0 0
      %921 = vmatprep.subr.bf16.mxu0 0
      %922 = vmatpush1.bf16.msra.mxu0 0
      %923 = vmatprep.subr.bf16.mxu0 0
      %924 = vmatpush1.bf16.msra.mxu0 0
      %925 = vmatprep.subr.bf16.mxu0 0
      %926 = vmatpush1.bf16.msra.mxu0 0
      %927 = vmatprep.subr.bf16.mxu0 0
      %928 = vmatpush1.bf16.msra.mxu0 0
      %929 = vmatprep.subr.bf16.mxu0 0
      %930 = vmatpush1.bf16.msra.mxu0 0
      %931 = vmatprep.subr.bf16.mxu0 0
      %932 = vmatpush1.bf16.msra.mxu0 0
      %933 = vmatprep.subr.bf16.mxu0 0
      %934 = vmatpush1.bf16.msra.mxu0 0
      %935 = vmatprep.subr.bf16.mxu0 0
      %936 = vmatpush1.bf16.msra.mxu0 0
      %937 = vmatprep.subr.bf16.mxu0 0
      %938 = vmatpush1.bf16.msra.mxu0 0
      %939 = vmatprep.subr.bf16.mxu0 0
      %940 = vmatpush1.bf16.msra.mxu0 0
      %941 = vmatprep.mubr.bf16.mxu0 0
      %942 = vmatmul.mubr.bf16.gmra.mrb[0].mxu0 %v871
      %v943 = vpop.f32.mrb[0].mxu0
      %v944 = vadd.f32 %v798, %v943
      %v945 = vpop.f32.mrb[0].mxu0
      %v946 = vpop.f32.mrb[0].mxu0
      %v947 = vadd.f32 %v798, %v946
      %v948 = vpop.f32.mrb[0].mxu0
      %949 = vmatprep.mubr.bf16.mxu0 0
      %950 = vmatmul.mubr.bf16.gmra.mrb[0].mxu0 %v874
      %v951 = vpop.f32.mrb[0].mxu0
      %v952 = vadd.f32 %v798, %v951
      %v953 = vpop.f32.mrb[0].mxu0
      %v954 = vpop.f32.mrb[0].mxu0
      %v955 = vadd.f32 %v798, %v954
      %v956 = vpop.f32.mrb[0].mxu0
      %957 = vmatprep.mubr.bf16.mxu0 0
      %958 = vmatmul.mubr.bf16.gmra.mrb[0].mxu0 %v877
      %v959 = vpop.f32.mrb[0].mxu0
      %v960 = vadd.f32 %v798, %v959
      %v961 = vpop.f32.mrb[0].mxu0
      %v962 = vpop.f32.mrb[0].mxu0
      %v963 = vadd.f32 %v798, %v962
      %v964 = vpop.f32.mrb[0].mxu0
      %965 = vmatprep.mubr.bf16.mxu0 0
      %966 = vmatmul.mubr.bf16.gmra.mrb[0].mxu0 %v880
      %v967 = vpop.f32.mrb[0].mxu0
      %v968 = vadd.f32 %v798, %v967
      %v969 = vpop.f32.mrb[0].mxu0
      %v970 = vpop.f32.mrb[0].mxu0
      %v971 = vadd.f32 %v798, %v970
      %v972 = vpop.f32.mrb[0].mxu0
      %973 = vmatprep.mubr.bf16.mxu0 0
      %974 = vmatmul.mubr.bf16.gmra.mrb[0].mxu0 %v883
      %v975 = vpop.f32.mrb[0].mxu0
      %v976 = vadd.f32 %v798, %v975
      %v977 = vpop.f32.mrb[0].mxu0
      %v978 = vpop.f32.mrb[0].mxu0
      %v979 = vadd.f32 %v798, %v978
      %v980 = vpop.f32.mrb[0].mxu0
      %981 = vmatprep.mubr.bf16.mxu0 0
      %982 = vmatmul.mubr.bf16.gmra.mrb[0].mxu0 %v886
      %v983 = vpop.f32.mrb[0].mxu0
      %v984 = vadd.f32 %v798, %v983
      %v985 = vpop.f32.mrb[0].mxu0
      %v986 = vpop.f32.mrb[0].mxu0
      %v987 = vadd.f32 %v798, %v986
      %v988 = vpop.f32.mrb[0].mxu0
      %989 = vmatprep.mubr.bf16.mxu0 0
      %990 = vmatmul.mubr.bf16.gmra.mrb[0].mxu0 %v889
      %v991 = vpop.f32.mrb[0].mxu0
      %v992 = vadd.f32 %v798, %v991
      %v993 = vpop.f32.mrb[0].mxu0
      %v994 = vpop.f32.mrb[0].mxu0
      %v995 = vadd.f32 %v798, %v994
      %v996 = vpop.f32.mrb[0].mxu0
      %997 = vmatprep.mubr.bf16.mxu0 0
      %998 = vmatmul.mubr.bf16.gmra.mrb[0].mxu0 %v892
      %v999 = vpop.f32.mrb[0].mxu0
      %v1000 = vadd.f32 %v798, %v999
      %v1001 = vpop.f32.mrb[0].mxu0
      %v1002 = vpop.f32.mrb[0].mxu0
      %v1003 = vadd.f32 %v798, %v1002
      %v1004 = vpop.f32.mrb[0].mxu0
      %1005 = vmatprep.mubr.bf16.mxu0 0
      %1006 = vmatmul.mubr.bf16.gmra.mrb[0].mxu0 %v895
      %v1007 = vpop.f32.mrb[0].mxu0
      %v1008 = vadd.f32 %v798, %v1007
      %v1009 = vpop.f32.mrb[0].mxu0
      %v1010 = vpop.f32.mrb[0].mxu0
      %v1011 = vadd.f32 %v798, %v1010
      %v1012 = vpop.f32.mrb[0].mxu0
      %1013 = vmatprep.mubr.bf16.mxu0 0
      %1014 = vmatmul.mubr.bf16.gmra.mrb[0].mxu0 %v898
      %v1015 = vpop.f32.mrb[0].mxu0
      %v1016 = vadd.f32 %v798, %v1015
      %v1017 = vpop.f32.mrb[0].mxu0
      %v1018 = vpop.f32.mrb[0].mxu0
      %v1019 = vadd.f32 %v798, %v1018
      %v1020 = vpop.f32.mrb[0].mxu0
      %1021 = vmatprep.mubr.bf16.mxu0 0
      %1022 = vmatmul.mubr.bf16.gmra.mrb[0].mxu0 %v901
      %v1023 = vpop.f32.mrb[0].mxu0
      %v1024 = vadd.f32 %v798, %v1023
      %v1025 = vpop.f32.mrb[0].mxu0
      %v1026 = vpop.f32.mrb[0].mxu0
      %v1027 = vadd.f32 %v798, %v1026
      %v1028 = vpop.f32.mrb[0].mxu0
      %1029 = vmatprep.mubr.bf16.mxu0 0
      %1030 = vmatmul.mubr.bf16.gmra.mrb[0].mxu0 %v904
      %v1031 = vpop.f32.mrb[0].mxu0
      %v1032 = vadd.f32 %v798, %v1031
      %v1033 = vpop.f32.mrb[0].mxu0
      %v1034 = vpop.f32.mrb[0].mxu0
      %v1035 = vadd.f32 %v798, %v1034
      %v1036 = vpop.f32.mrb[0].mxu0
      %1037 = vmatprep.mubr.bf16.mxu0 0
      %1038 = vmatmul.mubr.bf16.gmra.mrb[0].mxu0 %v907
      %v1039 = vpop.f32.mrb[0].mxu0
      %v1040 = vadd.f32 %v798, %v1039
      %v1041 = vpop.f32.mrb[0].mxu0
      %v1042 = vpop.f32.mrb[0].mxu0
      %v1043 = vpop.f32.mrb[0].mxu0
      %1044 = vdwg.mxu0
      %v1045 = vmax.f32 %v944, 0.0
      %v1046 = vmax.f32 %v947, 0.0
      %v1047 = vmax.f32 %v952, 0.0
      %v1048 = vmax.f32 %v955, 0.0
      %v1049 = vmax.f32 %v960, 0.0
      %v1050 = vmax.f32 %v963, 0.0
      %v1051 = vmax.f32 %v968, 0.0
      %v1052 = vmax.f32 %v971, 0.0
      %v1053 = vmax.f32 %v976, 0.0
      %v1054 = vmax.f32 %v979, 0.0
      %v1055 = vmax.f32 %v984, 0.0
      %v1056 = vmax.f32 %v987, 0.0
      %v1057 = vmax.f32 %v992, 0.0
      %v1058 = vmax.f32 %v995, 0.0
      %v1059 = vmax.f32 %v1000, 0.0
      %v1060 = vmax.f32 %v1003, 0.0
      %v1061 = vmax.f32 %v1008, 0.0
      %v1062 = vmax.f32 %v1011, 0.0
      %v1063 = vmax.f32 %v1016, 0.0
      %v1064 = vmax.f32 %v1019, 0.0
      %v1065 = vmax.f32 %v1024, 0.0
      %v1066 = vmax.f32 %v1027, 0.0
      %v1067 = vmax.f32 %v1032, 0.0
      %v1068 = vmax.f32 %v1035, 0.0
      %v1069 = vmax.f32 %v1040, 0.0
      %v1070 = vpack.c.bf16 %v1046, %v1045
      %v1071 = vpack.c.bf16 %v1048, %v1047
      %v1072 = vpack.c.bf16 %v1050, %v1049
      %v1073 = vpack.c.bf16 %v1052, %v1051
      %v1074 = vpack.c.bf16 %v1054, %v1053
      %v1075 = vpack.c.bf16 %v1056, %v1055
      %v1076 = vpack.c.bf16 %v1058, %v1057
      %v1077 = vpack.c.bf16 %v1060, %v1059
      %v1078 = vpack.c.bf16 %v1062, %v1061
      %v1079 = vpack.c.bf16 %v1064, %v1063
      %v1080 = vpack.c.bf16 %v1066, %v1065
      %v1081 = vpack.c.bf16 %v1068, %v1067
      %v1082 = vpack.c.bf16 %v1069, %v1069
      %v1083 = vld [vmem:[%s1] sm:$0xff]
      %v1084 = vld [vmem:[%s1 + $0x8] sm:$0xff]
      %v1085 = vld [vmem:[%s1 + $0x10] sm:$0xff]
      %v1086 = vld [vmem:[%s1 + $0x18] sm:$0xff]
      %v1087 = vld [vmem:[%s1 + $0x20] sm:$0xff]
      %v1088 = vld [vmem:[%s1 + $0x28] sm:$0xff]
      %v1089 = vld [vmem:[%s1 + $0x30] sm:$0x11]
      %v1097 = vunpack.c.l.b16 %v1083
      %v1098 = vunpack.c.h.b16 %v1083
      %v1099 = vunpack.c.l.b16 %v1084
      %v1100 = vunpack.c.h.b16 %v1084
      %v1101 = vunpack.c.l.b16 %v1085
      %v1102 = vunpack.c.h.b16 %v1085
      %v1103 = vunpack.c.l.b16 %v1086
      %v1104 = vunpack.c.h.b16 %v1086
      %v1105 = vunpack.c.l.b16 %v1087
      %v1106 = vunpack.c.h.b16 %v1087
      %v1107 = vunpack.c.l.b16 %v1088
      %v1108 = vunpack.c.h.b16 %v1088
      %v1109 = vunpack.c.l.b16 %v1089
      %v1110 = vunpack.c.h.b16 %v1089
      %v1111 = vpack.c.b16 %v1099, %v1097
      %v1112 = vpack.c.b16 %v1100, %v1098
      %v1113 = vpack.c.b16 %v1103, %v1101
      %v1114 = vpack.c.b16 %v1104, %v1102
      %v1115 = vpack.c.b16 %v1107, %v1105
      %v1116 = vpack.c.b16 %v1108, %v1106
      %v1117 = vpack.c.b16 %v1109, %v1109
      %v1118 = vpack.c.b16 %v1110, %v1110
      %vm1123 = vcmask 556032
      %v1125 = vsel %vm1123, %v1112, 0
      %v1128 = vsel %vm1123, %v1114, 0
      %v1131 = vsel %vm1123, %v1116, 0
      %v1134 = vsel %vm1123, %v1118, 0
      %vm1136 = vcmask 1041408
      %v1138 = vsel %vm1136, %v1082, 0
      %1140 = vmatprep.subr.bf16.mxu0 0
      %1141 = vmatpush1.bf16.msra.mxu0 %v1070
      %1142 = vmatprep.subr.bf16.mxu0 0
      %1143 = vmatpush1.bf16.msra.mxu0 %v1071
      %1144 = vmatprep.subr.bf16.mxu0 0
      %1145 = vmatpush1.bf16.msra.mxu0 %v1072
      %1146 = vmatprep.subr.bf16.mxu0 0
      %1147 = vmatpush1.bf16.msra.mxu0 %v1073
      %1148 = vmatprep.subr.bf16.mxu0 0
      %1149 = vmatpush1.bf16.msra.mxu0 %v1074
      %1150 = vmatprep.subr.bf16.mxu0 0
      %1151 = vmatpush1.bf16.msra.mxu0 %v1075
      %1152 = vmatprep.subr.bf16.mxu0 0
      %1153 = vmatpush1.bf16.msra.mxu0 %v1076
      %1154 = vmatprep.subr.bf16.mxu0 0
      %1155 = vmatpush1.bf16.msra.mxu0 %v1077
      %1156 = vmatprep.subr.bf16.mxu0 0
      %1157 = vmatpush1.bf16.msra.mxu0 %v1078
      %1158 = vmatprep.subr.bf16.mxu0 0
      %1159 = vmatpush1.bf16.msra.mxu0 %v1079
      %1160 = vmatprep.subr.bf16.mxu0 0
      %1161 = vmatpush1.bf16.msra.mxu0 %v1080
      %1162 = vmatprep.subr.bf16.mxu0 0
      %1163 = vmatpush1.bf16.msra.mxu0 %v1081
      %1164 = vmatprep.subr.bf16.mxu0 0
      %1165 = vmatpush1.bf16.msra.mxu0 %v1138
      %1166 = vmatprep.subr.bf16.mxu0 0
      %1167 = vmatpush1.bf16.msra.mxu0 0
      %1168 = vmatprep.subr.bf16.mxu0 0
      %1169 = vmatpush1.bf16.msra.mxu0 0
      %1170 = vmatprep.subr.bf16.mxu0 0
      %1171 = vmatpush1.bf16.msra.mxu0 0
      %1172 = vmatprep.mubr.bf16.mxu0 %v1125
      %1173 = vmatmul.mubr.bf16.gmra.mrb[0].mxu0 %v1111
      %v1174 = vpop.f32.mrb[0].mxu0
      %v1175 = vadd.f32 0.0, %v1174
      %v1176 = vpop.f32.mrb[0].mxu0
      %v1177 = vpop.f32.mrb[0].mxu0
      %v1178 = vadd.f32 0.0, %v1177
      %v1179 = vpop.f32.mrb[0].mxu0
      %1180 = vmatprep.mubr.bf16.mxu0 %v1128
      %1181 = vmatmul.mubr.bf16.gmra.mrb[0].mxu0 %v1113
      %v1182 = vpop.f32.mrb[0].mxu0
      %v1183 = vadd.f32 0.0, %v1182
      %v1184 = vpop.f32.mrb[0].mxu0
      %v1185 = vpop.f32.mrb[0].mxu0
      %v1186 = vadd.f32 0.0, %v1185
      %v1187 = vpop.f32.mrb[0].mxu0
      %1188 = vmatprep.mubr.bf16.mxu0 %v1131
      %1189 = vmatmul.mubr.bf16.gmra.mrb[0].mxu0 %v1115
      %v1190 = vpop.f32.mrb[0].mxu0
      %v1191 = vadd.f32 0.0, %v1190
      %v1192 = vpop.f32.mrb[0].mxu0
      %v1193 = vpop.f32.mrb[0].mxu0
      %v1194 = vadd.f32 0.0, %v1193
      %v1195 = vpop.f32.mrb[0].mxu0
      %1196 = vmatprep.mubr.bf16.mxu0 %v1134
      %1197 = vmatmul.mubr.bf16.gmra.mrb[0].mxu0 %v1117
      %v1198 = vpop.f32.mrb[0].mxu0
      %v1199 = vadd.f32 0.0, %v1198
      %v1200 = vpop.f32.mrb[0].mxu0
      %v1201 = vpop.f32.mrb[0].mxu0
      %v1202 = vpop.f32.mrb[0].mxu0
      %1203 = vdwg.mxu0
      %v1204 = vpack.c.bf16 %v1178, %v1175
      %v1205 = vpack.c.bf16 %v1186, %v1183
      %v1206 = vpack.c.bf16 %v1194, %v1191
      %v1207 = vpack.c.bf16 %v1199, %v1199
      %v1208 = vld [vmem:[%s4] sm:$0xf]
      %s1209 = scalar_lea.vmem %s1, 56
      %v1210 = vld [vmem:[%s1209] sm:$0xff]
      %v1211 = vld [vmem:[%s1209 + $0x8] sm:$0xff]
      %v1212 = vld [vmem:[%s1209 + $0x10] sm:$0xff]
      %v1213 = vld [vmem:[%s1209 + $0x18] sm:$0xff]
      %v1214 = vld [vmem:[%s1209 + $0x20] sm:$0xff]
      %v1215 = vld [vmem:[%s1209 + $0x28] sm:$0xff]
      %v1216 = vld [vmem:[%s1209 + $0x30] sm:$0x11]
      %v1224 = vunpack.c.l.b16 %v1210
      %v1225 = vunpack.c.h.b16 %v1210
      %v1226 = vunpack.c.l.b16 %v1211
      %v1227 = vunpack.c.h.b16 %v1211
      %v1228 = vunpack.c.l.b16 %v1212
      %v1229 = vunpack.c.h.b16 %v1212
      %v1230 = vunpack.c.l.b16 %v1213
      %v1231 = vunpack.c.h.b16 %v1213
      %v1232 = vunpack.c.l.b16 %v1214
      %v1233 = vunpack.c.h.b16 %v1214
      %v1234 = vunpack.c.l.b16 %v1215
      %v1235 = vunpack.c.h.b16 %v1215
      %v1236 = vunpack.c.l.b16 %v1216
      %v1237 = vunpack.c.h.b16 %v1216
      %v1238 = vpack.c.b16 %v1226, %v1224
      %v1239 = vpack.c.b16 %v1227, %v1225
      %v1240 = vpack.c.b16 %v1230, %v1228
      %v1241 = vpack.c.b16 %v1231, %v1229
      %v1242 = vpack.c.b16 %v1234, %v1232
      %v1243 = vpack.c.b16 %v1235, %v1233
      %v1244 = vpack.c.b16 %v1236, %v1236
      %v1245 = vpack.c.b16 %v1237, %v1237
      %v1251 = vsel %vm1123, %v1239, 0
      %v1254 = vsel %vm1123, %v1241, 0
      %v1257 = vsel %vm1123, %v1243, 0
      %v1260 = vsel %vm1123, %v1245, 0
      %1262 = vmatprep.subr.bf16.mxu0 0
      %1263 = vmatpush1.bf16.msra.mxu0 %v1070
      %1264 = vmatprep.subr.bf16.mxu0 0
      %1265 = vmatpush1.bf16.msra.mxu0 %v1071
      %1266 = vmatprep.subr.bf16.mxu0 0
      %1267 = vmatpush1.bf16.msra.mxu0 %v1072
      %1268 = vmatprep.subr.bf16.mxu0 0
      %1269 = vmatpush1.bf16.msra.mxu0 %v1073
      %1270 = vmatprep.subr.bf16.mxu0 0
      %1271 = vmatpush1.bf16.msra.mxu0 %v1074
      %1272 = vmatprep.subr.bf16.mxu0 0
      %1273 = vmatpush1.bf16.msra.mxu0 %v1075
      %1274 = vmatprep.subr.bf16.mxu0 0
      %1275 = vmatpush1.bf16.msra.mxu0 %v1076
      %1276 = vmatprep.subr.bf16.mxu0 0
      %1277 = vmatpush1.bf16.msra.mxu0 %v1077
      %1278 = vmatprep.subr.bf16.mxu0 0
      %1279 = vmatpush1.bf16.msra.mxu0 %v1078
      %1280 = vmatprep.subr.bf16.mxu0 0
      %1281 = vmatpush1.bf16.msra.mxu0 %v1079
      %1282 = vmatprep.subr.bf16.mxu0 0
      %1283 = vmatpush1.bf16.msra.mxu0 %v1080
      %1284 = vmatprep.subr.bf16.mxu0 0
      %1285 = vmatpush1.bf16.msra.mxu0 %v1081
      %1286 = vmatprep.subr.bf16.mxu0 0
      %1287 = vmatpush1.bf16.msra.mxu0 %v1138
      %1288 = vmatprep.subr.bf16.mxu0 0
      %1289 = vmatpush1.bf16.msra.mxu0 0
      %1290 = vmatprep.subr.bf16.mxu0 0
      %1291 = vmatpush1.bf16.msra.mxu0 0
      %1292 = vmatprep.subr.bf16.mxu0 0
      %1293 = vmatpush1.bf16.msra.mxu0 0
      %1294 = vmatprep.mubr.bf16.mxu0 %v1251
      %1295 = vmatmul.mubr.bf16.gmra.mrb[0].mxu0 %v1238
      %v1296 = vpop.f32.mrb[0].mxu0
      %v1297 = vadd.f32 0.0, %v1296
      %v1298 = vpop.f32.mrb[0].mxu0
      %v1299 = vpop.f32.mrb[0].mxu0
      %v1300 = vadd.f32 0.0, %v1299
      %v1301 = vpop.f32.mrb[0].mxu0
      %1302 = vmatprep.mubr.bf16.mxu0 %v1254
      %1303 = vmatmul.mubr.bf16.gmra.mrb[0].mxu0 %v1240
      %v1304 = vpop.f32.mrb[0].mxu0
      %v1305 = vadd.f32 0.0, %v1304
      %v1306 = vpop.f32.mrb[0].mxu0
      %v1307 = vpop.f32.mrb[0].mxu0
      %v1308 = vadd.f32 0.0, %v1307
      %v1309 = vpop.f32.mrb[0].mxu0
      %1310 = vmatprep.mubr.bf16.mxu0 %v1257
      %1311 = vmatmul.mubr.bf16.gmra.mrb[0].mxu0 %v1242
      %v1312 = vpop.f32.mrb[0].mxu0
      %v1313 = vadd.f32 0.0, %v1312
      %v1314 = vpop.f32.mrb[0].mxu0
      %v1315 = vpop.f32.mrb[0].mxu0
      %v1316 = vadd.f32 0.0, %v1315
      %v1317 = vpop.f32.mrb[0].mxu0
      %1318 = vmatprep.mubr.bf16.mxu0 %v1260
      %1319 = vmatmul.mubr.bf16.gmra.mrb[0].mxu0 %v1244
      %v1320 = vpop.f32.mrb[0].mxu0
      %v1321 = vadd.f32 0.0, %v1320
      %v1322 = vpop.f32.mrb[0].mxu0
      %v1323 = vpop.f32.mrb[0].mxu0
      %v1324 = vpop.f32.mrb[0].mxu0
      %1325 = vdwg.mxu0
      %v1326 = vpack.c.bf16 %v1300, %v1297
      %v1327 = vpack.c.bf16 %v1308, %v1305
      %v1328 = vpack.c.bf16 %v1316, %v1313
      %v1329 = vpack.c.bf16 %v1321, %v1321
      %s1330 = scalar_lea.vmem %s4, 4
      %v1331 = vld [vmem:[%s1330] sm:$0xf]
      %vm1332 = vcmask 64512
      %v1334 = vsel %vm1332, %v1326, 0
      %v1337 = vsel %vm1332, %v1327, 0
      %v1340 = vsel %vm1332, %v1328, 0
      %v1343 = vsel %vm1332, %v1329, 0
      %vm1345 = vcmask 1043456
      %v1347 = vsel %vm1345, %v1331, 0
      %1349 = vmatprep.subr.bf16.mxu0 0
      %1350 = vmatpush1.bf16.msra.mxu0 %v1347
      %1351 = vmatprep.subr.bf16.mxu0 0
      %1352 = vmatpush1.bf16.msra.mxu0 0
      %1353 = vmatprep.subr.bf16.mxu0 0
      %1354 = vmatpush1.bf16.msra.mxu0 0
      %1355 = vmatprep.subr.bf16.mxu0 0
      %1356 = vmatpush1.bf16.msra.mxu0 0
      %1357 = vmatprep.subr.bf16.mxu0 0
      %1358 = vmatpush1.bf16.msra.mxu0 0
      %1359 = vmatprep.subr.bf16.mxu0 0
      %1360 = vmatpush1.bf16.msra.mxu0 0
      %1361 = vmatprep.subr.bf16.mxu0 0
      %1362 = vmatpush1.bf16.msra.mxu0 0
      %1363 = vmatprep.subr.bf16.mxu0 0
      %1364 = vmatpush1.bf16.msra.mxu0 0
      %1365 = vmatprep.subr.bf16.mxu0 0
      %1366 = vmatpush1.bf16.msra.mxu0 0
      %1367 = vmatprep.subr.bf16.mxu0 0
      %1368 = vmatpush1.bf16.msra.mxu0 0
      %1369 = vmatprep.subr.bf16.mxu0 0
      %1370 = vmatpush1.bf16.msra.mxu0 0
      %1371 = vmatprep.subr.bf16.mxu0 0
      %1372 = vmatpush1.bf16.msra.mxu0 0
      %1373 = vmatprep.subr.bf16.mxu0 0
      %1374 = vmatpush1.bf16.msra.mxu0 0
      %1375 = vmatprep.subr.bf16.mxu0 0
      %1376 = vmatpush1.bf16.msra.mxu0 0
      %1377 = vmatprep.subr.bf16.mxu0 0
      %1378 = vmatpush1.bf16.msra.mxu0 0
      %1379 = vmatprep.subr.bf16.mxu0 0
      %1380 = vmatpush1.bf16.msra.mxu0 0
      %1381 = vmatprep.mubr.bf16.mxu0 0
      %1382 = vmatmul.mubr.bf16.gmra.mrb[0].mxu0 %v1334
      %v1383 = vpop.f32.mrb[0].mxu0
      %v1384 = vadd.f32 0.0, %v1383
      %v1385 = vpop.f32.mrb[0].mxu0
      %v1386 = vpop.f32.mrb[0].mxu0
      %v1387 = vadd.f32 0.0, %v1386
      %v1388 = vpop.f32.mrb[0].mxu0
      %1389 = vmatprep.mubr.bf16.mxu0 0
      %1390 = vmatmul.mubr.bf16.gmra.mrb[0].mxu0 %v1337
      %v1391 = vpop.f32.mrb[0].mxu0
      %v1392 = vadd.f32 0.0, %v1391
      %v1393 = vpop.f32.mrb[0].mxu0
      %v1394 = vpop.f32.mrb[0].mxu0
      %v1395 = vadd.f32 0.0, %v1394
      %v1396 = vpop.f32.mrb[0].mxu0
      %1397 = vmatprep.mubr.bf16.mxu0 0
      %1398 = vmatmul.mubr.bf16.gmra.mrb[0].mxu0 %v1340
      %v1399 = vpop.f32.mrb[0].mxu0
      %v1400 = vadd.f32 0.0, %v1399
      %v1401 = vpop.f32.mrb[0].mxu0
      %v1402 = vpop.f32.mrb[0].mxu0
      %v1403 = vadd.f32 0.0, %v1402
      %v1404 = vpop.f32.mrb[0].mxu0
      %1405 = vmatprep.mubr.bf16.mxu0 0
      %1406 = vmatmul.mubr.bf16.gmra.mrb[0].mxu0 %v1343
      %v1407 = vpop.f32.mrb[0].mxu0
      %v1408 = vadd.f32 0.0, %v1407
      %v1409 = vpop.f32.mrb[0].mxu0
      %v1410 = vpop.f32.mrb[0].mxu0
      %v1411 = vpop.f32.mrb[0].mxu0
      %1412 = vdwg.mxu0
      %v1414 = vsel %vm1332, %v1204, 0
      %v1417 = vsel %vm1332, %v1205, 0
      %v1420 = vsel %vm1332, %v1206, 0
      %v1423 = vsel %vm1332, %v1207, 0
      %v1426 = vsel %vm1345, %v1208, 0
      %1428 = vmatprep.subr.bf16.mxu0 0
      %1429 = vmatpush1.bf16.msra.mxu0 %v1426
      %1430 = vmatprep.subr.bf16.mxu0 0
      %1431 = vmatpush1.bf16.msra.mxu0 0
      %1432 = vmatprep.subr.bf16.mxu0 0
      %1433 = vmatpush1.bf16.msra.mxu0 0
      %1434 = vmatprep.subr.bf16.mxu0 0
      %1435 = vmatpush1.bf16.msra.mxu0 0
      %1436 = vmatprep.subr.bf16.mxu0 0
      %1437 = vmatpush1.bf16.msra.mxu0 0
      %1438 = vmatprep.subr.bf16.mxu0 0
      %1439 = vmatpush1.bf16.msra.mxu0 0
      %1440 = vmatprep.subr.bf16.mxu0 0
      %1441 = vmatpush1.bf16.msra.mxu0 0
      %1442 = vmatprep.subr.bf16.mxu0 0
      %1443 = vmatpush1.bf16.msra.mxu0 0
      %1444 = vmatprep.subr.bf16.mxu0 0
      %1445 = vmatpush1.bf16.msra.mxu0 0
      %1446 = vmatprep.subr.bf16.mxu0 0
      %1447 = vmatpush1.bf16.msra.mxu0 0
      %1448 = vmatprep.subr.bf16.mxu0 0
      %1449 = vmatpush1.bf16.msra.mxu0 0
      %1450 = vmatprep.subr.bf16.mxu0 0
      %1451 = vmatpush1.bf16.msra.mxu0 0
      %1452 = vmatprep.subr.bf16.mxu0 0
      %1453 = vmatpush1.bf16.msra.mxu0 0
      %1454 = vmatprep.subr.bf16.mxu0 0
      %1455 = vmatpush1.bf16.msra.mxu0 0
      %1456 = vmatprep.subr.bf16.mxu0 0
      %1457 = vmatpush1.bf16.msra.mxu0 0
      %1458 = vmatprep.subr.bf16.mxu0 0
      %1459 = vmatpush1.bf16.msra.mxu0 0
      %1460 = vmatprep.mubr.bf16.mxu0 0
      %1461 = vmatmul.mubr.bf16.gmra.mrb[0].mxu0 %v1414
      %v1462 = vpop.f32.mrb[0].mxu0
      %v1463 = vadd.f32 %v1384, %v1462
      %v1464 = vpop.f32.mrb[0].mxu0
      %v1465 = vpop.f32.mrb[0].mxu0
      %v1466 = vadd.f32 %v1387, %v1465
      %v1467 = vpop.f32.mrb[0].mxu0
      %1468 = vmatprep.mubr.bf16.mxu0 0
      %1469 = vmatmul.mubr.bf16.gmra.mrb[0].mxu0 %v1417
      %v1470 = vpop.f32.mrb[0].mxu0
      %v1471 = vadd.f32 %v1392, %v1470
      %v1472 = vpop.f32.mrb[0].mxu0
      %v1473 = vpop.f32.mrb[0].mxu0
      %v1474 = vadd.f32 %v1395, %v1473
      %v1475 = vpop.f32.mrb[0].mxu0
      %1476 = vmatprep.mubr.bf16.mxu0 0
      %1477 = vmatmul.mubr.bf16.gmra.mrb[0].mxu0 %v1420
      %v1478 = vpop.f32.mrb[0].mxu0
      %v1479 = vadd.f32 %v1400, %v1478
      %v1480 = vpop.f32.mrb[0].mxu0
      %v1481 = vpop.f32.mrb[0].mxu0
      %v1482 = vadd.f32 %v1403, %v1481
      %v1483 = vpop.f32.mrb[0].mxu0
      %1484 = vmatprep.mubr.bf16.mxu0 0
      %1485 = vmatmul.mubr.bf16.gmra.mrb[0].mxu0 %v1423
      %v1486 = vpop.f32.mrb[0].mxu0
      %v1487 = vadd.f32 %v1408, %v1486
      %v1488 = vpop.f32.mrb[0].mxu0
      %v1489 = vpop.f32.mrb[0].mxu0
      %v1490 = vpop.f32.mrb[0].mxu0
      %1491 = vdwg.mxu0
      %s1492 = scalar_lea.vmem %s1, 112
      %v1493 = vld [vmem:[%s1492] sm:$0xff]
      %v1494 = vld [vmem:[%s1492 + $0x8] sm:$0xff]
      %v1495 = vld [vmem:[%s1492 + $0x10] sm:$0xff]
      %v1496 = vld [vmem:[%s1492 + $0x18] sm:$0xff]
      %v1497 = vld [vmem:[%s1492 + $0x20] sm:$0xff]
      %v1498 = vld [vmem:[%s1492 + $0x28] sm:$0xff]
      %v1499 = vld [vmem:[%s1492 + $0x30] sm:$0x11]
      %v1507 = vunpack.c.l.b16 %v1493
      %v1508 = vunpack.c.h.b16 %v1493
      %v1509 = vunpack.c.l.b16 %v1494
      %v1510 = vunpack.c.h.b16 %v1494
      %v1511 = vunpack.c.l.b16 %v1495
      %v1512 = vunpack.c.h.b16 %v1495
      %v1513 = vunpack.c.l.b16 %v1496
      %v1514 = vunpack.c.h.b16 %v1496
      %v1515 = vunpack.c.l.b16 %v1497
      %v1516 = vunpack.c.h.b16 %v1497
      %v1517 = vunpack.c.l.b16 %v1498
      %v1518 = vunpack.c.h.b16 %v1498
      %v1519 = vunpack.c.l.b16 %v1499
      %v1520 = vunpack.c.h.b16 %v1499
      %v1521 = vpack.c.b16 %v1509, %v1507
      %v1522 = vpack.c.b16 %v1510, %v1508
      %v1523 = vpack.c.b16 %v1513, %v1511
      %v1524 = vpack.c.b16 %v1514, %v1512
      %v1525 = vpack.c.b16 %v1517, %v1515
      %v1526 = vpack.c.b16 %v1518, %v1516
      %v1527 = vpack.c.b16 %v1519, %v1519
      %v1528 = vpack.c.b16 %v1520, %v1520
      %v1534 = vsel %vm1123, %v1522, 0
      %v1537 = vsel %vm1123, %v1524, 0
      %v1540 = vsel %vm1123, %v1526, 0
      %v1543 = vsel %vm1123, %v1528, 0
      %1545 = vmatprep.subr.bf16.mxu0 0
      %1546 = vmatpush1.bf16.msra.mxu0 %v1070
      %1547 = vmatprep.subr.bf16.mxu0 0
      %1548 = vmatpush1.bf16.msra.mxu0 %v1071
      %1549 = vmatprep.subr.bf16.mxu0 0
      %1550 = vmatpush1.bf16.msra.mxu0 %v1072
      %1551 = vmatprep.subr.bf16.mxu0 0
      %1552 = vmatpush1.bf16.msra.mxu0 %v1073
      %1553 = vmatprep.subr.bf16.mxu0 0
      %1554 = vmatpush1.bf16.msra.mxu0 %v1074
      %1555 = vmatprep.subr.bf16.mxu0 0
      %1556 = vmatpush1.bf16.msra.mxu0 %v1075
      %1557 = vmatprep.subr.bf16.mxu0 0
      %1558 = vmatpush1.bf16.msra.mxu0 %v1076
      %1559 = vmatprep.subr.bf16.mxu0 0
      %1560 = vmatpush1.bf16.msra.mxu0 %v1077
      %1561 = vmatprep.subr.bf16.mxu0 0
      %1562 = vmatpush1.bf16.msra.mxu0 %v1078
      %1563 = vmatprep.subr.bf16.mxu0 0
      %1564 = vmatpush1.bf16.msra.mxu0 %v1079
      %1565 = vmatprep.subr.bf16.mxu0 0
      %1566 = vmatpush1.bf16.msra.mxu0 %v1080
      %1567 = vmatprep.subr.bf16.mxu0 0
      %1568 = vmatpush1.bf16.msra.mxu0 %v1081
      %1569 = vmatprep.subr.bf16.mxu0 0
      %1570 = vmatpush1.bf16.msra.mxu0 %v1138
      %1571 = vmatprep.subr.bf16.mxu0 0
      %1572 = vmatpush1.bf16.msra.mxu0 0
      %1573 = vmatprep.subr.bf16.mxu0 0
      %1574 = vmatpush1.bf16.msra.mxu0 0
      %1575 = vmatprep.subr.bf16.mxu0 0
      %1576 = vmatpush1.bf16.msra.mxu0 0
      %1577 = vmatprep.mubr.bf16.mxu0 %v1534
      %1578 = vmatmul.mubr.bf16.gmra.mrb[0].mxu0 %v1521
      %v1579 = vpop.f32.mrb[0].mxu0
      %v1580 = vadd.f32 0.0, %v1579
      %v1581 = vpop.f32.mrb[0].mxu0
      %v1582 = vpop.f32.mrb[0].mxu0
      %v1583 = vadd.f32 0.0, %v1582
      %v1584 = vpop.f32.mrb[0].mxu0
      %1585 = vmatprep.mubr.bf16.mxu0 %v1537
      %1586 = vmatmul.mubr.bf16.gmra.mrb[0].mxu0 %v1523
      %v1587 = vpop.f32.mrb[0].mxu0
      %v1588 = vadd.f32 0.0, %v1587
      %v1589 = vpop.f32.mrb[0].mxu0
      %v1590 = vpop.f32.mrb[0].mxu0
      %v1591 = vadd.f32 0.0, %v1590
      %v1592 = vpop.f32.mrb[0].mxu0
      %1593 = vmatprep.mubr.bf16.mxu0 %v1540
      %1594 = vmatmul.mubr.bf16.gmra.mrb[0].mxu0 %v1525
      %v1595 = vpop.f32.mrb[0].mxu0
      %v1596 = vadd.f32 0.0, %v1595
      %v1597 = vpop.f32.mrb[0].mxu0
      %v1598 = vpop.f32.mrb[0].mxu0
      %v1599 = vadd.f32 0.0, %v1598
      %v1600 = vpop.f32.mrb[0].mxu0
      %1601 = vmatprep.mubr.bf16.mxu0 %v1543
      %1602 = vmatmul.mubr.bf16.gmra.mrb[0].mxu0 %v1527
      %v1603 = vpop.f32.mrb[0].mxu0
      %v1604 = vadd.f32 0.0, %v1603
      %v1605 = vpop.f32.mrb[0].mxu0
      %v1606 = vpop.f32.mrb[0].mxu0
      %v1607 = vpop.f32.mrb[0].mxu0
      %1608 = vdwg.mxu0
      %v1609 = vpack.c.bf16 %v1583, %v1580
      %v1610 = vpack.c.bf16 %v1591, %v1588
      %v1611 = vpack.c.bf16 %v1599, %v1596
      %v1612 = vpack.c.bf16 %v1604, %v1604
      %s1613 = scalar_lea.vmem %s4, 8
      %v1614 = vld [vmem:[%s1613] sm:$0xf]
      %v1616 = vsel %vm1332, %v1609, 0
      %v1619 = vsel %vm1332, %v1610, 0
      %v1622 = vsel %vm1332, %v1611, 0
      %v1625 = vsel %vm1332, %v1612, 0
      %v1628 = vsel %vm1345, %v1614, 0
      %1630 = vmatprep.subr.bf16.mxu0 0
      %1631 = vmatpush1.bf16.msra.mxu0 %v1628
      %1632 = vmatprep.subr.bf16.mxu0 0
      %1633 = vmatpush1.bf16.msra.mxu0 0
      %1634 = vmatprep.subr.bf16.mxu0 0
      %1635 = vmatpush1.bf16.msra.mxu0 0
      %1636 = vmatprep.subr.bf16.mxu0 0
      %1637 = vmatpush1.bf16.msra.mxu0 0
      %1638 = vmatprep.subr.bf16.mxu0 0
      %1639 = vmatpush1.bf16.msra.mxu0 0
      %1640 = vmatprep.subr.bf16.mxu0 0
      %1641 = vmatpush1.bf16.msra.mxu0 0
      %1642 = vmatprep.subr.bf16.mxu0 0
      %1643 = vmatpush1.bf16.msra.mxu0 0
      %1644 = vmatprep.subr.bf16.mxu0 0
      %1645 = vmatpush1.bf16.msra.mxu0 0
      %1646 = vmatprep.subr.bf16.mxu0 0
      %1647 = vmatpush1.bf16.msra.mxu0 0
      %1648 = vmatprep.subr.bf16.mxu0 0
      %1649 = vmatpush1.bf16.msra.mxu0 0
      %1650 = vmatprep.subr.bf16.mxu0 0
      %1651 = vmatpush1.bf16.msra.mxu0 0
      %1652 = vmatprep.subr.bf16.mxu0 0
      %1653 = vmatpush1.bf16.msra.mxu0 0
      %1654 = vmatprep.subr.bf16.mxu0 0
      %1655 = vmatpush1.bf16.msra.mxu0 0
      %1656 = vmatprep.subr.bf16.mxu0 0
      %1657 = vmatpush1.bf16.msra.mxu0 0
      %1658 = vmatprep.subr.bf16.mxu0 0
      %1659 = vmatpush1.bf16.msra.mxu0 0
      %1660 = vmatprep.subr.bf16.mxu0 0
      %1661 = vmatpush1.bf16.msra.mxu0 0
      %1662 = vmatprep.mubr.bf16.mxu0 0
      %1663 = vmatmul.mubr.bf16.gmra.mrb[0].mxu0 %v1616
      %v1664 = vpop.f32.mrb[0].mxu0
      %v1665 = vadd.f32 0.0, %v1664
      %v1666 = vpop.f32.mrb[0].mxu0
      %v1667 = vpop.f32.mrb[0].mxu0
      %v1668 = vadd.f32 0.0, %v1667
      %v1669 = vpop.f32.mrb[0].mxu0
      %1670 = vmatprep.mubr.bf16.mxu0 0
      %1671 = vmatmul.mubr.bf16.gmra.mrb[0].mxu0 %v1619
      %v1672 = vpop.f32.mrb[0].mxu0
      %v1673 = vadd.f32 0.0, %v1672
      %v1674 = vpop.f32.mrb[0].mxu0
      %v1675 = vpop.f32.mrb[0].mxu0
      %v1676 = vadd.f32 0.0, %v1675
      %v1677 = vpop.f32.mrb[0].mxu0
      %1678 = vmatprep.mubr.bf16.mxu0 0
      %1679 = vmatmul.mubr.bf16.gmra.mrb[0].mxu0 %v1622
      %v1680 = vpop.f32.mrb[0].mxu0
      %v1681 = vadd.f32 0.0, %v1680
      %v1682 = vpop.f32.mrb[0].mxu0
      %v1683 = vpop.f32.mrb[0].mxu0
      %v1684 = vadd.f32 0.0, %v1683
      %v1685 = vpop.f32.mrb[0].mxu0
      %1686 = vmatprep.mubr.bf16.mxu0 0
      %1687 = vmatmul.mubr.bf16.gmra.mrb[0].mxu0 %v1625
      %v1688 = vpop.f32.mrb[0].mxu0
      %v1689 = vadd.f32 0.0, %v1688
      %v1690 = vpop.f32.mrb[0].mxu0
      %v1691 = vpop.f32.mrb[0].mxu0
      %v1692 = vpop.f32.mrb[0].mxu0
      %1693 = vdwg.mxu0
      %v1694 = vadd.f32 %v1463, %v1665
      %v1695 = vadd.f32 %v1466, %v1668
      %v1696 = vadd.f32 %v1471, %v1673
      %v1697 = vadd.f32 %v1474, %v1676
      %v1698 = vadd.f32 %v1479, %v1681
      %v1699 = vadd.f32 %v1482, %v1684
      %v1700 = vadd.f32 %v1487, %v1689
      %s1701 = scalar_lea.vmem %s1, 168
      %v1702 = vld [vmem:[%s1701] sm:$0xff]
      %v1703 = vld [vmem:[%s1701 + $0x8] sm:$0xff]
      %v1704 = vld [vmem:[%s1701 + $0x10] sm:$0xff]
      %v1705 = vld [vmem:[%s1701 + $0x18] sm:$0xff]
      %v1706 = vld [vmem:[%s1701 + $0x20] sm:$0xff]
      %v1707 = vld [vmem:[%s1701 + $0x28] sm:$0xff]
      %v1708 = vld [vmem:[%s1701 + $0x30] sm:$0x11]
      %v1716 = vunpack.c.l.b16 %v1702
      %v1717 = vunpack.c.h.b16 %v1702
      %v1718 = vunpack.c.l.b16 %v1703
      %v1719 = vunpack.c.h.b16 %v1703
      %v1720 = vunpack.c.l.b16 %v1704
      %v1721 = vunpack.c.h.b16 %v1704
      %v1722 = vunpack.c.l.b16 %v1705
      %v1723 = vunpack.c.h.b16 %v1705
      %v1724 = vunpack.c.l.b16 %v1706
      %v1725 = vunpack.c.h.b16 %v1706
      %v1726 = vunpack.c.l.b16 %v1707
      %v1727 = vunpack.c.h.b16 %v1707
      %v1728 = vunpack.c.l.b16 %v1708
      %v1729 = vunpack.c.h.b16 %v1708
      %v1730 = vpack.c.b16 %v1718, %v1716
      %v1731 = vpack.c.b16 %v1719, %v1717
      %v1732 = vpack.c.b16 %v1722, %v1720
      %v1733 = vpack.c.b16 %v1723, %v1721
      %v1734 = vpack.c.b16 %v1726, %v1724
      %v1735 = vpack.c.b16 %v1727, %v1725
      %v1736 = vpack.c.b16 %v1728, %v1728
      %v1737 = vpack.c.b16 %v1729, %v1729
      %v1743 = vsel %vm1123, %v1731, 0
      %v1746 = vsel %vm1123, %v1733, 0
      %v1749 = vsel %vm1123, %v1735, 0
      %v1752 = vsel %vm1123, %v1737, 0
      %1754 = vmatprep.subr.bf16.mxu0 0
      %1755 = vmatpush1.bf16.msra.mxu0 %v1070
      %1756 = vmatprep.subr.bf16.mxu0 0
      %1757 = vmatpush1.bf16.msra.mxu0 %v1071
      %1758 = vmatprep.subr.bf16.mxu0 0
      %1759 = vmatpush1.bf16.msra.mxu0 %v1072
      %1760 = vmatprep.subr.bf16.mxu0 0
      %1761 = vmatpush1.bf16.msra.mxu0 %v1073
      %1762 = vmatprep.subr.bf16.mxu0 0
      %1763 = vmatpush1.bf16.msra.mxu0 %v1074
      %1764 = vmatprep.subr.bf16.mxu0 0
      %1765 = vmatpush1.bf16.msra.mxu0 %v1075
      %1766 = vmatprep.subr.bf16.mxu0 0
      %1767 = vmatpush1.bf16.msra.mxu0 %v1076
      %1768 = vmatprep.subr.bf16.mxu0 0
      %1769 = vmatpush1.bf16.msra.mxu0 %v1077
      %1770 = vmatprep.subr.bf16.mxu0 0
      %1771 = vmatpush1.bf16.msra.mxu0 %v1078
      %1772 = vmatprep.subr.bf16.mxu0 0
      %1773 = vmatpush1.bf16.msra.mxu0 %v1079
      %1774 = vmatprep.subr.bf16.mxu0 0
      %1775 = vmatpush1.bf16.msra.mxu0 %v1080
      %1776 = vmatprep.subr.bf16.mxu0 0
      %1777 = vmatpush1.bf16.msra.mxu0 %v1081
      %1778 = vmatprep.subr.bf16.mxu0 0
      %1779 = vmatpush1.bf16.msra.mxu0 %v1138
      %1780 = vmatprep.subr.bf16.mxu0 0
      %1781 = vmatpush1.bf16.msra.mxu0 0
      %1782 = vmatprep.subr.bf16.mxu0 0
      %1783 = vmatpush1.bf16.msra.mxu0 0
      %1784 = vmatprep.subr.bf16.mxu0 0
      %1785 = vmatpush1.bf16.msra.mxu0 0
      %1786 = vmatprep.mubr.bf16.mxu0 %v1743
      %1787 = vmatmul.mubr.bf16.gmra.mrb[0].mxu0 %v1730
      %v1788 = vpop.f32.mrb[0].mxu0
      %v1789 = vadd.f32 0.0, %v1788
      %v1790 = vpop.f32.mrb[0].mxu0
      %v1791 = vpop.f32.mrb[0].mxu0
      %v1792 = vadd.f32 0.0, %v1791
      %v1793 = vpop.f32.mrb[0].mxu0
      %1794 = vmatprep.mubr.bf16.mxu0 %v1746
      %1795 = vmatmul.mubr.bf16.gmra.mrb[0].mxu0 %v1732
      %v1796 = vpop.f32.mrb[0].mxu0
      %v1797 = vadd.f32 0.0, %v1796
      %v1798 = vpop.f32.mrb[0].mxu0
      %v1799 = vpop.f32.mrb[0].mxu0
      %v1800 = vadd.f32 0.0, %v1799
      %v1801 = vpop.f32.mrb[0].mxu0
      %1802 = vmatprep.mubr.bf16.mxu0 %v1749
      %1803 = vmatmul.mubr.bf16.gmra.mrb[0].mxu0 %v1734
      %v1804 = vpop.f32.mrb[0].mxu0
      %v1805 = vadd.f32 0.0, %v1804
      %v1806 = vpop.f32.mrb[0].mxu0
      %v1807 = vpop.f32.mrb[0].mxu0
      %v1808 = vadd.f32 0.0, %v1807
      %v1809 = vpop.f32.mrb[0].mxu0
      %1810 = vmatprep.mubr.bf16.mxu0 %v1752
      %1811 = vmatmul.mubr.bf16.gmra.mrb[0].mxu0 %v1736
      %v1812 = vpop.f32.mrb[0].mxu0
      %v1813 = vadd.f32 0.0, %v1812
      %v1814 = vpop.f32.mrb[0].mxu0
      %v1815 = vpop.f32.mrb[0].mxu0
      %v1816 = vpop.f32.mrb[0].mxu0
      %1817 = vdwg.mxu0
      %v1818 = vpack.c.bf16 %v1792, %v1789
      %v1819 = vpack.c.bf16 %v1800, %v1797
      %v1820 = vpack.c.bf16 %v1808, %v1805
      %v1821 = vpack.c.bf16 %v1813, %v1813
      %s1822 = scalar_lea.vmem %s4, 12
      %v1823 = vld [vmem:[%s1822] sm:$0xf]
      %v1825 = vsel %vm1332, %v1818, 0
      %v1828 = vsel %vm1332, %v1819, 0
      %v1831 = vsel %vm1332, %v1820, 0
      %v1834 = vsel %vm1332, %v1821, 0
      %v1837 = vsel %vm1345, %v1823, 0
      %1839 = vmatprep.subr.bf16.mxu0 0
      %1840 = vmatpush1.bf16.msra.mxu0 %v1837
      %1841 = vmatprep.subr.bf16.mxu0 0
      %1842 = vmatpush1.bf16.msra.mxu0 0
      %1843 = vmatprep.subr.bf16.mxu0 0
      %1844 = vmatpush1.bf16.msra.mxu0 0
      %1845 = vmatprep.subr.bf16.mxu0 0
      %1846 = vmatpush1.bf16.msra.mxu0 0
      %1847 = vmatprep.subr.bf16.mxu0 0
      %1848 = vmatpush1.bf16.msra.mxu0 0
      %1849 = vmatprep.subr.bf16.mxu0 0
      %1850 = vmatpush1.bf16.msra.mxu0 0
      %1851 = vmatprep.subr.bf16.mxu0 0
      %1852 = vmatpush1.bf16.msra.mxu0 0
      %1853 = vmatprep.subr.bf16.mxu0 0
      %1854 = vmatpush1.bf16.msra.mxu0 0
      %1855 = vmatprep.subr.bf16.mxu0 0
      %1856 = vmatpush1.bf16.msra.mxu0 0
      %1857 = vmatprep.subr.bf16.mxu0 0
      %1858 = vmatpush1.bf16.msra.mxu0 0
      %1859 = vmatprep.subr.bf16.mxu0 0
      %1860 = vmatpush1.bf16.msra.mxu0 0
      %1861 = vmatprep.subr.bf16.mxu0 0
      %1862 = vmatpush1.bf16.msra.mxu0 0
      %1863 = vmatprep.subr.bf16.mxu0 0
      %1864 = vmatpush1.bf16.msra.mxu0 0
      %1865 = vmatprep.subr.bf16.mxu0 0
      %1866 = vmatpush1.bf16.msra.mxu0 0
      %1867 = vmatprep.subr.bf16.mxu0 0
      %1868 = vmatpush1.bf16.msra.mxu0 0
      %1869 = vmatprep.subr.bf16.mxu0 0
      %1870 = vmatpush1.bf16.msra.mxu0 0
      %1871 = vmatprep.mubr.bf16.mxu0 0
      %1872 = vmatmul.mubr.bf16.gmra.mrb[0].mxu0 %v1825
      %v1873 = vpop.f32.mrb[0].mxu0
      %v1874 = vadd.f32 0.0, %v1873
      %v1875 = vpop.f32.mrb[0].mxu0
      %v1876 = vpop.f32.mrb[0].mxu0
      %v1877 = vadd.f32 0.0, %v1876
      %v1878 = vpop.f32.mrb[0].mxu0
      %1879 = vmatprep.mubr.bf16.mxu0 0
      %1880 = vmatmul.mubr.bf16.gmra.mrb[0].mxu0 %v1828
      %v1881 = vpop.f32.mrb[0].mxu0
      %v1882 = vadd.f32 0.0, %v1881
      %v1883 = vpop.f32.mrb[0].mxu0
      %v1884 = vpop.f32.mrb[0].mxu0
      %v1885 = vadd.f32 0.0, %v1884
      %v1886 = vpop.f32.mrb[0].mxu0
      %1887 = vmatprep.mubr.bf16.mxu0 0
      %1888 = vmatmul.mubr.bf16.gmra.mrb[0].mxu0 %v1831
      %v1889 = vpop.f32.mrb[0].mxu0
      %v1890 = vadd.f32 0.0, %v1889
      %v1891 = vpop.f32.mrb[0].mxu0
      %v1892 = vpop.f32.mrb[0].mxu0
      %v1893 = vadd.f32 0.0, %v1892
      %v1894 = vpop.f32.mrb[0].mxu0
      %1895 = vmatprep.mubr.bf16.mxu0 0
      %1896 = vmatmul.mubr.bf16.gmra.mrb[0].mxu0 %v1834
      %v1897 = vpop.f32.mrb[0].mxu0
      %v1898 = vadd.f32 0.0, %v1897
      %v1899 = vpop.f32.mrb[0].mxu0
      %v1900 = vpop.f32.mrb[0].mxu0
      %v1901 = vpop.f32.mrb[0].mxu0
      %1902 = vdwg.mxu0
      %v1903 = vadd.f32 %v1694, %v1874
      %v1904 = vadd.f32 %v1695, %v1877
      %v1905 = vadd.f32 %v1696, %v1882
      %v1906 = vadd.f32 %v1697, %v1885
      %v1907 = vadd.f32 %v1698, %v1890
      %v1908 = vadd.f32 %v1699, %v1893
      %v1909 = vadd.f32 %v1700, %v1898
      %s1910 = scalar_lea.vmem %s1, 224
      %v1911 = vld [vmem:[%s1910] sm:$0xff]
      %v1912 = vld [vmem:[%s1910 + $0x8] sm:$0xff]
      %v1913 = vld [vmem:[%s1910 + $0x10] sm:$0xff]
      %v1914 = vld [vmem:[%s1910 + $0x18] sm:$0xff]
      %v1915 = vld [vmem:[%s1910 + $0x20] sm:$0xff]
      %v1916 = vld [vmem:[%s1910 + $0x28] sm:$0xff]
      %v1917 = vld [vmem:[%s1910 + $0x30] sm:$0x11]
      %v1925 = vunpack.c.l.b16 %v1911
      %v1926 = vunpack.c.h.b16 %v1911
      %v1927 = vunpack.c.l.b16 %v1912
      %v1928 = vunpack.c.h.b16 %v1912
      %v1929 = vunpack.c.l.b16 %v1913
      %v1930 = vunpack.c.h.b16 %v1913
      %v1931 = vunpack.c.l.b16 %v1914
      %v1932 = vunpack.c.h.b16 %v1914
      %v1933 = vunpack.c.l.b16 %v1915
      %v1934 = vunpack.c.h.b16 %v1915
      %v1935 = vunpack.c.l.b16 %v1916
      %v1936 = vunpack.c.h.b16 %v1916
      %v1937 = vunpack.c.l.b16 %v1917
      %v1938 = vunpack.c.h.b16 %v1917
      %v1939 = vpack.c.b16 %v1927, %v1925
      %v1940 = vpack.c.b16 %v1928, %v1926
      %v1941 = vpack.c.b16 %v1931, %v1929
      %v1942 = vpack.c.b16 %v1932, %v1930
      %v1943 = vpack.c.b16 %v1935, %v1933
      %v1944 = vpack.c.b16 %v1936, %v1934
      %v1945 = vpack.c.b16 %v1937, %v1937
      %v1946 = vpack.c.b16 %v1938, %v1938
      %v1952 = vsel %vm1123, %v1940, 0
      %v1955 = vsel %vm1123, %v1942, 0
      %v1958 = vsel %vm1123, %v1944, 0
      %v1961 = vsel %vm1123, %v1946, 0
      %1963 = vmatprep.subr.bf16.mxu0 0
      %1964 = vmatpush1.bf16.msra.mxu0 %v1070
      %1965 = vmatprep.subr.bf16.mxu0 0
      %1966 = vmatpush1.bf16.msra.mxu0 %v1071
      %1967 = vmatprep.subr.bf16.mxu0 0
      %1968 = vmatpush1.bf16.msra.mxu0 %v1072
      %1969 = vmatprep.subr.bf16.mxu0 0
      %1970 = vmatpush1.bf16.msra.mxu0 %v1073
      %1971 = vmatprep.subr.bf16.mxu0 0
      %1972 = vmatpush1.bf16.msra.mxu0 %v1074
      %1973 = vmatprep.subr.bf16.mxu0 0
      %1974 = vmatpush1.bf16.msra.mxu0 %v1075
      %1975 = vmatprep.subr.bf16.mxu0 0
      %1976 = vmatpush1.bf16.msra.mxu0 %v1076
      %1977 = vmatprep.subr.bf16.mxu0 0
      %1978 = vmatpush1.bf16.msra.mxu0 %v1077
      %1979 = vmatprep.subr.bf16.mxu0 0
      %1980 = vmatpush1.bf16.msra.mxu0 %v1078
      %1981 = vmatprep.subr.bf16.mxu0 0
      %1982 = vmatpush1.bf16.msra.mxu0 %v1079
      %1983 = vmatprep.subr.bf16.mxu0 0
      %1984 = vmatpush1.bf16.msra.mxu0 %v1080
      %1985 = vmatprep.subr.bf16.mxu0 0
      %1986 = vmatpush1.bf16.msra.mxu0 %v1081
      %1987 = vmatprep.subr.bf16.mxu0 0
      %1988 = vmatpush1.bf16.msra.mxu0 %v1138
      %1989 = vmatprep.subr.bf16.mxu0 0
      %1990 = vmatpush1.bf16.msra.mxu0 0
      %1991 = vmatprep.subr.bf16.mxu0 0
      %1992 = vmatpush1.bf16.msra.mxu0 0
      %1993 = vmatprep.subr.bf16.mxu0 0
      %1994 = vmatpush1.bf16.msra.mxu0 0
      %1995 = vmatprep.mubr.bf16.mxu0 %v1952
      %1996 = vmatmul.mubr.bf16.gmra.mrb[0].mxu0 %v1939
      %v1997 = vpop.f32.mrb[0].mxu0
      %v1998 = vadd.f32 0.0, %v1997
      %v1999 = vpop.f32.mrb[0].mxu0
      %v2000 = vpop.f32.mrb[0].mxu0
      %v2001 = vadd.f32 0.0, %v2000
      %v2002 = vpop.f32.mrb[0].mxu0
      %2003 = vmatprep.mubr.bf16.mxu0 %v1955
      %2004 = vmatmul.mubr.bf16.gmra.mrb[0].mxu0 %v1941
      %v2005 = vpop.f32.mrb[0].mxu0
      %v2006 = vadd.f32 0.0, %v2005
      %v2007 = vpop.f32.mrb[0].mxu0
      %v2008 = vpop.f32.mrb[0].mxu0
      %v2009 = vadd.f32 0.0, %v2008
      %v2010 = vpop.f32.mrb[0].mxu0
      %2011 = vmatprep.mubr.bf16.mxu0 %v1958
      %2012 = vmatmul.mubr.bf16.gmra.mrb[0].mxu0 %v1943
      %v2013 = vpop.f32.mrb[0].mxu0
      %v2014 = vadd.f32 0.0, %v2013
      %v2015 = vpop.f32.mrb[0].mxu0
      %v2016 = vpop.f32.mrb[0].mxu0
      %v2017 = vadd.f32 0.0, %v2016
      %v2018 = vpop.f32.mrb[0].mxu0
      %2019 = vmatprep.mubr.bf16.mxu0 %v1961
      %2020 = vmatmul.mubr.bf16.gmra.mrb[0].mxu0 %v1945
      %v2021 = vpop.f32.mrb[0].mxu0
      %v2022 = vadd.f32 0.0, %v2021
      %v2023 = vpop.f32.mrb[0].mxu0
      %v2024 = vpop.f32.mrb[0].mxu0
      %v2025 = vpop.f32.mrb[0].mxu0
      %2026 = vdwg.mxu0
      %v2027 = vpack.c.bf16 %v2001, %v1998
      %v2028 = vpack.c.bf16 %v2009, %v2006
      %v2029 = vpack.c.bf16 %v2017, %v2014
      %v2030 = vpack.c.bf16 %v2022, %v2022
      %s2031 = scalar_lea.vmem %s4, 16
      %v2032 = vld [vmem:[%s2031] sm:$0xf]
      %v2034 = vsel %vm1332, %v2027, 0
      %v2037 = vsel %vm1332, %v2028, 0
      %v2040 = vsel %vm1332, %v2029, 0
      %v2043 = vsel %vm1332, %v2030, 0
      %v2046 = vsel %vm1345, %v2032, 0
      %2048 = vmatprep.subr.bf16.mxu0 0
      %2049 = vmatpush1.bf16.msra.mxu0 %v2046
      %2050 = vmatprep.subr.bf16.mxu0 0
      %2051 = vmatpush1.bf16.msra.mxu0 0
      %2052 = vmatprep.subr.bf16.mxu0 0
      %2053 = vmatpush1.bf16.msra.mxu0 0
      %2054 = vmatprep.subr.bf16.mxu0 0
      %2055 = vmatpush1.bf16.msra.mxu0 0
      %2056 = vmatprep.subr.bf16.mxu0 0
      %2057 = vmatpush1.bf16.msra.mxu0 0
      %2058 = vmatprep.subr.bf16.mxu0 0
      %2059 = vmatpush1.bf16.msra.mxu0 0
      %2060 = vmatprep.subr.bf16.mxu0 0
      %2061 = vmatpush1.bf16.msra.mxu0 0
      %2062 = vmatprep.subr.bf16.mxu0 0
      %2063 = vmatpush1.bf16.msra.mxu0 0
      %2064 = vmatprep.subr.bf16.mxu0 0
      %2065 = vmatpush1.bf16.msra.mxu0 0
      %2066 = vmatprep.subr.bf16.mxu0 0
      %2067 = vmatpush1.bf16.msra.mxu0 0
      %2068 = vmatprep.subr.bf16.mxu0 0
      %2069 = vmatpush1.bf16.msra.mxu0 0
      %2070 = vmatprep.subr.bf16.mxu0 0
      %2071 = vmatpush1.bf16.msra.mxu0 0
      %2072 = vmatprep.subr.bf16.mxu0 0
      %2073 = vmatpush1.bf16.msra.mxu0 0
      %2074 = vmatprep.subr.bf16.mxu0 0
      %2075 = vmatpush1.bf16.msra.mxu0 0
      %2076 = vmatprep.subr.bf16.mxu0 0
      %2077 = vmatpush1.bf16.msra.mxu0 0
      %2078 = vmatprep.subr.bf16.mxu0 0
      %2079 = vmatpush1.bf16.msra.mxu0 0
      %2080 = vmatprep.mubr.bf16.mxu0 0
      %2081 = vmatmul.mubr.bf16.gmra.mrb[0].mxu0 %v2034
      %v2082 = vpop.f32.mrb[0].mxu0
      %v2083 = vadd.f32 0.0, %v2082
      %v2084 = vpop.f32.mrb[0].mxu0
      %v2085 = vpop.f32.mrb[0].mxu0
      %v2086 = vadd.f32 0.0, %v2085
      %v2087 = vpop.f32.mrb[0].mxu0
      %2088 = vmatprep.mubr.bf16.mxu0 0
      %2089 = vmatmul.mubr.bf16.gmra.mrb[0].mxu0 %v2037
      %v2090 = vpop.f32.mrb[0].mxu0
      %v2091 = vadd.f32 0.0, %v2090
      %v2092 = vpop.f32.mrb[0].mxu0
      %v2093 = vpop.f32.mrb[0].mxu0
      %v2094 = vadd.f32 0.0, %v2093
      %v2095 = vpop.f32.mrb[0].mxu0
      %2096 = vmatprep.mubr.bf16.mxu0 0
      %2097 = vmatmul.mubr.bf16.gmra.mrb[0].mxu0 %v2040
      %v2098 = vpop.f32.mrb[0].mxu0
      %v2099 = vadd.f32 0.0, %v2098
      %v2100 = vpop.f32.mrb[0].mxu0
      %v2101 = vpop.f32.mrb[0].mxu0
      %v2102 = vadd.f32 0.0, %v2101
      %v2103 = vpop.f32.mrb[0].mxu0
      %2104 = vmatprep.mubr.bf16.mxu0 0
      %2105 = vmatmul.mubr.bf16.gmra.mrb[0].mxu0 %v2043
      %v2106 = vpop.f32.mrb[0].mxu0
      %v2107 = vadd.f32 0.0, %v2106
      %v2108 = vpop.f32.mrb[0].mxu0
      %v2109 = vpop.f32.mrb[0].mxu0
      %v2110 = vpop.f32.mrb[0].mxu0
      %2111 = vdwg.mxu0
      %v2112 = vadd.f32 %v1903, %v2083
      %v2113 = vadd.f32 %v1904, %v2086
      %v2114 = vadd.f32 %v1905, %v2091
      %v2115 = vadd.f32 %v1906, %v2094
      %v2116 = vadd.f32 %v1907, %v2099
      %v2117 = vadd.f32 %v1908, %v2102
      %v2118 = vadd.f32 %v1909, %v2107
      %s2119 = scalar_lea.vmem %s1, 280
      %v2120 = vld [vmem:[%s2119] sm:$0xff]
      %v2121 = vld [vmem:[%s2119 + $0x8] sm:$0xff]
      %v2122 = vld [vmem:[%s2119 + $0x10] sm:$0xff]
      %v2123 = vld [vmem:[%s2119 + $0x18] sm:$0xff]
      %v2124 = vld [vmem:[%s2119 + $0x20] sm:$0xff]
      %v2125 = vld [vmem:[%s2119 + $0x28] sm:$0xff]
      %v2126 = vld [vmem:[%s2119 + $0x30] sm:$0x11]
      %v2134 = vunpack.c.l.b16 %v2120
      %v2135 = vunpack.c.h.b16 %v2120
      %v2136 = vunpack.c.l.b16 %v2121
      %v2137 = vunpack.c.h.b16 %v2121
      %v2138 = vunpack.c.l.b16 %v2122
      %v2139 = vunpack.c.h.b16 %v2122
      %v2140 = vunpack.c.l.b16 %v2123
      %v2141 = vunpack.c.h.b16 %v2123
      %v2142 = vunpack.c.l.b16 %v2124
      %v2143 = vunpack.c.h.b16 %v2124
      %v2144 = vunpack.c.l.b16 %v2125
      %v2145 = vunpack.c.h.b16 %v2125
      %v2146 = vunpack.c.l.b16 %v2126
      %v2147 = vunpack.c.h.b16 %v2126
      %v2148 = vpack.c.b16 %v2136, %v2134
      %v2149 = vpack.c.b16 %v2137, %v2135
      %v2150 = vpack.c.b16 %v2140, %v2138
      %v2151 = vpack.c.b16 %v2141, %v2139
      %v2152 = vpack.c.b16 %v2144, %v2142
      %v2153 = vpack.c.b16 %v2145, %v2143
      %v2154 = vpack.c.b16 %v2146, %v2146
      %v2155 = vpack.c.b16 %v2147, %v2147
      %v2161 = vsel %vm1123, %v2149, 0
      %v2164 = vsel %vm1123, %v2151, 0
      %v2167 = vsel %vm1123, %v2153, 0
      %v2170 = vsel %vm1123, %v2155, 0
      %2172 = vmatprep.subr.bf16.mxu0 0
      %2173 = vmatpush1.bf16.msra.mxu0 %v1070
      %2174 = vmatprep.subr.bf16.mxu0 0
      %2175 = vmatpush1.bf16.msra.mxu0 %v1071
      %2176 = vmatprep.subr.bf16.mxu0 0
      %2177 = vmatpush1.bf16.msra.mxu0 %v1072
      %2178 = vmatprep.subr.bf16.mxu0 0
      %2179 = vmatpush1.bf16.msra.mxu0 %v1073
      %2180 = vmatprep.subr.bf16.mxu0 0
      %2181 = vmatpush1.bf16.msra.mxu0 %v1074
      %2182 = vmatprep.subr.bf16.mxu0 0
      %2183 = vmatpush1.bf16.msra.mxu0 %v1075
      %2184 = vmatprep.subr.bf16.mxu0 0
      %2185 = vmatpush1.bf16.msra.mxu0 %v1076
      %2186 = vmatprep.subr.bf16.mxu0 0
      %2187 = vmatpush1.bf16.msra.mxu0 %v1077
      %2188 = vmatprep.subr.bf16.mxu0 0
      %2189 = vmatpush1.bf16.msra.mxu0 %v1078
      %2190 = vmatprep.subr.bf16.mxu0 0
      %2191 = vmatpush1.bf16.msra.mxu0 %v1079
      %2192 = vmatprep.subr.bf16.mxu0 0
      %2193 = vmatpush1.bf16.msra.mxu0 %v1080
      %2194 = vmatprep.subr.bf16.mxu0 0
      %2195 = vmatpush1.bf16.msra.mxu0 %v1081
      %2196 = vmatprep.subr.bf16.mxu0 0
      %2197 = vmatpush1.bf16.msra.mxu0 %v1138
      %2198 = vmatprep.subr.bf16.mxu0 0
      %2199 = vmatpush1.bf16.msra.mxu0 0
      %2200 = vmatprep.subr.bf16.mxu0 0
      %2201 = vmatpush1.bf16.msra.mxu0 0
      %2202 = vmatprep.subr.bf16.mxu0 0
      %2203 = vmatpush1.bf16.msra.mxu0 0
      %2204 = vmatprep.mubr.bf16.mxu0 %v2161
      %2205 = vmatmul.mubr.bf16.gmra.mrb[0].mxu0 %v2148
      %v2206 = vpop.f32.mrb[0].mxu0
      %v2207 = vadd.f32 0.0, %v2206
      %v2208 = vpop.f32.mrb[0].mxu0
      %v2209 = vpop.f32.mrb[0].mxu0
      %v2210 = vadd.f32 0.0, %v2209
      %v2211 = vpop.f32.mrb[0].mxu0
      %2212 = vmatprep.mubr.bf16.mxu0 %v2164
      %2213 = vmatmul.mubr.bf16.gmra.mrb[0].mxu0 %v2150
      %v2214 = vpop.f32.mrb[0].mxu0
      %v2215 = vadd.f32 0.0, %v2214
      %v2216 = vpop.f32.mrb[0].mxu0
      %v2217 = vpop.f32.mrb[0].mxu0
      %v2218 = vadd.f32 0.0, %v2217
      %v2219 = vpop.f32.mrb[0].mxu0
      %2220 = vmatprep.mubr.bf16.mxu0 %v2167
      %2221 = vmatmul.mubr.bf16.gmra.mrb[0].mxu0 %v2152
      %v2222 = vpop.f32.mrb[0].mxu0
      %v2223 = vadd.f32 0.0, %v2222
      %v2224 = vpop.f32.mrb[0].mxu0
      %v2225 = vpop.f32.mrb[0].mxu0
      %v2226 = vadd.f32 0.0, %v2225
      %v2227 = vpop.f32.mrb[0].mxu0
      %2228 = vmatprep.mubr.bf16.mxu0 %v2170
      %2229 = vmatmul.mubr.bf16.gmra.mrb[0].mxu0 %v2154
      %v2230 = vpop.f32.mrb[0].mxu0
      %v2231 = vadd.f32 0.0, %v2230
      %v2232 = vpop.f32.mrb[0].mxu0
      %v2233 = vpop.f32.mrb[0].mxu0
      %v2234 = vpop.f32.mrb[0].mxu0
      %2235 = vdwg.mxu0
      %v2236 = vpack.c.bf16 %v2210, %v2207
      %v2237 = vpack.c.bf16 %v2218, %v2215
      %v2238 = vpack.c.bf16 %v2226, %v2223
      %v2239 = vpack.c.bf16 %v2231, %v2231
      %s2240 = scalar_lea.vmem %s4, 20
      %v2241 = vld [vmem:[%s2240] sm:$0xf]
      %v2243 = vsel %vm1332, %v2236, 0
      %v2246 = vsel %vm1332, %v2237, 0
      %v2249 = vsel %vm1332, %v2238, 0
      %v2252 = vsel %vm1332, %v2239, 0
      %v2255 = vsel %vm1345, %v2241, 0
      %2257 = vmatprep.subr.bf16.mxu0 0
      %2258 = vmatpush1.bf16.msra.mxu0 %v2255
      %2259 = vmatprep.subr.bf16.mxu0 0
      %2260 = vmatpush1.bf16.msra.mxu0 0
      %2261 = vmatprep.subr.bf16.mxu0 0
      %2262 = vmatpush1.bf16.msra.mxu0 0
      %2263 = vmatprep.subr.bf16.mxu0 0
      %2264 = vmatpush1.bf16.msra.mxu0 0
      %2265 = vmatprep.subr.bf16.mxu0 0
      %2266 = vmatpush1.bf16.msra.mxu0 0
      %2267 = vmatprep.subr.bf16.mxu0 0
      %2268 = vmatpush1.bf16.msra.mxu0 0
      %2269 = vmatprep.subr.bf16.mxu0 0
      %2270 = vmatpush1.bf16.msra.mxu0 0
      %2271 = vmatprep.subr.bf16.mxu0 0
      %2272 = vmatpush1.bf16.msra.mxu0 0
      %2273 = vmatprep.subr.bf16.mxu0 0
      %2274 = vmatpush1.bf16.msra.mxu0 0
      %2275 = vmatprep.subr.bf16.mxu0 0
      %2276 = vmatpush1.bf16.msra.mxu0 0
      %2277 = vmatprep.subr.bf16.mxu0 0
      %2278 = vmatpush1.bf16.msra.mxu0 0
      %2279 = vmatprep.subr.bf16.mxu0 0
      %2280 = vmatpush1.bf16.msra.mxu0 0
      %2281 = vmatprep.subr.bf16.mxu0 0
      %2282 = vmatpush1.bf16.msra.mxu0 0
      %2283 = vmatprep.subr.bf16.mxu0 0
      %2284 = vmatpush1.bf16.msra.mxu0 0
      %2285 = vmatprep.subr.bf16.mxu0 0
      %2286 = vmatpush1.bf16.msra.mxu0 0
      %2287 = vmatprep.subr.bf16.mxu0 0
      %2288 = vmatpush1.bf16.msra.mxu0 0
      %2289 = vmatprep.mubr.bf16.mxu0 0
      %2290 = vmatmul.mubr.bf16.gmra.mrb[0].mxu0 %v2243
      %v2291 = vpop.f32.mrb[0].mxu0
      %v2292 = vadd.f32 0.0, %v2291
      %v2293 = vpop.f32.mrb[0].mxu0
      %v2294 = vpop.f32.mrb[0].mxu0
      %v2295 = vadd.f32 0.0, %v2294
      %v2296 = vpop.f32.mrb[0].mxu0
      %2297 = vmatprep.mubr.bf16.mxu0 0
      %2298 = vmatmul.mubr.bf16.gmra.mrb[0].mxu0 %v2246
      %v2299 = vpop.f32.mrb[0].mxu0
      %v2300 = vadd.f32 0.0, %v2299
      %v2301 = vpop.f32.mrb[0].mxu0
      %v2302 = vpop.f32.mrb[0].mxu0
      %v2303 = vadd.f32 0.0, %v2302
      %v2304 = vpop.f32.mrb[0].mxu0
      %2305 = vmatprep.mubr.bf16.mxu0 0
      %2306 = vmatmul.mubr.bf16.gmra.mrb[0].mxu0 %v2249
      %v2307 = vpop.f32.mrb[0].mxu0
      %v2308 = vadd.f32 0.0, %v2307
      %v2309 = vpop.f32.mrb[0].mxu0
      %v2310 = vpop.f32.mrb[0].mxu0
      %v2311 = vadd.f32 0.0, %v2310
      %v2312 = vpop.f32.mrb[0].mxu0
      %2313 = vmatprep.mubr.bf16.mxu0 0
      %2314 = vmatmul.mubr.bf16.gmra.mrb[0].mxu0 %v2252
      %v2315 = vpop.f32.mrb[0].mxu0
      %v2316 = vadd.f32 0.0, %v2315
      %v2317 = vpop.f32.mrb[0].mxu0
      %v2318 = vpop.f32.mrb[0].mxu0
      %v2319 = vpop.f32.mrb[0].mxu0
      %2320 = vdwg.mxu0
      %v2321 = vadd.f32 %v2112, %v2292
      %v2322 = vadd.f32 %v2113, %v2295
      %v2323 = vadd.f32 %v2114, %v2300
      %v2324 = vadd.f32 %v2115, %v2303
      %v2325 = vadd.f32 %v2116, %v2308
      %v2326 = vadd.f32 %v2117, %v2311
      %v2327 = vadd.f32 %v2118, %v2316
      %s2328 = scalar_lea.vmem %s1, 336
      %v2329 = vld [vmem:[%s2328] sm:$0xff]
      %v2330 = vld [vmem:[%s2328 + $0x8] sm:$0xff]
      %v2331 = vld [vmem:[%s2328 + $0x10] sm:$0xff]
      %v2332 = vld [vmem:[%s2328 + $0x18] sm:$0xff]
      %v2333 = vld [vmem:[%s2328 + $0x20] sm:$0xff]
      %v2334 = vld [vmem:[%s2328 + $0x28] sm:$0xff]
      %v2335 = vld [vmem:[%s2328 + $0x30] sm:$0x11]
      %v2343 = vunpack.c.l.b16 %v2329
      %v2344 = vunpack.c.h.b16 %v2329
      %v2345 = vunpack.c.l.b16 %v2330
      %v2346 = vunpack.c.h.b16 %v2330
      %v2347 = vunpack.c.l.b16 %v2331
      %v2348 = vunpack.c.h.b16 %v2331
      %v2349 = vunpack.c.l.b16 %v2332
      %v2350 = vunpack.c.h.b16 %v2332
      %v2351 = vunpack.c.l.b16 %v2333
      %v2352 = vunpack.c.h.b16 %v2333
      %v2353 = vunpack.c.l.b16 %v2334
      %v2354 = vunpack.c.h.b16 %v2334
      %v2355 = vunpack.c.l.b16 %v2335
      %v2356 = vunpack.c.h.b16 %v2335
      %v2357 = vpack.c.b16 %v2345, %v2343
      %v2358 = vpack.c.b16 %v2346, %v2344
      %v2359 = vpack.c.b16 %v2349, %v2347
      %v2360 = vpack.c.b16 %v2350, %v2348
      %v2361 = vpack.c.b16 %v2353, %v2351
      %v2362 = vpack.c.b16 %v2354, %v2352
      %v2363 = vpack.c.b16 %v2355, %v2355
      %v2364 = vpack.c.b16 %v2356, %v2356
      %v2370 = vsel %vm1123, %v2358, 0
      %v2373 = vsel %vm1123, %v2360, 0
      %v2376 = vsel %vm1123, %v2362, 0
      %v2379 = vsel %vm1123, %v2364, 0
      %2381 = vmatprep.subr.bf16.mxu0 0
      %2382 = vmatpush1.bf16.msra.mxu0 %v1070
      %2383 = vmatprep.subr.bf16.mxu0 0
      %2384 = vmatpush1.bf16.msra.mxu0 %v1071
      %2385 = vmatprep.subr.bf16.mxu0 0
      %2386 = vmatpush1.bf16.msra.mxu0 %v1072
      %2387 = vmatprep.subr.bf16.mxu0 0
      %2388 = vmatpush1.bf16.msra.mxu0 %v1073
      %2389 = vmatprep.subr.bf16.mxu0 0
      %2390 = vmatpush1.bf16.msra.mxu0 %v1074
      %2391 = vmatprep.subr.bf16.mxu0 0
      %2392 = vmatpush1.bf16.msra.mxu0 %v1075
      %2393 = vmatprep.subr.bf16.mxu0 0
      %2394 = vmatpush1.bf16.msra.mxu0 %v1076
      %2395 = vmatprep.subr.bf16.mxu0 0
      %2396 = vmatpush1.bf16.msra.mxu0 %v1077
      %2397 = vmatprep.subr.bf16.mxu0 0
      %2398 = vmatpush1.bf16.msra.mxu0 %v1078
      %2399 = vmatprep.subr.bf16.mxu0 0
      %2400 = vmatpush1.bf16.msra.mxu0 %v1079
      %2401 = vmatprep.subr.bf16.mxu0 0
      %2402 = vmatpush1.bf16.msra.mxu0 %v1080
      %2403 = vmatprep.subr.bf16.mxu0 0
      %2404 = vmatpush1.bf16.msra.mxu0 %v1081
      %2405 = vmatprep.subr.bf16.mxu0 0
      %2406 = vmatpush1.bf16.msra.mxu0 %v1138
      %2407 = vmatprep.subr.bf16.mxu0 0
      %2408 = vmatpush1.bf16.msra.mxu0 0
      %2409 = vmatprep.subr.bf16.mxu0 0
      %2410 = vmatpush1.bf16.msra.mxu0 0
      %2411 = vmatprep.subr.bf16.mxu0 0
      %2412 = vmatpush1.bf16.msra.mxu0 0
      %2413 = vmatprep.mubr.bf16.mxu0 %v2370
      %2414 = vmatmul.mubr.bf16.gmra.mrb[0].mxu0 %v2357
      %v2415 = vpop.f32.mrb[0].mxu0
      %v2416 = vadd.f32 0.0, %v2415
      %v2417 = vpop.f32.mrb[0].mxu0
      %v2418 = vpop.f32.mrb[0].mxu0
      %v2419 = vadd.f32 0.0, %v2418
      %v2420 = vpop.f32.mrb[0].mxu0
      %2421 = vmatprep.mubr.bf16.mxu0 %v2373
      %2422 = vmatmul.mubr.bf16.gmra.mrb[0].mxu0 %v2359
      %v2423 = vpop.f32.mrb[0].mxu0
      %v2424 = vadd.f32 0.0, %v2423
      %v2425 = vpop.f32.mrb[0].mxu0
      %v2426 = vpop.f32.mrb[0].mxu0
      %v2427 = vadd.f32 0.0, %v2426
      %v2428 = vpop.f32.mrb[0].mxu0
      %2429 = vmatprep.mubr.bf16.mxu0 %v2376
      %2430 = vmatmul.mubr.bf16.gmra.mrb[0].mxu0 %v2361
      %v2431 = vpop.f32.mrb[0].mxu0
      %v2432 = vadd.f32 0.0, %v2431
      %v2433 = vpop.f32.mrb[0].mxu0
      %v2434 = vpop.f32.mrb[0].mxu0
      %v2435 = vadd.f32 0.0, %v2434
      %v2436 = vpop.f32.mrb[0].mxu0
      %2437 = vmatprep.mubr.bf16.mxu0 %v2379
      %2438 = vmatmul.mubr.bf16.gmra.mrb[0].mxu0 %v2363
      %v2439 = vpop.f32.mrb[0].mxu0
      %v2440 = vadd.f32 0.0, %v2439
      %v2441 = vpop.f32.mrb[0].mxu0
      %v2442 = vpop.f32.mrb[0].mxu0
      %v2443 = vpop.f32.mrb[0].mxu0
      %2444 = vdwg.mxu0
      %v2445 = vpack.c.bf16 %v2419, %v2416
      %v2446 = vpack.c.bf16 %v2427, %v2424
      %v2447 = vpack.c.bf16 %v2435, %v2432
      %v2448 = vpack.c.bf16 %v2440, %v2440
      %s2449 = scalar_lea.vmem %s4, 24
      %v2450 = vld [vmem:[%s2449] sm:$0xf]
      %v2452 = vsel %vm1332, %v2445, 0
      %v2455 = vsel %vm1332, %v2446, 0
      %v2458 = vsel %vm1332, %v2447, 0
      %v2461 = vsel %vm1332, %v2448, 0
      %v2464 = vsel %vm1345, %v2450, 0
      %2466 = vmatprep.subr.bf16.mxu0 0
      %2467 = vmatpush1.bf16.msra.mxu0 %v2464
      %2468 = vmatprep.subr.bf16.mxu0 0
      %2469 = vmatpush1.bf16.msra.mxu0 0
      %2470 = vmatprep.subr.bf16.mxu0 0
      %2471 = vmatpush1.bf16.msra.mxu0 0
      %2472 = vmatprep.subr.bf16.mxu0 0
      %2473 = vmatpush1.bf16.msra.mxu0 0
      %2474 = vmatprep.subr.bf16.mxu0 0
      %2475 = vmatpush1.bf16.msra.mxu0 0
      %2476 = vmatprep.subr.bf16.mxu0 0
      %2477 = vmatpush1.bf16.msra.mxu0 0
      %2478 = vmatprep.subr.bf16.mxu0 0
      %2479 = vmatpush1.bf16.msra.mxu0 0
      %2480 = vmatprep.subr.bf16.mxu0 0
      %2481 = vmatpush1.bf16.msra.mxu0 0
      %2482 = vmatprep.subr.bf16.mxu0 0
      %2483 = vmatpush1.bf16.msra.mxu0 0
      %2484 = vmatprep.subr.bf16.mxu0 0
      %2485 = vmatpush1.bf16.msra.mxu0 0
      %2486 = vmatprep.subr.bf16.mxu0 0
      %2487 = vmatpush1.bf16.msra.mxu0 0
      %2488 = vmatprep.subr.bf16.mxu0 0
      %2489 = vmatpush1.bf16.msra.mxu0 0
      %2490 = vmatprep.subr.bf16.mxu0 0
      %2491 = vmatpush1.bf16.msra.mxu0 0
      %2492 = vmatprep.subr.bf16.mxu0 0
      %2493 = vmatpush1.bf16.msra.mxu0 0
      %2494 = vmatprep.subr.bf16.mxu0 0
      %2495 = vmatpush1.bf16.msra.mxu0 0
      %2496 = vmatprep.subr.bf16.mxu0 0
      %2497 = vmatpush1.bf16.msra.mxu0 0
      %2498 = vmatprep.mubr.bf16.mxu0 0
      %2499 = vmatmul.mubr.bf16.gmra.mrb[0].mxu0 %v2452
      %v2500 = vpop.f32.mrb[0].mxu0
      %v2501 = vadd.f32 0.0, %v2500
      %v2502 = vpop.f32.mrb[0].mxu0
      %v2503 = vpop.f32.mrb[0].mxu0
      %v2504 = vadd.f32 0.0, %v2503
      %v2505 = vpop.f32.mrb[0].mxu0
      %2506 = vmatprep.mubr.bf16.mxu0 0
      %2507 = vmatmul.mubr.bf16.gmra.mrb[0].mxu0 %v2455
      %v2508 = vpop.f32.mrb[0].mxu0
      %v2509 = vadd.f32 0.0, %v2508
      %v2510 = vpop.f32.mrb[0].mxu0
      %v2511 = vpop.f32.mrb[0].mxu0
      %v2512 = vadd.f32 0.0, %v2511
      %v2513 = vpop.f32.mrb[0].mxu0
      %2514 = vmatprep.mubr.bf16.mxu0 0
      %2515 = vmatmul.mubr.bf16.gmra.mrb[0].mxu0 %v2458
      %v2516 = vpop.f32.mrb[0].mxu0
      %v2517 = vadd.f32 0.0, %v2516
      %v2518 = vpop.f32.mrb[0].mxu0
      %v2519 = vpop.f32.mrb[0].mxu0
      %v2520 = vadd.f32 0.0, %v2519
      %v2521 = vpop.f32.mrb[0].mxu0
      %2522 = vmatprep.mubr.bf16.mxu0 0
      %2523 = vmatmul.mubr.bf16.gmra.mrb[0].mxu0 %v2461
      %v2524 = vpop.f32.mrb[0].mxu0
      %v2525 = vadd.f32 0.0, %v2524
      %v2526 = vpop.f32.mrb[0].mxu0
      %v2527 = vpop.f32.mrb[0].mxu0
      %v2528 = vpop.f32.mrb[0].mxu0
      %2529 = vdwg.mxu0
      %v2530 = vadd.f32 %v2321, %v2501
      %v2531 = vadd.f32 %v2322, %v2504
      %v2532 = vadd.f32 %v2323, %v2509
      %v2533 = vadd.f32 %v2324, %v2512
      %v2534 = vadd.f32 %v2325, %v2517
      %v2535 = vadd.f32 %v2326, %v2520
      %v2536 = vadd.f32 %v2327, %v2525
      %s2537 = scalar_lea.vmem %s1, 392
      %v2538 = vld [vmem:[%s2537] sm:$0xff]
      %v2539 = vld [vmem:[%s2537 + $0x8] sm:$0xff]
      %v2540 = vld [vmem:[%s2537 + $0x10] sm:$0xff]
      %v2541 = vld [vmem:[%s2537 + $0x18] sm:$0xff]
      %v2542 = vld [vmem:[%s2537 + $0x20] sm:$0xff]
      %v2543 = vld [vmem:[%s2537 + $0x28] sm:$0xff]
      %v2544 = vld [vmem:[%s2537 + $0x30] sm:$0x11]
      %v2552 = vunpack.c.l.b16 %v2538
      %v2553 = vunpack.c.h.b16 %v2538
      %v2554 = vunpack.c.l.b16 %v2539
      %v2555 = vunpack.c.h.b16 %v2539
      %v2556 = vunpack.c.l.b16 %v2540
      %v2557 = vunpack.c.h.b16 %v2540
      %v2558 = vunpack.c.l.b16 %v2541
      %v2559 = vunpack.c.h.b16 %v2541
      %v2560 = vunpack.c.l.b16 %v2542
      %v2561 = vunpack.c.h.b16 %v2542
      %v2562 = vunpack.c.l.b16 %v2543
      %v2563 = vunpack.c.h.b16 %v2543
      %v2564 = vunpack.c.l.b16 %v2544
      %v2565 = vunpack.c.h.b16 %v2544
      %v2566 = vpack.c.b16 %v2554, %v2552
      %v2567 = vpack.c.b16 %v2555, %v2553
      %v2568 = vpack.c.b16 %v2558, %v2556
      %v2569 = vpack.c.b16 %v2559, %v2557
      %v2570 = vpack.c.b16 %v2562, %v2560
      %v2571 = vpack.c.b16 %v2563, %v2561
      %v2572 = vpack.c.b16 %v2564, %v2564
      %v2573 = vpack.c.b16 %v2565, %v2565
      %v2579 = vsel %vm1123, %v2567, 0
      %v2582 = vsel %vm1123, %v2569, 0
      %v2585 = vsel %vm1123, %v2571, 0
      %v2588 = vsel %vm1123, %v2573, 0
      %2590 = vmatprep.subr.bf16.mxu0 0
      %2591 = vmatpush1.bf16.msra.mxu0 %v1070
      %2592 = vmatprep.subr.bf16.mxu0 0
      %2593 = vmatpush1.bf16.msra.mxu0 %v1071
      %2594 = vmatprep.subr.bf16.mxu0 0
      %2595 = vmatpush1.bf16.msra.mxu0 %v1072
      %2596 = vmatprep.subr.bf16.mxu0 0
      %2597 = vmatpush1.bf16.msra.mxu0 %v1073
      %2598 = vmatprep.subr.bf16.mxu0 0
      %2599 = vmatpush1.bf16.msra.mxu0 %v1074
      %2600 = vmatprep.subr.bf16.mxu0 0
      %2601 = vmatpush1.bf16.msra.mxu0 %v1075
      %2602 = vmatprep.subr.bf16.mxu0 0
      %2603 = vmatpush1.bf16.msra.mxu0 %v1076
      %2604 = vmatprep.subr.bf16.mxu0 0
      %2605 = vmatpush1.bf16.msra.mxu0 %v1077
      %2606 = vmatprep.subr.bf16.mxu0 0
      %2607 = vmatpush1.bf16.msra.mxu0 %v1078
      %2608 = vmatprep.subr.bf16.mxu0 0
      %2609 = vmatpush1.bf16.msra.mxu0 %v1079
      %2610 = vmatprep.subr.bf16.mxu0 0
      %2611 = vmatpush1.bf16.msra.mxu0 %v1080
      %2612 = vmatprep.subr.bf16.mxu0 0
      %2613 = vmatpush1.bf16.msra.mxu0 %v1081
      %2614 = vmatprep.subr.bf16.mxu0 0
      %2615 = vmatpush1.bf16.msra.mxu0 %v1138
      %2616 = vmatprep.subr.bf16.mxu0 0
      %2617 = vmatpush1.bf16.msra.mxu0 0
      %2618 = vmatprep.subr.bf16.mxu0 0
      %2619 = vmatpush1.bf16.msra.mxu0 0
      %2620 = vmatprep.subr.bf16.mxu0 0
      %2621 = vmatpush1.bf16.msra.mxu0 0
      %2622 = vmatprep.mubr.bf16.mxu0 %v2579
      %2623 = vmatmul.mubr.bf16.gmra.mrb[0].mxu0 %v2566
      %v2624 = vpop.f32.mrb[0].mxu0
      %v2625 = vadd.f32 0.0, %v2624
      %v2626 = vpop.f32.mrb[0].mxu0
      %v2627 = vpop.f32.mrb[0].mxu0
      %v2628 = vadd.f32 0.0, %v2627
      %v2629 = vpop.f32.mrb[0].mxu0
      %2630 = vmatprep.mubr.bf16.mxu0 %v2582
      %2631 = vmatmul.mubr.bf16.gmra.mrb[0].mxu0 %v2568
      %v2632 = vpop.f32.mrb[0].mxu0
      %v2633 = vadd.f32 0.0, %v2632
      %v2634 = vpop.f32.mrb[0].mxu0
      %v2635 = vpop.f32.mrb[0].mxu0
      %v2636 = vadd.f32 0.0, %v2635
      %v2637 = vpop.f32.mrb[0].mxu0
      %2638 = vmatprep.mubr.bf16.mxu0 %v2585
      %2639 = vmatmul.mubr.bf16.gmra.mrb[0].mxu0 %v2570
      %v2640 = vpop.f32.mrb[0].mxu0
      %v2641 = vadd.f32 0.0, %v2640
      %v2642 = vpop.f32.mrb[0].mxu0
      %v2643 = vpop.f32.mrb[0].mxu0
      %v2644 = vadd.f32 0.0, %v2643
      %v2645 = vpop.f32.mrb[0].mxu0
      %2646 = vmatprep.mubr.bf16.mxu0 %v2588
      %2647 = vmatmul.mubr.bf16.gmra.mrb[0].mxu0 %v2572
      %v2648 = vpop.f32.mrb[0].mxu0
      %v2649 = vadd.f32 0.0, %v2648
      %v2650 = vpop.f32.mrb[0].mxu0
      %v2651 = vpop.f32.mrb[0].mxu0
      %v2652 = vpop.f32.mrb[0].mxu0
      %2653 = vdwg.mxu0
      %v2654 = vpack.c.bf16 %v2628, %v2625
      %v2655 = vpack.c.bf16 %v2636, %v2633
      %v2656 = vpack.c.bf16 %v2644, %v2641
      %v2657 = vpack.c.bf16 %v2649, %v2649
      %s2658 = scalar_lea.vmem %s4, 28
      %v2659 = vld [vmem:[%s2658] sm:$0xf]
      %v2661 = vsel %vm1332, %v2654, 0
      %v2664 = vsel %vm1332, %v2655, 0
      %v2667 = vsel %vm1332, %v2656, 0
      %v2670 = vsel %vm1332, %v2657, 0
      %v2673 = vsel %vm1345, %v2659, 0
      %2675 = vmatprep.subr.bf16.mxu0 0
      %2676 = vmatpush1.bf16.msra.mxu0 %v2673
      %2677 = vmatprep.subr.bf16.mxu0 0
      %2678 = vmatpush1.bf16.msra.mxu0 0
      %2679 = vmatprep.subr.bf16.mxu0 0
      %2680 = vmatpush1.bf16.msra.mxu0 0
      %2681 = vmatprep.subr.bf16.mxu0 0
      %2682 = vmatpush1.bf16.msra.mxu0 0
      %2683 = vmatprep.subr.bf16.mxu0 0
      %2684 = vmatpush1.bf16.msra.mxu0 0
      %2685 = vmatprep.subr.bf16.mxu0 0
      %2686 = vmatpush1.bf16.msra.mxu0 0
      %2687 = vmatprep.subr.bf16.mxu0 0
      %2688 = vmatpush1.bf16.msra.mxu0 0
      %2689 = vmatprep.subr.bf16.mxu0 0
      %2690 = vmatpush1.bf16.msra.mxu0 0
      %2691 = vmatprep.subr.bf16.mxu0 0
      %2692 = vmatpush1.bf16.msra.mxu0 0
      %2693 = vmatprep.subr.bf16.mxu0 0
      %2694 = vmatpush1.bf16.msra.mxu0 0
      %2695 = vmatprep.subr.bf16.mxu0 0
      %2696 = vmatpush1.bf16.msra.mxu0 0
      %2697 = vmatprep.subr.bf16.mxu0 0
      %2698 = vmatpush1.bf16.msra.mxu0 0
      %2699 = vmatprep.subr.bf16.mxu0 0
      %2700 = vmatpush1.bf16.msra.mxu0 0
      %2701 = vmatprep.subr.bf16.mxu0 0
      %2702 = vmatpush1.bf16.msra.mxu0 0
      %2703 = vmatprep.subr.bf16.mxu0 0
      %2704 = vmatpush1.bf16.msra.mxu0 0
      %2705 = vmatprep.subr.bf16.mxu0 0
      %2706 = vmatpush1.bf16.msra.mxu0 0
      %2707 = vmatprep.mubr.bf16.mxu0 0
      %2708 = vmatmul.mubr.bf16.gmra.mrb[0].mxu0 %v2661
      %v2709 = vpop.f32.mrb[0].mxu0
      %v2710 = vadd.f32 0.0, %v2709
      %v2711 = vpop.f32.mrb[0].mxu0
      %v2712 = vpop.f32.mrb[0].mxu0
      %v2713 = vadd.f32 0.0, %v2712
      %v2714 = vpop.f32.mrb[0].mxu0
      %2715 = vmatprep.mubr.bf16.mxu0 0
      %2716 = vmatmul.mubr.bf16.gmra.mrb[0].mxu0 %v2664
      %v2717 = vpop.f32.mrb[0].mxu0
      %v2718 = vadd.f32 0.0, %v2717
      %v2719 = vpop.f32.mrb[0].mxu0
      %v2720 = vpop.f32.mrb[0].mxu0
      %v2721 = vadd.f32 0.0, %v2720
      %v2722 = vpop.f32.mrb[0].mxu0
      %2723 = vmatprep.mubr.bf16.mxu0 0
      %2724 = vmatmul.mubr.bf16.gmra.mrb[0].mxu0 %v2667
      %v2725 = vpop.f32.mrb[0].mxu0
      %v2726 = vadd.f32 0.0, %v2725
      %v2727 = vpop.f32.mrb[0].mxu0
      %v2728 = vpop.f32.mrb[0].mxu0
      %v2729 = vadd.f32 0.0, %v2728
      %v2730 = vpop.f32.mrb[0].mxu0
      %2731 = vmatprep.mubr.bf16.mxu0 0
      %2732 = vmatmul.mubr.bf16.gmra.mrb[0].mxu0 %v2670
      %v2733 = vpop.f32.mrb[0].mxu0
      %v2734 = vadd.f32 0.0, %v2733
      %v2735 = vpop.f32.mrb[0].mxu0
      %v2736 = vpop.f32.mrb[0].mxu0
      %v2737 = vpop.f32.mrb[0].mxu0
      %2738 = vdwg.mxu0
      %v2739 = vadd.f32 %v2530, %v2710
      %v2740 = vadd.f32 %v2531, %v2713
      %v2741 = vadd.f32 %v2532, %v2718
      %v2742 = vadd.f32 %v2533, %v2721
      %v2743 = vadd.f32 %v2534, %v2726
      %v2744 = vadd.f32 %v2535, %v2729
      %v2745 = vadd.f32 %v2536, %v2734
      %s2746 = scalar_lea.vmem %s1, 448
      %v2747 = vld [vmem:[%s2746] sm:$0xff]
      %v2748 = vld [vmem:[%s2746 + $0x8] sm:$0xff]
      %v2749 = vld [vmem:[%s2746 + $0x10] sm:$0xff]
      %v2750 = vld [vmem:[%s2746 + $0x18] sm:$0xff]
      %v2751 = vld [vmem:[%s2746 + $0x20] sm:$0xff]
      %v2752 = vld [vmem:[%s2746 + $0x28] sm:$0xff]
      %v2753 = vld [vmem:[%s2746 + $0x30] sm:$0x11]
      %v2761 = vunpack.c.l.b16 %v2747
      %v2762 = vunpack.c.h.b16 %v2747
      %v2763 = vunpack.c.l.b16 %v2748
      %v2764 = vunpack.c.h.b16 %v2748
      %v2765 = vunpack.c.l.b16 %v2749
      %v2766 = vunpack.c.h.b16 %v2749
      %v2767 = vunpack.c.l.b16 %v2750
      %v2768 = vunpack.c.h.b16 %v2750
      %v2769 = vunpack.c.l.b16 %v2751
      %v2770 = vunpack.c.h.b16 %v2751
      %v2771 = vunpack.c.l.b16 %v2752
      %v2772 = vunpack.c.h.b16 %v2752
      %v2773 = vunpack.c.l.b16 %v2753
      %v2774 = vunpack.c.h.b16 %v2753
      %v2775 = vpack.c.b16 %v2763, %v2761
      %v2776 = vpack.c.b16 %v2764, %v2762
      %v2777 = vpack.c.b16 %v2767, %v2765
      %v2778 = vpack.c.b16 %v2768, %v2766
      %v2779 = vpack.c.b16 %v2771, %v2769
      %v2780 = vpack.c.b16 %v2772, %v2770
      %v2781 = vpack.c.b16 %v2773, %v2773
      %v2782 = vpack.c.b16 %v2774, %v2774
      %v2788 = vsel %vm1123, %v2776, 0
      %v2791 = vsel %vm1123, %v2778, 0
      %v2794 = vsel %vm1123, %v2780, 0
      %v2797 = vsel %vm1123, %v2782, 0
      %2799 = vmatprep.subr.bf16.mxu0 0
      %2800 = vmatpush1.bf16.msra.mxu0 %v1070
      %2801 = vmatprep.subr.bf16.mxu0 0
      %2802 = vmatpush1.bf16.msra.mxu0 %v1071
      %2803 = vmatprep.subr.bf16.mxu0 0
      %2804 = vmatpush1.bf16.msra.mxu0 %v1072
      %2805 = vmatprep.subr.bf16.mxu0 0
      %2806 = vmatpush1.bf16.msra.mxu0 %v1073
      %2807 = vmatprep.subr.bf16.mxu0 0
      %2808 = vmatpush1.bf16.msra.mxu0 %v1074
      %2809 = vmatprep.subr.bf16.mxu0 0
      %2810 = vmatpush1.bf16.msra.mxu0 %v1075
      %2811 = vmatprep.subr.bf16.mxu0 0
      %2812 = vmatpush1.bf16.msra.mxu0 %v1076
      %2813 = vmatprep.subr.bf16.mxu0 0
      %2814 = vmatpush1.bf16.msra.mxu0 %v1077
      %2815 = vmatprep.subr.bf16.mxu0 0
      %2816 = vmatpush1.bf16.msra.mxu0 %v1078
      %2817 = vmatprep.subr.bf16.mxu0 0
      %2818 = vmatpush1.bf16.msra.mxu0 %v1079
      %2819 = vmatprep.subr.bf16.mxu0 0
      %2820 = vmatpush1.bf16.msra.mxu0 %v1080
      %2821 = vmatprep.subr.bf16.mxu0 0
      %2822 = vmatpush1.bf16.msra.mxu0 %v1081
      %2823 = vmatprep.subr.bf16.mxu0 0
      %2824 = vmatpush1.bf16.msra.mxu0 %v1138
      %2825 = vmatprep.subr.bf16.mxu0 0
      %2826 = vmatpush1.bf16.msra.mxu0 0
      %2827 = vmatprep.subr.bf16.mxu0 0
      %2828 = vmatpush1.bf16.msra.mxu0 0
      %2829 = vmatprep.subr.bf16.mxu0 0
      %2830 = vmatpush1.bf16.msra.mxu0 0
      %2831 = vmatprep.mubr.bf16.mxu0 %v2788
      %2832 = vmatmul.mubr.bf16.gmra.mrb[0].mxu0 %v2775
      %v2833 = vpop.f32.mrb[0].mxu0
      %v2834 = vadd.f32 0.0, %v2833
      %v2835 = vpop.f32.mrb[0].mxu0
      %v2836 = vpop.f32.mrb[0].mxu0
      %v2837 = vadd.f32 0.0, %v2836
      %v2838 = vpop.f32.mrb[0].mxu0
      %2839 = vmatprep.mubr.bf16.mxu0 %v2791
      %2840 = vmatmul.mubr.bf16.gmra.mrb[0].mxu0 %v2777
      %v2841 = vpop.f32.mrb[0].mxu0
      %v2842 = vadd.f32 0.0, %v2841
      %v2843 = vpop.f32.mrb[0].mxu0
      %v2844 = vpop.f32.mrb[0].mxu0
      %v2845 = vadd.f32 0.0, %v2844
      %v2846 = vpop.f32.mrb[0].mxu0
      %2847 = vmatprep.mubr.bf16.mxu0 %v2794
      %2848 = vmatmul.mubr.bf16.gmra.mrb[0].mxu0 %v2779
      %v2849 = vpop.f32.mrb[0].mxu0
      %v2850 = vadd.f32 0.0, %v2849
      %v2851 = vpop.f32.mrb[0].mxu0
      %v2852 = vpop.f32.mrb[0].mxu0
      %v2853 = vadd.f32 0.0, %v2852
      %v2854 = vpop.f32.mrb[0].mxu0
      %2855 = vmatprep.mubr.bf16.mxu0 %v2797
      %2856 = vmatmul.mubr.bf16.gmra.mrb[0].mxu0 %v2781
      %v2857 = vpop.f32.mrb[0].mxu0
      %v2858 = vadd.f32 0.0, %v2857
      %v2859 = vpop.f32.mrb[0].mxu0
      %v2860 = vpop.f32.mrb[0].mxu0
      %v2861 = vpop.f32.mrb[0].mxu0
      %2862 = vdwg.mxu0
      %v2863 = vpack.c.bf16 %v2837, %v2834
      %v2864 = vpack.c.bf16 %v2845, %v2842
      %v2865 = vpack.c.bf16 %v2853, %v2850
      %v2866 = vpack.c.bf16 %v2858, %v2858
      %s2867 = scalar_lea.vmem %s4, 32
      %v2868 = vld [vmem:[%s2867] sm:$0xf]
      %v2870 = vsel %vm1332, %v2863, 0
      %v2873 = vsel %vm1332, %v2864, 0
      %v2876 = vsel %vm1332, %v2865, 0
      %v2879 = vsel %vm1332, %v2866, 0
      %v2882 = vsel %vm1345, %v2868, 0
      %2884 = vmatprep.subr.bf16.mxu0 0
      %2885 = vmatpush1.bf16.msra.mxu0 %v2882
      %2886 = vmatprep.subr.bf16.mxu0 0
      %2887 = vmatpush1.bf16.msra.mxu0 0
      %2888 = vmatprep.subr.bf16.mxu0 0
      %2889 = vmatpush1.bf16.msra.mxu0 0
      %2890 = vmatprep.subr.bf16.mxu0 0
      %2891 = vmatpush1.bf16.msra.mxu0 0
      %2892 = vmatprep.subr.bf16.mxu0 0
      %2893 = vmatpush1.bf16.msra.mxu0 0
      %2894 = vmatprep.subr.bf16.mxu0 0
      %2895 = vmatpush1.bf16.msra.mxu0 0
      %2896 = vmatprep.subr.bf16.mxu0 0
      %2897 = vmatpush1.bf16.msra.mxu0 0
      %2898 = vmatprep.subr.bf16.mxu0 0
      %2899 = vmatpush1.bf16.msra.mxu0 0
      %2900 = vmatprep.subr.bf16.mxu0 0
      %2901 = vmatpush1.bf16.msra.mxu0 0
      %2902 = vmatprep.subr.bf16.mxu0 0
      %2903 = vmatpush1.bf16.msra.mxu0 0
      %2904 = vmatprep.subr.bf16.mxu0 0
      %2905 = vmatpush1.bf16.msra.mxu0 0
      %2906 = vmatprep.subr.bf16.mxu0 0
      %2907 = vmatpush1.bf16.msra.mxu0 0
      %2908 = vmatprep.subr.bf16.mxu0 0
      %2909 = vmatpush1.bf16.msra.mxu0 0
      %2910 = vmatprep.subr.bf16.mxu0 0
      %2911 = vmatpush1.bf16.msra.mxu0 0
      %2912 = vmatprep.subr.bf16.mxu0 0
      %2913 = vmatpush1.bf16.msra.mxu0 0
      %2914 = vmatprep.subr.bf16.mxu0 0
      %2915 = vmatpush1.bf16.msra.mxu0 0
      %2916 = vmatprep.mubr.bf16.mxu0 0
      %2917 = vmatmul.mubr.bf16.gmra.mrb[0].mxu0 %v2870
      %v2918 = vpop.f32.mrb[0].mxu0
      %v2919 = vadd.f32 0.0, %v2918
      %v2920 = vpop.f32.mrb[0].mxu0
      %v2921 = vpop.f32.mrb[0].mxu0
      %v2922 = vadd.f32 0.0, %v2921
      %v2923 = vpop.f32.mrb[0].mxu0
      %2924 = vmatprep.mubr.bf16.mxu0 0
      %2925 = vmatmul.mubr.bf16.gmra.mrb[0].mxu0 %v2873
      %v2926 = vpop.f32.mrb[0].mxu0
      %v2927 = vadd.f32 0.0, %v2926
      %v2928 = vpop.f32.mrb[0].mxu0
      %v2929 = vpop.f32.mrb[0].mxu0
      %v2930 = vadd.f32 0.0, %v2929
      %v2931 = vpop.f32.mrb[0].mxu0
      %2932 = vmatprep.mubr.bf16.mxu0 0
      %2933 = vmatmul.mubr.bf16.gmra.mrb[0].mxu0 %v2876
      %v2934 = vpop.f32.mrb[0].mxu0
      %v2935 = vadd.f32 0.0, %v2934
      %v2936 = vpop.f32.mrb[0].mxu0
      %v2937 = vpop.f32.mrb[0].mxu0
      %v2938 = vadd.f32 0.0, %v2937
      %v2939 = vpop.f32.mrb[0].mxu0
      %2940 = vmatprep.mubr.bf16.mxu0 0
      %2941 = vmatmul.mubr.bf16.gmra.mrb[0].mxu0 %v2879
      %v2942 = vpop.f32.mrb[0].mxu0
      %v2943 = vadd.f32 0.0, %v2942
      %v2944 = vpop.f32.mrb[0].mxu0
      %v2945 = vpop.f32.mrb[0].mxu0
      %v2946 = vpop.f32.mrb[0].mxu0
      %2947 = vdwg.mxu0
      %v2948 = vadd.f32 %v2739, %v2919
      %v2949 = vadd.f32 %v2740, %v2922
      %v2950 = vadd.f32 %v2741, %v2927
      %v2951 = vadd.f32 %v2742, %v2930
      %v2952 = vadd.f32 %v2743, %v2935
      %v2953 = vadd.f32 %v2744, %v2938
      %v2954 = vadd.f32 %v2745, %v2943
      %v2955 = vld [vmem:[%s5] sm:$0x1]
      %v2957 = vlaneseq
      %v2958 = vshrl.u32 %v2957, 7
      %v2959 = vsub.s32 0, %v2958
      %v2960 = vrot.slane %v2955, %v2959
      %v2962 = vadd.f32 %v2948, %v2960
      %v2963 = vadd.f32 %v2949, %v2960
      %v2964 = vadd.f32 %v2950, %v2960
      %v2965 = vadd.f32 %v2951, %v2960
      %v2966 = vadd.f32 %v2952, %v2960
      %v2967 = vadd.f32 %v2953, %v2960
      %v2968 = vadd.f32 %v2954, %v2960
      %v2969 = vmax.f32 %v2962, 0.0
      %v2970 = vmax.f32 %v2963, 0.0
      %v2971 = vmax.f32 %v2964, 0.0
      %v2972 = vmax.f32 %v2965, 0.0
      %v2973 = vmax.f32 %v2966, 0.0
      %v2974 = vmax.f32 %v2967, 0.0
      %v2975 = vmax.f32 %v2968, 0.0
      %v2976 = vld [vmem:[%s8] sm:$0xff]
      %v2977 = vld [vmem:[%s8 + $0x8] sm:$0xff]
      %v2978 = vld [vmem:[%s8 + $0x10] sm:$0xff]
      %v2979 = vld [vmem:[%s8 + $0x18] sm:$0xff]
      %v2980 = vld [vmem:[%s8 + $0x20] sm:$0xff]
      %v2981 = vld [vmem:[%s8 + $0x28] sm:$0xff]
      %v2982 = vld [vmem:[%s8 + $0x30] sm:$0x11]
      %v2990 = vunpack.c.l.b16 %v2976
      %v2991 = vunpack.c.h.b16 %v2976
      %v2992 = vunpack.c.l.b16 %v2977
      %v2993 = vunpack.c.h.b16 %v2977
      %v2994 = vunpack.c.l.b16 %v2978
      %v2995 = vunpack.c.h.b16 %v2978
      %v2996 = vunpack.c.l.b16 %v2979
      %v2997 = vunpack.c.h.b16 %v2979
      %v2998 = vunpack.c.l.b16 %v2980
      %v2999 = vunpack.c.h.b16 %v2980
      %v3000 = vunpack.c.l.b16 %v2981
      %v3001 = vunpack.c.h.b16 %v2981
      %v3002 = vunpack.c.l.b16 %v2982
      %v3003 = vunpack.c.h.b16 %v2982
      %v3004 = vpack.c.b16 %v2992, %v2990
      %v3005 = vpack.c.b16 %v2993, %v2991
      %v3006 = vpack.c.b16 %v2996, %v2994
      %v3007 = vpack.c.b16 %v2997, %v2995
      %v3008 = vpack.c.b16 %v3000, %v2998
      %v3009 = vpack.c.b16 %v3001, %v2999
      %v3010 = vpack.c.b16 %v3002, %v3002
      %v3011 = vpack.c.b16 %v3003, %v3003
      %v3029 = vsel %vm1123, %v3005, 0
      %v3032 = vsel %vm1123, %v3007, 0
      %v3035 = vsel %vm1123, %v3009, 0
      %v3038 = vsel %vm1123, %v3011, 0
      %v3040 = vsel %vm1136, %v862, 0
      %3042 = vmatprep.subr.bf16.mxu0 0
      %3043 = vmatpush1.bf16.msra.mxu0 %v850
      %3044 = vmatprep.subr.bf16.mxu0 0
      %3045 = vmatpush1.bf16.msra.mxu0 %v851
      %3046 = vmatprep.subr.bf16.mxu0 0
      %3047 = vmatpush1.bf16.msra.mxu0 %v852
      %3048 = vmatprep.subr.bf16.mxu0 0
      %3049 = vmatpush1.bf16.msra.mxu0 %v853
      %3050 = vmatprep.subr.bf16.mxu0 0
      %3051 = vmatpush1.bf16.msra.mxu0 %v854
      %3052 = vmatprep.subr.bf16.mxu0 0
      %3053 = vmatpush1.bf16.msra.mxu0 %v855
      %3054 = vmatprep.subr.bf16.mxu0 0
      %3055 = vmatpush1.bf16.msra.mxu0 %v856
      %3056 = vmatprep.subr.bf16.mxu0 0
      %3057 = vmatpush1.bf16.msra.mxu0 %v857
      %3058 = vmatprep.subr.bf16.mxu0 0
      %3059 = vmatpush1.bf16.msra.mxu0 %v858
      %3060 = vmatprep.subr.bf16.mxu0 0
      %3061 = vmatpush1.bf16.msra.mxu0 %v859
      %3062 = vmatprep.subr.bf16.mxu0 0
      %3063 = vmatpush1.bf16.msra.mxu0 %v860
      %3064 = vmatprep.subr.bf16.mxu0 0
      %3065 = vmatpush1.bf16.msra.mxu0 %v861
      %3066 = vmatprep.subr.bf16.mxu0 0
      %3067 = vmatpush1.bf16.msra.mxu0 %v3040
      %3068 = vmatprep.subr.bf16.mxu0 0
      %3069 = vmatpush1.bf16.msra.mxu0 0
      %3070 = vmatprep.subr.bf16.mxu0 0
      %3071 = vmatpush1.bf16.msra.mxu0 0
      %3072 = vmatprep.subr.bf16.mxu0 0
      %3073 = vmatpush1.bf16.msra.mxu0 0
      %3074 = vmatprep.mubr.bf16.mxu0 %v3029
      %3075 = vmatmul.mubr.bf16.gmra.mrb[0].mxu0 %v3004
      %v3076 = vpop.f32.mrb[0].mxu0
      %v3077 = vadd.f32 0.0, %v3076
      %v3078 = vpop.f32.mrb[0].mxu0
      %v3079 = vpop.f32.mrb[0].mxu0
      %v3080 = vadd.f32 0.0, %v3079
      %v3081 = vpop.f32.mrb[0].mxu0
      %3082 = vmatprep.mubr.bf16.mxu0 %v3032
      %3083 = vmatmul.mubr.bf16.gmra.mrb[0].mxu0 %v3006
      %v3084 = vpop.f32.mrb[0].mxu0
      %v3085 = vadd.f32 0.0, %v3084
      %v3086 = vpop.f32.mrb[0].mxu0
      %v3087 = vpop.f32.mrb[0].mxu0
      %v3088 = vadd.f32 0.0, %v3087
      %v3089 = vpop.f32.mrb[0].mxu0
      %3090 = vmatprep.mubr.bf16.mxu0 %v3035
      %3091 = vmatmul.mubr.bf16.gmra.mrb[0].mxu0 %v3008
      %v3092 = vpop.f32.mrb[0].mxu0
      %v3093 = vadd.f32 0.0, %v3092
      %v3094 = vpop.f32.mrb[0].mxu0
      %v3095 = vpop.f32.mrb[0].mxu0
      %v3096 = vadd.f32 0.0, %v3095
      %v3097 = vpop.f32.mrb[0].mxu0
      %3098 = vmatprep.mubr.bf16.mxu0 %v3038
      %3099 = vmatmul.mubr.bf16.gmra.mrb[0].mxu0 %v3010
      %v3100 = vpop.f32.mrb[0].mxu0
      %v3101 = vadd.f32 0.0, %v3100
      %v3102 = vpop.f32.mrb[0].mxu0
      %v3103 = vpop.f32.mrb[0].mxu0
      %v3104 = vpop.f32.mrb[0].mxu0
      %3105 = vdwg.mxu0
      %v3106 = vpack.c.bf16 %v3080, %v3077
      %v3107 = vpack.c.bf16 %v3088, %v3085
      %v3108 = vpack.c.bf16 %v3096, %v3093
      %v3109 = vpack.c.bf16 %v3101, %v3101
      %v3110 = vld [vmem:[%s9] sm:$0xf]
      %v3111 = vld [vmem:[%s9 + $0x4] sm:$0xf]
      %v3112 = vld [vmem:[%s10] sm:$0x1]
      %v3114 = vlaneseq
      %v3115 = vshrl.u32 %v3114, 7
      %v3116 = vsub.s32 0, %v3115
      %v3117 = vrot.slane %v3112, %v3116
      %v3121 = vunpack.c.l.b16 %v3110
      %v3122 = vunpack.c.l.b16 %v3111
      %v3123 = vpack.c.b16 %v3122, %v3121
      %v3126 = vsel %vm869, %v3106, 0
      %v3129 = vsel %vm869, %v3107, 0
      %v3132 = vsel %vm869, %v3108, 0
      %v3135 = vsel %vm869, %v3109, 0
      %3137 = vmatprep.subr.bf16.mxu0 0
      %3138 = vmatpush1.bf16.msra.mxu0 %v3123
      %3139 = vmatprep.subr.bf16.mxu0 0
      %3140 = vmatpush1.bf16.msra.mxu0 0
      %3141 = vmatprep.subr.bf16.mxu0 0
      %3142 = vmatpush1.bf16.msra.mxu0 0
      %3143 = vmatprep.subr.bf16.mxu0 0
      %3144 = vmatpush1.bf16.msra.mxu0 0
      %3145 = vmatprep.subr.bf16.mxu0 0
      %3146 = vmatpush1.bf16.msra.mxu0 0
      %3147 = vmatprep.subr.bf16.mxu0 0
      %3148 = vmatpush1.bf16.msra.mxu0 0
      %3149 = vmatprep.subr.bf16.mxu0 0
      %3150 = vmatpush1.bf16.msra.mxu0 0
      %3151 = vmatprep.subr.bf16.mxu0 0
      %3152 = vmatpush1.bf16.msra.mxu0 0
      %3153 = vmatprep.subr.bf16.mxu0 0
      %3154 = vmatpush1.bf16.msra.mxu0 0
      %3155 = vmatprep.subr.bf16.mxu0 0
      %3156 = vmatpush1.bf16.msra.mxu0 0
      %3157 = vmatprep.subr.bf16.mxu0 0
      %3158 = vmatpush1.bf16.msra.mxu0 0
      %3159 = vmatprep.subr.bf16.mxu0 0
      %3160 = vmatpush1.bf16.msra.mxu0 0
      %3161 = vmatprep.subr.bf16.mxu0 0
      %3162 = vmatpush1.bf16.msra.mxu0 0
      %3163 = vmatprep.subr.bf16.mxu0 0
      %3164 = vmatpush1.bf16.msra.mxu0 0
      %3165 = vmatprep.subr.bf16.mxu0 0
      %3166 = vmatpush1.bf16.msra.mxu0 0
      %3167 = vmatprep.subr.bf16.mxu0 0
      %3168 = vmatpush1.bf16.msra.mxu0 0
      %3169 = vmatprep.mubr.bf16.mxu0 0
      %3170 = vmatmul.mubr.bf16.gmra.mrb[0].mxu0 %v3126
      %v3171 = vpop.f32.mrb[0].mxu0
      %v3172 = vadd.f32 %v3117, %v3171
      %v3173 = vpop.f32.mrb[0].mxu0
      %v3174 = vpop.f32.mrb[0].mxu0
      %v3175 = vadd.f32 %v3117, %v3174
      %v3176 = vpop.f32.mrb[0].mxu0
      %3177 = vmatprep.mubr.bf16.mxu0 0
      %3178 = vmatmul.mubr.bf16.gmra.mrb[0].mxu0 %v3129
      %v3179 = vpop.f32.mrb[0].mxu0
      %v3180 = vadd.f32 %v3117, %v3179
      %v3181 = vpop.f32.mrb[0].mxu0
      %v3182 = vpop.f32.mrb[0].mxu0
      %v3183 = vadd.f32 %v3117, %v3182
      %v3184 = vpop.f32.mrb[0].mxu0
      %3185 = vmatprep.mubr.bf16.mxu0 0
      %3186 = vmatmul.mubr.bf16.gmra.mrb[0].mxu0 %v3132
      %v3187 = vpop.f32.mrb[0].mxu0
      %v3188 = vadd.f32 %v3117, %v3187
      %v3189 = vpop.f32.mrb[0].mxu0
      %v3190 = vpop.f32.mrb[0].mxu0
      %v3191 = vadd.f32 %v3117, %v3190
      %v3192 = vpop.f32.mrb[0].mxu0
      %3193 = vmatprep.mubr.bf16.mxu0 0
      %3194 = vmatmul.mubr.bf16.gmra.mrb[0].mxu0 %v3135
      %v3195 = vpop.f32.mrb[0].mxu0
      %v3196 = vadd.f32 %v3117, %v3195
      %v3197 = vpop.f32.mrb[0].mxu0
      %v3198 = vpop.f32.mrb[0].mxu0
      %v3199 = vpop.f32.mrb[0].mxu0
      %3200 = vdwg.mxu0
      %v3201 = vpack.c.bf16 %v2970, %v2969
      %v3202 = vpack.c.bf16 %v2972, %v2971
      %v3203 = vpack.c.bf16 %v2974, %v2973
      %v3204 = vpack.c.bf16 %v2975, %v2975
      %v3205 = vld [vmem:[%s6] sm:$0xf]
      %v3206 = vld [vmem:[%s7] sm:$0x1]
      %v3208 = vlaneseq
      %v3209 = vshrl.u32 %v3208, 7
      %v3210 = vsub.s32 0, %v3209
      %v3211 = vrot.slane %v3206, %v3210
      %v3214 = vsel %vm1332, %v3201, 0
      %v3217 = vsel %vm1332, %v3202, 0
      %v3220 = vsel %vm1332, %v3203, 0
      %v3223 = vsel %vm1332, %v3204, 0
      %v3226 = vsel %vm1345, %v3205, 0
      %3228 = vmatprep.subr.bf16.mxu0 0
      %3229 = vmatpush1.bf16.msra.mxu0 %v3226
      %3230 = vmatprep.subr.bf16.mxu0 0
      %3231 = vmatpush1.bf16.msra.mxu0 0
      %3232 = vmatprep.subr.bf16.mxu0 0
      %3233 = vmatpush1.bf16.msra.mxu0 0
      %3234 = vmatprep.subr.bf16.mxu0 0
      %3235 = vmatpush1.bf16.msra.mxu0 0
      %3236 = vmatprep.subr.bf16.mxu0 0
      %3237 = vmatpush1.bf16.msra.mxu0 0
      %3238 = vmatprep.subr.bf16.mxu0 0
      %3239 = vmatpush1.bf16.msra.mxu0 0
      %3240 = vmatprep.subr.bf16.mxu0 0
      %3241 = vmatpush1.bf16.msra.mxu0 0
      %3242 = vmatprep.subr.bf16.mxu0 0
      %3243 = vmatpush1.bf16.msra.mxu0 0
      %3244 = vmatprep.subr.bf16.mxu0 0
      %3245 = vmatpush1.bf16.msra.mxu0 0
      %3246 = vmatprep.subr.bf16.mxu0 0
      %3247 = vmatpush1.bf16.msra.mxu0 0
      %3248 = vmatprep.subr.bf16.mxu0 0
      %3249 = vmatpush1.bf16.msra.mxu0 0
      %3250 = vmatprep.subr.bf16.mxu0 0
      %3251 = vmatpush1.bf16.msra.mxu0 0
      %3252 = vmatprep.subr.bf16.mxu0 0
      %3253 = vmatpush1.bf16.msra.mxu0 0
      %3254 = vmatprep.subr.bf16.mxu0 0
      %3255 = vmatpush1.bf16.msra.mxu0 0
      %3256 = vmatprep.subr.bf16.mxu0 0
      %3257 = vmatpush1.bf16.msra.mxu0 0
      %3258 = vmatprep.subr.bf16.mxu0 0
      %3259 = vmatpush1.bf16.msra.mxu0 0
      %3260 = vmatprep.mubr.bf16.mxu0 0
      %3261 = vmatmul.mubr.bf16.gmra.mrb[0].mxu0 %v3214
      %v3262 = vpop.f32.mrb[0].mxu0
      %v3263 = vadd.f32 %v3211, %v3262
      %v3264 = vpop.f32.mrb[0].mxu0
      %v3265 = vpop.f32.mrb[0].mxu0
      %v3266 = vadd.f32 %v3211, %v3265
      %v3267 = vpop.f32.mrb[0].mxu0
      %3268 = vmatprep.mubr.bf16.mxu0 0
      %3269 = vmatmul.mubr.bf16.gmra.mrb[0].mxu0 %v3217
      %v3270 = vpop.f32.mrb[0].mxu0
      %v3271 = vadd.f32 %v3211, %v3270
      %v3272 = vpop.f32.mrb[0].mxu0
      %v3273 = vpop.f32.mrb[0].mxu0
      %v3274 = vadd.f32 %v3211, %v3273
      %v3275 = vpop.f32.mrb[0].mxu0
      %3276 = vmatprep.mubr.bf16.mxu0 0
      %3277 = vmatmul.mubr.bf16.gmra.mrb[0].mxu0 %v3220
      %v3278 = vpop.f32.mrb[0].mxu0
      %v3279 = vadd.f32 %v3211, %v3278
      %v3280 = vpop.f32.mrb[0].mxu0
      %v3281 = vpop.f32.mrb[0].mxu0
      %v3282 = vadd.f32 %v3211, %v3281
      %v3283 = vpop.f32.mrb[0].mxu0
      %3284 = vmatprep.mubr.bf16.mxu0 0
      %3285 = vmatmul.mubr.bf16.gmra.mrb[0].mxu0 %v3223
      %v3286 = vpop.f32.mrb[0].mxu0
      %v3287 = vadd.f32 %v3211, %v3286
      %v3288 = vpop.f32.mrb[0].mxu0
      %v3289 = vpop.f32.mrb[0].mxu0
      %v3290 = vpop.f32.mrb[0].mxu0
      %3291 = vdwg.mxu0
      %v3292 = vadd.f32 %v3263, %v3172
      %v3293 = vadd.f32 %v3266, %v3175
      %v3294 = vadd.f32 %v3271, %v3180
      %v3295 = vadd.f32 %v3274, %v3183
      %v3296 = vadd.f32 %v3279, %v3188
      %v3297 = vadd.f32 %v3282, %v3191
      %v3298 = vadd.f32 %v3287, %v3196
      %v3299 = vmax.f32 %v3292, 0.0
      %v3300 = vmax.f32 %v3293, 0.0
      %v3301 = vmax.f32 %v3294, 0.0
      %v3302 = vmax.f32 %v3295, 0.0
      %v3303 = vmax.f32 %v3296, 0.0
      %v3304 = vmax.f32 %v3297, 0.0
      %v3305 = vmax.f32 %v3298, 0.0
      %v3306 = vpack.c.bf16 %v3300, %v3299
      %v3307 = vpack.c.bf16 %v3302, %v3301
      %v3308 = vpack.c.bf16 %v3304, %v3303
      %v3309 = vpack.c.bf16 %v3305, %v3305
      %v3310 = vld [vmem:[%s12] sm:$0xf]
      %v3311 = vld [vmem:[%s12 + $0x4] sm:$0xf]
      %v3312 = vld [vmem:[%s12 + $0x8] sm:$0xf]
      %v3313 = vld [vmem:[%s12 + $0xc] sm:$0xf]
      %v3314 = vld [vmem:[%s13] sm:$0x1]
      %v3316 = vlaneseq
      %v3317 = vshrl.u32 %v3316, 7
      %v3318 = vsub.s32 0, %v3317
      %v3319 = vrot.slane %v3314, %v3318
      %v3325 = vunpack.c.l.b16 %v3310
      %v3326 = vunpack.c.l.b16 %v3311
      %v3327 = vunpack.c.l.b16 %v3312
      %v3328 = vunpack.c.l.b16 %v3313
      %v3329 = vpack.c.b16 %v3326, %v3325
      %v3330 = vpack.c.b16 %v3328, %v3327
      %vm3333 = vcmask 261120
      %v3335 = vsel %vm3333, %v3306, 0
      %v3338 = vsel %vm3333, %v3307, 0
      %v3341 = vsel %vm3333, %v3308, 0
      %v3344 = vsel %vm3333, %v3309, 0
      %3346 = vmatprep.subr.bf16.mxu0 0
      %3347 = vmatpush1.bf16.msra.mxu0 %v3329
      %3348 = vmatprep.subr.bf16.mxu0 0
      %3349 = vmatpush1.bf16.msra.mxu0 %v3330
      %3350 = vmatprep.subr.bf16.mxu0 0
      %3351 = vmatpush1.bf16.msra.mxu0 0
      %3352 = vmatprep.subr.bf16.mxu0 0
      %3353 = vmatpush1.bf16.msra.mxu0 0
      %3354 = vmatprep.subr.bf16.mxu0 0
      %3355 = vmatpush1.bf16.msra.mxu0 0
      %3356 = vmatprep.subr.bf16.mxu0 0
      %3357 = vmatpush1.bf16.msra.mxu0 0
      %3358 = vmatprep.subr.bf16.mxu0 0
      %3359 = vmatpush1.bf16.msra.mxu0 0
      %3360 = vmatprep.subr.bf16.mxu0 0
      %3361 = vmatpush1.bf16.msra.mxu0 0
      %3362 = vmatprep.subr.bf16.mxu0 0
      %3363 = vmatpush1.bf16.msra.mxu0 0
      %3364 = vmatprep.subr.bf16.mxu0 0
      %3365 = vmatpush1.bf16.msra.mxu0 0
      %3366 = vmatprep.subr.bf16.mxu0 0
      %3367 = vmatpush1.bf16.msra.mxu0 0
      %3368 = vmatprep.subr.bf16.mxu0 0
      %3369 = vmatpush1.bf16.msra.mxu0 0
      %3370 = vmatprep.subr.bf16.mxu0 0
      %3371 = vmatpush1.bf16.msra.mxu0 0
      %3372 = vmatprep.subr.bf16.mxu0 0
      %3373 = vmatpush1.bf16.msra.mxu0 0
      %3374 = vmatprep.subr.bf16.mxu0 0
      %3375 = vmatpush1.bf16.msra.mxu0 0
      %3376 = vmatprep.subr.bf16.mxu0 0
      %3377 = vmatpush1.bf16.msra.mxu0 0
      %3378 = vmatprep.mubr.bf16.mxu0 0
      %3379 = vmatmul.mubr.bf16.gmra.mrb[0].mxu0 %v3335
      %v3380 = vpop.f32.mrb[0].mxu0
      %v3381 = vadd.f32 %v3319, %v3380
      %v3382 = vpop.f32.mrb[0].mxu0
      %v3383 = vpop.f32.mrb[0].mxu0
      %v3384 = vadd.f32 %v3319, %v3383
      %v3385 = vpop.f32.mrb[0].mxu0
      %3386 = vmatprep.mubr.bf16.mxu0 0
      %3387 = vmatmul.mubr.bf16.gmra.mrb[0].mxu0 %v3338
      %v3388 = vpop.f32.mrb[0].mxu0
      %v3389 = vadd.f32 %v3319, %v3388
      %v3390 = vpop.f32.mrb[0].mxu0
      %v3391 = vpop.f32.mrb[0].mxu0
      %v3392 = vadd.f32 %v3319, %v3391
      %v3393 = vpop.f32.mrb[0].mxu0
      %3394 = vmatprep.mubr.bf16.mxu0 0
      %3395 = vmatmul.mubr.bf16.gmra.mrb[0].mxu0 %v3341
      %v3396 = vpop.f32.mrb[0].mxu0
      %v3397 = vadd.f32 %v3319, %v3396
      %v3398 = vpop.f32.mrb[0].mxu0
      %v3399 = vpop.f32.mrb[0].mxu0
      %v3400 = vadd.f32 %v3319, %v3399
      %v3401 = vpop.f32.mrb[0].mxu0
      %3402 = vmatprep.mubr.bf16.mxu0 0
      %3403 = vmatmul.mubr.bf16.gmra.mrb[0].mxu0 %v3344
      %v3404 = vpop.f32.mrb[0].mxu0
      %v3405 = vadd.f32 %v3319, %v3404
      %v3406 = vpop.f32.mrb[0].mxu0
      %v3407 = vpop.f32.mrb[0].mxu0
      %v3408 = vpop.f32.mrb[0].mxu0
      %3409 = vdwg.mxu0
      %v3410 = vmax.f32 %v3381, 0.0
      %v3411 = vmax.f32 %v3384, 0.0
      %v3412 = vmax.f32 %v3389, 0.0
      %v3413 = vmax.f32 %v3392, 0.0
      %v3414 = vmax.f32 %v3397, 0.0
      %v3415 = vmax.f32 %v3400, 0.0
      %v3416 = vmax.f32 %v3405, 0.0
      %v3417 = vpack.c.bf16 %v3411, %v3410
      %v3418 = vpack.c.bf16 %v3413, %v3412
      %v3419 = vpack.c.bf16 %v3415, %v3414
      %v3420 = vpack.c.bf16 %v3416, %v3416
      %v3421 = vld [vmem:[%s11] sm:$0xf]
      %v3422 = vld [vmem:[%s11 + $0x4] sm:$0xf]
      %v3423 = vld [vmem:[%s11 + $0x8] sm:$0xf]
      %v3424 = vld [vmem:[%s11 + $0xc] sm:$0xf]
      %v3425 = vld [vmem:[%s11 + $0x10] sm:$0xf]
      %v3426 = vld [vmem:[%s11 + $0x14] sm:$0xf]
      %v3427 = vld [vmem:[%s11 + $0x18] sm:$0x1]
      %v3435 = vunpack.c.l.b16 %v3421
      %v3436 = vunpack.c.l.b16 %v3422
      %v3437 = vunpack.c.l.b16 %v3423
      %v3438 = vunpack.c.l.b16 %v3424
      %v3439 = vunpack.c.l.b16 %v3425
      %v3440 = vunpack.c.l.b16 %v3426
      %v3441 = vunpack.c.l.b16 %v3427
      %v3442 = vpack.c.b16 %v3436, %v3435
      %v3443 = vpack.c.b16 %v3438, %v3437
      %v3444 = vpack.c.b16 %v3440, %v3439
      %v3445 = vpack.c.b16 %v3441, %v3441
      %vm3446 = vcmask 400384
      %v3448 = vsel %vm3446, %v3442, 0
      %v3451 = vsel %vm3446, %v3443, 0
      %v3454 = vsel %vm3446, %v3444, 0
      %v3457 = vsel %vm3446, %v3445, 0
      %vm3459 = vcmask 1040384
      %v3460 = vsel 0, 4294967295, 65535
      %v3461 = vsel %vm3459, %v3460, 0
      %v3463 = vand.u32 %v3420, %v3461
      %3465 = vmatprep.subr.bf16.mxu0 0
      %3466 = vmatpush1.bf16.msra.mxu0 %v3417
      %3467 = vmatprep.subr.bf16.mxu0 0
      %3468 = vmatpush1.bf16.msra.mxu0 %v3418
      %3469 = vmatprep.subr.bf16.mxu0 0
      %3470 = vmatpush1.bf16.msra.mxu0 %v3419
      %3471 = vmatprep.subr.bf16.mxu0 0
      %3472 = vmatpush1.bf16.msra.mxu0 %v3463
      %3473 = vmatprep.subr.bf16.mxu0 0
      %3474 = vmatpush1.bf16.msra.mxu0 0
      %3475 = vmatprep.subr.bf16.mxu0 0
      %3476 = vmatpush1.bf16.msra.mxu0 0
      %3477 = vmatprep.subr.bf16.mxu0 0
      %3478 = vmatpush1.bf16.msra.mxu0 0
      %3479 = vmatprep.subr.bf16.mxu0 0
      %3480 = vmatpush1.bf16.msra.mxu0 0
      %3481 = vmatprep.subr.bf16.mxu0 0
      %3482 = vmatpush1.bf16.msra.mxu0 0
      %3483 = vmatprep.subr.bf16.mxu0 0
      %3484 = vmatpush1.bf16.msra.mxu0 0
      %3485 = vmatprep.subr.bf16.mxu0 0
      %3486 = vmatpush1.bf16.msra.mxu0 0
      %3487 = vmatprep.subr.bf16.mxu0 0
      %3488 = vmatpush1.bf16.msra.mxu0 0
      %3489 = vmatprep.subr.bf16.mxu0 0
      %3490 = vmatpush1.bf16.msra.mxu0 0
      %3491 = vmatprep.subr.bf16.mxu0 0
      %3492 = vmatpush1.bf16.msra.mxu0 0
      %3493 = vmatprep.subr.bf16.mxu0 0
      %3494 = vmatpush1.bf16.msra.mxu0 0
      %3495 = vmatprep.subr.bf16.mxu0 0
      %3496 = vmatpush1.bf16.msra.mxu0 0
      %3497 = vmatprep.mubr.bf16.mxu0 0
      %3498 = vmatmul.mubr.bf16.gmra.mrb[0].mxu0 %v3448
      %v3499 = vpop.f32.mrb[0].mxu0
      %v3500 = vadd.f32 0.0, %v3499
      %v3501 = vpop.f32.mrb[0].mxu0
      %v3502 = vpop.f32.mrb[0].mxu0
      %v3503 = vadd.f32 0.0, %v3502
      %v3504 = vpop.f32.mrb[0].mxu0
      %3505 = vmatprep.mubr.bf16.mxu0 0
      %3506 = vmatmul.mubr.bf16.gmra.mrb[0].mxu0 %v3451
      %v3507 = vpop.f32.mrb[0].mxu0
      %v3508 = vadd.f32 0.0, %v3507
      %v3509 = vpop.f32.mrb[0].mxu0
      %v3510 = vpop.f32.mrb[0].mxu0
      %v3511 = vadd.f32 0.0, %v3510
      %v3512 = vpop.f32.mrb[0].mxu0
      %3513 = vmatprep.mubr.bf16.mxu0 0
      %3514 = vmatmul.mubr.bf16.gmra.mrb[0].mxu0 %v3454
      %v3515 = vpop.f32.mrb[0].mxu0
      %v3516 = vadd.f32 0.0, %v3515
      %v3517 = vpop.f32.mrb[0].mxu0
      %v3518 = vpop.f32.mrb[0].mxu0
      %v3519 = vadd.f32 0.0, %v3518
      %v3520 = vpop.f32.mrb[0].mxu0
      %3521 = vmatprep.mubr.bf16.mxu0 0
      %3522 = vmatmul.mubr.bf16.gmra.mrb[0].mxu0 %v3457
      %v3523 = vpop.f32.mrb[0].mxu0
      %v3524 = vadd.f32 0.0, %v3523
      %v3525 = vpop.f32.mrb[0].mxu0
      %v3526 = vpop.f32.mrb[0].mxu0
      %v3527 = vpop.f32.mrb[0].mxu0
      %3528 = vdwg.mxu0
      %v3529 = vpack.c.bf16 %v3503, %v3500
      %v3530 = vpack.c.bf16 %v3511, %v3508
      %v3531 = vpack.c.bf16 %v3519, %v3516
      %v3532 = vpack.c.bf16 %v3524, %v3524
      %v3533 = vld [vmem:[%s14] sm:$0xf]
      %s3534 = scalar_lea.vmem %s11, 28
      %v3535 = vld [vmem:[%s3534] sm:$0xf]
      %v3536 = vld [vmem:[%s3534 + $0x4] sm:$0xf]
      %v3537 = vld [vmem:[%s3534 + $0x8] sm:$0xf]
      %v3538 = vld [vmem:[%s3534 + $0xc] sm:$0xf]
      %v3539 = vld [vmem:[%s3534 + $0x10] sm:$0xf]
      %v3540 = vld [vmem:[%s3534 + $0x14] sm:$0xf]
      %v3541 = vld [vmem:[%s3534 + $0x18] sm:$0x1]
      %v3549 = vunpack.c.l.b16 %v3535
      %v3550 = vunpack.c.l.b16 %v3536
      %v3551 = vunpack.c.l.b16 %v3537
      %v3552 = vunpack.c.l.b16 %v3538
      %v3553 = vunpack.c.l.b16 %v3539
      %v3554 = vunpack.c.l.b16 %v3540
      %v3555 = vunpack.c.l.b16 %v3541
      %v3556 = vpack.c.b16 %v3550, %v3549
      %v3557 = vpack.c.b16 %v3552, %v3551
      %v3558 = vpack.c.b16 %v3554, %v3553
      %v3559 = vpack.c.b16 %v3555, %v3555
      %v3561 = vsel %vm3446, %v3556, 0
      %v3564 = vsel %vm3446, %v3557, 0
      %v3567 = vsel %vm3446, %v3558, 0
      %v3570 = vsel %vm3446, %v3559, 0
      %3572 = vmatprep.subr.bf16.mxu0 0
      %3573 = vmatpush1.bf16.msra.mxu0 %v3417
      %3574 = vmatprep.subr.bf16.mxu0 0
      %3575 = vmatpush1.bf16.msra.mxu0 %v3418
      %3576 = vmatprep.subr.bf16.mxu0 0
      %3577 = vmatpush1.bf16.msra.mxu0 %v3419
      %3578 = vmatprep.subr.bf16.mxu0 0
      %3579 = vmatpush1.bf16.msra.mxu0 %v3463
      %3580 = vmatprep.subr.bf16.mxu0 0
      %3581 = vmatpush1.bf16.msra.mxu0 0
      %3582 = vmatprep.subr.bf16.mxu0 0
      %3583 = vmatpush1.bf16.msra.mxu0 0
      %3584 = vmatprep.subr.bf16.mxu0 0
      %3585 = vmatpush1.bf16.msra.mxu0 0
      %3586 = vmatprep.subr.bf16.mxu0 0
      %3587 = vmatpush1.bf16.msra.mxu0 0
      %3588 = vmatprep.subr.bf16.mxu0 0
      %3589 = vmatpush1.bf16.msra.mxu0 0
      %3590 = vmatprep.subr.bf16.mxu0 0
      %3591 = vmatpush1.bf16.msra.mxu0 0
      %3592 = vmatprep.subr.bf16.mxu0 0
      %3593 = vmatpush1.bf16.msra.mxu0 0
      %3594 = vmatprep.subr.bf16.mxu0 0
      %3595 = vmatpush1.bf16.msra.mxu0 0
      %3596 = vmatprep.subr.bf16.mxu0 0
      %3597 = vmatpush1.bf16.msra.mxu0 0
      %3598 = vmatprep.subr.bf16.mxu0 0
      %3599 = vmatpush1.bf16.msra.mxu0 0
      %3600 = vmatprep.subr.bf16.mxu0 0
      %3601 = vmatpush1.bf16.msra.mxu0 0
      %3602 = vmatprep.subr.bf16.mxu0 0
      %3603 = vmatpush1.bf16.msra.mxu0 0
      %3604 = vmatprep.mubr.bf16.mxu0 0
      %3605 = vmatmul.mubr.bf16.gmra.mrb[0].mxu0 %v3561
      %v3606 = vpop.f32.mrb[0].mxu0
      %v3607 = vadd.f32 0.0, %v3606
      %v3608 = vpop.f32.mrb[0].mxu0
      %v3609 = vpop.f32.mrb[0].mxu0
      %v3610 = vadd.f32 0.0, %v3609
      %v3611 = vpop.f32.mrb[0].mxu0
      %3612 = vmatprep.mubr.bf16.mxu0 0
      %3613 = vmatmul.mubr.bf16.gmra.mrb[0].mxu0 %v3564
      %v3614 = vpop.f32.mrb[0].mxu0
      %v3615 = vadd.f32 0.0, %v3614
      %v3616 = vpop.f32.mrb[0].mxu0
      %v3617 = vpop.f32.mrb[0].mxu0
      %v3618 = vadd.f32 0.0, %v3617
      %v3619 = vpop.f32.mrb[0].mxu0
      %3620 = vmatprep.mubr.bf16.mxu0 0
      %3621 = vmatmul.mubr.bf16.gmra.mrb[0].mxu0 %v3567
      %v3622 = vpop.f32.mrb[0].mxu0
      %v3623 = vadd.f32 0.0, %v3622
      %v3624 = vpop.f32.mrb[0].mxu0
      %v3625 = vpop.f32.mrb[0].mxu0
      %v3626 = vadd.f32 0.0, %v3625
      %v3627 = vpop.f32.mrb[0].mxu0
      %3628 = vmatprep.mubr.bf16.mxu0 0
      %3629 = vmatmul.mubr.bf16.gmra.mrb[0].mxu0 %v3570
      %v3630 = vpop.f32.mrb[0].mxu0
      %v3631 = vadd.f32 0.0, %v3630
      %v3632 = vpop.f32.mrb[0].mxu0
      %v3633 = vpop.f32.mrb[0].mxu0
      %v3634 = vpop.f32.mrb[0].mxu0
      %3635 = vdwg.mxu0
      %v3636 = vpack.c.bf16 %v3610, %v3607
      %v3637 = vpack.c.bf16 %v3618, %v3615
      %v3638 = vpack.c.bf16 %v3626, %v3623
      %v3639 = vpack.c.bf16 %v3631, %v3631
      %s3640 = scalar_lea.vmem %s14, 4
      %v3641 = vld [vmem:[%s3640] sm:$0xf]
      %v3643 = vsel %vm1332, %v3636, 0
      %v3646 = vsel %vm1332, %v3637, 0
      %v3649 = vsel %vm1332, %v3638, 0
      %v3652 = vsel %vm1332, %v3639, 0
      %v3655 = vsel %vm1345, %v3641, 0
      %3657 = vmatprep.subr.bf16.mxu0 0
      %3658 = vmatpush1.bf16.msra.mxu0 %v3655
      %3659 = vmatprep.subr.bf16.mxu0 0
      %3660 = vmatpush1.bf16.msra.mxu0 0
      %3661 = vmatprep.subr.bf16.mxu0 0
      %3662 = vmatpush1.bf16.msra.mxu0 0
      %3663 = vmatprep.subr.bf16.mxu0 0
      %3664 = vmatpush1.bf16.msra.mxu0 0
      %3665 = vmatprep.subr.bf16.mxu0 0
      %3666 = vmatpush1.bf16.msra.mxu0 0
      %3667 = vmatprep.subr.bf16.mxu0 0
      %3668 = vmatpush1.bf16.msra.mxu0 0
      %3669 = vmatprep.subr.bf16.mxu0 0
      %3670 = vmatpush1.bf16.msra.mxu0 0
      %3671 = vmatprep.subr.bf16.mxu0 0
      %3672 = vmatpush1.bf16.msra.mxu0 0
      %3673 = vmatprep.subr.bf16.mxu0 0
      %3674 = vmatpush1.bf16.msra.mxu0 0
      %3675 = vmatprep.subr.bf16.mxu0 0
      %3676 = vmatpush1.bf16.msra.mxu0 0
      %3677 = vmatprep.subr.bf16.mxu0 0
      %3678 = vmatpush1.bf16.msra.mxu0 0
      %3679 = vmatprep.subr.bf16.mxu0 0
      %3680 = vmatpush1.bf16.msra.mxu0 0
      %3681 = vmatprep.subr.bf16.mxu0 0
      %3682 = vmatpush1.bf16.msra.mxu0 0
      %3683 = vmatprep.subr.bf16.mxu0 0
      %3684 = vmatpush1.bf16.msra.mxu0 0
      %3685 = vmatprep.subr.bf16.mxu0 0
      %3686 = vmatpush1.bf16.msra.mxu0 0
      %3687 = vmatprep.subr.bf16.mxu0 0
      %3688 = vmatpush1.bf16.msra.mxu0 0
      %3689 = vmatprep.mubr.bf16.mxu0 0
      %3690 = vmatmul.mubr.bf16.gmra.mrb[0].mxu0 %v3643
      %v3691 = vpop.f32.mrb[0].mxu0
      %v3692 = vadd.f32 0.0, %v3691
      %v3693 = vpop.f32.mrb[0].mxu0
      %v3694 = vpop.f32.mrb[0].mxu0
      %v3695 = vadd.f32 0.0, %v3694
      %v3696 = vpop.f32.mrb[0].mxu0
      %3697 = vmatprep.mubr.bf16.mxu0 0
      %3698 = vmatmul.mubr.bf16.gmra.mrb[0].mxu0 %v3646
      %v3699 = vpop.f32.mrb[0].mxu0
      %v3700 = vadd.f32 0.0, %v3699
      %v3701 = vpop.f32.mrb[0].mxu0
      %v3702 = vpop.f32.mrb[0].mxu0
      %v3703 = vadd.f32 0.0, %v3702
      %v3704 = vpop.f32.mrb[0].mxu0
      %3705 = vmatprep.mubr.bf16.mxu0 0
      %3706 = vmatmul.mubr.bf16.gmra.mrb[0].mxu0 %v3649
      %v3707 = vpop.f32.mrb[0].mxu0
      %v3708 = vadd.f32 0.0, %v3707
      %v3709 = vpop.f32.mrb[0].mxu0
      %v3710 = vpop.f32.mrb[0].mxu0
      %v3711 = vadd.f32 0.0, %v3710
      %v3712 = vpop.f32.mrb[0].mxu0
      %3713 = vmatprep.mubr.bf16.mxu0 0
      %3714 = vmatmul.mubr.bf16.gmra.mrb[0].mxu0 %v3652
      %v3715 = vpop.f32.mrb[0].mxu0
      %v3716 = vadd.f32 0.0, %v3715
      %v3717 = vpop.f32.mrb[0].mxu0
      %v3718 = vpop.f32.mrb[0].mxu0
      %v3719 = vpop.f32.mrb[0].mxu0
      %3720 = vdwg.mxu0
      %v3722 = vsel %vm1332, %v3529, 0
      %v3725 = vsel %vm1332, %v3530, 0
      %v3728 = vsel %vm1332, %v3531, 0
      %v3731 = vsel %vm1332, %v3532, 0
      %v3734 = vsel %vm1345, %v3533, 0
      %3736 = vmatprep.subr.bf16.mxu0 0
      %3737 = vmatpush1.bf16.msra.mxu0 %v3734
      %3738 = vmatprep.subr.bf16.mxu0 0
      %3739 = vmatpush1.bf16.msra.mxu0 0
      %3740 = vmatprep.subr.bf16.mxu0 0
      %3741 = vmatpush1.bf16.msra.mxu0 0
      %3742 = vmatprep.subr.bf16.mxu0 0
      %3743 = vmatpush1.bf16.msra.mxu0 0
      %3744 = vmatprep.subr.bf16.mxu0 0
      %3745 = vmatpush1.bf16.msra.mxu0 0
      %3746 = vmatprep.subr.bf16.mxu0 0
      %3747 = vmatpush1.bf16.msra.mxu0 0
      %3748 = vmatprep.subr.bf16.mxu0 0
      %3749 = vmatpush1.bf16.msra.mxu0 0
      %3750 = vmatprep.subr.bf16.mxu0 0
      %3751 = vmatpush1.bf16.msra.mxu0 0
      %3752 = vmatprep.subr.bf16.mxu0 0
      %3753 = vmatpush1.bf16.msra.mxu0 0
      %3754 = vmatprep.subr.bf16.mxu0 0
      %3755 = vmatpush1.bf16.msra.mxu0 0
      %3756 = vmatprep.subr.bf16.mxu0 0
      %3757 = vmatpush1.bf16.msra.mxu0 0
      %3758 = vmatprep.subr.bf16.mxu0 0
      %3759 = vmatpush1.bf16.msra.mxu0 0
      %3760 = vmatprep.subr.bf16.mxu0 0
      %3761 = vmatpush1.bf16.msra.mxu0 0
      %3762 = vmatprep.subr.bf16.mxu0 0
      %3763 = vmatpush1.bf16.msra.mxu0 0
      %3764 = vmatprep.subr.bf16.mxu0 0
      %3765 = vmatpush1.bf16.msra.mxu0 0
      %3766 = vmatprep.subr.bf16.mxu0 0
      %3767 = vmatpush1.bf16.msra.mxu0 0
      %3768 = vmatprep.mubr.bf16.mxu0 0
      %3769 = vmatmul.mubr.bf16.gmra.mrb[0].mxu0 %v3722
      %v3770 = vpop.f32.mrb[0].mxu0
      %v3771 = vadd.f32 %v3692, %v3770
      %v3772 = vpop.f32.mrb[0].mxu0
      %v3773 = vpop.f32.mrb[0].mxu0
      %v3774 = vadd.f32 %v3695, %v3773
      %v3775 = vpop.f32.mrb[0].mxu0
      %3776 = vmatprep.mubr.bf16.mxu0 0
      %3777 = vmatmul.mubr.bf16.gmra.mrb[0].mxu0 %v3725
      %v3778 = vpop.f32.mrb[0].mxu0
      %v3779 = vadd.f32 %v3700, %v3778
      %v3780 = vpop.f32.mrb[0].mxu0
      %v3781 = vpop.f32.mrb[0].mxu0
      %v3782 = vadd.f32 %v3703, %v3781
      %v3783 = vpop.f32.mrb[0].mxu0
      %3784 = vmatprep.mubr.bf16.mxu0 0
      %3785 = vmatmul.mubr.bf16.gmra.mrb[0].mxu0 %v3728
      %v3786 = vpop.f32.mrb[0].mxu0
      %v3787 = vadd.f32 %v3708, %v3786
      %v3788 = vpop.f32.mrb[0].mxu0
      %v3789 = vpop.f32.mrb[0].mxu0
      %v3790 = vadd.f32 %v3711, %v3789
      %v3791 = vpop.f32.mrb[0].mxu0
      %3792 = vmatprep.mubr.bf16.mxu0 0
      %3793 = vmatmul.mubr.bf16.gmra.mrb[0].mxu0 %v3731
      %v3794 = vpop.f32.mrb[0].mxu0
      %v3795 = vadd.f32 %v3716, %v3794
      %v3796 = vpop.f32.mrb[0].mxu0
      %v3797 = vpop.f32.mrb[0].mxu0
      %v3798 = vpop.f32.mrb[0].mxu0
      %3799 = vdwg.mxu0
      %s3800 = scalar_lea.vmem %s11, 56
      %v3801 = vld [vmem:[%s3800] sm:$0xf]
      %v3802 = vld [vmem:[%s3800 + $0x4] sm:$0xf]
      %v3803 = vld [vmem:[%s3800 + $0x8] sm:$0xf]
      %v3804 = vld [vmem:[%s3800 + $0xc] sm:$0xf]
      %v3805 = vld [vmem:[%s3800 + $0x10] sm:$0xf]
      %v3806 = vld [vmem:[%s3800 + $0x14] sm:$0xf]
      %v3807 = vld [vmem:[%s3800 + $0x18] sm:$0x1]
      %v3815 = vunpack.c.l.b16 %v3801
      %v3816 = vunpack.c.l.b16 %v3802
      %v3817 = vunpack.c.l.b16 %v3803
      %v3818 = vunpack.c.l.b16 %v3804
      %v3819 = vunpack.c.l.b16 %v3805
      %v3820 = vunpack.c.l.b16 %v3806
      %v3821 = vunpack.c.l.b16 %v3807
      %v3822 = vpack.c.b16 %v3816, %v3815
      %v3823 = vpack.c.b16 %v3818, %v3817
      %v3824 = vpack.c.b16 %v3820, %v3819
      %v3825 = vpack.c.b16 %v3821, %v3821
      %v3827 = vsel %vm3446, %v3822, 0
      %v3830 = vsel %vm3446, %v3823, 0
      %v3833 = vsel %vm3446, %v3824, 0
      %v3836 = vsel %vm3446, %v3825, 0
      %3838 = vmatprep.subr.bf16.mxu0 0
      %3839 = vmatpush1.bf16.msra.mxu0 %v3417
      %3840 = vmatprep.subr.bf16.mxu0 0
      %3841 = vmatpush1.bf16.msra.mxu0 %v3418
      %3842 = vmatprep.subr.bf16.mxu0 0
      %3843 = vmatpush1.bf16.msra.mxu0 %v3419
      %3844 = vmatprep.subr.bf16.mxu0 0
      %3845 = vmatpush1.bf16.msra.mxu0 %v3463
      %3846 = vmatprep.subr.bf16.mxu0 0
      %3847 = vmatpush1.bf16.msra.mxu0 0
      %3848 = vmatprep.subr.bf16.mxu0 0
      %3849 = vmatpush1.bf16.msra.mxu0 0
      %3850 = vmatprep.subr.bf16.mxu0 0
      %3851 = vmatpush1.bf16.msra.mxu0 0
      %3852 = vmatprep.subr.bf16.mxu0 0
      %3853 = vmatpush1.bf16.msra.mxu0 0
      %3854 = vmatprep.subr.bf16.mxu0 0
      %3855 = vmatpush1.bf16.msra.mxu0 0
      %3856 = vmatprep.subr.bf16.mxu0 0
      %3857 = vmatpush1.bf16.msra.mxu0 0
      %3858 = vmatprep.subr.bf16.mxu0 0
      %3859 = vmatpush1.bf16.msra.mxu0 0
      %3860 = vmatprep.subr.bf16.mxu0 0
      %3861 = vmatpush1.bf16.msra.mxu0 0
      %3862 = vmatprep.subr.bf16.mxu0 0
      %3863 = vmatpush1.bf16.msra.mxu0 0
      %3864 = vmatprep.subr.bf16.mxu0 0
      %3865 = vmatpush1.bf16.msra.mxu0 0
      %3866 = vmatprep.subr.bf16.mxu0 0
      %3867 = vmatpush1.bf16.msra.mxu0 0
      %3868 = vmatprep.subr.bf16.mxu0 0
      %3869 = vmatpush1.bf16.msra.mxu0 0
      %3870 = vmatprep.mubr.bf16.mxu0 0
      %3871 = vmatmul.mubr.bf16.gmra.mrb[0].mxu0 %v3827
      %v3872 = vpop.f32.mrb[0].mxu0
      %v3873 = vadd.f32 0.0, %v3872
      %v3874 = vpop.f32.mrb[0].mxu0
      %v3875 = vpop.f32.mrb[0].mxu0
      %v3876 = vadd.f32 0.0, %v3875
      %v3877 = vpop.f32.mrb[0].mxu0
      %3878 = vmatprep.mubr.bf16.mxu0 0
      %3879 = vmatmul.mubr.bf16.gmra.mrb[0].mxu0 %v3830
      %v3880 = vpop.f32.mrb[0].mxu0
      %v3881 = vadd.f32 0.0, %v3880
      %v3882 = vpop.f32.mrb[0].mxu0
      %v3883 = vpop.f32.mrb[0].mxu0
      %v3884 = vadd.f32 0.0, %v3883
      %v3885 = vpop.f32.mrb[0].mxu0
      %3886 = vmatprep.mubr.bf16.mxu0 0
      %3887 = vmatmul.mubr.bf16.gmra.mrb[0].mxu0 %v3833
      %v3888 = vpop.f32.mrb[0].mxu0
      %v3889 = vadd.f32 0.0, %v3888
      %v3890 = vpop.f32.mrb[0].mxu0
      %v3891 = vpop.f32.mrb[0].mxu0
      %v3892 = vadd.f32 0.0, %v3891
      %v3893 = vpop.f32.mrb[0].mxu0
      %3894 = vmatprep.mubr.bf16.mxu0 0
      %3895 = vmatmul.mubr.bf16.gmra.mrb[0].mxu0 %v3836
      %v3896 = vpop.f32.mrb[0].mxu0
      %v3897 = vadd.f32 0.0, %v3896
      %v3898 = vpop.f32.mrb[0].mxu0
      %v3899 = vpop.f32.mrb[0].mxu0
      %v3900 = vpop.f32.mrb[0].mxu0
      %3901 = vdwg.mxu0
      %v3902 = vpack.c.bf16 %v3876, %v3873
      %v3903 = vpack.c.bf16 %v3884, %v3881
      %v3904 = vpack.c.bf16 %v3892, %v3889
      %v3905 = vpack.c.bf16 %v3897, %v3897
      %s3906 = scalar_lea.vmem %s14, 8
      %v3907 = vld [vmem:[%s3906] sm:$0xf]
      %v3909 = vsel %vm1332, %v3902, 0
      %v3912 = vsel %vm1332, %v3903, 0
      %v3915 = vsel %vm1332, %v3904, 0
      %v3918 = vsel %vm1332, %v3905, 0
      %v3921 = vsel %vm1345, %v3907, 0
      %3923 = vmatprep.subr.bf16.mxu0 0
      %3924 = vmatpush1.bf16.msra.mxu0 %v3921
      %3925 = vmatprep.subr.bf16.mxu0 0
      %3926 = vmatpush1.bf16.msra.mxu0 0
      %3927 = vmatprep.subr.bf16.mxu0 0
      %3928 = vmatpush1.bf16.msra.mxu0 0
      %3929 = vmatprep.subr.bf16.mxu0 0
      %3930 = vmatpush1.bf16.msra.mxu0 0
      %3931 = vmatprep.subr.bf16.mxu0 0
      %3932 = vmatpush1.bf16.msra.mxu0 0
      %3933 = vmatprep.subr.bf16.mxu0 0
      %3934 = vmatpush1.bf16.msra.mxu0 0
      %3935 = vmatprep.subr.bf16.mxu0 0
      %3936 = vmatpush1.bf16.msra.mxu0 0
      %3937 = vmatprep.subr.bf16.mxu0 0
      %3938 = vmatpush1.bf16.msra.mxu0 0
      %3939 = vmatprep.subr.bf16.mxu0 0
      %3940 = vmatpush1.bf16.msra.mxu0 0
      %3941 = vmatprep.subr.bf16.mxu0 0
      %3942 = vmatpush1.bf16.msra.mxu0 0
      %3943 = vmatprep.subr.bf16.mxu0 0
      %3944 = vmatpush1.bf16.msra.mxu0 0
      %3945 = vmatprep.subr.bf16.mxu0 0
      %3946 = vmatpush1.bf16.msra.mxu0 0
      %3947 = vmatprep.subr.bf16.mxu0 0
      %3948 = vmatpush1.bf16.msra.mxu0 0
      %3949 = vmatprep.subr.bf16.mxu0 0
      %3950 = vmatpush1.bf16.msra.mxu0 0
      %3951 = vmatprep.subr.bf16.mxu0 0
      %3952 = vmatpush1.bf16.msra.mxu0 0
      %3953 = vmatprep.subr.bf16.mxu0 0
      %3954 = vmatpush1.bf16.msra.mxu0 0
      %3955 = vmatprep.mubr.bf16.mxu0 0
      %3956 = vmatmul.mubr.bf16.gmra.mrb[0].mxu0 %v3909
      %v3957 = vpop.f32.mrb[0].mxu0
      %v3958 = vadd.f32 0.0, %v3957
      %v3959 = vpop.f32.mrb[0].mxu0
      %v3960 = vpop.f32.mrb[0].mxu0
      %v3961 = vadd.f32 0.0, %v3960
      %v3962 = vpop.f32.mrb[0].mxu0
      %3963 = vmatprep.mubr.bf16.mxu0 0
      %3964 = vmatmul.mubr.bf16.gmra.mrb[0].mxu0 %v3912
      %v3965 = vpop.f32.mrb[0].mxu0
      %v3966 = vadd.f32 0.0, %v3965
      %v3967 = vpop.f32.mrb[0].mxu0
      %v3968 = vpop.f32.mrb[0].mxu0
      %v3969 = vadd.f32 0.0, %v3968
      %v3970 = vpop.f32.mrb[0].mxu0
      %3971 = vmatprep.mubr.bf16.mxu0 0
      %3972 = vmatmul.mubr.bf16.gmra.mrb[0].mxu0 %v3915
      %v3973 = vpop.f32.mrb[0].mxu0
      %v3974 = vadd.f32 0.0, %v3973
      %v3975 = vpop.f32.mrb[0].mxu0
      %v3976 = vpop.f32.mrb[0].mxu0
      %v3977 = vadd.f32 0.0, %v3976
      %v3978 = vpop.f32.mrb[0].mxu0
      %3979 = vmatprep.mubr.bf16.mxu0 0
      %3980 = vmatmul.mubr.bf16.gmra.mrb[0].mxu0 %v3918
      %v3981 = vpop.f32.mrb[0].mxu0
      %v3982 = vadd.f32 0.0, %v3981
      %v3983 = vpop.f32.mrb[0].mxu0
      %v3984 = vpop.f32.mrb[0].mxu0
      %v3985 = vpop.f32.mrb[0].mxu0
      %3986 = vdwg.mxu0
      %v3987 = vadd.f32 %v3771, %v3958
      %v3988 = vadd.f32 %v3774, %v3961
      %v3989 = vadd.f32 %v3779, %v3966
      %v3990 = vadd.f32 %v3782, %v3969
      %v3991 = vadd.f32 %v3787, %v3974
      %v3992 = vadd.f32 %v3790, %v3977
      %v3993 = vadd.f32 %v3795, %v3982
      %s3994 = scalar_lea.vmem %s11, 84
      %v3995 = vld [vmem:[%s3994] sm:$0xf]
      %v3996 = vld [vmem:[%s3994 + $0x4] sm:$0xf]
      %v3997 = vld [vmem:[%s3994 + $0x8] sm:$0xf]
      %v3998 = vld [vmem:[%s3994 + $0xc] sm:$0xf]
      %v3999 = vld [vmem:[%s3994 + $0x10] sm:$0xf]
      %v4000 = vld [vmem:[%s3994 + $0x14] sm:$0xf]
      %v4001 = vld [vmem:[%s3994 + $0x18] sm:$0x1]
      %v4009 = vunpack.c.l.b16 %v3995
      %v4010 = vunpack.c.l.b16 %v3996
      %v4011 = vunpack.c.l.b16 %v3997
      %v4012 = vunpack.c.l.b16 %v3998
      %v4013 = vunpack.c.l.b16 %v3999
      %v4014 = vunpack.c.l.b16 %v4000
      %v4015 = vunpack.c.l.b16 %v4001
      %v4016 = vpack.c.b16 %v4010, %v4009
      %v4017 = vpack.c.b16 %v4012, %v4011
      %v4018 = vpack.c.b16 %v4014, %v4013
      %v4019 = vpack.c.b16 %v4015, %v4015
      %v4021 = vsel %vm3446, %v4016, 0
      %v4024 = vsel %vm3446, %v4017, 0
      %v4027 = vsel %vm3446, %v4018, 0
      %v4030 = vsel %vm3446, %v4019, 0
      %4032 = vmatprep.subr.bf16.mxu0 0
      %4033 = vmatpush1.bf16.msra.mxu0 %v3417
      %4034 = vmatprep.subr.bf16.mxu0 0
      %4035 = vmatpush1.bf16.msra.mxu0 %v3418
      %4036 = vmatprep.subr.bf16.mxu0 0
      %4037 = vmatpush1.bf16.msra.mxu0 %v3419
      %4038 = vmatprep.subr.bf16.mxu0 0
      %4039 = vmatpush1.bf16.msra.mxu0 %v3463
      %4040 = vmatprep.subr.bf16.mxu0 0
      %4041 = vmatpush1.bf16.msra.mxu0 0
      %4042 = vmatprep.subr.bf16.mxu0 0
      %4043 = vmatpush1.bf16.msra.mxu0 0
      %4044 = vmatprep.subr.bf16.mxu0 0
      %4045 = vmatpush1.bf16.msra.mxu0 0
      %4046 = vmatprep.subr.bf16.mxu0 0
      %4047 = vmatpush1.bf16.msra.mxu0 0
      %4048 = vmatprep.subr.bf16.mxu0 0
      %4049 = vmatpush1.bf16.msra.mxu0 0
      %4050 = vmatprep.subr.bf16.mxu0 0
      %4051 = vmatpush1.bf16.msra.mxu0 0
      %4052 = vmatprep.subr.bf16.mxu0 0
      %4053 = vmatpush1.bf16.msra.mxu0 0
      %4054 = vmatprep.subr.bf16.mxu0 0
      %4055 = vmatpush1.bf16.msra.mxu0 0
      %4056 = vmatprep.subr.bf16.mxu0 0
      %4057 = vmatpush1.bf16.msra.mxu0 0
      %4058 = vmatprep.subr.bf16.mxu0 0
      %4059 = vmatpush1.bf16.msra.mxu0 0
      %4060 = vmatprep.subr.bf16.mxu0 0
      %4061 = vmatpush1.bf16.msra.mxu0 0
      %4062 = vmatprep.subr.bf16.mxu0 0
      %4063 = vmatpush1.bf16.msra.mxu0 0
      %4064 = vmatprep.mubr.bf16.mxu0 0
      %4065 = vmatmul.mubr.bf16.gmra.mrb[0].mxu0 %v4021
      %v4066 = vpop.f32.mrb[0].mxu0
      %v4067 = vadd.f32 0.0, %v4066
      %v4068 = vpop.f32.mrb[0].mxu0
      %v4069 = vpop.f32.mrb[0].mxu0
      %v4070 = vadd.f32 0.0, %v4069
      %v4071 = vpop.f32.mrb[0].mxu0
      %4072 = vmatprep.mubr.bf16.mxu0 0
      %4073 = vmatmul.mubr.bf16.gmra.mrb[0].mxu0 %v4024
      %v4074 = vpop.f32.mrb[0].mxu0
      %v4075 = vadd.f32 0.0, %v4074
      %v4076 = vpop.f32.mrb[0].mxu0
      %v4077 = vpop.f32.mrb[0].mxu0
      %v4078 = vadd.f32 0.0, %v4077
      %v4079 = vpop.f32.mrb[0].mxu0
      %4080 = vmatprep.mubr.bf16.mxu0 0
      %4081 = vmatmul.mubr.bf16.gmra.mrb[0].mxu0 %v4027
      %v4082 = vpop.f32.mrb[0].mxu0
      %v4083 = vadd.f32 0.0, %v4082
      %v4084 = vpop.f32.mrb[0].mxu0
      %v4085 = vpop.f32.mrb[0].mxu0
      %v4086 = vadd.f32 0.0, %v4085
      %v4087 = vpop.f32.mrb[0].mxu0
      %4088 = vmatprep.mubr.bf16.mxu0 0
      %4089 = vmatmul.mubr.bf16.gmra.mrb[0].mxu0 %v4030
      %v4090 = vpop.f32.mrb[0].mxu0
      %v4091 = vadd.f32 0.0, %v4090
      %v4092 = vpop.f32.mrb[0].mxu0
      %v4093 = vpop.f32.mrb[0].mxu0
      %v4094 = vpop.f32.mrb[0].mxu0
      %4095 = vdwg.mxu0
      %v4096 = vpack.c.bf16 %v4070, %v4067
      %v4097 = vpack.c.bf16 %v4078, %v4075
      %v4098 = vpack.c.bf16 %v4086, %v4083
      %v4099 = vpack.c.bf16 %v4091, %v4091
      %s4100 = scalar_lea.vmem %s14, 12
      %v4101 = vld [vmem:[%s4100] sm:$0xf]
      %v4103 = vsel %vm1332, %v4096, 0
      %v4106 = vsel %vm1332, %v4097, 0
      %v4109 = vsel %vm1332, %v4098, 0
      %v4112 = vsel %vm1332, %v4099, 0
      %v4115 = vsel %vm1345, %v4101, 0
      %4117 = vmatprep.subr.bf16.mxu0 0
      %4118 = vmatpush1.bf16.msra.mxu0 %v4115
      %4119 = vmatprep.subr.bf16.mxu0 0
      %4120 = vmatpush1.bf16.msra.mxu0 0
      %4121 = vmatprep.subr.bf16.mxu0 0
      %4122 = vmatpush1.bf16.msra.mxu0 0
      %4123 = vmatprep.subr.bf16.mxu0 0
      %4124 = vmatpush1.bf16.msra.mxu0 0
      %4125 = vmatprep.subr.bf16.mxu0 0
      %4126 = vmatpush1.bf16.msra.mxu0 0
      %4127 = vmatprep.subr.bf16.mxu0 0
      %4128 = vmatpush1.bf16.msra.mxu0 0
      %4129 = vmatprep.subr.bf16.mxu0 0
      %4130 = vmatpush1.bf16.msra.mxu0 0
      %4131 = vmatprep.subr.bf16.mxu0 0
      %4132 = vmatpush1.bf16.msra.mxu0 0
      %4133 = vmatprep.subr.bf16.mxu0 0
      %4134 = vmatpush1.bf16.msra.mxu0 0
      %4135 = vmatprep.subr.bf16.mxu0 0
      %4136 = vmatpush1.bf16.msra.mxu0 0
      %4137 = vmatprep.subr.bf16.mxu0 0
      %4138 = vmatpush1.bf16.msra.mxu0 0
      %4139 = vmatprep.subr.bf16.mxu0 0
      %4140 = vmatpush1.bf16.msra.mxu0 0
      %4141 = vmatprep.subr.bf16.mxu0 0
      %4142 = vmatpush1.bf16.msra.mxu0 0
      %4143 = vmatprep.subr.bf16.mxu0 0
      %4144 = vmatpush1.bf16.msra.mxu0 0
      %4145 = vmatprep.subr.bf16.mxu0 0
      %4146 = vmatpush1.bf16.msra.mxu0 0
      %4147 = vmatprep.subr.bf16.mxu0 0
      %4148 = vmatpush1.bf16.msra.mxu0 0
      %4149 = vmatprep.mubr.bf16.mxu0 0
      %4150 = vmatmul.mubr.bf16.gmra.mrb[0].mxu0 %v4103
      %v4151 = vpop.f32.mrb[0].mxu0
      %v4152 = vadd.f32 0.0, %v4151
      %v4153 = vpop.f32.mrb[0].mxu0
      %v4154 = vpop.f32.mrb[0].mxu0
      %v4155 = vadd.f32 0.0, %v4154
      %v4156 = vpop.f32.mrb[0].mxu0
      %4157 = vmatprep.mubr.bf16.mxu0 0
      %4158 = vmatmul.mubr.bf16.gmra.mrb[0].mxu0 %v4106
      %v4159 = vpop.f32.mrb[0].mxu0
      %v4160 = vadd.f32 0.0, %v4159
      %v4161 = vpop.f32.mrb[0].mxu0
      %v4162 = vpop.f32.mrb[0].mxu0
      %v4163 = vadd.f32 0.0, %v4162
      %v4164 = vpop.f32.mrb[0].mxu0
      %4165 = vmatprep.mubr.bf16.mxu0 0
      %4166 = vmatmul.mubr.bf16.gmra.mrb[0].mxu0 %v4109
      %v4167 = vpop.f32.mrb[0].mxu0
      %v4168 = vadd.f32 0.0, %v4167
      %v4169 = vpop.f32.mrb[0].mxu0
      %v4170 = vpop.f32.mrb[0].mxu0
      %v4171 = vadd.f32 0.0, %v4170
      %v4172 = vpop.f32.mrb[0].mxu0
      %4173 = vmatprep.mubr.bf16.mxu0 0
      %4174 = vmatmul.mubr.bf16.gmra.mrb[0].mxu0 %v4112
      %v4175 = vpop.f32.mrb[0].mxu0
      %v4176 = vadd.f32 0.0, %v4175
      %v4177 = vpop.f32.mrb[0].mxu0
      %v4178 = vpop.f32.mrb[0].mxu0
      %v4179 = vpop.f32.mrb[0].mxu0
      %4180 = vdwg.mxu0
      %v4181 = vadd.f32 %v3987, %v4152
      %v4182 = vadd.f32 %v3988, %v4155
      %v4183 = vadd.f32 %v3989, %v4160
      %v4184 = vadd.f32 %v3990, %v4163
      %v4185 = vadd.f32 %v3991, %v4168
      %v4186 = vadd.f32 %v3992, %v4171
      %v4187 = vadd.f32 %v3993, %v4176
      %s4188 = scalar_lea.vmem %s11, 112
      %v4189 = vld [vmem:[%s4188] sm:$0xf]
      %v4190 = vld [vmem:[%s4188 + $0x4] sm:$0xf]
      %v4191 = vld [vmem:[%s4188 + $0x8] sm:$0xf]
      %v4192 = vld [vmem:[%s4188 + $0xc] sm:$0xf]
      %v4193 = vld [vmem:[%s4188 + $0x10] sm:$0xf]
      %v4194 = vld [vmem:[%s4188 + $0x14] sm:$0xf]
      %v4195 = vld [vmem:[%s4188 + $0x18] sm:$0x1]
      %v4203 = vunpack.c.l.b16 %v4189
      %v4204 = vunpack.c.l.b16 %v4190
      %v4205 = vunpack.c.l.b16 %v4191
      %v4206 = vunpack.c.l.b16 %v4192
      %v4207 = vunpack.c.l.b16 %v4193
      %v4208 = vunpack.c.l.b16 %v4194
      %v4209 = vunpack.c.l.b16 %v4195
      %v4210 = vpack.c.b16 %v4204, %v4203
      %v4211 = vpack.c.b16 %v4206, %v4205
      %v4212 = vpack.c.b16 %v4208, %v4207
      %v4213 = vpack.c.b16 %v4209, %v4209
      %v4215 = vsel %vm3446, %v4210, 0
      %v4218 = vsel %vm3446, %v4211, 0
      %v4221 = vsel %vm3446, %v4212, 0
      %v4224 = vsel %vm3446, %v4213, 0
      %4226 = vmatprep.subr.bf16.mxu0 0
      %4227 = vmatpush1.bf16.msra.mxu0 %v3417
      %4228 = vmatprep.subr.bf16.mxu0 0
      %4229 = vmatpush1.bf16.msra.mxu0 %v3418
      %4230 = vmatprep.subr.bf16.mxu0 0
      %4231 = vmatpush1.bf16.msra.mxu0 %v3419
      %4232 = vmatprep.subr.bf16.mxu0 0
      %4233 = vmatpush1.bf16.msra.mxu0 %v3463
      %4234 = vmatprep.subr.bf16.mxu0 0
      %4235 = vmatpush1.bf16.msra.mxu0 0
      %4236 = vmatprep.subr.bf16.mxu0 0
      %4237 = vmatpush1.bf16.msra.mxu0 0
      %4238 = vmatprep.subr.bf16.mxu0 0
      %4239 = vmatpush1.bf16.msra.mxu0 0
      %4240 = vmatprep.subr.bf16.mxu0 0
      %4241 = vmatpush1.bf16.msra.mxu0 0
      %4242 = vmatprep.subr.bf16.mxu0 0
      %4243 = vmatpush1.bf16.msra.mxu0 0
      %4244 = vmatprep.subr.bf16.mxu0 0
      %4245 = vmatpush1.bf16.msra.mxu0 0
      %4246 = vmatprep.subr.bf16.mxu0 0
      %4247 = vmatpush1.bf16.msra.mxu0 0
      %4248 = vmatprep.subr.bf16.mxu0 0
      %4249 = vmatpush1.bf16.msra.mxu0 0
      %4250 = vmatprep.subr.bf16.mxu0 0
      %4251 = vmatpush1.bf16.msra.mxu0 0
      %4252 = vmatprep.subr.bf16.mxu0 0
      %4253 = vmatpush1.bf16.msra.mxu0 0
      %4254 = vmatprep.subr.bf16.mxu0 0
      %4255 = vmatpush1.bf16.msra.mxu0 0
      %4256 = vmatprep.subr.bf16.mxu0 0
      %4257 = vmatpush1.bf16.msra.mxu0 0
      %4258 = vmatprep.mubr.bf16.mxu0 0
      %4259 = vmatmul.mubr.bf16.gmra.mrb[0].mxu0 %v4215
      %v4260 = vpop.f32.mrb[0].mxu0
      %v4261 = vadd.f32 0.0, %v4260
      %v4262 = vpop.f32.mrb[0].mxu0
      %v4263 = vpop.f32.mrb[0].mxu0
      %v4264 = vadd.f32 0.0, %v4263
      %v4265 = vpop.f32.mrb[0].mxu0
      %4266 = vmatprep.mubr.bf16.mxu0 0
      %4267 = vmatmul.mubr.bf16.gmra.mrb[0].mxu0 %v4218
      %v4268 = vpop.f32.mrb[0].mxu0
      %v4269 = vadd.f32 0.0, %v4268
      %v4270 = vpop.f32.mrb[0].mxu0
      %v4271 = vpop.f32.mrb[0].mxu0
      %v4272 = vadd.f32 0.0, %v4271
      %v4273 = vpop.f32.mrb[0].mxu0
      %4274 = vmatprep.mubr.bf16.mxu0 0
      %4275 = vmatmul.mubr.bf16.gmra.mrb[0].mxu0 %v4221
      %v4276 = vpop.f32.mrb[0].mxu0
      %v4277 = vadd.f32 0.0, %v4276
      %v4278 = vpop.f32.mrb[0].mxu0
      %v4279 = vpop.f32.mrb[0].mxu0
      %v4280 = vadd.f32 0.0, %v4279
      %v4281 = vpop.f32.mrb[0].mxu0
      %4282 = vmatprep.mubr.bf16.mxu0 0
      %4283 = vmatmul.mubr.bf16.gmra.mrb[0].mxu0 %v4224
      %v4284 = vpop.f32.mrb[0].mxu0
      %v4285 = vadd.f32 0.0, %v4284
      %v4286 = vpop.f32.mrb[0].mxu0
      %v4287 = vpop.f32.mrb[0].mxu0
      %v4288 = vpop.f32.mrb[0].mxu0
      %4289 = vdwg.mxu0
      %v4290 = vpack.c.bf16 %v4264, %v4261
      %v4291 = vpack.c.bf16 %v4272, %v4269
      %v4292 = vpack.c.bf16 %v4280, %v4277
      %v4293 = vpack.c.bf16 %v4285, %v4285
      %s4294 = scalar_lea.vmem %s14, 16
      %v4295 = vld [vmem:[%s4294] sm:$0xf]
      %v4297 = vsel %vm1332, %v4290, 0
      %v4300 = vsel %vm1332, %v4291, 0
      %v4303 = vsel %vm1332, %v4292, 0
      %v4306 = vsel %vm1332, %v4293, 0
      %v4309 = vsel %vm1345, %v4295, 0
      %4311 = vmatprep.subr.bf16.mxu0 0
      %4312 = vmatpush1.bf16.msra.mxu0 %v4309
      %4313 = vmatprep.subr.bf16.mxu0 0
      %4314 = vmatpush1.bf16.msra.mxu0 0
      %4315 = vmatprep.subr.bf16.mxu0 0
      %4316 = vmatpush1.bf16.msra.mxu0 0
      %4317 = vmatprep.subr.bf16.mxu0 0
      %4318 = vmatpush1.bf16.msra.mxu0 0
      %4319 = vmatprep.subr.bf16.mxu0 0
      %4320 = vmatpush1.bf16.msra.mxu0 0
      %4321 = vmatprep.subr.bf16.mxu0 0
      %4322 = vmatpush1.bf16.msra.mxu0 0
      %4323 = vmatprep.subr.bf16.mxu0 0
      %4324 = vmatpush1.bf16.msra.mxu0 0
      %4325 = vmatprep.subr.bf16.mxu0 0
      %4326 = vmatpush1.bf16.msra.mxu0 0
      %4327 = vmatprep.subr.bf16.mxu0 0
      %4328 = vmatpush1.bf16.msra.mxu0 0
      %4329 = vmatprep.subr.bf16.mxu0 0
      %4330 = vmatpush1.bf16.msra.mxu0 0
      %4331 = vmatprep.subr.bf16.mxu0 0
      %4332 = vmatpush1.bf16.msra.mxu0 0
      %4333 = vmatprep.subr.bf16.mxu0 0
      %4334 = vmatpush1.bf16.msra.mxu0 0
      %4335 = vmatprep.subr.bf16.mxu0 0
      %4336 = vmatpush1.bf16.msra.mxu0 0
      %4337 = vmatprep.subr.bf16.mxu0 0
      %4338 = vmatpush1.bf16.msra.mxu0 0
      %4339 = vmatprep.subr.bf16.mxu0 0
      %4340 = vmatpush1.bf16.msra.mxu0 0
      %4341 = vmatprep.subr.bf16.mxu0 0
      %4342 = vmatpush1.bf16.msra.mxu0 0
      %4343 = vmatprep.mubr.bf16.mxu0 0
      %4344 = vmatmul.mubr.bf16.gmra.mrb[0].mxu0 %v4297
      %v4345 = vpop.f32.mrb[0].mxu0
      %v4346 = vadd.f32 0.0, %v4345
      %v4347 = vpop.f32.mrb[0].mxu0
      %v4348 = vpop.f32.mrb[0].mxu0
      %v4349 = vadd.f32 0.0, %v4348
      %v4350 = vpop.f32.mrb[0].mxu0
      %4351 = vmatprep.mubr.bf16.mxu0 0
      %4352 = vmatmul.mubr.bf16.gmra.mrb[0].mxu0 %v4300
      %v4353 = vpop.f32.mrb[0].mxu0
      %v4354 = vadd.f32 0.0, %v4353
      %v4355 = vpop.f32.mrb[0].mxu0
      %v4356 = vpop.f32.mrb[0].mxu0
      %v4357 = vadd.f32 0.0, %v4356
      %v4358 = vpop.f32.mrb[0].mxu0
      %4359 = vmatprep.mubr.bf16.mxu0 0
      %4360 = vmatmul.mubr.bf16.gmra.mrb[0].mxu0 %v4303
      %v4361 = vpop.f32.mrb[0].mxu0
      %v4362 = vadd.f32 0.0, %v4361
      %v4363 = vpop.f32.mrb[0].mxu0
      %v4364 = vpop.f32.mrb[0].mxu0
      %v4365 = vadd.f32 0.0, %v4364
      %v4366 = vpop.f32.mrb[0].mxu0
      %4367 = vmatprep.mubr.bf16.mxu0 0
      %4368 = vmatmul.mubr.bf16.gmra.mrb[0].mxu0 %v4306
      %v4369 = vpop.f32.mrb[0].mxu0
      %v4370 = vadd.f32 0.0, %v4369
      %v4371 = vpop.f32.mrb[0].mxu0
      %v4372 = vpop.f32.mrb[0].mxu0
      %v4373 = vpop.f32.mrb[0].mxu0
      %4374 = vdwg.mxu0
      %v4375 = vadd.f32 %v4181, %v4346
      %v4376 = vadd.f32 %v4182, %v4349
      %v4377 = vadd.f32 %v4183, %v4354
      %v4378 = vadd.f32 %v4184, %v4357
      %v4379 = vadd.f32 %v4185, %v4362
      %v4380 = vadd.f32 %v4186, %v4365
      %v4381 = vadd.f32 %v4187, %v4370
      %s4382 = scalar_lea.vmem %s11, 140
      %v4383 = vld [vmem:[%s4382] sm:$0xf]
      %v4384 = vld [vmem:[%s4382 + $0x4] sm:$0xf]
      %v4385 = vld [vmem:[%s4382 + $0x8] sm:$0xf]
      %v4386 = vld [vmem:[%s4382 + $0xc] sm:$0xf]
      %v4387 = vld [vmem:[%s4382 + $0x10] sm:$0xf]
      %v4388 = vld [vmem:[%s4382 + $0x14] sm:$0xf]
      %v4389 = vld [vmem:[%s4382 + $0x18] sm:$0x1]
      %v4397 = vunpack.c.l.b16 %v4383
      %v4398 = vunpack.c.l.b16 %v4384
      %v4399 = vunpack.c.l.b16 %v4385
      %v4400 = vunpack.c.l.b16 %v4386
      %v4401 = vunpack.c.l.b16 %v4387
      %v4402 = vunpack.c.l.b16 %v4388
      %v4403 = vunpack.c.l.b16 %v4389
      %v4404 = vpack.c.b16 %v4398, %v4397
      %v4405 = vpack.c.b16 %v4400, %v4399
      %v4406 = vpack.c.b16 %v4402, %v4401
      %v4407 = vpack.c.b16 %v4403, %v4403
      %v4409 = vsel %vm3446, %v4404, 0
      %v4412 = vsel %vm3446, %v4405, 0
      %v4415 = vsel %vm3446, %v4406, 0
      %v4418 = vsel %vm3446, %v4407, 0
      %4420 = vmatprep.subr.bf16.mxu0 0
      %4421 = vmatpush1.bf16.msra.mxu0 %v3417
      %4422 = vmatprep.subr.bf16.mxu0 0
      %4423 = vmatpush1.bf16.msra.mxu0 %v3418
      %4424 = vmatprep.subr.bf16.mxu0 0
      %4425 = vmatpush1.bf16.msra.mxu0 %v3419
      %4426 = vmatprep.subr.bf16.mxu0 0
      %4427 = vmatpush1.bf16.msra.mxu0 %v3463
      %4428 = vmatprep.subr.bf16.mxu0 0
      %4429 = vmatpush1.bf16.msra.mxu0 0
      %4430 = vmatprep.subr.bf16.mxu0 0
      %4431 = vmatpush1.bf16.msra.mxu0 0
      %4432 = vmatprep.subr.bf16.mxu0 0
      %4433 = vmatpush1.bf16.msra.mxu0 0
      %4434 = vmatprep.subr.bf16.mxu0 0
      %4435 = vmatpush1.bf16.msra.mxu0 0
      %4436 = vmatprep.subr.bf16.mxu0 0
      %4437 = vmatpush1.bf16.msra.mxu0 0
      %4438 = vmatprep.subr.bf16.mxu0 0
      %4439 = vmatpush1.bf16.msra.mxu0 0
      %4440 = vmatprep.subr.bf16.mxu0 0
      %4441 = vmatpush1.bf16.msra.mxu0 0
      %4442 = vmatprep.subr.bf16.mxu0 0
      %4443 = vmatpush1.bf16.msra.mxu0 0
      %4444 = vmatprep.subr.bf16.mxu0 0
      %4445 = vmatpush1.bf16.msra.mxu0 0
      %4446 = vmatprep.subr.bf16.mxu0 0
      %4447 = vmatpush1.bf16.msra.mxu0 0
      %4448 = vmatprep.subr.bf16.mxu0 0
      %4449 = vmatpush1.bf16.msra.mxu0 0
      %4450 = vmatprep.subr.bf16.mxu0 0
      %4451 = vmatpush1.bf16.msra.mxu0 0
      %4452 = vmatprep.mubr.bf16.mxu0 0
      %4453 = vmatmul.mubr.bf16.gmra.mrb[0].mxu0 %v4409
      %v4454 = vpop.f32.mrb[0].mxu0
      %v4455 = vadd.f32 0.0, %v4454
      %v4456 = vpop.f32.mrb[0].mxu0
      %v4457 = vpop.f32.mrb[0].mxu0
      %v4458 = vadd.f32 0.0, %v4457
      %v4459 = vpop.f32.mrb[0].mxu0
      %4460 = vmatprep.mubr.bf16.mxu0 0
      %4461 = vmatmul.mubr.bf16.gmra.mrb[0].mxu0 %v4412
      %v4462 = vpop.f32.mrb[0].mxu0
      %v4463 = vadd.f32 0.0, %v4462
      %v4464 = vpop.f32.mrb[0].mxu0
      %v4465 = vpop.f32.mrb[0].mxu0
      %v4466 = vadd.f32 0.0, %v4465
      %v4467 = vpop.f32.mrb[0].mxu0
      %4468 = vmatprep.mubr.bf16.mxu0 0
      %4469 = vmatmul.mubr.bf16.gmra.mrb[0].mxu0 %v4415
      %v4470 = vpop.f32.mrb[0].mxu0
      %v4471 = vadd.f32 0.0, %v4470
      %v4472 = vpop.f32.mrb[0].mxu0
      %v4473 = vpop.f32.mrb[0].mxu0
      %v4474 = vadd.f32 0.0, %v4473
      %v4475 = vpop.f32.mrb[0].mxu0
      %4476 = vmatprep.mubr.bf16.mxu0 0
      %4477 = vmatmul.mubr.bf16.gmra.mrb[0].mxu0 %v4418
      %v4478 = vpop.f32.mrb[0].mxu0
      %v4479 = vadd.f32 0.0, %v4478
      %v4480 = vpop.f32.mrb[0].mxu0
      %v4481 = vpop.f32.mrb[0].mxu0
      %v4482 = vpop.f32.mrb[0].mxu0
      %4483 = vdwg.mxu0
      %v4484 = vpack.c.bf16 %v4458, %v4455
      %v4485 = vpack.c.bf16 %v4466, %v4463
      %v4486 = vpack.c.bf16 %v4474, %v4471
      %v4487 = vpack.c.bf16 %v4479, %v4479
      %s4488 = scalar_lea.vmem %s14, 20
      %v4489 = vld [vmem:[%s4488] sm:$0xf]
      %v4491 = vsel %vm1332, %v4484, 0
      %v4494 = vsel %vm1332, %v4485, 0
      %v4497 = vsel %vm1332, %v4486, 0
      %v4500 = vsel %vm1332, %v4487, 0
      %v4503 = vsel %vm1345, %v4489, 0
      %4505 = vmatprep.subr.bf16.mxu0 0
      %4506 = vmatpush1.bf16.msra.mxu0 %v4503
      %4507 = vmatprep.subr.bf16.mxu0 0
      %4508 = vmatpush1.bf16.msra.mxu0 0
      %4509 = vmatprep.subr.bf16.mxu0 0
      %4510 = vmatpush1.bf16.msra.mxu0 0
      %4511 = vmatprep.subr.bf16.mxu0 0
      %4512 = vmatpush1.bf16.msra.mxu0 0
      %4513 = vmatprep.subr.bf16.mxu0 0
      %4514 = vmatpush1.bf16.msra.mxu0 0
      %4515 = vmatprep.subr.bf16.mxu0 0
      %4516 = vmatpush1.bf16.msra.mxu0 0
      %4517 = vmatprep.subr.bf16.mxu0 0
      %4518 = vmatpush1.bf16.msra.mxu0 0
      %4519 = vmatprep.subr.bf16.mxu0 0
      %4520 = vmatpush1.bf16.msra.mxu0 0
      %4521 = vmatprep.subr.bf16.mxu0 0
      %4522 = vmatpush1.bf16.msra.mxu0 0
      %4523 = vmatprep.subr.bf16.mxu0 0
      %4524 = vmatpush1.bf16.msra.mxu0 0
      %4525 = vmatprep.subr.bf16.mxu0 0
      %4526 = vmatpush1.bf16.msra.mxu0 0
      %4527 = vmatprep.subr.bf16.mxu0 0
      %4528 = vmatpush1.bf16.msra.mxu0 0
      %4529 = vmatprep.subr.bf16.mxu0 0
      %4530 = vmatpush1.bf16.msra.mxu0 0
      %4531 = vmatprep.subr.bf16.mxu0 0
      %4532 = vmatpush1.bf16.msra.mxu0 0
      %4533 = vmatprep.subr.bf16.mxu0 0
      %4534 = vmatpush1.bf16.msra.mxu0 0
      %4535 = vmatprep.subr.bf16.mxu0 0
      %4536 = vmatpush1.bf16.msra.mxu0 0
      %4537 = vmatprep.mubr.bf16.mxu0 0
      %4538 = vmatmul.mubr.bf16.gmra.mrb[0].mxu0 %v4491
      %v4539 = vpop.f32.mrb[0].mxu0
      %v4540 = vadd.f32 0.0, %v4539
      %v4541 = vpop.f32.mrb[0].mxu0
      %v4542 = vpop.f32.mrb[0].mxu0
      %v4543 = vadd.f32 0.0, %v4542
      %v4544 = vpop.f32.mrb[0].mxu0
      %4545 = vmatprep.mubr.bf16.mxu0 0
      %4546 = vmatmul.mubr.bf16.gmra.mrb[0].mxu0 %v4494
      %v4547 = vpop.f32.mrb[0].mxu0
      %v4548 = vadd.f32 0.0, %v4547
      %v4549 = vpop.f32.mrb[0].mxu0
      %v4550 = vpop.f32.mrb[0].mxu0
      %v4551 = vadd.f32 0.0, %v4550
      %v4552 = vpop.f32.mrb[0].mxu0
      %4553 = vmatprep.mubr.bf16.mxu0 0
      %4554 = vmatmul.mubr.bf16.gmra.mrb[0].mxu0 %v4497
      %v4555 = vpop.f32.mrb[0].mxu0
      %v4556 = vadd.f32 0.0, %v4555
      %v4557 = vpop.f32.mrb[0].mxu0
      %v4558 = vpop.f32.mrb[0].mxu0
      %v4559 = vadd.f32 0.0, %v4558
      %v4560 = vpop.f32.mrb[0].mxu0
      %4561 = vmatprep.mubr.bf16.mxu0 0
      %4562 = vmatmul.mubr.bf16.gmra.mrb[0].mxu0 %v4500
      %v4563 = vpop.f32.mrb[0].mxu0
      %v4564 = vadd.f32 0.0, %v4563
      %v4565 = vpop.f32.mrb[0].mxu0
      %v4566 = vpop.f32.mrb[0].mxu0
      %v4567 = vpop.f32.mrb[0].mxu0
      %4568 = vdwg.mxu0
      %v4569 = vadd.f32 %v4375, %v4540
      %v4570 = vadd.f32 %v4376, %v4543
      %v4571 = vadd.f32 %v4377, %v4548
      %v4572 = vadd.f32 %v4378, %v4551
      %v4573 = vadd.f32 %v4379, %v4556
      %v4574 = vadd.f32 %v4380, %v4559
      %v4575 = vadd.f32 %v4381, %v4564
      %s4576 = scalar_lea.vmem %s11, 168
      %v4577 = vld [vmem:[%s4576] sm:$0xf]
      %v4578 = vld [vmem:[%s4576 + $0x4] sm:$0xf]
      %v4579 = vld [vmem:[%s4576 + $0x8] sm:$0xf]
      %v4580 = vld [vmem:[%s4576 + $0xc] sm:$0xf]
      %v4581 = vld [vmem:[%s4576 + $0x10] sm:$0xf]
      %v4582 = vld [vmem:[%s4576 + $0x14] sm:$0xf]
      %v4583 = vld [vmem:[%s4576 + $0x18] sm:$0x1]
      %v4591 = vunpack.c.l.b16 %v4577
      %v4592 = vunpack.c.l.b16 %v4578
      %v4593 = vunpack.c.l.b16 %v4579
      %v4594 = vunpack.c.l.b16 %v4580
      %v4595 = vunpack.c.l.b16 %v4581
      %v4596 = vunpack.c.l.b16 %v4582
      %v4597 = vunpack.c.l.b16 %v4583
      %v4598 = vpack.c.b16 %v4592, %v4591
      %v4599 = vpack.c.b16 %v4594, %v4593
      %v4600 = vpack.c.b16 %v4596, %v4595
      %v4601 = vpack.c.b16 %v4597, %v4597
      %v4603 = vsel %vm3446, %v4598, 0
      %v4606 = vsel %vm3446, %v4599, 0
      %v4609 = vsel %vm3446, %v4600, 0
      %v4612 = vsel %vm3446, %v4601, 0
      %4614 = vmatprep.subr.bf16.mxu0 0
      %4615 = vmatpush1.bf16.msra.mxu0 %v3417
      %4616 = vmatprep.subr.bf16.mxu0 0
      %4617 = vmatpush1.bf16.msra.mxu0 %v3418
      %4618 = vmatprep.subr.bf16.mxu0 0
      %4619 = vmatpush1.bf16.msra.mxu0 %v3419
      %4620 = vmatprep.subr.bf16.mxu0 0
      %4621 = vmatpush1.bf16.msra.mxu0 %v3463
      %4622 = vmatprep.subr.bf16.mxu0 0
      %4623 = vmatpush1.bf16.msra.mxu0 0
      %4624 = vmatprep.subr.bf16.mxu0 0
      %4625 = vmatpush1.bf16.msra.mxu0 0
      %4626 = vmatprep.subr.bf16.mxu0 0
      %4627 = vmatpush1.bf16.msra.mxu0 0
      %4628 = vmatprep.subr.bf16.mxu0 0
      %4629 = vmatpush1.bf16.msra.mxu0 0
      %4630 = vmatprep.subr.bf16.mxu0 0
      %4631 = vmatpush1.bf16.msra.mxu0 0
      %4632 = vmatprep.subr.bf16.mxu0 0
      %4633 = vmatpush1.bf16.msra.mxu0 0
      %4634 = vmatprep.subr.bf16.mxu0 0
      %4635 = vmatpush1.bf16.msra.mxu0 0
      %4636 = vmatprep.subr.bf16.mxu0 0
      %4637 = vmatpush1.bf16.msra.mxu0 0
      %4638 = vmatprep.subr.bf16.mxu0 0
      %4639 = vmatpush1.bf16.msra.mxu0 0
      %4640 = vmatprep.subr.bf16.mxu0 0
      %4641 = vmatpush1.bf16.msra.mxu0 0
      %4642 = vmatprep.subr.bf16.mxu0 0
      %4643 = vmatpush1.bf16.msra.mxu0 0
      %4644 = vmatprep.subr.bf16.mxu0 0
      %4645 = vmatpush1.bf16.msra.mxu0 0
      %4646 = vmatprep.mubr.bf16.mxu0 0
      %4647 = vmatmul.mubr.bf16.gmra.mrb[0].mxu0 %v4603
      %v4648 = vpop.f32.mrb[0].mxu0
      %v4649 = vadd.f32 0.0, %v4648
      %v4650 = vpop.f32.mrb[0].mxu0
      %v4651 = vpop.f32.mrb[0].mxu0
      %v4652 = vadd.f32 0.0, %v4651
      %v4653 = vpop.f32.mrb[0].mxu0
      %4654 = vmatprep.mubr.bf16.mxu0 0
      %4655 = vmatmul.mubr.bf16.gmra.mrb[0].mxu0 %v4606
      %v4656 = vpop.f32.mrb[0].mxu0
      %v4657 = vadd.f32 0.0, %v4656
      %v4658 = vpop.f32.mrb[0].mxu0
      %v4659 = vpop.f32.mrb[0].mxu0
      %v4660 = vadd.f32 0.0, %v4659
      %v4661 = vpop.f32.mrb[0].mxu0
      %4662 = vmatprep.mubr.bf16.mxu0 0
      %4663 = vmatmul.mubr.bf16.gmra.mrb[0].mxu0 %v4609
      %v4664 = vpop.f32.mrb[0].mxu0
      %v4665 = vadd.f32 0.0, %v4664
      %v4666 = vpop.f32.mrb[0].mxu0
      %v4667 = vpop.f32.mrb[0].mxu0
      %v4668 = vadd.f32 0.0, %v4667
      %v4669 = vpop.f32.mrb[0].mxu0
      %4670 = vmatprep.mubr.bf16.mxu0 0
      %4671 = vmatmul.mubr.bf16.gmra.mrb[0].mxu0 %v4612
      %v4672 = vpop.f32.mrb[0].mxu0
      %v4673 = vadd.f32 0.0, %v4672
      %v4674 = vpop.f32.mrb[0].mxu0
      %v4675 = vpop.f32.mrb[0].mxu0
      %v4676 = vpop.f32.mrb[0].mxu0
      %4677 = vdwg.mxu0
      %v4678 = vpack.c.bf16 %v4652, %v4649
      %v4679 = vpack.c.bf16 %v4660, %v4657
      %v4680 = vpack.c.bf16 %v4668, %v4665
      %v4681 = vpack.c.bf16 %v4673, %v4673
      %s4682 = scalar_lea.vmem %s14, 24
      %v4683 = vld [vmem:[%s4682] sm:$0xf]
      %v4685 = vsel %vm1332, %v4678, 0
      %v4688 = vsel %vm1332, %v4679, 0
      %v4691 = vsel %vm1332, %v4680, 0
      %v4694 = vsel %vm1332, %v4681, 0
      %v4697 = vsel %vm1345, %v4683, 0
      %4699 = vmatprep.subr.bf16.mxu0 0
      %4700 = vmatpush1.bf16.msra.mxu0 %v4697
      %4701 = vmatprep.subr.bf16.mxu0 0
      %4702 = vmatpush1.bf16.msra.mxu0 0
      %4703 = vmatprep.subr.bf16.mxu0 0
      %4704 = vmatpush1.bf16.msra.mxu0 0
      %4705 = vmatprep.subr.bf16.mxu0 0
      %4706 = vmatpush1.bf16.msra.mxu0 0
      %4707 = vmatprep.subr.bf16.mxu0 0
      %4708 = vmatpush1.bf16.msra.mxu0 0
      %4709 = vmatprep.subr.bf16.mxu0 0
      %4710 = vmatpush1.bf16.msra.mxu0 0
      %4711 = vmatprep.subr.bf16.mxu0 0
      %4712 = vmatpush1.bf16.msra.mxu0 0
      %4713 = vmatprep.subr.bf16.mxu0 0
      %4714 = vmatpush1.bf16.msra.mxu0 0
      %4715 = vmatprep.subr.bf16.mxu0 0
      %4716 = vmatpush1.bf16.msra.mxu0 0
      %4717 = vmatprep.subr.bf16.mxu0 0
      %4718 = vmatpush1.bf16.msra.mxu0 0
      %4719 = vmatprep.subr.bf16.mxu0 0
      %4720 = vmatpush1.bf16.msra.mxu0 0
      %4721 = vmatprep.subr.bf16.mxu0 0
      %4722 = vmatpush1.bf16.msra.mxu0 0
      %4723 = vmatprep.subr.bf16.mxu0 0
      %4724 = vmatpush1.bf16.msra.mxu0 0
      %4725 = vmatprep.subr.bf16.mxu0 0
      %4726 = vmatpush1.bf16.msra.mxu0 0
      %4727 = vmatprep.subr.bf16.mxu0 0
      %4728 = vmatpush1.bf16.msra.mxu0 0
      %4729 = vmatprep.subr.bf16.mxu0 0
      %4730 = vmatpush1.bf16.msra.mxu0 0
      %4731 = vmatprep.mubr.bf16.mxu0 0
      %4732 = vmatmul.mubr.bf16.gmra.mrb[0].mxu0 %v4685
      %v4733 = vpop.f32.mrb[0].mxu0
      %v4734 = vadd.f32 0.0, %v4733
      %v4735 = vpop.f32.mrb[0].mxu0
      %v4736 = vpop.f32.mrb[0].mxu0
      %v4737 = vadd.f32 0.0, %v4736
      %v4738 = vpop.f32.mrb[0].mxu0
      %4739 = vmatprep.mubr.bf16.mxu0 0
      %4740 = vmatmul.mubr.bf16.gmra.mrb[0].mxu0 %v4688
      %v4741 = vpop.f32.mrb[0].mxu0
      %v4742 = vadd.f32 0.0, %v4741
      %v4743 = vpop.f32.mrb[0].mxu0
      %v4744 = vpop.f32.mrb[0].mxu0
      %v4745 = vadd.f32 0.0, %v4744
      %v4746 = vpop.f32.mrb[0].mxu0
      %4747 = vmatprep.mubr.bf16.mxu0 0
      %4748 = vmatmul.mubr.bf16.gmra.mrb[0].mxu0 %v4691
      %v4749 = vpop.f32.mrb[0].mxu0
      %v4750 = vadd.f32 0.0, %v4749
      %v4751 = vpop.f32.mrb[0].mxu0
      %v4752 = vpop.f32.mrb[0].mxu0
      %v4753 = vadd.f32 0.0, %v4752
      %v4754 = vpop.f32.mrb[0].mxu0
      %4755 = vmatprep.mubr.bf16.mxu0 0
      %4756 = vmatmul.mubr.bf16.gmra.mrb[0].mxu0 %v4694
      %v4757 = vpop.f32.mrb[0].mxu0
      %v4758 = vadd.f32 0.0, %v4757
      %v4759 = vpop.f32.mrb[0].mxu0
      %v4760 = vpop.f32.mrb[0].mxu0
      %v4761 = vpop.f32.mrb[0].mxu0
      %4762 = vdwg.mxu0
      %v4763 = vadd.f32 %v4569, %v4734
      %v4764 = vadd.f32 %v4570, %v4737
      %v4765 = vadd.f32 %v4571, %v4742
      %v4766 = vadd.f32 %v4572, %v4745
      %v4767 = vadd.f32 %v4573, %v4750
      %v4768 = vadd.f32 %v4574, %v4753
      %v4769 = vadd.f32 %v4575, %v4758
      %s4770 = scalar_lea.vmem %s11, 196
      %v4771 = vld [vmem:[%s4770] sm:$0xf]
      %v4772 = vld [vmem:[%s4770 + $0x4] sm:$0xf]
      %v4773 = vld [vmem:[%s4770 + $0x8] sm:$0xf]
      %v4774 = vld [vmem:[%s4770 + $0xc] sm:$0xf]
      %v4775 = vld [vmem:[%s4770 + $0x10] sm:$0xf]
      %v4776 = vld [vmem:[%s4770 + $0x14] sm:$0xf]
      %v4777 = vld [vmem:[%s4770 + $0x18] sm:$0x1]
      %v4785 = vunpack.c.l.b16 %v4771
      %v4786 = vunpack.c.l.b16 %v4772
      %v4787 = vunpack.c.l.b16 %v4773
      %v4788 = vunpack.c.l.b16 %v4774
      %v4789 = vunpack.c.l.b16 %v4775
      %v4790 = vunpack.c.l.b16 %v4776
      %v4791 = vunpack.c.l.b16 %v4777
      %v4792 = vpack.c.b16 %v4786, %v4785
      %v4793 = vpack.c.b16 %v4788, %v4787
      %v4794 = vpack.c.b16 %v4790, %v4789
      %v4795 = vpack.c.b16 %v4791, %v4791
      %v4797 = vsel %vm3446, %v4792, 0
      %v4800 = vsel %vm3446, %v4793, 0
      %v4803 = vsel %vm3446, %v4794, 0
      %v4806 = vsel %vm3446, %v4795, 0
      %4808 = vmatprep.subr.bf16.mxu0 0
      %4809 = vmatpush1.bf16.msra.mxu0 %v3417
      %4810 = vmatprep.subr.bf16.mxu0 0
      %4811 = vmatpush1.bf16.msra.mxu0 %v3418
      %4812 = vmatprep.subr.bf16.mxu0 0
      %4813 = vmatpush1.bf16.msra.mxu0 %v3419
      %4814 = vmatprep.subr.bf16.mxu0 0
      %4815 = vmatpush1.bf16.msra.mxu0 %v3463
      %4816 = vmatprep.subr.bf16.mxu0 0
      %4817 = vmatpush1.bf16.msra.mxu0 0
      %4818 = vmatprep.subr.bf16.mxu0 0
      %4819 = vmatpush1.bf16.msra.mxu0 0
      %4820 = vmatprep.subr.bf16.mxu0 0
      %4821 = vmatpush1.bf16.msra.mxu0 0
      %4822 = vmatprep.subr.bf16.mxu0 0
      %4823 = vmatpush1.bf16.msra.mxu0 0
      %4824 = vmatprep.subr.bf16.mxu0 0
      %4825 = vmatpush1.bf16.msra.mxu0 0
      %4826 = vmatprep.subr.bf16.mxu0 0
      %4827 = vmatpush1.bf16.msra.mxu0 0
      %4828 = vmatprep.subr.bf16.mxu0 0
      %4829 = vmatpush1.bf16.msra.mxu0 0
      %4830 = vmatprep.subr.bf16.mxu0 0
      %4831 = vmatpush1.bf16.msra.mxu0 0
      %4832 = vmatprep.subr.bf16.mxu0 0
      %4833 = vmatpush1.bf16.msra.mxu0 0
      %4834 = vmatprep.subr.bf16.mxu0 0
      %4835 = vmatpush1.bf16.msra.mxu0 0
      %4836 = vmatprep.subr.bf16.mxu0 0
      %4837 = vmatpush1.bf16.msra.mxu0 0
      %4838 = vmatprep.subr.bf16.mxu0 0
      %4839 = vmatpush1.bf16.msra.mxu0 0
      %4840 = vmatprep.mubr.bf16.mxu0 0
      %4841 = vmatmul.mubr.bf16.gmra.mrb[0].mxu0 %v4797
      %v4842 = vpop.f32.mrb[0].mxu0
      %v4843 = vadd.f32 0.0, %v4842
      %v4844 = vpop.f32.mrb[0].mxu0
      %v4845 = vpop.f32.mrb[0].mxu0
      %v4846 = vadd.f32 0.0, %v4845
      %v4847 = vpop.f32.mrb[0].mxu0
      %4848 = vmatprep.mubr.bf16.mxu0 0
      %4849 = vmatmul.mubr.bf16.gmra.mrb[0].mxu0 %v4800
      %v4850 = vpop.f32.mrb[0].mxu0
      %v4851 = vadd.f32 0.0, %v4850
      %v4852 = vpop.f32.mrb[0].mxu0
      %v4853 = vpop.f32.mrb[0].mxu0
      %v4854 = vadd.f32 0.0, %v4853
      %v4855 = vpop.f32.mrb[0].mxu0
      %4856 = vmatprep.mubr.bf16.mxu0 0
      %4857 = vmatmul.mubr.bf16.gmra.mrb[0].mxu0 %v4803
      %v4858 = vpop.f32.mrb[0].mxu0
      %v4859 = vadd.f32 0.0, %v4858
      %v4860 = vpop.f32.mrb[0].mxu0
      %v4861 = vpop.f32.mrb[0].mxu0
      %v4862 = vadd.f32 0.0, %v4861
      %v4863 = vpop.f32.mrb[0].mxu0
      %4864 = vmatprep.mubr.bf16.mxu0 0
      %4865 = vmatmul.mubr.bf16.gmra.mrb[0].mxu0 %v4806
      %v4866 = vpop.f32.mrb[0].mxu0
      %v4867 = vadd.f32 0.0, %v4866
      %v4868 = vpop.f32.mrb[0].mxu0
      %v4869 = vpop.f32.mrb[0].mxu0
      %v4870 = vpop.f32.mrb[0].mxu0
      %4871 = vdwg.mxu0
      %v4872 = vpack.c.bf16 %v4846, %v4843
      %v4873 = vpack.c.bf16 %v4854, %v4851
      %v4874 = vpack.c.bf16 %v4862, %v4859
      %v4875 = vpack.c.bf16 %v4867, %v4867
      %s4876 = scalar_lea.vmem %s14, 28
      %v4877 = vld [vmem:[%s4876] sm:$0xf]
      %v4879 = vsel %vm1332, %v4872, 0
      %v4882 = vsel %vm1332, %v4873, 0
      %v4885 = vsel %vm1332, %v4874, 0
      %v4888 = vsel %vm1332, %v4875, 0
      %v4891 = vsel %vm1345, %v4877, 0
      %4893 = vmatprep.subr.bf16.mxu0 0
      %4894 = vmatpush1.bf16.msra.mxu0 %v4891
      %4895 = vmatprep.subr.bf16.mxu0 0
      %4896 = vmatpush1.bf16.msra.mxu0 0
      %4897 = vmatprep.subr.bf16.mxu0 0
      %4898 = vmatpush1.bf16.msra.mxu0 0
      %4899 = vmatprep.subr.bf16.mxu0 0
      %4900 = vmatpush1.bf16.msra.mxu0 0
      %4901 = vmatprep.subr.bf16.mxu0 0
      %4902 = vmatpush1.bf16.msra.mxu0 0
      %4903 = vmatprep.subr.bf16.mxu0 0
      %4904 = vmatpush1.bf16.msra.mxu0 0
      %4905 = vmatprep.subr.bf16.mxu0 0
      %4906 = vmatpush1.bf16.msra.mxu0 0
      %4907 = vmatprep.subr.bf16.mxu0 0
      %4908 = vmatpush1.bf16.msra.mxu0 0
      %4909 = vmatprep.subr.bf16.mxu0 0
      %4910 = vmatpush1.bf16.msra.mxu0 0
      %4911 = vmatprep.subr.bf16.mxu0 0
      %4912 = vmatpush1.bf16.msra.mxu0 0
      %4913 = vmatprep.subr.bf16.mxu0 0
      %4914 = vmatpush1.bf16.msra.mxu0 0
      %4915 = vmatprep.subr.bf16.mxu0 0
      %4916 = vmatpush1.bf16.msra.mxu0 0
      %4917 = vmatprep.subr.bf16.mxu0 0
      %4918 = vmatpush1.bf16.msra.mxu0 0
      %4919 = vmatprep.subr.bf16.mxu0 0
      %4920 = vmatpush1.bf16.msra.mxu0 0
      %4921 = vmatprep.subr.bf16.mxu0 0
      %4922 = vmatpush1.bf16.msra.mxu0 0
      %4923 = vmatprep.subr.bf16.mxu0 0
      %4924 = vmatpush1.bf16.msra.mxu0 0
      %4925 = vmatprep.mubr.bf16.mxu0 0
      %4926 = vmatmul.mubr.bf16.gmra.mrb[0].mxu0 %v4879
      %v4927 = vpop.f32.mrb[0].mxu0
      %v4928 = vadd.f32 0.0, %v4927
      %v4929 = vpop.f32.mrb[0].mxu0
      %v4930 = vpop.f32.mrb[0].mxu0
      %v4931 = vadd.f32 0.0, %v4930
      %v4932 = vpop.f32.mrb[0].mxu0
      %4933 = vmatprep.mubr.bf16.mxu0 0
      %4934 = vmatmul.mubr.bf16.gmra.mrb[0].mxu0 %v4882
      %v4935 = vpop.f32.mrb[0].mxu0
      %v4936 = vadd.f32 0.0, %v4935
      %v4937 = vpop.f32.mrb[0].mxu0
      %v4938 = vpop.f32.mrb[0].mxu0
      %v4939 = vadd.f32 0.0, %v4938
      %v4940 = vpop.f32.mrb[0].mxu0
      %4941 = vmatprep.mubr.bf16.mxu0 0
      %4942 = vmatmul.mubr.bf16.gmra.mrb[0].mxu0 %v4885
      %v4943 = vpop.f32.mrb[0].mxu0
      %v4944 = vadd.f32 0.0, %v4943
      %v4945 = vpop.f32.mrb[0].mxu0
      %v4946 = vpop.f32.mrb[0].mxu0
      %v4947 = vadd.f32 0.0, %v4946
      %v4948 = vpop.f32.mrb[0].mxu0
      %4949 = vmatprep.mubr.bf16.mxu0 0
      %4950 = vmatmul.mubr.bf16.gmra.mrb[0].mxu0 %v4888
      %v4951 = vpop.f32.mrb[0].mxu0
      %v4952 = vadd.f32 0.0, %v4951
      %v4953 = vpop.f32.mrb[0].mxu0
      %v4954 = vpop.f32.mrb[0].mxu0
      %v4955 = vpop.f32.mrb[0].mxu0
      %4956 = vdwg.mxu0
      %v4957 = vadd.f32 %v4763, %v4928
      %v4958 = vadd.f32 %v4764, %v4931
      %v4959 = vadd.f32 %v4765, %v4936
      %v4960 = vadd.f32 %v4766, %v4939
      %v4961 = vadd.f32 %v4767, %v4944
      %v4962 = vadd.f32 %v4768, %v4947
      %v4963 = vadd.f32 %v4769, %v4952
      %s4964 = scalar_lea.vmem %s11, 224
      %v4965 = vld [vmem:[%s4964] sm:$0xf]
      %v4966 = vld [vmem:[%s4964 + $0x4] sm:$0xf]
      %v4967 = vld [vmem:[%s4964 + $0x8] sm:$0xf]
      %v4968 = vld [vmem:[%s4964 + $0xc] sm:$0xf]
      %v4969 = vld [vmem:[%s4964 + $0x10] sm:$0xf]
      %v4970 = vld [vmem:[%s4964 + $0x14] sm:$0xf]
      %v4971 = vld [vmem:[%s4964 + $0x18] sm:$0x1]
      %v4979 = vunpack.c.l.b16 %v4965
      %v4980 = vunpack.c.l.b16 %v4966
      %v4981 = vunpack.c.l.b16 %v4967
      %v4982 = vunpack.c.l.b16 %v4968
      %v4983 = vunpack.c.l.b16 %v4969
      %v4984 = vunpack.c.l.b16 %v4970
      %v4985 = vunpack.c.l.b16 %v4971
      %v4986 = vpack.c.b16 %v4980, %v4979
      %v4987 = vpack.c.b16 %v4982, %v4981
      %v4988 = vpack.c.b16 %v4984, %v4983
      %v4989 = vpack.c.b16 %v4985, %v4985
      %v4991 = vsel %vm3446, %v4986, 0
      %v4994 = vsel %vm3446, %v4987, 0
      %v4997 = vsel %vm3446, %v4988, 0
      %v5000 = vsel %vm3446, %v4989, 0
      %5002 = vmatprep.subr.bf16.mxu0 0
      %5003 = vmatpush1.bf16.msra.mxu0 %v3417
      %5004 = vmatprep.subr.bf16.mxu0 0
      %5005 = vmatpush1.bf16.msra.mxu0 %v3418
      %5006 = vmatprep.subr.bf16.mxu0 0
      %5007 = vmatpush1.bf16.msra.mxu0 %v3419
      %5008 = vmatprep.subr.bf16.mxu0 0
      %5009 = vmatpush1.bf16.msra.mxu0 %v3463
      %5010 = vmatprep.subr.bf16.mxu0 0
      %5011 = vmatpush1.bf16.msra.mxu0 0
      %5012 = vmatprep.subr.bf16.mxu0 0
      %5013 = vmatpush1.bf16.msra.mxu0 0
      %5014 = vmatprep.subr.bf16.mxu0 0
      %5015 = vmatpush1.bf16.msra.mxu0 0
      %5016 = vmatprep.subr.bf16.mxu0 0
      %5017 = vmatpush1.bf16.msra.mxu0 0
      %5018 = vmatprep.subr.bf16.mxu0 0
      %5019 = vmatpush1.bf16.msra.mxu0 0
      %5020 = vmatprep.subr.bf16.mxu0 0
      %5021 = vmatpush1.bf16.msra.mxu0 0
      %5022 = vmatprep.subr.bf16.mxu0 0
      %5023 = vmatpush1.bf16.msra.mxu0 0
      %5024 = vmatprep.subr.bf16.mxu0 0
      %5025 = vmatpush1.bf16.msra.mxu0 0
      %5026 = vmatprep.subr.bf16.mxu0 0
      %5027 = vmatpush1.bf16.msra.mxu0 0
      %5028 = vmatprep.subr.bf16.mxu0 0
      %5029 = vmatpush1.bf16.msra.mxu0 0
      %5030 = vmatprep.subr.bf16.mxu0 0
      %5031 = vmatpush1.bf16.msra.mxu0 0
      %5032 = vmatprep.subr.bf16.mxu0 0
      %5033 = vmatpush1.bf16.msra.mxu0 0
      %5034 = vmatprep.mubr.bf16.mxu0 0
      %5035 = vmatmul.mubr.bf16.gmra.mrb[0].mxu0 %v4991
      %v5036 = vpop.f32.mrb[0].mxu0
      %v5037 = vadd.f32 0.0, %v5036
      %v5038 = vpop.f32.mrb[0].mxu0
      %v5039 = vpop.f32.mrb[0].mxu0
      %v5040 = vadd.f32 0.0, %v5039
      %v5041 = vpop.f32.mrb[0].mxu0
      %5042 = vmatprep.mubr.bf16.mxu0 0
      %5043 = vmatmul.mubr.bf16.gmra.mrb[0].mxu0 %v4994
      %v5044 = vpop.f32.mrb[0].mxu0
      %v5045 = vadd.f32 0.0, %v5044
      %v5046 = vpop.f32.mrb[0].mxu0
      %v5047 = vpop.f32.mrb[0].mxu0
      %v5048 = vadd.f32 0.0, %v5047
      %v5049 = vpop.f32.mrb[0].mxu0
      %5050 = vmatprep.mubr.bf16.mxu0 0
      %5051 = vmatmul.mubr.bf16.gmra.mrb[0].mxu0 %v4997
      %v5052 = vpop.f32.mrb[0].mxu0
      %v5053 = vadd.f32 0.0, %v5052
      %v5054 = vpop.f32.mrb[0].mxu0
      %v5055 = vpop.f32.mrb[0].mxu0
      %v5056 = vadd.f32 0.0, %v5055
      %v5057 = vpop.f32.mrb[0].mxu0
      %5058 = vmatprep.mubr.bf16.mxu0 0
      %5059 = vmatmul.mubr.bf16.gmra.mrb[0].mxu0 %v5000
      %v5060 = vpop.f32.mrb[0].mxu0
      %v5061 = vadd.f32 0.0, %v5060
      %v5062 = vpop.f32.mrb[0].mxu0
      %v5063 = vpop.f32.mrb[0].mxu0
      %v5064 = vpop.f32.mrb[0].mxu0
      %5065 = vdwg.mxu0
      %v5066 = vpack.c.bf16 %v5040, %v5037
      %v5067 = vpack.c.bf16 %v5048, %v5045
      %v5068 = vpack.c.bf16 %v5056, %v5053
      %v5069 = vpack.c.bf16 %v5061, %v5061
      %s5070 = scalar_lea.vmem %s14, 32
      %v5071 = vld [vmem:[%s5070] sm:$0xf]
      %v5073 = vsel %vm1332, %v5066, 0
      %v5076 = vsel %vm1332, %v5067, 0
      %v5079 = vsel %vm1332, %v5068, 0
      %v5082 = vsel %vm1332, %v5069, 0
      %v5085 = vsel %vm1345, %v5071, 0
      %5087 = vmatprep.subr.bf16.mxu0 0
      %5088 = vmatpush1.bf16.msra.mxu0 %v5085
      %5089 = vmatprep.subr.bf16.mxu0 0
      %5090 = vmatpush1.bf16.msra.mxu0 0
      %5091 = vmatprep.subr.bf16.mxu0 0
      %5092 = vmatpush1.bf16.msra.mxu0 0
      %5093 = vmatprep.subr.bf16.mxu0 0
      %5094 = vmatpush1.bf16.msra.mxu0 0
      %5095 = vmatprep.subr.bf16.mxu0 0
      %5096 = vmatpush1.bf16.msra.mxu0 0
      %5097 = vmatprep.subr.bf16.mxu0 0
      %5098 = vmatpush1.bf16.msra.mxu0 0
      %5099 = vmatprep.subr.bf16.mxu0 0
      %5100 = vmatpush1.bf16.msra.mxu0 0
      %5101 = vmatprep.subr.bf16.mxu0 0
      %5102 = vmatpush1.bf16.msra.mxu0 0
      %5103 = vmatprep.subr.bf16.mxu0 0
      %5104 = vmatpush1.bf16.msra.mxu0 0
      %5105 = vmatprep.subr.bf16.mxu0 0
      %5106 = vmatpush1.bf16.msra.mxu0 0
      %5107 = vmatprep.subr.bf16.mxu0 0
      %5108 = vmatpush1.bf16.msra.mxu0 0
      %5109 = vmatprep.subr.bf16.mxu0 0
      %5110 = vmatpush1.bf16.msra.mxu0 0
      %5111 = vmatprep.subr.bf16.mxu0 0
      %5112 = vmatpush1.bf16.msra.mxu0 0
      %5113 = vmatprep.subr.bf16.mxu0 0
      %5114 = vmatpush1.bf16.msra.mxu0 0
      %5115 = vmatprep.subr.bf16.mxu0 0
      %5116 = vmatpush1.bf16.msra.mxu0 0
      %5117 = vmatprep.subr.bf16.mxu0 0
      %5118 = vmatpush1.bf16.msra.mxu0 0
      %5119 = vmatprep.mubr.bf16.mxu0 0
      %5120 = vmatmul.mubr.bf16.gmra.mrb[0].mxu0 %v5073
      %v5121 = vpop.f32.mrb[0].mxu0
      %v5122 = vadd.f32 0.0, %v5121
      %v5123 = vpop.f32.mrb[0].mxu0
      %v5124 = vpop.f32.mrb[0].mxu0
      %v5125 = vadd.f32 0.0, %v5124
      %v5126 = vpop.f32.mrb[0].mxu0
      %5127 = vmatprep.mubr.bf16.mxu0 0
      %5128 = vmatmul.mubr.bf16.gmra.mrb[0].mxu0 %v5076
      %v5129 = vpop.f32.mrb[0].mxu0
      %v5130 = vadd.f32 0.0, %v5129
      %v5131 = vpop.f32.mrb[0].mxu0
      %v5132 = vpop.f32.mrb[0].mxu0
      %v5133 = vadd.f32 0.0, %v5132
      %v5134 = vpop.f32.mrb[0].mxu0
      %5135 = vmatprep.mubr.bf16.mxu0 0
      %5136 = vmatmul.mubr.bf16.gmra.mrb[0].mxu0 %v5079
      %v5137 = vpop.f32.mrb[0].mxu0
      %v5138 = vadd.f32 0.0, %v5137
      %v5139 = vpop.f32.mrb[0].mxu0
      %v5140 = vpop.f32.mrb[0].mxu0
      %v5141 = vadd.f32 0.0, %v5140
      %v5142 = vpop.f32.mrb[0].mxu0
      %5143 = vmatprep.mubr.bf16.mxu0 0
      %5144 = vmatmul.mubr.bf16.gmra.mrb[0].mxu0 %v5082
      %v5145 = vpop.f32.mrb[0].mxu0
      %v5146 = vadd.f32 0.0, %v5145
      %v5147 = vpop.f32.mrb[0].mxu0
      %v5148 = vpop.f32.mrb[0].mxu0
      %v5149 = vpop.f32.mrb[0].mxu0
      %5150 = vdwg.mxu0
      %v5151 = vadd.f32 %v4957, %v5122
      %v5152 = vadd.f32 %v4958, %v5125
      %v5153 = vadd.f32 %v4959, %v5130
      %v5154 = vadd.f32 %v4960, %v5133
      %v5155 = vadd.f32 %v4961, %v5138
      %v5156 = vadd.f32 %v4962, %v5141
      %v5157 = vadd.f32 %v4963, %v5146
      %v5158 = vld [vmem:[%s15] sm:$0x1]
      %v5160 = vlaneseq
      %v5161 = vshrl.u32 %v5160, 7
      %v5162 = vsub.s32 0, %v5161
      %v5163 = vrot.slane %v5158, %v5162
      %v5165 = vadd.f32 %v5151, %v5163
      %v5166 = vadd.f32 %v5152, %v5163
      %v5167 = vadd.f32 %v5153, %v5163
      %v5168 = vadd.f32 %v5154, %v5163
      %v5169 = vadd.f32 %v5155, %v5163
      %v5170 = vadd.f32 %v5156, %v5163
      %v5171 = vadd.f32 %v5157, %v5163
      %v5172 = vmax.f32 %v5165, 0.0
      %v5173 = vmax.f32 %v5166, 0.0
      %v5174 = vmax.f32 %v5167, 0.0
      %v5175 = vmax.f32 %v5168, 0.0
      %v5176 = vmax.f32 %v5169, 0.0
      %v5177 = vmax.f32 %v5170, 0.0
      %v5178 = vmax.f32 %v5171, 0.0
      %v5179 = vpack.c.bf16 %v5173, %v5172
      %v5180 = vpack.c.bf16 %v5175, %v5174
      %v5181 = vpack.c.bf16 %v5177, %v5176
      %v5182 = vpack.c.bf16 %v5178, %v5178
      %v5183 = vld [vmem:[%s16] sm:$0xf]
      %v5184 = vld [vmem:[%s17] sm:$0x1]
      %v5186 = vlaneseq
      %v5187 = vshrl.u32 %v5186, 7
      %v5188 = vsub.s32 0, %v5187
      %v5189 = vrot.slane %v5184, %v5188
      %v5192 = vsel %vm1332, %v5179, 0
      %v5195 = vsel %vm1332, %v5180, 0
      %v5198 = vsel %vm1332, %v5181, 0
      %v5201 = vsel %vm1332, %v5182, 0
      %v5204 = vsel %vm1345, %v5183, 0
      %5206 = vmatprep.subr.bf16.mxu0 0
      %5207 = vmatpush1.bf16.msra.mxu0 %v5204
      %5208 = vmatprep.subr.bf16.mxu0 0
      %5209 = vmatpush1.bf16.msra.mxu0 0
      %5210 = vmatprep.subr.bf16.mxu0 0
      %5211 = vmatpush1.bf16.msra.mxu0 0
      %5212 = vmatprep.subr.bf16.mxu0 0
      %5213 = vmatpush1.bf16.msra.mxu0 0
      %5214 = vmatprep.subr.bf16.mxu0 0
      %5215 = vmatpush1.bf16.msra.mxu0 0
      %5216 = vmatprep.subr.bf16.mxu0 0
      %5217 = vmatpush1.bf16.msra.mxu0 0
      %5218 = vmatprep.subr.bf16.mxu0 0
      %5219 = vmatpush1.bf16.msra.mxu0 0
      %5220 = vmatprep.subr.bf16.mxu0 0
      %5221 = vmatpush1.bf16.msra.mxu0 0
      %5222 = vmatprep.subr.bf16.mxu0 0
      %5223 = vmatpush1.bf16.msra.mxu0 0
      %5224 = vmatprep.subr.bf16.mxu0 0
      %5225 = vmatpush1.bf16.msra.mxu0 0
      %5226 = vmatprep.subr.bf16.mxu0 0
      %5227 = vmatpush1.bf16.msra.mxu0 0
      %5228 = vmatprep.subr.bf16.mxu0 0
      %5229 = vmatpush1.bf16.msra.mxu0 0
      %5230 = vmatprep.subr.bf16.mxu0 0
      %5231 = vmatpush1.bf16.msra.mxu0 0
      %5232 = vmatprep.subr.bf16.mxu0 0
      %5233 = vmatpush1.bf16.msra.mxu0 0
      %5234 = vmatprep.subr.bf16.mxu0 0
      %5235 = vmatpush1.bf16.msra.mxu0 0
      %5236 = vmatprep.subr.bf16.mxu0 0
      %5237 = vmatpush1.bf16.msra.mxu0 0
      %5238 = vmatprep.mubr.bf16.mxu0 0
      %5239 = vmatmul.mubr.bf16.gmra.mrb[0].mxu0 %v5192
      %v5240 = vpop.f32.mrb[0].mxu0
      %v5241 = vadd.f32 %v5189, %v5240
      %v5242 = vpop.f32.mrb[0].mxu0
      %v5243 = vpop.f32.mrb[0].mxu0
      %v5244 = vadd.f32 %v5189, %v5243
      %v5245 = vpop.f32.mrb[0].mxu0
      %5246 = vmatprep.mubr.bf16.mxu0 0
      %5247 = vmatmul.mubr.bf16.gmra.mrb[0].mxu0 %v5195
      %v5248 = vpop.f32.mrb[0].mxu0
      %v5249 = vadd.f32 %v5189, %v5248
      %v5250 = vpop.f32.mrb[0].mxu0
      %v5251 = vpop.f32.mrb[0].mxu0
      %v5252 = vadd.f32 %v5189, %v5251
      %v5253 = vpop.f32.mrb[0].mxu0
      %5254 = vmatprep.mubr.bf16.mxu0 0
      %5255 = vmatmul.mubr.bf16.gmra.mrb[0].mxu0 %v5198
      %v5256 = vpop.f32.mrb[0].mxu0
      %v5257 = vadd.f32 %v5189, %v5256
      %v5258 = vpop.f32.mrb[0].mxu0
      %v5259 = vpop.f32.mrb[0].mxu0
      %v5260 = vadd.f32 %v5189, %v5259
      %v5261 = vpop.f32.mrb[0].mxu0
      %5262 = vmatprep.mubr.bf16.mxu0 0
      %5263 = vmatmul.mubr.bf16.gmra.mrb[0].mxu0 %v5201
      %v5264 = vpop.f32.mrb[0].mxu0
      %v5265 = vadd.f32 %v5189, %v5264
      %v5266 = vpop.f32.mrb[0].mxu0
      %v5267 = vpop.f32.mrb[0].mxu0
      %v5268 = vpop.f32.mrb[0].mxu0
      %5269 = vdwg.mxu0
      %v5270 = vadd.f32 %v5241, %v3299
      %v5271 = vadd.f32 %v5244, %v3300
      %v5272 = vadd.f32 %v5249, %v3301
      %v5273 = vadd.f32 %v5252, %v3302
      %v5274 = vadd.f32 %v5257, %v3303
      %v5275 = vadd.f32 %v5260, %v3304
      %v5276 = vadd.f32 %v5265, %v3305
      %v5277 = vmax.f32 %v5270, 0.0
      %v5278 = vmax.f32 %v5271, 0.0
      %v5279 = vmax.f32 %v5272, 0.0
      %v5280 = vmax.f32 %v5273, 0.0
      %v5281 = vmax.f32 %v5274, 0.0
      %v5282 = vmax.f32 %v5275, 0.0
      %v5283 = vmax.f32 %v5276, 0.0
      %v5284 = vpack.c.bf16 %v5278, %v5277
      %v5285 = vpack.c.bf16 %v5280, %v5279
      %v5286 = vpack.c.bf16 %v5282, %v5281
      %v5287 = vpack.c.bf16 %v5283, %v5283
      %v5288 = vld [vmem:[%s19] sm:$0xf]
      %v5289 = vld [vmem:[%s19 + $0x4] sm:$0xf]
      %v5290 = vld [vmem:[%s19 + $0x8] sm:$0xf]
      %v5291 = vld [vmem:[%s19 + $0xc] sm:$0xf]
      %v5292 = vld [vmem:[%s20] sm:$0x1]
      %v5294 = vlaneseq
      %v5295 = vshrl.u32 %v5294, 7
      %v5296 = vsub.s32 0, %v5295
      %v5297 = vrot.slane %v5292, %v5296
      %v5303 = vunpack.c.l.b16 %v5288
      %v5304 = vunpack.c.l.b16 %v5289
      %v5305 = vunpack.c.l.b16 %v5290
      %v5306 = vunpack.c.l.b16 %v5291
      %v5307 = vpack.c.b16 %v5304, %v5303
      %v5308 = vpack.c.b16 %v5306, %v5305
      %v5312 = vsel %vm3333, %v5284, 0
      %v5315 = vsel %vm3333, %v5285, 0
      %v5318 = vsel %vm3333, %v5286, 0
      %v5321 = vsel %vm3333, %v5287, 0
      %5323 = vmatprep.subr.bf16.mxu0 0
      %5324 = vmatpush1.bf16.msra.mxu0 %v5307
      %5325 = vmatprep.subr.bf16.mxu0 0
      %5326 = vmatpush1.bf16.msra.mxu0 %v5308
      %5327 = vmatprep.subr.bf16.mxu0 0
      %5328 = vmatpush1.bf16.msra.mxu0 0
      %5329 = vmatprep.subr.bf16.mxu0 0
      %5330 = vmatpush1.bf16.msra.mxu0 0
      %5331 = vmatprep.subr.bf16.mxu0 0
      %5332 = vmatpush1.bf16.msra.mxu0 0
      %5333 = vmatprep.subr.bf16.mxu0 0
      %5334 = vmatpush1.bf16.msra.mxu0 0
      %5335 = vmatprep.subr.bf16.mxu0 0
      %5336 = vmatpush1.bf16.msra.mxu0 0
      %5337 = vmatprep.subr.bf16.mxu0 0
      %5338 = vmatpush1.bf16.msra.mxu0 0
      %5339 = vmatprep.subr.bf16.mxu0 0
      %5340 = vmatpush1.bf16.msra.mxu0 0
      %5341 = vmatprep.subr.bf16.mxu0 0
      %5342 = vmatpush1.bf16.msra.mxu0 0
      %5343 = vmatprep.subr.bf16.mxu0 0
      %5344 = vmatpush1.bf16.msra.mxu0 0
      %5345 = vmatprep.subr.bf16.mxu0 0
      %5346 = vmatpush1.bf16.msra.mxu0 0
      %5347 = vmatprep.subr.bf16.mxu0 0
      %5348 = vmatpush1.bf16.msra.mxu0 0
      %5349 = vmatprep.subr.bf16.mxu0 0
      %5350 = vmatpush1.bf16.msra.mxu0 0
      %5351 = vmatprep.subr.bf16.mxu0 0
      %5352 = vmatpush1.bf16.msra.mxu0 0
      %5353 = vmatprep.subr.bf16.mxu0 0
      %5354 = vmatpush1.bf16.msra.mxu0 0
      %5355 = vmatprep.mubr.bf16.mxu0 0
      %5356 = vmatmul.mubr.bf16.gmra.mrb[0].mxu0 %v5312
      %v5357 = vpop.f32.mrb[0].mxu0
      %v5358 = vadd.f32 %v5297, %v5357
      %v5359 = vpop.f32.mrb[0].mxu0
      %v5360 = vpop.f32.mrb[0].mxu0
      %v5361 = vadd.f32 %v5297, %v5360
      %v5362 = vpop.f32.mrb[0].mxu0
      %5363 = vmatprep.mubr.bf16.mxu0 0
      %5364 = vmatmul.mubr.bf16.gmra.mrb[0].mxu0 %v5315
      %v5365 = vpop.f32.mrb[0].mxu0
      %v5366 = vadd.f32 %v5297, %v5365
      %v5367 = vpop.f32.mrb[0].mxu0
      %v5368 = vpop.f32.mrb[0].mxu0
      %v5369 = vadd.f32 %v5297, %v5368
      %v5370 = vpop.f32.mrb[0].mxu0
      %5371 = vmatprep.mubr.bf16.mxu0 0
      %5372 = vmatmul.mubr.bf16.gmra.mrb[0].mxu0 %v5318
      %v5373 = vpop.f32.mrb[0].mxu0
      %v5374 = vadd.f32 %v5297, %v5373
      %v5375 = vpop.f32.mrb[0].mxu0
      %v5376 = vpop.f32.mrb[0].mxu0
      %v5377 = vadd.f32 %v5297, %v5376
      %v5378 = vpop.f32.mrb[0].mxu0
      %5379 = vmatprep.mubr.bf16.mxu0 0
      %5380 = vmatmul.mubr.bf16.gmra.mrb[0].mxu0 %v5321
      %v5381 = vpop.f32.mrb[0].mxu0
      %v5382 = vadd.f32 %v5297, %v5381
      %v5383 = vpop.f32.mrb[0].mxu0
      %v5384 = vpop.f32.mrb[0].mxu0
      %v5385 = vpop.f32.mrb[0].mxu0
      %5386 = vdwg.mxu0
      %v5387 = vmax.f32 %v5358, 0.0
      %v5388 = vmax.f32 %v5361, 0.0
      %v5389 = vmax.f32 %v5366, 0.0
      %v5390 = vmax.f32 %v5369, 0.0
      %v5391 = vmax.f32 %v5374, 0.0
      %v5392 = vmax.f32 %v5377, 0.0
      %v5393 = vmax.f32 %v5382, 0.0
      %v5394 = vpack.c.bf16 %v5388, %v5387
      %v5395 = vpack.c.bf16 %v5390, %v5389
      %v5396 = vpack.c.bf16 %v5392, %v5391
      %v5397 = vpack.c.bf16 %v5393, %v5393
      %v5398 = vld [vmem:[%s18] sm:$0xf]
      %v5399 = vld [vmem:[%s18 + $0x4] sm:$0xf]
      %v5400 = vld [vmem:[%s18 + $0x8] sm:$0xf]
      %v5401 = vld [vmem:[%s18 + $0xc] sm:$0xf]
      %v5402 = vld [vmem:[%s18 + $0x10] sm:$0xf]
      %v5403 = vld [vmem:[%s18 + $0x14] sm:$0xf]
      %v5404 = vld [vmem:[%s18 + $0x18] sm:$0x1]
      %v5412 = vunpack.c.l.b16 %v5398
      %v5413 = vunpack.c.l.b16 %v5399
      %v5414 = vunpack.c.l.b16 %v5400
      %v5415 = vunpack.c.l.b16 %v5401
      %v5416 = vunpack.c.l.b16 %v5402
      %v5417 = vunpack.c.l.b16 %v5403
      %v5418 = vunpack.c.l.b16 %v5404
      %v5419 = vpack.c.b16 %v5413, %v5412
      %v5420 = vpack.c.b16 %v5415, %v5414
      %v5421 = vpack.c.b16 %v5417, %v5416
      %v5422 = vpack.c.b16 %v5418, %v5418
      %v5424 = vsel %vm3446, %v5419, 0
      %v5427 = vsel %vm3446, %v5420, 0
      %v5430 = vsel %vm3446, %v5421, 0
      %v5433 = vsel %vm3446, %v5422, 0
      %v5436 = vand.u32 %v5397, %v3461
      %5438 = vmatprep.subr.bf16.mxu0 0
      %5439 = vmatpush1.bf16.msra.mxu0 %v5394
      %5440 = vmatprep.subr.bf16.mxu0 0
      %5441 = vmatpush1.bf16.msra.mxu0 %v5395
      %5442 = vmatprep.subr.bf16.mxu0 0
      %5443 = vmatpush1.bf16.msra.mxu0 %v5396
      %5444 = vmatprep.subr.bf16.mxu0 0
      %5445 = vmatpush1.bf16.msra.mxu0 %v5436
      %5446 = vmatprep.subr.bf16.mxu0 0
      %5447 = vmatpush1.bf16.msra.mxu0 0
      %5448 = vmatprep.subr.bf16.mxu0 0
      %5449 = vmatpush1.bf16.msra.mxu0 0
      %5450 = vmatprep.subr.bf16.mxu0 0
      %5451 = vmatpush1.bf16.msra.mxu0 0
      %5452 = vmatprep.subr.bf16.mxu0 0
      %5453 = vmatpush1.bf16.msra.mxu0 0
      %5454 = vmatprep.subr.bf16.mxu0 0
      %5455 = vmatpush1.bf16.msra.mxu0 0
      %5456 = vmatprep.subr.bf16.mxu0 0
      %5457 = vmatpush1.bf16.msra.mxu0 0
      %5458 = vmatprep.subr.bf16.mxu0 0
      %5459 = vmatpush1.bf16.msra.mxu0 0
      %5460 = vmatprep.subr.bf16.mxu0 0
      %5461 = vmatpush1.bf16.msra.mxu0 0
      %5462 = vmatprep.subr.bf16.mxu0 0
      %5463 = vmatpush1.bf16.msra.mxu0 0
      %5464 = vmatprep.subr.bf16.mxu0 0
      %5465 = vmatpush1.bf16.msra.mxu0 0
      %5466 = vmatprep.subr.bf16.mxu0 0
      %5467 = vmatpush1.bf16.msra.mxu0 0
      %5468 = vmatprep.subr.bf16.mxu0 0
      %5469 = vmatpush1.bf16.msra.mxu0 0
      %5470 = vmatprep.mubr.bf16.mxu0 0
      %5471 = vmatmul.mubr.bf16.gmra.mrb[0].mxu0 %v5424
      %v5472 = vpop.f32.mrb[0].mxu0
      %v5473 = vadd.f32 0.0, %v5472
      %v5474 = vpop.f32.mrb[0].mxu0
      %v5475 = vpop.f32.mrb[0].mxu0
      %v5476 = vadd.f32 0.0, %v5475
      %v5477 = vpop.f32.mrb[0].mxu0
      %5478 = vmatprep.mubr.bf16.mxu0 0
      %5479 = vmatmul.mubr.bf16.gmra.mrb[0].mxu0 %v5427
      %v5480 = vpop.f32.mrb[0].mxu0
      %v5481 = vadd.f32 0.0, %v5480
      %v5482 = vpop.f32.mrb[0].mxu0
      %v5483 = vpop.f32.mrb[0].mxu0
      %v5484 = vadd.f32 0.0, %v5483
      %v5485 = vpop.f32.mrb[0].mxu0
      %5486 = vmatprep.mubr.bf16.mxu0 0
      %5487 = vmatmul.mubr.bf16.gmra.mrb[0].mxu0 %v5430
      %v5488 = vpop.f32.mrb[0].mxu0
      %v5489 = vadd.f32 0.0, %v5488
      %v5490 = vpop.f32.mrb[0].mxu0
      %v5491 = vpop.f32.mrb[0].mxu0
      %v5492 = vadd.f32 0.0, %v5491
      %v5493 = vpop.f32.mrb[0].mxu0
      %5494 = vmatprep.mubr.bf16.mxu0 0
      %5495 = vmatmul.mubr.bf16.gmra.mrb[0].mxu0 %v5433
      %v5496 = vpop.f32.mrb[0].mxu0
      %v5497 = vadd.f32 0.0, %v5496
      %v5498 = vpop.f32.mrb[0].mxu0
      %v5499 = vpop.f32.mrb[0].mxu0
      %v5500 = vpop.f32.mrb[0].mxu0
      %5501 = vdwg.mxu0
      %v5502 = vpack.c.bf16 %v5476, %v5473
      %v5503 = vpack.c.bf16 %v5484, %v5481
      %v5504 = vpack.c.bf16 %v5492, %v5489
      %v5505 = vpack.c.bf16 %v5497, %v5497
      %v5506 = vld [vmem:[%s21] sm:$0xf]
      %s5507 = scalar_lea.vmem %s18, 28
      %v5508 = vld [vmem:[%s5507] sm:$0xf]
      %v5509 = vld [vmem:[%s5507 + $0x4] sm:$0xf]
      %v5510 = vld [vmem:[%s5507 + $0x8] sm:$0xf]
      %v5511 = vld [vmem:[%s5507 + $0xc] sm:$0xf]
      %v5512 = vld [vmem:[%s5507 + $0x10] sm:$0xf]
      %v5513 = vld [vmem:[%s5507 + $0x14] sm:$0xf]
      %v5514 = vld [vmem:[%s5507 + $0x18] sm:$0x1]
      %v5522 = vunpack.c.l.b16 %v5508
      %v5523 = vunpack.c.l.b16 %v5509
      %v5524 = vunpack.c.l.b16 %v5510
      %v5525 = vunpack.c.l.b16 %v5511
      %v5526 = vunpack.c.l.b16 %v5512
      %v5527 = vunpack.c.l.b16 %v5513
      %v5528 = vunpack.c.l.b16 %v5514
      %v5529 = vpack.c.b16 %v5523, %v5522
      %v5530 = vpack.c.b16 %v5525, %v5524
      %v5531 = vpack.c.b16 %v5527, %v5526
      %v5532 = vpack.c.b16 %v5528, %v5528
      %v5534 = vsel %vm3446, %v5529, 0
      %v5537 = vsel %vm3446, %v5530, 0
      %v5540 = vsel %vm3446, %v5531, 0
      %v5543 = vsel %vm3446, %v5532, 0
      %5545 = vmatprep.subr.bf16.mxu0 0
      %5546 = vmatpush1.bf16.msra.mxu0 %v5394
      %5547 = vmatprep.subr.bf16.mxu0 0
      %5548 = vmatpush1.bf16.msra.mxu0 %v5395
      %5549 = vmatprep.subr.bf16.mxu0 0
      %5550 = vmatpush1.bf16.msra.mxu0 %v5396
      %5551 = vmatprep.subr.bf16.mxu0 0
      %5552 = vmatpush1.bf16.msra.mxu0 %v5436
      %5553 = vmatprep.subr.bf16.mxu0 0
      %5554 = vmatpush1.bf16.msra.mxu0 0
      %5555 = vmatprep.subr.bf16.mxu0 0
      %5556 = vmatpush1.bf16.msra.mxu0 0
      %5557 = vmatprep.subr.bf16.mxu0 0
      %5558 = vmatpush1.bf16.msra.mxu0 0
      %5559 = vmatprep.subr.bf16.mxu0 0
      %5560 = vmatpush1.bf16.msra.mxu0 0
      %5561 = vmatprep.subr.bf16.mxu0 0
      %5562 = vmatpush1.bf16.msra.mxu0 0
      %5563 = vmatprep.subr.bf16.mxu0 0
      %5564 = vmatpush1.bf16.msra.mxu0 0
      %5565 = vmatprep.subr.bf16.mxu0 0
      %5566 = vmatpush1.bf16.msra.mxu0 0
      %5567 = vmatprep.subr.bf16.mxu0 0
      %5568 = vmatpush1.bf16.msra.mxu0 0
      %5569 = vmatprep.subr.bf16.mxu0 0
      %5570 = vmatpush1.bf16.msra.mxu0 0
      %5571 = vmatprep.subr.bf16.mxu0 0
      %5572 = vmatpush1.bf16.msra.mxu0 0
      %5573 = vmatprep.subr.bf16.mxu0 0
      %5574 = vmatpush1.bf16.msra.mxu0 0
      %5575 = vmatprep.subr.bf16.mxu0 0
      %5576 = vmatpush1.bf16.msra.mxu0 0
      %5577 = vmatprep.mubr.bf16.mxu0 0
      %5578 = vmatmul.mubr.bf16.gmra.mrb[0].mxu0 %v5534
      %v5579 = vpop.f32.mrb[0].mxu0
      %v5580 = vadd.f32 0.0, %v5579
      %v5581 = vpop.f32.mrb[0].mxu0
      %v5582 = vpop.f32.mrb[0].mxu0
      %v5583 = vadd.f32 0.0, %v5582
      %v5584 = vpop.f32.mrb[0].mxu0
      %5585 = vmatprep.mubr.bf16.mxu0 0
      %5586 = vmatmul.mubr.bf16.gmra.mrb[0].mxu0 %v5537
      %v5587 = vpop.f32.mrb[0].mxu0
      %v5588 = vadd.f32 0.0, %v5587
      %v5589 = vpop.f32.mrb[0].mxu0
      %v5590 = vpop.f32.mrb[0].mxu0
      %v5591 = vadd.f32 0.0, %v5590
      %v5592 = vpop.f32.mrb[0].mxu0
      %5593 = vmatprep.mubr.bf16.mxu0 0
      %5594 = vmatmul.mubr.bf16.gmra.mrb[0].mxu0 %v5540
      %v5595 = vpop.f32.mrb[0].mxu0
      %v5596 = vadd.f32 0.0, %v5595
      %v5597 = vpop.f32.mrb[0].mxu0
      %v5598 = vpop.f32.mrb[0].mxu0
      %v5599 = vadd.f32 0.0, %v5598
      %v5600 = vpop.f32.mrb[0].mxu0
      %5601 = vmatprep.mubr.bf16.mxu0 0
      %5602 = vmatmul.mubr.bf16.gmra.mrb[0].mxu0 %v5543
      %v5603 = vpop.f32.mrb[0].mxu0
      %v5604 = vadd.f32 0.0, %v5603
      %v5605 = vpop.f32.mrb[0].mxu0
      %v5606 = vpop.f32.mrb[0].mxu0
      %v5607 = vpop.f32.mrb[0].mxu0
      %5608 = vdwg.mxu0
      %v5609 = vpack.c.bf16 %v5583, %v5580
      %v5610 = vpack.c.bf16 %v5591, %v5588
      %v5611 = vpack.c.bf16 %v5599, %v5596
      %v5612 = vpack.c.bf16 %v5604, %v5604
      %s5613 = scalar_lea.vmem %s21, 4
      %v5614 = vld [vmem:[%s5613] sm:$0xf]
      %v5616 = vsel %vm1332, %v5609, 0
      %v5619 = vsel %vm1332, %v5610, 0
      %v5622 = vsel %vm1332, %v5611, 0
      %v5625 = vsel %vm1332, %v5612, 0
      %v5628 = vsel %vm1345, %v5614, 0
      %5630 = vmatprep.subr.bf16.mxu0 0
      %5631 = vmatpush1.bf16.msra.mxu0 %v5628
      %5632 = vmatprep.subr.bf16.mxu0 0
      %5633 = vmatpush1.bf16.msra.mxu0 0
      %5634 = vmatprep.subr.bf16.mxu0 0
      %5635 = vmatpush1.bf16.msra.mxu0 0
      %5636 = vmatprep.subr.bf16.mxu0 0
      %5637 = vmatpush1.bf16.msra.mxu0 0
      %5638 = vmatprep.subr.bf16.mxu0 0
      %5639 = vmatpush1.bf16.msra.mxu0 0
      %5640 = vmatprep.subr.bf16.mxu0 0
      %5641 = vmatpush1.bf16.msra.mxu0 0
      %5642 = vmatprep.subr.bf16.mxu0 0
      %5643 = vmatpush1.bf16.msra.mxu0 0
      %5644 = vmatprep.subr.bf16.mxu0 0
      %5645 = vmatpush1.bf16.msra.mxu0 0
      %5646 = vmatprep.subr.bf16.mxu0 0
      %5647 = vmatpush1.bf16.msra.mxu0 0
      %5648 = vmatprep.subr.bf16.mxu0 0
      %5649 = vmatpush1.bf16.msra.mxu0 0
      %5650 = vmatprep.subr.bf16.mxu0 0
      %5651 = vmatpush1.bf16.msra.mxu0 0
      %5652 = vmatprep.subr.bf16.mxu0 0
      %5653 = vmatpush1.bf16.msra.mxu0 0
      %5654 = vmatprep.subr.bf16.mxu0 0
      %5655 = vmatpush1.bf16.msra.mxu0 0
      %5656 = vmatprep.subr.bf16.mxu0 0
      %5657 = vmatpush1.bf16.msra.mxu0 0
      %5658 = vmatprep.subr.bf16.mxu0 0
      %5659 = vmatpush1.bf16.msra.mxu0 0
      %5660 = vmatprep.subr.bf16.mxu0 0
      %5661 = vmatpush1.bf16.msra.mxu0 0
      %5662 = vmatprep.mubr.bf16.mxu0 0
      %5663 = vmatmul.mubr.bf16.gmra.mrb[0].mxu0 %v5616
      %v5664 = vpop.f32.mrb[0].mxu0
      %v5665 = vadd.f32 0.0, %v5664
      %v5666 = vpop.f32.mrb[0].mxu0
      %v5667 = vpop.f32.mrb[0].mxu0
      %v5668 = vadd.f32 0.0, %v5667
      %v5669 = vpop.f32.mrb[0].mxu0
      %5670 = vmatprep.mubr.bf16.mxu0 0
      %5671 = vmatmul.mubr.bf16.gmra.mrb[0].mxu0 %v5619
      %v5672 = vpop.f32.mrb[0].mxu0
      %v5673 = vadd.f32 0.0, %v5672
      %v5674 = vpop.f32.mrb[0].mxu0
      %v5675 = vpop.f32.mrb[0].mxu0
      %v5676 = vadd.f32 0.0, %v5675
      %v5677 = vpop.f32.mrb[0].mxu0
      %5678 = vmatprep.mubr.bf16.mxu0 0
      %5679 = vmatmul.mubr.bf16.gmra.mrb[0].mxu0 %v5622
      %v5680 = vpop.f32.mrb[0].mxu0
      %v5681 = vadd.f32 0.0, %v5680
      %v5682 = vpop.f32.mrb[0].mxu0
      %v5683 = vpop.f32.mrb[0].mxu0
      %v5684 = vadd.f32 0.0, %v5683
      %v5685 = vpop.f32.mrb[0].mxu0
      %5686 = vmatprep.mubr.bf16.mxu0 0
      %5687 = vmatmul.mubr.bf16.gmra.mrb[0].mxu0 %v5625
      %v5688 = vpop.f32.mrb[0].mxu0
      %v5689 = vadd.f32 0.0, %v5688
      %v5690 = vpop.f32.mrb[0].mxu0
      %v5691 = vpop.f32.mrb[0].mxu0
      %v5692 = vpop.f32.mrb[0].mxu0
      %5693 = vdwg.mxu0
      %v5695 = vsel %vm1332, %v5502, 0
      %v5698 = vsel %vm1332, %v5503, 0
      %v5701 = vsel %vm1332, %v5504, 0
      %v5704 = vsel %vm1332, %v5505, 0
      %v5707 = vsel %vm1345, %v5506, 0
      %5709 = vmatprep.subr.bf16.mxu0 0
      %5710 = vmatpush1.bf16.msra.mxu0 %v5707
      %5711 = vmatprep.subr.bf16.mxu0 0
      %5712 = vmatpush1.bf16.msra.mxu0 0
      %5713 = vmatprep.subr.bf16.mxu0 0
      %5714 = vmatpush1.bf16.msra.mxu0 0
      %5715 = vmatprep.subr.bf16.mxu0 0
      %5716 = vmatpush1.bf16.msra.mxu0 0
      %5717 = vmatprep.subr.bf16.mxu0 0
      %5718 = vmatpush1.bf16.msra.mxu0 0
      %5719 = vmatprep.subr.bf16.mxu0 0
      %5720 = vmatpush1.bf16.msra.mxu0 0
      %5721 = vmatprep.subr.bf16.mxu0 0
      %5722 = vmatpush1.bf16.msra.mxu0 0
      %5723 = vmatprep.subr.bf16.mxu0 0
      %5724 = vmatpush1.bf16.msra.mxu0 0
      %5725 = vmatprep.subr.bf16.mxu0 0
      %5726 = vmatpush1.bf16.msra.mxu0 0
      %5727 = vmatprep.subr.bf16.mxu0 0
      %5728 = vmatpush1.bf16.msra.mxu0 0
      %5729 = vmatprep.subr.bf16.mxu0 0
      %5730 = vmatpush1.bf16.msra.mxu0 0
      %5731 = vmatprep.subr.bf16.mxu0 0
      %5732 = vmatpush1.bf16.msra.mxu0 0
      %5733 = vmatprep.subr.bf16.mxu0 0
      %5734 = vmatpush1.bf16.msra.mxu0 0
      %5735 = vmatprep.subr.bf16.mxu0 0
      %5736 = vmatpush1.bf16.msra.mxu0 0
      %5737 = vmatprep.subr.bf16.mxu0 0
      %5738 = vmatpush1.bf16.msra.mxu0 0
      %5739 = vmatprep.subr.bf16.mxu0 0
      %5740 = vmatpush1.bf16.msra.mxu0 0
      %5741 = vmatprep.mubr.bf16.mxu0 0
      %5742 = vmatmul.mubr.bf16.gmra.mrb[0].mxu0 %v5695
      %v5743 = vpop.f32.mrb[0].mxu0
      %v5744 = vadd.f32 %v5665, %v5743
      %v5745 = vpop.f32.mrb[0].mxu0
      %v5746 = vpop.f32.mrb[0].mxu0
      %v5747 = vadd.f32 %v5668, %v5746
      %v5748 = vpop.f32.mrb[0].mxu0
      %5749 = vmatprep.mubr.bf16.mxu0 0
      %5750 = vmatmul.mubr.bf16.gmra.mrb[0].mxu0 %v5698
      %v5751 = vpop.f32.mrb[0].mxu0
      %v5752 = vadd.f32 %v5673, %v5751
      %v5753 = vpop.f32.mrb[0].mxu0
      %v5754 = vpop.f32.mrb[0].mxu0
      %v5755 = vadd.f32 %v5676, %v5754
      %v5756 = vpop.f32.mrb[0].mxu0
      %5757 = vmatprep.mubr.bf16.mxu0 0
      %5758 = vmatmul.mubr.bf16.gmra.mrb[0].mxu0 %v5701
      %v5759 = vpop.f32.mrb[0].mxu0
      %v5760 = vadd.f32 %v5681, %v5759
      %v5761 = vpop.f32.mrb[0].mxu0
      %v5762 = vpop.f32.mrb[0].mxu0
      %v5763 = vadd.f32 %v5684, %v5762
      %v5764 = vpop.f32.mrb[0].mxu0
      %5765 = vmatprep.mubr.bf16.mxu0 0
      %5766 = vmatmul.mubr.bf16.gmra.mrb[0].mxu0 %v5704
      %v5767 = vpop.f32.mrb[0].mxu0
      %v5768 = vadd.f32 %v5689, %v5767
      %v5769 = vpop.f32.mrb[0].mxu0
      %v5770 = vpop.f32.mrb[0].mxu0
      %v5771 = vpop.f32.mrb[0].mxu0
      %5772 = vdwg.mxu0
      %s5773 = scalar_lea.vmem %s18, 56
      %v5774 = vld [vmem:[%s5773] sm:$0xf]
      %v5775 = vld [vmem:[%s5773 + $0x4] sm:$0xf]
      %v5776 = vld [vmem:[%s5773 + $0x8] sm:$0xf]
      %v5777 = vld [vmem:[%s5773 + $0xc] sm:$0xf]
      %v5778 = vld [vmem:[%s5773 + $0x10] sm:$0xf]
      %v5779 = vld [vmem:[%s5773 + $0x14] sm:$0xf]
      %v5780 = vld [vmem:[%s5773 + $0x18] sm:$0x1]
      %v5788 = vunpack.c.l.b16 %v5774
      %v5789 = vunpack.c.l.b16 %v5775
      %v5790 = vunpack.c.l.b16 %v5776
      %v5791 = vunpack.c.l.b16 %v5777
      %v5792 = vunpack.c.l.b16 %v5778
      %v5793 = vunpack.c.l.b16 %v5779
      %v5794 = vunpack.c.l.b16 %v5780
      %v5795 = vpack.c.b16 %v5789, %v5788
      %v5796 = vpack.c.b16 %v5791, %v5790
      %v5797 = vpack.c.b16 %v5793, %v5792
      %v5798 = vpack.c.b16 %v5794, %v5794
      %v5800 = vsel %vm3446, %v5795, 0
      %v5803 = vsel %vm3446, %v5796, 0
      %v5806 = vsel %vm3446, %v5797, 0
      %v5809 = vsel %vm3446, %v5798, 0
      %5811 = vmatprep.subr.bf16.mxu0 0
      %5812 = vmatpush1.bf16.msra.mxu0 %v5394
      %5813 = vmatprep.subr.bf16.mxu0 0
      %5814 = vmatpush1.bf16.msra.mxu0 %v5395
      %5815 = vmatprep.subr.bf16.mxu0 0
      %5816 = vmatpush1.bf16.msra.mxu0 %v5396
      %5817 = vmatprep.subr.bf16.mxu0 0
      %5818 = vmatpush1.bf16.msra.mxu0 %v5436
      %5819 = vmatprep.subr.bf16.mxu0 0
      %5820 = vmatpush1.bf16.msra.mxu0 0
      %5821 = vmatprep.subr.bf16.mxu0 0
      %5822 = vmatpush1.bf16.msra.mxu0 0
      %5823 = vmatprep.subr.bf16.mxu0 0
      %5824 = vmatpush1.bf16.msra.mxu0 0
      %5825 = vmatprep.subr.bf16.mxu0 0
      %5826 = vmatpush1.bf16.msra.mxu0 0
      %5827 = vmatprep.subr.bf16.mxu0 0
      %5828 = vmatpush1.bf16.msra.mxu0 0
      %5829 = vmatprep.subr.bf16.mxu0 0
      %5830 = vmatpush1.bf16.msra.mxu0 0
      %5831 = vmatprep.subr.bf16.mxu0 0
      %5832 = vmatpush1.bf16.msra.mxu0 0
      %5833 = vmatprep.subr.bf16.mxu0 0
      %5834 = vmatpush1.bf16.msra.mxu0 0
      %5835 = vmatprep.subr.bf16.mxu0 0
      %5836 = vmatpush1.bf16.msra.mxu0 0
      %5837 = vmatprep.subr.bf16.mxu0 0
      %5838 = vmatpush1.bf16.msra.mxu0 0
      %5839 = vmatprep.subr.bf16.mxu0 0
      %5840 = vmatpush1.bf16.msra.mxu0 0
      %5841 = vmatprep.subr.bf16.mxu0 0
      %5842 = vmatpush1.bf16.msra.mxu0 0
      %5843 = vmatprep.mubr.bf16.mxu0 0
      %5844 = vmatmul.mubr.bf16.gmra.mrb[0].mxu0 %v5800
      %v5845 = vpop.f32.mrb[0].mxu0
      %v5846 = vadd.f32 0.0, %v5845
      %v5847 = vpop.f32.mrb[0].mxu0
      %v5848 = vpop.f32.mrb[0].mxu0
      %v5849 = vadd.f32 0.0, %v5848
      %v5850 = vpop.f32.mrb[0].mxu0
      %5851 = vmatprep.mubr.bf16.mxu0 0
      %5852 = vmatmul.mubr.bf16.gmra.mrb[0].mxu0 %v5803
      %v5853 = vpop.f32.mrb[0].mxu0
      %v5854 = vadd.f32 0.0, %v5853
      %v5855 = vpop.f32.mrb[0].mxu0
      %v5856 = vpop.f32.mrb[0].mxu0
      %v5857 = vadd.f32 0.0, %v5856
      %v5858 = vpop.f32.mrb[0].mxu0
      %5859 = vmatprep.mubr.bf16.mxu0 0
      %5860 = vmatmul.mubr.bf16.gmra.mrb[0].mxu0 %v5806
      %v5861 = vpop.f32.mrb[0].mxu0
      %v5862 = vadd.f32 0.0, %v5861
      %v5863 = vpop.f32.mrb[0].mxu0
      %v5864 = vpop.f32.mrb[0].mxu0
      %v5865 = vadd.f32 0.0, %v5864
      %v5866 = vpop.f32.mrb[0].mxu0
      %5867 = vmatprep.mubr.bf16.mxu0 0
      %5868 = vmatmul.mubr.bf16.gmra.mrb[0].mxu0 %v5809
      %v5869 = vpop.f32.mrb[0].mxu0
      %v5870 = vadd.f32 0.0, %v5869
      %v5871 = vpop.f32.mrb[0].mxu0
      %v5872 = vpop.f32.mrb[0].mxu0
      %v5873 = vpop.f32.mrb[0].mxu0
      %5874 = vdwg.mxu0
      %v5875 = vpack.c.bf16 %v5849, %v5846
      %v5876 = vpack.c.bf16 %v5857, %v5854
      %v5877 = vpack.c.bf16 %v5865, %v5862
      %v5878 = vpack.c.bf16 %v5870, %v5870
      %s5879 = scalar_lea.vmem %s21, 8
      %v5880 = vld [vmem:[%s5879] sm:$0xf]
      %v5882 = vsel %vm1332, %v5875, 0
      %v5885 = vsel %vm1332, %v5876, 0
      %v5888 = vsel %vm1332, %v5877, 0
      %v5891 = vsel %vm1332, %v5878, 0
      %v5894 = vsel %vm1345, %v5880, 0
      %5896 = vmatprep.subr.bf16.mxu0 0
      %5897 = vmatpush1.bf16.msra.mxu0 %v5894
      %5898 = vmatprep.subr.bf16.mxu0 0
      %5899 = vmatpush1.bf16.msra.mxu0 0
      %5900 = vmatprep.subr.bf16.mxu0 0
      %5901 = vmatpush1.bf16.msra.mxu0 0
      %5902 = vmatprep.subr.bf16.mxu0 0
      %5903 = vmatpush1.bf16.msra.mxu0 0
      %5904 = vmatprep.subr.bf16.mxu0 0
      %5905 = vmatpush1.bf16.msra.mxu0 0
      %5906 = vmatprep.subr.bf16.mxu0 0
      %5907 = vmatpush1.bf16.msra.mxu0 0
      %5908 = vmatprep.subr.bf16.mxu0 0
      %5909 = vmatpush1.bf16.msra.mxu0 0
      %5910 = vmatprep.subr.bf16.mxu0 0
      %5911 = vmatpush1.bf16.msra.mxu0 0
      %5912 = vmatprep.subr.bf16.mxu0 0
      %5913 = vmatpush1.bf16.msra.mxu0 0
      %5914 = vmatprep.subr.bf16.mxu0 0
      %5915 = vmatpush1.bf16.msra.mxu0 0
      %5916 = vmatprep.subr.bf16.mxu0 0
      %5917 = vmatpush1.bf16.msra.mxu0 0
      %5918 = vmatprep.subr.bf16.mxu0 0
      %5919 = vmatpush1.bf16.msra.mxu0 0
      %5920 = vmatprep.subr.bf16.mxu0 0
      %5921 = vmatpush1.bf16.msra.mxu0 0
      %5922 = vmatprep.subr.bf16.mxu0 0
      %5923 = vmatpush1.bf16.msra.mxu0 0
      %5924 = vmatprep.subr.bf16.mxu0 0
      %5925 = vmatpush1.bf16.msra.mxu0 0
      %5926 = vmatprep.subr.bf16.mxu0 0
      %5927 = vmatpush1.bf16.msra.mxu0 0
      %5928 = vmatprep.mubr.bf16.mxu0 0
      %5929 = vmatmul.mubr.bf16.gmra.mrb[0].mxu0 %v5882
      %v5930 = vpop.f32.mrb[0].mxu0
      %v5931 = vadd.f32 0.0, %v5930
      %v5932 = vpop.f32.mrb[0].mxu0
      %v5933 = vpop.f32.mrb[0].mxu0
      %v5934 = vadd.f32 0.0, %v5933
      %v5935 = vpop.f32.mrb[0].mxu0
      %5936 = vmatprep.mubr.bf16.mxu0 0
      %5937 = vmatmul.mubr.bf16.gmra.mrb[0].mxu0 %v5885
      %v5938 = vpop.f32.mrb[0].mxu0
      %v5939 = vadd.f32 0.0, %v5938
      %v5940 = vpop.f32.mrb[0].mxu0
      %v5941 = vpop.f32.mrb[0].mxu0
      %v5942 = vadd.f32 0.0, %v5941
      %v5943 = vpop.f32.mrb[0].mxu0
      %5944 = vmatprep.mubr.bf16.mxu0 0
      %5945 = vmatmul.mubr.bf16.gmra.mrb[0].mxu0 %v5888
      %v5946 = vpop.f32.mrb[0].mxu0
      %v5947 = vadd.f32 0.0, %v5946
      %v5948 = vpop.f32.mrb[0].mxu0
      %v5949 = vpop.f32.mrb[0].mxu0
      %v5950 = vadd.f32 0.0, %v5949
      %v5951 = vpop.f32.mrb[0].mxu0
      %5952 = vmatprep.mubr.bf16.mxu0 0
      %5953 = vmatmul.mubr.bf16.gmra.mrb[0].mxu0 %v5891
      %v5954 = vpop.f32.mrb[0].mxu0
      %v5955 = vadd.f32 0.0, %v5954
      %v5956 = vpop.f32.mrb[0].mxu0
      %v5957 = vpop.f32.mrb[0].mxu0
      %v5958 = vpop.f32.mrb[0].mxu0
      %5959 = vdwg.mxu0
      %v5960 = vadd.f32 %v5744, %v5931
      %v5961 = vadd.f32 %v5747, %v5934
      %v5962 = vadd.f32 %v5752, %v5939
      %v5963 = vadd.f32 %v5755, %v5942
      %v5964 = vadd.f32 %v5760, %v5947
      %v5965 = vadd.f32 %v5763, %v5950
      %v5966 = vadd.f32 %v5768, %v5955
      %s5967 = scalar_lea.vmem %s18, 84
      %v5968 = vld [vmem:[%s5967] sm:$0xf]
      %v5969 = vld [vmem:[%s5967 + $0x4] sm:$0xf]
      %v5970 = vld [vmem:[%s5967 + $0x8] sm:$0xf]
      %v5971 = vld [vmem:[%s5967 + $0xc] sm:$0xf]
      %v5972 = vld [vmem:[%s5967 + $0x10] sm:$0xf]
      %v5973 = vld [vmem:[%s5967 + $0x14] sm:$0xf]
      %v5974 = vld [vmem:[%s5967 + $0x18] sm:$0x1]
      %v5982 = vunpack.c.l.b16 %v5968
      %v5983 = vunpack.c.l.b16 %v5969
      %v5984 = vunpack.c.l.b16 %v5970
      %v5985 = vunpack.c.l.b16 %v5971
      %v5986 = vunpack.c.l.b16 %v5972
      %v5987 = vunpack.c.l.b16 %v5973
      %v5988 = vunpack.c.l.b16 %v5974
      %v5989 = vpack.c.b16 %v5983, %v5982
      %v5990 = vpack.c.b16 %v5985, %v5984
      %v5991 = vpack.c.b16 %v5987, %v5986
      %v5992 = vpack.c.b16 %v5988, %v5988
      %v5994 = vsel %vm3446, %v5989, 0
      %v5997 = vsel %vm3446, %v5990, 0
      %v6000 = vsel %vm3446, %v5991, 0
      %v6003 = vsel %vm3446, %v5992, 0
      %6005 = vmatprep.subr.bf16.mxu0 0
      %6006 = vmatpush1.bf16.msra.mxu0 %v5394
      %6007 = vmatprep.subr.bf16.mxu0 0
      %6008 = vmatpush1.bf16.msra.mxu0 %v5395
      %6009 = vmatprep.subr.bf16.mxu0 0
      %6010 = vmatpush1.bf16.msra.mxu0 %v5396
      %6011 = vmatprep.subr.bf16.mxu0 0
      %6012 = vmatpush1.bf16.msra.mxu0 %v5436
      %6013 = vmatprep.subr.bf16.mxu0 0
      %6014 = vmatpush1.bf16.msra.mxu0 0
      %6015 = vmatprep.subr.bf16.mxu0 0
      %6016 = vmatpush1.bf16.msra.mxu0 0
      %6017 = vmatprep.subr.bf16.mxu0 0
      %6018 = vmatpush1.bf16.msra.mxu0 0
      %6019 = vmatprep.subr.bf16.mxu0 0
      %6020 = vmatpush1.bf16.msra.mxu0 0
      %6021 = vmatprep.subr.bf16.mxu0 0
      %6022 = vmatpush1.bf16.msra.mxu0 0
      %6023 = vmatprep.subr.bf16.mxu0 0
      %6024 = vmatpush1.bf16.msra.mxu0 0
      %6025 = vmatprep.subr.bf16.mxu0 0
      %6026 = vmatpush1.bf16.msra.mxu0 0
      %6027 = vmatprep.subr.bf16.mxu0 0
      %6028 = vmatpush1.bf16.msra.mxu0 0
      %6029 = vmatprep.subr.bf16.mxu0 0
      %6030 = vmatpush1.bf16.msra.mxu0 0
      %6031 = vmatprep.subr.bf16.mxu0 0
      %6032 = vmatpush1.bf16.msra.mxu0 0
      %6033 = vmatprep.subr.bf16.mxu0 0
      %6034 = vmatpush1.bf16.msra.mxu0 0
      %6035 = vmatprep.subr.bf16.mxu0 0
      %6036 = vmatpush1.bf16.msra.mxu0 0
      %6037 = vmatprep.mubr.bf16.mxu0 0
      %6038 = vmatmul.mubr.bf16.gmra.mrb[0].mxu0 %v5994
      %v6039 = vpop.f32.mrb[0].mxu0
      %v6040 = vadd.f32 0.0, %v6039
      %v6041 = vpop.f32.mrb[0].mxu0
      %v6042 = vpop.f32.mrb[0].mxu0
      %v6043 = vadd.f32 0.0, %v6042
      %v6044 = vpop.f32.mrb[0].mxu0
      %6045 = vmatprep.mubr.bf16.mxu0 0
      %6046 = vmatmul.mubr.bf16.gmra.mrb[0].mxu0 %v5997
      %v6047 = vpop.f32.mrb[0].mxu0
      %v6048 = vadd.f32 0.0, %v6047
      %v6049 = vpop.f32.mrb[0].mxu0
      %v6050 = vpop.f32.mrb[0].mxu0
      %v6051 = vadd.f32 0.0, %v6050
      %v6052 = vpop.f32.mrb[0].mxu0
      %6053 = vmatprep.mubr.bf16.mxu0 0
      %6054 = vmatmul.mubr.bf16.gmra.mrb[0].mxu0 %v6000
      %v6055 = vpop.f32.mrb[0].mxu0
      %v6056 = vadd.f32 0.0, %v6055
      %v6057 = vpop.f32.mrb[0].mxu0
      %v6058 = vpop.f32.mrb[0].mxu0
      %v6059 = vadd.f32 0.0, %v6058
      %v6060 = vpop.f32.mrb[0].mxu0
      %6061 = vmatprep.mubr.bf16.mxu0 0
      %6062 = vmatmul.mubr.bf16.gmra.mrb[0].mxu0 %v6003
      %v6063 = vpop.f32.mrb[0].mxu0
      %v6064 = vadd.f32 0.0, %v6063
      %v6065 = vpop.f32.mrb[0].mxu0
      %v6066 = vpop.f32.mrb[0].mxu0
      %v6067 = vpop.f32.mrb[0].mxu0
      %6068 = vdwg.mxu0
      %v6069 = vpack.c.bf16 %v6043, %v6040
      %v6070 = vpack.c.bf16 %v6051, %v6048
      %v6071 = vpack.c.bf16 %v6059, %v6056
      %v6072 = vpack.c.bf16 %v6064, %v6064
      %s6073 = scalar_lea.vmem %s21, 12
      %v6074 = vld [vmem:[%s6073] sm:$0xf]
      %v6076 = vsel %vm1332, %v6069, 0
      %v6079 = vsel %vm1332, %v6070, 0
      %v6082 = vsel %vm1332, %v6071, 0
      %v6085 = vsel %vm1332, %v6072, 0
      %v6088 = vsel %vm1345, %v6074, 0
      %6090 = vmatprep.subr.bf16.mxu0 0
      %6091 = vmatpush1.bf16.msra.mxu0 %v6088
      %6092 = vmatprep.subr.bf16.mxu0 0
      %6093 = vmatpush1.bf16.msra.mxu0 0
      %6094 = vmatprep.subr.bf16.mxu0 0
      %6095 = vmatpush1.bf16.msra.mxu0 0
      %6096 = vmatprep.subr.bf16.mxu0 0
      %6097 = vmatpush1.bf16.msra.mxu0 0
      %6098 = vmatprep.subr.bf16.mxu0 0
      %6099 = vmatpush1.bf16.msra.mxu0 0
      %6100 = vmatprep.subr.bf16.mxu0 0
      %6101 = vmatpush1.bf16.msra.mxu0 0
      %6102 = vmatprep.subr.bf16.mxu0 0
      %6103 = vmatpush1.bf16.msra.mxu0 0
      %6104 = vmatprep.subr.bf16.mxu0 0
      %6105 = vmatpush1.bf16.msra.mxu0 0
      %6106 = vmatprep.subr.bf16.mxu0 0
      %6107 = vmatpush1.bf16.msra.mxu0 0
      %6108 = vmatprep.subr.bf16.mxu0 0
      %6109 = vmatpush1.bf16.msra.mxu0 0
      %6110 = vmatprep.subr.bf16.mxu0 0
      %6111 = vmatpush1.bf16.msra.mxu0 0
      %6112 = vmatprep.subr.bf16.mxu0 0
      %6113 = vmatpush1.bf16.msra.mxu0 0
      %6114 = vmatprep.subr.bf16.mxu0 0
      %6115 = vmatpush1.bf16.msra.mxu0 0
      %6116 = vmatprep.subr.bf16.mxu0 0
      %6117 = vmatpush1.bf16.msra.mxu0 0
      %6118 = vmatprep.subr.bf16.mxu0 0
      %6119 = vmatpush1.bf16.msra.mxu0 0
      %6120 = vmatprep.subr.bf16.mxu0 0
      %6121 = vmatpush1.bf16.msra.mxu0 0
      %6122 = vmatprep.mubr.bf16.mxu0 0
      %6123 = vmatmul.mubr.bf16.gmra.mrb[0].mxu0 %v6076
      %v6124 = vpop.f32.mrb[0].mxu0
      %v6125 = vadd.f32 0.0, %v6124
      %v6126 = vpop.f32.mrb[0].mxu0
      %v6127 = vpop.f32.mrb[0].mxu0
      %v6128 = vadd.f32 0.0, %v6127
      %v6129 = vpop.f32.mrb[0].mxu0
      %6130 = vmatprep.mubr.bf16.mxu0 0
      %6131 = vmatmul.mubr.bf16.gmra.mrb[0].mxu0 %v6079
      %v6132 = vpop.f32.mrb[0].mxu0
      %v6133 = vadd.f32 0.0, %v6132
      %v6134 = vpop.f32.mrb[0].mxu0
      %v6135 = vpop.f32.mrb[0].mxu0
      %v6136 = vadd.f32 0.0, %v6135
      %v6137 = vpop.f32.mrb[0].mxu0
      %6138 = vmatprep.mubr.bf16.mxu0 0
      %6139 = vmatmul.mubr.bf16.gmra.mrb[0].mxu0 %v6082
      %v6140 = vpop.f32.mrb[0].mxu0
      %v6141 = vadd.f32 0.0, %v6140
      %v6142 = vpop.f32.mrb[0].mxu0
      %v6143 = vpop.f32.mrb[0].mxu0
      %v6144 = vadd.f32 0.0, %v6143
      %v6145 = vpop.f32.mrb[0].mxu0
      %6146 = vmatprep.mubr.bf16.mxu0 0
      %6147 = vmatmul.mubr.bf16.gmra.mrb[0].mxu0 %v6085
      %v6148 = vpop.f32.mrb[0].mxu0
      %v6149 = vadd.f32 0.0, %v6148
      %v6150 = vpop.f32.mrb[0].mxu0
      %v6151 = vpop.f32.mrb[0].mxu0
      %v6152 = vpop.f32.mrb[0].mxu0
      %6153 = vdwg.mxu0
      %v6154 = vadd.f32 %v5960, %v6125
      %v6155 = vadd.f32 %v5961, %v6128
      %v6156 = vadd.f32 %v5962, %v6133
      %v6157 = vadd.f32 %v5963, %v6136
      %v6158 = vadd.f32 %v5964, %v6141
      %v6159 = vadd.f32 %v5965, %v6144
      %v6160 = vadd.f32 %v5966, %v6149
      %s6161 = scalar_lea.vmem %s18, 112
      %v6162 = vld [vmem:[%s6161] sm:$0xf]
      %v6163 = vld [vmem:[%s6161 + $0x4] sm:$0xf]
      %v6164 = vld [vmem:[%s6161 + $0x8] sm:$0xf]
      %v6165 = vld [vmem:[%s6161 + $0xc] sm:$0xf]
      %v6166 = vld [vmem:[%s6161 + $0x10] sm:$0xf]
      %v6167 = vld [vmem:[%s6161 + $0x14] sm:$0xf]
      %v6168 = vld [vmem:[%s6161 + $0x18] sm:$0x1]
      %v6176 = vunpack.c.l.b16 %v6162
      %v6177 = vunpack.c.l.b16 %v6163
      %v6178 = vunpack.c.l.b16 %v6164
      %v6179 = vunpack.c.l.b16 %v6165
      %v6180 = vunpack.c.l.b16 %v6166
      %v6181 = vunpack.c.l.b16 %v6167
      %v6182 = vunpack.c.l.b16 %v6168
      %v6183 = vpack.c.b16 %v6177, %v6176
      %v6184 = vpack.c.b16 %v6179, %v6178
      %v6185 = vpack.c.b16 %v6181, %v6180
      %v6186 = vpack.c.b16 %v6182, %v6182
      %v6188 = vsel %vm3446, %v6183, 0
      %v6191 = vsel %vm3446, %v6184, 0
      %v6194 = vsel %vm3446, %v6185, 0
      %v6197 = vsel %vm3446, %v6186, 0
      %6199 = vmatprep.subr.bf16.mxu0 0
      %6200 = vmatpush1.bf16.msra.mxu0 %v5394
      %6201 = vmatprep.subr.bf16.mxu0 0
      %6202 = vmatpush1.bf16.msra.mxu0 %v5395
      %6203 = vmatprep.subr.bf16.mxu0 0
      %6204 = vmatpush1.bf16.msra.mxu0 %v5396
      %6205 = vmatprep.subr.bf16.mxu0 0
      %6206 = vmatpush1.bf16.msra.mxu0 %v5436
      %6207 = vmatprep.subr.bf16.mxu0 0
      %6208 = vmatpush1.bf16.msra.mxu0 0
      %6209 = vmatprep.subr.bf16.mxu0 0
      %6210 = vmatpush1.bf16.msra.mxu0 0
      %6211 = vmatprep.subr.bf16.mxu0 0
      %6212 = vmatpush1.bf16.msra.mxu0 0
      %6213 = vmatprep.subr.bf16.mxu0 0
      %6214 = vmatpush1.bf16.msra.mxu0 0
      %6215 = vmatprep.subr.bf16.mxu0 0
      %6216 = vmatpush1.bf16.msra.mxu0 0
      %6217 = vmatprep.subr.bf16.mxu0 0
      %6218 = vmatpush1.bf16.msra.mxu0 0
      %6219 = vmatprep.subr.bf16.mxu0 0
      %6220 = vmatpush1.bf16.msra.mxu0 0
      %6221 = vmatprep.subr.bf16.mxu0 0
      %6222 = vmatpush1.bf16.msra.mxu0 0
      %6223 = vmatprep.subr.bf16.mxu0 0
      %6224 = vmatpush1.bf16.msra.mxu0 0
      %6225 = vmatprep.subr.bf16.mxu0 0
      %6226 = vmatpush1.bf16.msra.mxu0 0
      %6227 = vmatprep.subr.bf16.mxu0 0
      %6228 = vmatpush1.bf16.msra.mxu0 0
      %6229 = vmatprep.subr.bf16.mxu0 0
      %6230 = vmatpush1.bf16.msra.mxu0 0
      %6231 = vmatprep.mubr.bf16.mxu0 0
      %6232 = vmatmul.mubr.bf16.gmra.mrb[0].mxu0 %v6188
      %v6233 = vpop.f32.mrb[0].mxu0
      %v6234 = vadd.f32 0.0, %v6233
      %v6235 = vpop.f32.mrb[0].mxu0
      %v6236 = vpop.f32.mrb[0].mxu0
      %v6237 = vadd.f32 0.0, %v6236
      %v6238 = vpop.f32.mrb[0].mxu0
      %6239 = vmatprep.mubr.bf16.mxu0 0
      %6240 = vmatmul.mubr.bf16.gmra.mrb[0].mxu0 %v6191
      %v6241 = vpop.f32.mrb[0].mxu0
      %v6242 = vadd.f32 0.0, %v6241
      %v6243 = vpop.f32.mrb[0].mxu0
      %v6244 = vpop.f32.mrb[0].mxu0
      %v6245 = vadd.f32 0.0, %v6244
      %v6246 = vpop.f32.mrb[0].mxu0
      %6247 = vmatprep.mubr.bf16.mxu0 0
      %6248 = vmatmul.mubr.bf16.gmra.mrb[0].mxu0 %v6194
      %v6249 = vpop.f32.mrb[0].mxu0
      %v6250 = vadd.f32 0.0, %v6249
      %v6251 = vpop.f32.mrb[0].mxu0
      %v6252 = vpop.f32.mrb[0].mxu0
      %v6253 = vadd.f32 0.0, %v6252
      %v6254 = vpop.f32.mrb[0].mxu0
      %6255 = vmatprep.mubr.bf16.mxu0 0
      %6256 = vmatmul.mubr.bf16.gmra.mrb[0].mxu0 %v6197
      %v6257 = vpop.f32.mrb[0].mxu0
      %v6258 = vadd.f32 0.0, %v6257
      %v6259 = vpop.f32.mrb[0].mxu0
      %v6260 = vpop.f32.mrb[0].mxu0
      %v6261 = vpop.f32.mrb[0].mxu0
      %6262 = vdwg.mxu0
      %v6263 = vpack.c.bf16 %v6237, %v6234
      %v6264 = vpack.c.bf16 %v6245, %v6242
      %v6265 = vpack.c.bf16 %v6253, %v6250
      %v6266 = vpack.c.bf16 %v6258, %v6258
      %s6267 = scalar_lea.vmem %s21, 16
      %v6268 = vld [vmem:[%s6267] sm:$0xf]
      %v6270 = vsel %vm1332, %v6263, 0
      %v6273 = vsel %vm1332, %v6264, 0
      %v6276 = vsel %vm1332, %v6265, 0
      %v6279 = vsel %vm1332, %v6266, 0
      %v6282 = vsel %vm1345, %v6268, 0
      %6284 = vmatprep.subr.bf16.mxu0 0
      %6285 = vmatpush1.bf16.msra.mxu0 %v6282
      %6286 = vmatprep.subr.bf16.mxu0 0
      %6287 = vmatpush1.bf16.msra.mxu0 0
      %6288 = vmatprep.subr.bf16.mxu0 0
      %6289 = vmatpush1.bf16.msra.mxu0 0
      %6290 = vmatprep.subr.bf16.mxu0 0
      %6291 = vmatpush1.bf16.msra.mxu0 0
      %6292 = vmatprep.subr.bf16.mxu0 0
      %6293 = vmatpush1.bf16.msra.mxu0 0
      %6294 = vmatprep.subr.bf16.mxu0 0
      %6295 = vmatpush1.bf16.msra.mxu0 0
      %6296 = vmatprep.subr.bf16.mxu0 0
      %6297 = vmatpush1.bf16.msra.mxu0 0
      %6298 = vmatprep.subr.bf16.mxu0 0
      %6299 = vmatpush1.bf16.msra.mxu0 0
      %6300 = vmatprep.subr.bf16.mxu0 0
      %6301 = vmatpush1.bf16.msra.mxu0 0
      %6302 = vmatprep.subr.bf16.mxu0 0
      %6303 = vmatpush1.bf16.msra.mxu0 0
      %6304 = vmatprep.subr.bf16.mxu0 0
      %6305 = vmatpush1.bf16.msra.mxu0 0
      %6306 = vmatprep.subr.bf16.mxu0 0
      %6307 = vmatpush1.bf16.msra.mxu0 0
      %6308 = vmatprep.subr.bf16.mxu0 0
      %6309 = vmatpush1.bf16.msra.mxu0 0
      %6310 = vmatprep.subr.bf16.mxu0 0
      %6311 = vmatpush1.bf16.msra.mxu0 0
      %6312 = vmatprep.subr.bf16.mxu0 0
      %6313 = vmatpush1.bf16.msra.mxu0 0
      %6314 = vmatprep.subr.bf16.mxu0 0
      %6315 = vmatpush1.bf16.msra.mxu0 0
      %6316 = vmatprep.mubr.bf16.mxu0 0
      %6317 = vmatmul.mubr.bf16.gmra.mrb[0].mxu0 %v6270
      %v6318 = vpop.f32.mrb[0].mxu0
      %v6319 = vadd.f32 0.0, %v6318
      %v6320 = vpop.f32.mrb[0].mxu0
      %v6321 = vpop.f32.mrb[0].mxu0
      %v6322 = vadd.f32 0.0, %v6321
      %v6323 = vpop.f32.mrb[0].mxu0
      %6324 = vmatprep.mubr.bf16.mxu0 0
      %6325 = vmatmul.mubr.bf16.gmra.mrb[0].mxu0 %v6273
      %v6326 = vpop.f32.mrb[0].mxu0
      %v6327 = vadd.f32 0.0, %v6326
      %v6328 = vpop.f32.mrb[0].mxu0
      %v6329 = vpop.f32.mrb[0].mxu0
      %v6330 = vadd.f32 0.0, %v6329
      %v6331 = vpop.f32.mrb[0].mxu0
      %6332 = vmatprep.mubr.bf16.mxu0 0
      %6333 = vmatmul.mubr.bf16.gmra.mrb[0].mxu0 %v6276
      %v6334 = vpop.f32.mrb[0].mxu0
      %v6335 = vadd.f32 0.0, %v6334
      %v6336 = vpop.f32.mrb[0].mxu0
      %v6337 = vpop.f32.mrb[0].mxu0
      %v6338 = vadd.f32 0.0, %v6337
      %v6339 = vpop.f32.mrb[0].mxu0
      %6340 = vmatprep.mubr.bf16.mxu0 0
      %6341 = vmatmul.mubr.bf16.gmra.mrb[0].mxu0 %v6279
      %v6342 = vpop.f32.mrb[0].mxu0
      %v6343 = vadd.f32 0.0, %v6342
      %v6344 = vpop.f32.mrb[0].mxu0
      %v6345 = vpop.f32.mrb[0].mxu0
      %v6346 = vpop.f32.mrb[0].mxu0
      %6347 = vdwg.mxu0
      %v6348 = vadd.f32 %v6154, %v6319
      %v6349 = vadd.f32 %v6155, %v6322
      %v6350 = vadd.f32 %v6156, %v6327
      %v6351 = vadd.f32 %v6157, %v6330
      %v6352 = vadd.f32 %v6158, %v6335
      %v6353 = vadd.f32 %v6159, %v6338
      %v6354 = vadd.f32 %v6160, %v6343
      %s6355 = scalar_lea.vmem %s18, 140
      %v6356 = vld [vmem:[%s6355] sm:$0xf]
      %v6357 = vld [vmem:[%s6355 + $0x4] sm:$0xf]
      %v6358 = vld [vmem:[%s6355 + $0x8] sm:$0xf]
      %v6359 = vld [vmem:[%s6355 + $0xc] sm:$0xf]
      %v6360 = vld [vmem:[%s6355 + $0x10] sm:$0xf]
      %v6361 = vld [vmem:[%s6355 + $0x14] sm:$0xf]
      %v6362 = vld [vmem:[%s6355 + $0x18] sm:$0x1]
      %v6370 = vunpack.c.l.b16 %v6356
      %v6371 = vunpack.c.l.b16 %v6357
      %v6372 = vunpack.c.l.b16 %v6358
      %v6373 = vunpack.c.l.b16 %v6359
      %v6374 = vunpack.c.l.b16 %v6360
      %v6375 = vunpack.c.l.b16 %v6361
      %v6376 = vunpack.c.l.b16 %v6362
      %v6377 = vpack.c.b16 %v6371, %v6370
      %v6378 = vpack.c.b16 %v6373, %v6372
      %v6379 = vpack.c.b16 %v6375, %v6374
      %v6380 = vpack.c.b16 %v6376, %v6376
      %v6382 = vsel %vm3446, %v6377, 0
      %v6385 = vsel %vm3446, %v6378, 0
      %v6388 = vsel %vm3446, %v6379, 0
      %v6391 = vsel %vm3446, %v6380, 0
      %6393 = vmatprep.subr.bf16.mxu0 0
      %6394 = vmatpush1.bf16.msra.mxu0 %v5394
      %6395 = vmatprep.subr.bf16.mxu0 0
      %6396 = vmatpush1.bf16.msra.mxu0 %v5395
      %6397 = vmatprep.subr.bf16.mxu0 0
      %6398 = vmatpush1.bf16.msra.mxu0 %v5396
      %6399 = vmatprep.subr.bf16.mxu0 0
      %6400 = vmatpush1.bf16.msra.mxu0 %v5436
      %6401 = vmatprep.subr.bf16.mxu0 0
      %6402 = vmatpush1.bf16.msra.mxu0 0
      %6403 = vmatprep.subr.bf16.mxu0 0
      %6404 = vmatpush1.bf16.msra.mxu0 0
      %6405 = vmatprep.subr.bf16.mxu0 0
      %6406 = vmatpush1.bf16.msra.mxu0 0
      %6407 = vmatprep.subr.bf16.mxu0 0
      %6408 = vmatpush1.bf16.msra.mxu0 0
      %6409 = vmatprep.subr.bf16.mxu0 0
      %6410 = vmatpush1.bf16.msra.mxu0 0
      %6411 = vmatprep.subr.bf16.mxu0 0
      %6412 = vmatpush1.bf16.msra.mxu0 0
      %6413 = vmatprep.subr.bf16.mxu0 0
      %6414 = vmatpush1.bf16.msra.mxu0 0
      %6415 = vmatprep.subr.bf16.mxu0 0
      %6416 = vmatpush1.bf16.msra.mxu0 0
      %6417 = vmatprep.subr.bf16.mxu0 0
      %6418 = vmatpush1.bf16.msra.mxu0 0
      %6419 = vmatprep.subr.bf16.mxu0 0
      %6420 = vmatpush1.bf16.msra.mxu0 0
      %6421 = vmatprep.subr.bf16.mxu0 0
      %6422 = vmatpush1.bf16.msra.mxu0 0
      %6423 = vmatprep.subr.bf16.mxu0 0
      %6424 = vmatpush1.bf16.msra.mxu0 0
      %6425 = vmatprep.mubr.bf16.mxu0 0
      %6426 = vmatmul.mubr.bf16.gmra.mrb[0].mxu0 %v6382
      %v6427 = vpop.f32.mrb[0].mxu0
      %v6428 = vadd.f32 0.0, %v6427
      %v6429 = vpop.f32.mrb[0].mxu0
      %v6430 = vpop.f32.mrb[0].mxu0
      %v6431 = vadd.f32 0.0, %v6430
      %v6432 = vpop.f32.mrb[0].mxu0
      %6433 = vmatprep.mubr.bf16.mxu0 0
      %6434 = vmatmul.mubr.bf16.gmra.mrb[0].mxu0 %v6385
      %v6435 = vpop.f32.mrb[0].mxu0
      %v6436 = vadd.f32 0.0, %v6435
      %v6437 = vpop.f32.mrb[0].mxu0
      %v6438 = vpop.f32.mrb[0].mxu0
      %v6439 = vadd.f32 0.0, %v6438
      %v6440 = vpop.f32.mrb[0].mxu0
      %6441 = vmatprep.mubr.bf16.mxu0 0
      %6442 = vmatmul.mubr.bf16.gmra.mrb[0].mxu0 %v6388
      %v6443 = vpop.f32.mrb[0].mxu0
      %v6444 = vadd.f32 0.0, %v6443
      %v6445 = vpop.f32.mrb[0].mxu0
      %v6446 = vpop.f32.mrb[0].mxu0
      %v6447 = vadd.f32 0.0, %v6446
      %v6448 = vpop.f32.mrb[0].mxu0
      %6449 = vmatprep.mubr.bf16.mxu0 0
      %6450 = vmatmul.mubr.bf16.gmra.mrb[0].mxu0 %v6391
      %v6451 = vpop.f32.mrb[0].mxu0
      %v6452 = vadd.f32 0.0, %v6451
      %v6453 = vpop.f32.mrb[0].mxu0
      %v6454 = vpop.f32.mrb[0].mxu0
      %v6455 = vpop.f32.mrb[0].mxu0
      %6456 = vdwg.mxu0
      %v6457 = vpack.c.bf16 %v6431, %v6428
      %v6458 = vpack.c.bf16 %v6439, %v6436
      %v6459 = vpack.c.bf16 %v6447, %v6444
      %v6460 = vpack.c.bf16 %v6452, %v6452
      %s6461 = scalar_lea.vmem %s21, 20
      %v6462 = vld [vmem:[%s6461] sm:$0xf]
      %v6464 = vsel %vm1332, %v6457, 0
      %v6467 = vsel %vm1332, %v6458, 0
      %v6470 = vsel %vm1332, %v6459, 0
      %v6473 = vsel %vm1332, %v6460, 0
      %v6476 = vsel %vm1345, %v6462, 0
      %6478 = vmatprep.subr.bf16.mxu0 0
      %6479 = vmatpush1.bf16.msra.mxu0 %v6476
      %6480 = vmatprep.subr.bf16.mxu0 0
      %6481 = vmatpush1.bf16.msra.mxu0 0
      %6482 = vmatprep.subr.bf16.mxu0 0
      %6483 = vmatpush1.bf16.msra.mxu0 0
      %6484 = vmatprep.subr.bf16.mxu0 0
      %6485 = vmatpush1.bf16.msra.mxu0 0
      %6486 = vmatprep.subr.bf16.mxu0 0
      %6487 = vmatpush1.bf16.msra.mxu0 0
      %6488 = vmatprep.subr.bf16.mxu0 0
      %6489 = vmatpush1.bf16.msra.mxu0 0
      %6490 = vmatprep.subr.bf16.mxu0 0
      %6491 = vmatpush1.bf16.msra.mxu0 0
      %6492 = vmatprep.subr.bf16.mxu0 0
      %6493 = vmatpush1.bf16.msra.mxu0 0
      %6494 = vmatprep.subr.bf16.mxu0 0
      %6495 = vmatpush1.bf16.msra.mxu0 0
      %6496 = vmatprep.subr.bf16.mxu0 0
      %6497 = vmatpush1.bf16.msra.mxu0 0
      %6498 = vmatprep.subr.bf16.mxu0 0
      %6499 = vmatpush1.bf16.msra.mxu0 0
      %6500 = vmatprep.subr.bf16.mxu0 0
      %6501 = vmatpush1.bf16.msra.mxu0 0
      %6502 = vmatprep.subr.bf16.mxu0 0
      %6503 = vmatpush1.bf16.msra.mxu0 0
      %6504 = vmatprep.subr.bf16.mxu0 0
      %6505 = vmatpush1.bf16.msra.mxu0 0
      %6506 = vmatprep.subr.bf16.mxu0 0
      %6507 = vmatpush1.bf16.msra.mxu0 0
      %6508 = vmatprep.subr.bf16.mxu0 0
      %6509 = vmatpush1.bf16.msra.mxu0 0
      %6510 = vmatprep.mubr.bf16.mxu0 0
      %6511 = vmatmul.mubr.bf16.gmra.mrb[0].mxu0 %v6464
      %v6512 = vpop.f32.mrb[0].mxu0
      %v6513 = vadd.f32 0.0, %v6512
      %v6514 = vpop.f32.mrb[0].mxu0
      %v6515 = vpop.f32.mrb[0].mxu0
      %v6516 = vadd.f32 0.0, %v6515
      %v6517 = vpop.f32.mrb[0].mxu0
      %6518 = vmatprep.mubr.bf16.mxu0 0
      %6519 = vmatmul.mubr.bf16.gmra.mrb[0].mxu0 %v6467
      %v6520 = vpop.f32.mrb[0].mxu0
      %v6521 = vadd.f32 0.0, %v6520
      %v6522 = vpop.f32.mrb[0].mxu0
      %v6523 = vpop.f32.mrb[0].mxu0
      %v6524 = vadd.f32 0.0, %v6523
      %v6525 = vpop.f32.mrb[0].mxu0
      %6526 = vmatprep.mubr.bf16.mxu0 0
      %6527 = vmatmul.mubr.bf16.gmra.mrb[0].mxu0 %v6470
      %v6528 = vpop.f32.mrb[0].mxu0
      %v6529 = vadd.f32 0.0, %v6528
      %v6530 = vpop.f32.mrb[0].mxu0
      %v6531 = vpop.f32.mrb[0].mxu0
      %v6532 = vadd.f32 0.0, %v6531
      %v6533 = vpop.f32.mrb[0].mxu0
      %6534 = vmatprep.mubr.bf16.mxu0 0
      %6535 = vmatmul.mubr.bf16.gmra.mrb[0].mxu0 %v6473
      %v6536 = vpop.f32.mrb[0].mxu0
      %v6537 = vadd.f32 0.0, %v6536
      %v6538 = vpop.f32.mrb[0].mxu0
      %v6539 = vpop.f32.mrb[0].mxu0
      %v6540 = vpop.f32.mrb[0].mxu0
      %6541 = vdwg.mxu0
      %v6542 = vadd.f32 %v6348, %v6513
      %v6543 = vadd.f32 %v6349, %v6516
      %v6544 = vadd.f32 %v6350, %v6521
      %v6545 = vadd.f32 %v6351, %v6524
      %v6546 = vadd.f32 %v6352, %v6529
      %v6547 = vadd.f32 %v6353, %v6532
      %v6548 = vadd.f32 %v6354, %v6537
      %s6549 = scalar_lea.vmem %s18, 168
      %v6550 = vld [vmem:[%s6549] sm:$0xf]
      %v6551 = vld [vmem:[%s6549 + $0x4] sm:$0xf]
      %v6552 = vld [vmem:[%s6549 + $0x8] sm:$0xf]
      %v6553 = vld [vmem:[%s6549 + $0xc] sm:$0xf]
      %v6554 = vld [vmem:[%s6549 + $0x10] sm:$0xf]
      %v6555 = vld [vmem:[%s6549 + $0x14] sm:$0xf]
      %v6556 = vld [vmem:[%s6549 + $0x18] sm:$0x1]
      %v6564 = vunpack.c.l.b16 %v6550
      %v6565 = vunpack.c.l.b16 %v6551
      %v6566 = vunpack.c.l.b16 %v6552
      %v6567 = vunpack.c.l.b16 %v6553
      %v6568 = vunpack.c.l.b16 %v6554
      %v6569 = vunpack.c.l.b16 %v6555
      %v6570 = vunpack.c.l.b16 %v6556
      %v6571 = vpack.c.b16 %v6565, %v6564
      %v6572 = vpack.c.b16 %v6567, %v6566
      %v6573 = vpack.c.b16 %v6569, %v6568
      %v6574 = vpack.c.b16 %v6570, %v6570
      %v6576 = vsel %vm3446, %v6571, 0
      %v6579 = vsel %vm3446, %v6572, 0
      %v6582 = vsel %vm3446, %v6573, 0
      %v6585 = vsel %vm3446, %v6574, 0
      %6587 = vmatprep.subr.bf16.mxu0 0
      %6588 = vmatpush1.bf16.msra.mxu0 %v5394
      %6589 = vmatprep.subr.bf16.mxu0 0
      %6590 = vmatpush1.bf16.msra.mxu0 %v5395
      %6591 = vmatprep.subr.bf16.mxu0 0
      %6592 = vmatpush1.bf16.msra.mxu0 %v5396
      %6593 = vmatprep.subr.bf16.mxu0 0
      %6594 = vmatpush1.bf16.msra.mxu0 %v5436
      %6595 = vmatprep.subr.bf16.mxu0 0
      %6596 = vmatpush1.bf16.msra.mxu0 0
      %6597 = vmatprep.subr.bf16.mxu0 0
      %6598 = vmatpush1.bf16.msra.mxu0 0
      %6599 = vmatprep.subr.bf16.mxu0 0
      %6600 = vmatpush1.bf16.msra.mxu0 0
      %6601 = vmatprep.subr.bf16.mxu0 0
      %6602 = vmatpush1.bf16.msra.mxu0 0
      %6603 = vmatprep.subr.bf16.mxu0 0
      %6604 = vmatpush1.bf16.msra.mxu0 0
      %6605 = vmatprep.subr.bf16.mxu0 0
      %6606 = vmatpush1.bf16.msra.mxu0 0
      %6607 = vmatprep.subr.bf16.mxu0 0
      %6608 = vmatpush1.bf16.msra.mxu0 0
      %6609 = vmatprep.subr.bf16.mxu0 0
      %6610 = vmatpush1.bf16.msra.mxu0 0
      %6611 = vmatprep.subr.bf16.mxu0 0
      %6612 = vmatpush1.bf16.msra.mxu0 0
      %6613 = vmatprep.subr.bf16.mxu0 0
      %6614 = vmatpush1.bf16.msra.mxu0 0
      %6615 = vmatprep.subr.bf16.mxu0 0
      %6616 = vmatpush1.bf16.msra.mxu0 0
      %6617 = vmatprep.subr.bf16.mxu0 0
      %6618 = vmatpush1.bf16.msra.mxu0 0
      %6619 = vmatprep.mubr.bf16.mxu0 0
      %6620 = vmatmul.mubr.bf16.gmra.mrb[0].mxu0 %v6576
      %v6621 = vpop.f32.mrb[0].mxu0
      %v6622 = vadd.f32 0.0, %v6621
      %v6623 = vpop.f32.mrb[0].mxu0
      %v6624 = vpop.f32.mrb[0].mxu0
      %v6625 = vadd.f32 0.0, %v6624
      %v6626 = vpop.f32.mrb[0].mxu0
      %6627 = vmatprep.mubr.bf16.mxu0 0
      %6628 = vmatmul.mubr.bf16.gmra.mrb[0].mxu0 %v6579
      %v6629 = vpop.f32.mrb[0].mxu0
      %v6630 = vadd.f32 0.0, %v6629
      %v6631 = vpop.f32.mrb[0].mxu0
      %v6632 = vpop.f32.mrb[0].mxu0
      %v6633 = vadd.f32 0.0, %v6632
      %v6634 = vpop.f32.mrb[0].mxu0
      %6635 = vmatprep.mubr.bf16.mxu0 0
      %6636 = vmatmul.mubr.bf16.gmra.mrb[0].mxu0 %v6582
      %v6637 = vpop.f32.mrb[0].mxu0
      %v6638 = vadd.f32 0.0, %v6637
      %v6639 = vpop.f32.mrb[0].mxu0
      %v6640 = vpop.f32.mrb[0].mxu0
      %v6641 = vadd.f32 0.0, %v6640
      %v6642 = vpop.f32.mrb[0].mxu0
      %6643 = vmatprep.mubr.bf16.mxu0 0
      %6644 = vmatmul.mubr.bf16.gmra.mrb[0].mxu0 %v6585
      %v6645 = vpop.f32.mrb[0].mxu0
      %v6646 = vadd.f32 0.0, %v6645
      %v6647 = vpop.f32.mrb[0].mxu0
      %v6648 = vpop.f32.mrb[0].mxu0
      %v6649 = vpop.f32.mrb[0].mxu0
      %6650 = vdwg.mxu0
      %v6651 = vpack.c.bf16 %v6625, %v6622
      %v6652 = vpack.c.bf16 %v6633, %v6630
      %v6653 = vpack.c.bf16 %v6641, %v6638
      %v6654 = vpack.c.bf16 %v6646, %v6646
      %s6655 = scalar_lea.vmem %s21, 24
      %v6656 = vld [vmem:[%s6655] sm:$0xf]
      %v6658 = vsel %vm1332, %v6651, 0
      %v6661 = vsel %vm1332, %v6652, 0
      %v6664 = vsel %vm1332, %v6653, 0
      %v6667 = vsel %vm1332, %v6654, 0
      %v6670 = vsel %vm1345, %v6656, 0
      %6672 = vmatprep.subr.bf16.mxu0 0
      %6673 = vmatpush1.bf16.msra.mxu0 %v6670
      %6674 = vmatprep.subr.bf16.mxu0 0
      %6675 = vmatpush1.bf16.msra.mxu0 0
      %6676 = vmatprep.subr.bf16.mxu0 0
      %6677 = vmatpush1.bf16.msra.mxu0 0
      %6678 = vmatprep.subr.bf16.mxu0 0
      %6679 = vmatpush1.bf16.msra.mxu0 0
      %6680 = vmatprep.subr.bf16.mxu0 0
      %6681 = vmatpush1.bf16.msra.mxu0 0
      %6682 = vmatprep.subr.bf16.mxu0 0
      %6683 = vmatpush1.bf16.msra.mxu0 0
      %6684 = vmatprep.subr.bf16.mxu0 0
      %6685 = vmatpush1.bf16.msra.mxu0 0
      %6686 = vmatprep.subr.bf16.mxu0 0
      %6687 = vmatpush1.bf16.msra.mxu0 0
      %6688 = vmatprep.subr.bf16.mxu0 0
      %6689 = vmatpush1.bf16.msra.mxu0 0
      %6690 = vmatprep.subr.bf16.mxu0 0
      %6691 = vmatpush1.bf16.msra.mxu0 0
      %6692 = vmatprep.subr.bf16.mxu0 0
      %6693 = vmatpush1.bf16.msra.mxu0 0
      %6694 = vmatprep.subr.bf16.mxu0 0
      %6695 = vmatpush1.bf16.msra.mxu0 0
      %6696 = vmatprep.subr.bf16.mxu0 0
      %6697 = vmatpush1.bf16.msra.mxu0 0
      %6698 = vmatprep.subr.bf16.mxu0 0
      %6699 = vmatpush1.bf16.msra.mxu0 0
      %6700 = vmatprep.subr.bf16.mxu0 0
      %6701 = vmatpush1.bf16.msra.mxu0 0
      %6702 = vmatprep.subr.bf16.mxu0 0
      %6703 = vmatpush1.bf16.msra.mxu0 0
      %6704 = vmatprep.mubr.bf16.mxu0 0
      %6705 = vmatmul.mubr.bf16.gmra.mrb[0].mxu0 %v6658
      %v6706 = vpop.f32.mrb[0].mxu0
      %v6707 = vadd.f32 0.0, %v6706
      %v6708 = vpop.f32.mrb[0].mxu0
      %v6709 = vpop.f32.mrb[0].mxu0
      %v6710 = vadd.f32 0.0, %v6709
      %v6711 = vpop.f32.mrb[0].mxu0
      %6712 = vmatprep.mubr.bf16.mxu0 0
      %6713 = vmatmul.mubr.bf16.gmra.mrb[0].mxu0 %v6661
      %v6714 = vpop.f32.mrb[0].mxu0
      %v6715 = vadd.f32 0.0, %v6714
      %v6716 = vpop.f32.mrb[0].mxu0
      %v6717 = vpop.f32.mrb[0].mxu0
      %v6718 = vadd.f32 0.0, %v6717
      %v6719 = vpop.f32.mrb[0].mxu0
      %6720 = vmatprep.mubr.bf16.mxu0 0
      %6721 = vmatmul.mubr.bf16.gmra.mrb[0].mxu0 %v6664
      %v6722 = vpop.f32.mrb[0].mxu0
      %v6723 = vadd.f32 0.0, %v6722
      %v6724 = vpop.f32.mrb[0].mxu0
      %v6725 = vpop.f32.mrb[0].mxu0
      %v6726 = vadd.f32 0.0, %v6725
      %v6727 = vpop.f32.mrb[0].mxu0
      %6728 = vmatprep.mubr.bf16.mxu0 0
      %6729 = vmatmul.mubr.bf16.gmra.mrb[0].mxu0 %v6667
      %v6730 = vpop.f32.mrb[0].mxu0
      %v6731 = vadd.f32 0.0, %v6730
      %v6732 = vpop.f32.mrb[0].mxu0
      %v6733 = vpop.f32.mrb[0].mxu0
      %v6734 = vpop.f32.mrb[0].mxu0
      %6735 = vdwg.mxu0
      %v6736 = vadd.f32 %v6542, %v6707
      %v6737 = vadd.f32 %v6543, %v6710
      %v6738 = vadd.f32 %v6544, %v6715
      %v6739 = vadd.f32 %v6545, %v6718
      %v6740 = vadd.f32 %v6546, %v6723
      %v6741 = vadd.f32 %v6547, %v6726
      %v6742 = vadd.f32 %v6548, %v6731
      %s6743 = scalar_lea.vmem %s18, 196
      %v6744 = vld [vmem:[%s6743] sm:$0xf]
      %v6745 = vld [vmem:[%s6743 + $0x4] sm:$0xf]
      %v6746 = vld [vmem:[%s6743 + $0x8] sm:$0xf]
      %v6747 = vld [vmem:[%s6743 + $0xc] sm:$0xf]
      %v6748 = vld [vmem:[%s6743 + $0x10] sm:$0xf]
      %v6749 = vld [vmem:[%s6743 + $0x14] sm:$0xf]
      %v6750 = vld [vmem:[%s6743 + $0x18] sm:$0x1]
      %v6758 = vunpack.c.l.b16 %v6744
      %v6759 = vunpack.c.l.b16 %v6745
      %v6760 = vunpack.c.l.b16 %v6746
      %v6761 = vunpack.c.l.b16 %v6747
      %v6762 = vunpack.c.l.b16 %v6748
      %v6763 = vunpack.c.l.b16 %v6749
      %v6764 = vunpack.c.l.b16 %v6750
      %v6765 = vpack.c.b16 %v6759, %v6758
      %v6766 = vpack.c.b16 %v6761, %v6760
      %v6767 = vpack.c.b16 %v6763, %v6762
      %v6768 = vpack.c.b16 %v6764, %v6764
      %v6770 = vsel %vm3446, %v6765, 0
      %v6773 = vsel %vm3446, %v6766, 0
      %v6776 = vsel %vm3446, %v6767, 0
      %v6779 = vsel %vm3446, %v6768, 0
      %6781 = vmatprep.subr.bf16.mxu0 0
      %6782 = vmatpush1.bf16.msra.mxu0 %v5394
      %6783 = vmatprep.subr.bf16.mxu0 0
      %6784 = vmatpush1.bf16.msra.mxu0 %v5395
      %6785 = vmatprep.subr.bf16.mxu0 0
      %6786 = vmatpush1.bf16.msra.mxu0 %v5396
      %6787 = vmatprep.subr.bf16.mxu0 0
      %6788 = vmatpush1.bf16.msra.mxu0 %v5436
      %6789 = vmatprep.subr.bf16.mxu0 0
      %6790 = vmatpush1.bf16.msra.mxu0 0
      %6791 = vmatprep.subr.bf16.mxu0 0
      %6792 = vmatpush1.bf16.msra.mxu0 0
      %6793 = vmatprep.subr.bf16.mxu0 0
      %6794 = vmatpush1.bf16.msra.mxu0 0
      %6795 = vmatprep.subr.bf16.mxu0 0
      %6796 = vmatpush1.bf16.msra.mxu0 0
      %6797 = vmatprep.subr.bf16.mxu0 0
      %6798 = vmatpush1.bf16.msra.mxu0 0
      %6799 = vmatprep.subr.bf16.mxu0 0
      %6800 = vmatpush1.bf16.msra.mxu0 0
      %6801 = vmatprep.subr.bf16.mxu0 0
      %6802 = vmatpush1.bf16.msra.mxu0 0
      %6803 = vmatprep.subr.bf16.mxu0 0
      %6804 = vmatpush1.bf16.msra.mxu0 0
      %6805 = vmatprep.subr.bf16.mxu0 0
      %6806 = vmatpush1.bf16.msra.mxu0 0
      %6807 = vmatprep.subr.bf16.mxu0 0
      %6808 = vmatpush1.bf16.msra.mxu0 0
      %6809 = vmatprep.subr.bf16.mxu0 0
      %6810 = vmatpush1.bf16.msra.mxu0 0
      %6811 = vmatprep.subr.bf16.mxu0 0
      %6812 = vmatpush1.bf16.msra.mxu0 0
      %6813 = vmatprep.mubr.bf16.mxu0 0
      %6814 = vmatmul.mubr.bf16.gmra.mrb[0].mxu0 %v6770
      %v6815 = vpop.f32.mrb[0].mxu0
      %v6816 = vadd.f32 0.0, %v6815
      %v6817 = vpop.f32.mrb[0].mxu0
      %v6818 = vpop.f32.mrb[0].mxu0
      %v6819 = vadd.f32 0.0, %v6818
      %v6820 = vpop.f32.mrb[0].mxu0
      %6821 = vmatprep.mubr.bf16.mxu0 0
      %6822 = vmatmul.mubr.bf16.gmra.mrb[0].mxu0 %v6773
      %v6823 = vpop.f32.mrb[0].mxu0
      %v6824 = vadd.f32 0.0, %v6823
      %v6825 = vpop.f32.mrb[0].mxu0
      %v6826 = vpop.f32.mrb[0].mxu0
      %v6827 = vadd.f32 0.0, %v6826
      %v6828 = vpop.f32.mrb[0].mxu0
      %6829 = vmatprep.mubr.bf16.mxu0 0
      %6830 = vmatmul.mubr.bf16.gmra.mrb[0].mxu0 %v6776
      %v6831 = vpop.f32.mrb[0].mxu0
      %v6832 = vadd.f32 0.0, %v6831
      %v6833 = vpop.f32.mrb[0].mxu0
      %v6834 = vpop.f32.mrb[0].mxu0
      %v6835 = vadd.f32 0.0, %v6834
      %v6836 = vpop.f32.mrb[0].mxu0
      %6837 = vmatprep.mubr.bf16.mxu0 0
      %6838 = vmatmul.mubr.bf16.gmra.mrb[0].mxu0 %v6779
      %v6839 = vpop.f32.mrb[0].mxu0
      %v6840 = vadd.f32 0.0, %v6839
      %v6841 = vpop.f32.mrb[0].mxu0
      %v6842 = vpop.f32.mrb[0].mxu0
      %v6843 = vpop.f32.mrb[0].mxu0
      %6844 = vdwg.mxu0
      %v6845 = vpack.c.bf16 %v6819, %v6816
      %v6846 = vpack.c.bf16 %v6827, %v6824
      %v6847 = vpack.c.bf16 %v6835, %v6832
      %v6848 = vpack.c.bf16 %v6840, %v6840
      %s6849 = scalar_lea.vmem %s21, 28
      %v6850 = vld [vmem:[%s6849] sm:$0xf]
      %v6852 = vsel %vm1332, %v6845, 0
      %v6855 = vsel %vm1332, %v6846, 0
      %v6858 = vsel %vm1332, %v6847, 0
      %v6861 = vsel %vm1332, %v6848, 0
      %v6864 = vsel %vm1345, %v6850, 0
      %6866 = vmatprep.subr.bf16.mxu0 0
      %6867 = vmatpush1.bf16.msra.mxu0 %v6864
      %6868 = vmatprep.subr.bf16.mxu0 0
      %6869 = vmatpush1.bf16.msra.mxu0 0
      %6870 = vmatprep.subr.bf16.mxu0 0
      %6871 = vmatpush1.bf16.msra.mxu0 0
      %6872 = vmatprep.subr.bf16.mxu0 0
      %6873 = vmatpush1.bf16.msra.mxu0 0
      %6874 = vmatprep.subr.bf16.mxu0 0
      %6875 = vmatpush1.bf16.msra.mxu0 0
      %6876 = vmatprep.subr.bf16.mxu0 0
      %6877 = vmatpush1.bf16.msra.mxu0 0
      %6878 = vmatprep.subr.bf16.mxu0 0
      %6879 = vmatpush1.bf16.msra.mxu0 0
      %6880 = vmatprep.subr.bf16.mxu0 0
      %6881 = vmatpush1.bf16.msra.mxu0 0
      %6882 = vmatprep.subr.bf16.mxu0 0
      %6883 = vmatpush1.bf16.msra.mxu0 0
      %6884 = vmatprep.subr.bf16.mxu0 0
      %6885 = vmatpush1.bf16.msra.mxu0 0
      %6886 = vmatprep.subr.bf16.mxu0 0
      %6887 = vmatpush1.bf16.msra.mxu0 0
      %6888 = vmatprep.subr.bf16.mxu0 0
      %6889 = vmatpush1.bf16.msra.mxu0 0
      %6890 = vmatprep.subr.bf16.mxu0 0
      %6891 = vmatpush1.bf16.msra.mxu0 0
      %6892 = vmatprep.subr.bf16.mxu0 0
      %6893 = vmatpush1.bf16.msra.mxu0 0
      %6894 = vmatprep.subr.bf16.mxu0 0
      %6895 = vmatpush1.bf16.msra.mxu0 0
      %6896 = vmatprep.subr.bf16.mxu0 0
      %6897 = vmatpush1.bf16.msra.mxu0 0
      %6898 = vmatprep.mubr.bf16.mxu0 0
      %6899 = vmatmul.mubr.bf16.gmra.mrb[0].mxu0 %v6852
      %v6900 = vpop.f32.mrb[0].mxu0
      %v6901 = vadd.f32 0.0, %v6900
      %v6902 = vpop.f32.mrb[0].mxu0
      %v6903 = vpop.f32.mrb[0].mxu0
      %v6904 = vadd.f32 0.0, %v6903
      %v6905 = vpop.f32.mrb[0].mxu0
      %6906 = vmatprep.mubr.bf16.mxu0 0
      %6907 = vmatmul.mubr.bf16.gmra.mrb[0].mxu0 %v6855
      %v6908 = vpop.f32.mrb[0].mxu0
      %v6909 = vadd.f32 0.0, %v6908
      %v6910 = vpop.f32.mrb[0].mxu0
      %v6911 = vpop.f32.mrb[0].mxu0
      %v6912 = vadd.f32 0.0, %v6911
      %v6913 = vpop.f32.mrb[0].mxu0
      %6914 = vmatprep.mubr.bf16.mxu0 0
      %6915 = vmatmul.mubr.bf16.gmra.mrb[0].mxu0 %v6858
      %v6916 = vpop.f32.mrb[0].mxu0
      %v6917 = vadd.f32 0.0, %v6916
      %v6918 = vpop.f32.mrb[0].mxu0
      %v6919 = vpop.f32.mrb[0].mxu0
      %v6920 = vadd.f32 0.0, %v6919
      %v6921 = vpop.f32.mrb[0].mxu0
      %6922 = vmatprep.mubr.bf16.mxu0 0
      %6923 = vmatmul.mubr.bf16.gmra.mrb[0].mxu0 %v6861
      %v6924 = vpop.f32.mrb[0].mxu0
      %v6925 = vadd.f32 0.0, %v6924
      %v6926 = vpop.f32.mrb[0].mxu0
      %v6927 = vpop.f32.mrb[0].mxu0
      %v6928 = vpop.f32.mrb[0].mxu0
      %6929 = vdwg.mxu0
      %v6930 = vadd.f32 %v6736, %v6901
      %v6931 = vadd.f32 %v6737, %v6904
      %v6932 = vadd.f32 %v6738, %v6909
      %v6933 = vadd.f32 %v6739, %v6912
      %v6934 = vadd.f32 %v6740, %v6917
      %v6935 = vadd.f32 %v6741, %v6920
      %v6936 = vadd.f32 %v6742, %v6925
      %s6937 = scalar_lea.vmem %s18, 224
      %v6938 = vld [vmem:[%s6937] sm:$0xf]
      %v6939 = vld [vmem:[%s6937 + $0x4] sm:$0xf]
      %v6940 = vld [vmem:[%s6937 + $0x8] sm:$0xf]
      %v6941 = vld [vmem:[%s6937 + $0xc] sm:$0xf]
      %v6942 = vld [vmem:[%s6937 + $0x10] sm:$0xf]
      %v6943 = vld [vmem:[%s6937 + $0x14] sm:$0xf]
      %v6944 = vld [vmem:[%s6937 + $0x18] sm:$0x1]
      %v6952 = vunpack.c.l.b16 %v6938
      %v6953 = vunpack.c.l.b16 %v6939
      %v6954 = vunpack.c.l.b16 %v6940
      %v6955 = vunpack.c.l.b16 %v6941
      %v6956 = vunpack.c.l.b16 %v6942
      %v6957 = vunpack.c.l.b16 %v6943
      %v6958 = vunpack.c.l.b16 %v6944
      %v6959 = vpack.c.b16 %v6953, %v6952
      %v6960 = vpack.c.b16 %v6955, %v6954
      %v6961 = vpack.c.b16 %v6957, %v6956
      %v6962 = vpack.c.b16 %v6958, %v6958
      %v6964 = vsel %vm3446, %v6959, 0
      %v6967 = vsel %vm3446, %v6960, 0
      %v6970 = vsel %vm3446, %v6961, 0
      %v6973 = vsel %vm3446, %v6962, 0
      %6975 = vmatprep.subr.bf16.mxu0 0
      %6976 = vmatpush1.bf16.msra.mxu0 %v5394
      %6977 = vmatprep.subr.bf16.mxu0 0
      %6978 = vmatpush1.bf16.msra.mxu0 %v5395
      %6979 = vmatprep.subr.bf16.mxu0 0
      %6980 = vmatpush1.bf16.msra.mxu0 %v5396
      %6981 = vmatprep.subr.bf16.mxu0 0
      %6982 = vmatpush1.bf16.msra.mxu0 %v5436
      %6983 = vmatprep.subr.bf16.mxu0 0
      %6984 = vmatpush1.bf16.msra.mxu0 0
      %6985 = vmatprep.subr.bf16.mxu0 0
      %6986 = vmatpush1.bf16.msra.mxu0 0
      %6987 = vmatprep.subr.bf16.mxu0 0
      %6988 = vmatpush1.bf16.msra.mxu0 0
      %6989 = vmatprep.subr.bf16.mxu0 0
      %6990 = vmatpush1.bf16.msra.mxu0 0
      %6991 = vmatprep.subr.bf16.mxu0 0
      %6992 = vmatpush1.bf16.msra.mxu0 0
      %6993 = vmatprep.subr.bf16.mxu0 0
      %6994 = vmatpush1.bf16.msra.mxu0 0
      %6995 = vmatprep.subr.bf16.mxu0 0
      %6996 = vmatpush1.bf16.msra.mxu0 0
      %6997 = vmatprep.subr.bf16.mxu0 0
      %6998 = vmatpush1.bf16.msra.mxu0 0
      %6999 = vmatprep.subr.bf16.mxu0 0
      %7000 = vmatpush1.bf16.msra.mxu0 0
      %7001 = vmatprep.subr.bf16.mxu0 0
      %7002 = vmatpush1.bf16.msra.mxu0 0
      %7003 = vmatprep.subr.bf16.mxu0 0
      %7004 = vmatpush1.bf16.msra.mxu0 0
      %7005 = vmatprep.subr.bf16.mxu0 0
      %7006 = vmatpush1.bf16.msra.mxu0 0
      %7007 = vmatprep.mubr.bf16.mxu0 0
      %7008 = vmatmul.mubr.bf16.gmra.mrb[0].mxu0 %v6964
      %v7009 = vpop.f32.mrb[0].mxu0
      %v7010 = vadd.f32 0.0, %v7009
      %v7011 = vpop.f32.mrb[0].mxu0
      %v7012 = vpop.f32.mrb[0].mxu0
      %v7013 = vadd.f32 0.0, %v7012
      %v7014 = vpop.f32.mrb[0].mxu0
      %7015 = vmatprep.mubr.bf16.mxu0 0
      %7016 = vmatmul.mubr.bf16.gmra.mrb[0].mxu0 %v6967
      %v7017 = vpop.f32.mrb[0].mxu0
      %v7018 = vadd.f32 0.0, %v7017
      %v7019 = vpop.f32.mrb[0].mxu0
      %v7020 = vpop.f32.mrb[0].mxu0
      %v7021 = vadd.f32 0.0, %v7020
      %v7022 = vpop.f32.mrb[0].mxu0
      %7023 = vmatprep.mubr.bf16.mxu0 0
      %7024 = vmatmul.mubr.bf16.gmra.mrb[0].mxu0 %v6970
      %v7025 = vpop.f32.mrb[0].mxu0
      %v7026 = vadd.f32 0.0, %v7025
      %v7027 = vpop.f32.mrb[0].mxu0
      %v7028 = vpop.f32.mrb[0].mxu0
      %v7029 = vadd.f32 0.0, %v7028
      %v7030 = vpop.f32.mrb[0].mxu0
      %7031 = vmatprep.mubr.bf16.mxu0 0
      %7032 = vmatmul.mubr.bf16.gmra.mrb[0].mxu0 %v6973
      %v7033 = vpop.f32.mrb[0].mxu0
      %v7034 = vadd.f32 0.0, %v7033
      %v7035 = vpop.f32.mrb[0].mxu0
      %v7036 = vpop.f32.mrb[0].mxu0
      %v7037 = vpop.f32.mrb[0].mxu0
      %7038 = vdwg.mxu0
      %v7039 = vpack.c.bf16 %v7013, %v7010
      %v7040 = vpack.c.bf16 %v7021, %v7018
      %v7041 = vpack.c.bf16 %v7029, %v7026
      %v7042 = vpack.c.bf16 %v7034, %v7034
      %s7043 = scalar_lea.vmem %s21, 32
      %v7044 = vld [vmem:[%s7043] sm:$0xf]
      %v7046 = vsel %vm1332, %v7039, 0
      %v7049 = vsel %vm1332, %v7040, 0
      %v7052 = vsel %vm1332, %v7041, 0
      %v7055 = vsel %vm1332, %v7042, 0
      %v7058 = vsel %vm1345, %v7044, 0
      %7060 = vmatprep.subr.bf16.mxu0 0
      %7061 = vmatpush1.bf16.msra.mxu0 %v7058
      %7062 = vmatprep.subr.bf16.mxu0 0
      %7063 = vmatpush1.bf16.msra.mxu0 0
      %7064 = vmatprep.subr.bf16.mxu0 0
      %7065 = vmatpush1.bf16.msra.mxu0 0
      %7066 = vmatprep.subr.bf16.mxu0 0
      %7067 = vmatpush1.bf16.msra.mxu0 0
      %7068 = vmatprep.subr.bf16.mxu0 0
      %7069 = vmatpush1.bf16.msra.mxu0 0
      %7070 = vmatprep.subr.bf16.mxu0 0
      %7071 = vmatpush1.bf16.msra.mxu0 0
      %7072 = vmatprep.subr.bf16.mxu0 0
      %7073 = vmatpush1.bf16.msra.mxu0 0
      %7074 = vmatprep.subr.bf16.mxu0 0
      %7075 = vmatpush1.bf16.msra.mxu0 0
      %7076 = vmatprep.subr.bf16.mxu0 0
      %7077 = vmatpush1.bf16.msra.mxu0 0
      %7078 = vmatprep.subr.bf16.mxu0 0
      %7079 = vmatpush1.bf16.msra.mxu0 0
      %7080 = vmatprep.subr.bf16.mxu0 0
      %7081 = vmatpush1.bf16.msra.mxu0 0
      %7082 = vmatprep.subr.bf16.mxu0 0
      %7083 = vmatpush1.bf16.msra.mxu0 0
      %7084 = vmatprep.subr.bf16.mxu0 0
      %7085 = vmatpush1.bf16.msra.mxu0 0
      %7086 = vmatprep.subr.bf16.mxu0 0
      %7087 = vmatpush1.bf16.msra.mxu0 0
      %7088 = vmatprep.subr.bf16.mxu0 0
      %7089 = vmatpush1.bf16.msra.mxu0 0
      %7090 = vmatprep.subr.bf16.mxu0 0
      %7091 = vmatpush1.bf16.msra.mxu0 0
      %7092 = vmatprep.mubr.bf16.mxu0 0
      %7093 = vmatmul.mubr.bf16.gmra.mrb[0].mxu0 %v7046
      %v7094 = vpop.f32.mrb[0].mxu0
      %v7095 = vadd.f32 0.0, %v7094
      %v7096 = vpop.f32.mrb[0].mxu0
      %v7097 = vpop.f32.mrb[0].mxu0
      %v7098 = vadd.f32 0.0, %v7097
      %v7099 = vpop.f32.mrb[0].mxu0
      %7100 = vmatprep.mubr.bf16.mxu0 0
      %7101 = vmatmul.mubr.bf16.gmra.mrb[0].mxu0 %v7049
      %v7102 = vpop.f32.mrb[0].mxu0
      %v7103 = vadd.f32 0.0, %v7102
      %v7104 = vpop.f32.mrb[0].mxu0
      %v7105 = vpop.f32.mrb[0].mxu0
      %v7106 = vadd.f32 0.0, %v7105
      %v7107 = vpop.f32.mrb[0].mxu0
      %7108 = vmatprep.mubr.bf16.mxu0 0
      %7109 = vmatmul.mubr.bf16.gmra.mrb[0].mxu0 %v7052
      %v7110 = vpop.f32.mrb[0].mxu0
      %v7111 = vadd.f32 0.0, %v7110
      %v7112 = vpop.f32.mrb[0].mxu0
      %v7113 = vpop.f32.mrb[0].mxu0
      %v7114 = vadd.f32 0.0, %v7113
      %v7115 = vpop.f32.mrb[0].mxu0
      %7116 = vmatprep.mubr.bf16.mxu0 0
      %7117 = vmatmul.mubr.bf16.gmra.mrb[0].mxu0 %v7055
      %v7118 = vpop.f32.mrb[0].mxu0
      %v7119 = vadd.f32 0.0, %v7118
      %v7120 = vpop.f32.mrb[0].mxu0
      %v7121 = vpop.f32.mrb[0].mxu0
      %v7122 = vpop.f32.mrb[0].mxu0
      %7123 = vdwg.mxu0
      %v7124 = vadd.f32 %v6930, %v7095
      %v7125 = vadd.f32 %v6931, %v7098
      %v7126 = vadd.f32 %v6932, %v7103
      %v7127 = vadd.f32 %v6933, %v7106
      %v7128 = vadd.f32 %v6934, %v7111
      %v7129 = vadd.f32 %v6935, %v7114
      %v7130 = vadd.f32 %v6936, %v7119
      %v7131 = vld [vmem:[%s22] sm:$0x1]
      %v7133 = vlaneseq
      %v7134 = vshrl.u32 %v7133, 7
      %v7135 = vsub.s32 0, %v7134
      %v7136 = vrot.slane %v7131, %v7135
      %v7138 = vadd.f32 %v7124, %v7136
      %v7139 = vadd.f32 %v7125, %v7136
      %v7140 = vadd.f32 %v7126, %v7136
      %v7141 = vadd.f32 %v7127, %v7136
      %v7142 = vadd.f32 %v7128, %v7136
      %v7143 = vadd.f32 %v7129, %v7136
      %v7144 = vadd.f32 %v7130, %v7136
      %v7145 = vmax.f32 %v7138, 0.0
      %v7146 = vmax.f32 %v7139, 0.0
      %v7147 = vmax.f32 %v7140, 0.0
      %v7148 = vmax.f32 %v7141, 0.0
      %v7149 = vmax.f32 %v7142, 0.0
      %v7150 = vmax.f32 %v7143, 0.0
      %v7151 = vmax.f32 %v7144, 0.0
      %v7152 = vpack.c.bf16 %v7146, %v7145
      %v7153 = vpack.c.bf16 %v7148, %v7147
      %v7154 = vpack.c.bf16 %v7150, %v7149
      %v7155 = vpack.c.bf16 %v7151, %v7151
      %v7156 = vld [vmem:[%s23] sm:$0xf]
      %v7157 = vld [vmem:[%s24] sm:$0x1]
      %v7159 = vlaneseq
      %v7160 = vshrl.u32 %v7159, 7
      %v7161 = vsub.s32 0, %v7160
      %v7162 = vrot.slane %v7157, %v7161
      %v7165 = vsel %vm1332, %v7152, 0
      %v7168 = vsel %vm1332, %v7153, 0
      %v7171 = vsel %vm1332, %v7154, 0
      %v7174 = vsel %vm1332, %v7155, 0
      %v7177 = vsel %vm1345, %v7156, 0
      %7179 = vmatprep.subr.bf16.mxu0 0
      %7180 = vmatpush1.bf16.msra.mxu0 %v7177
      %7181 = vmatprep.subr.bf16.mxu0 0
      %7182 = vmatpush1.bf16.msra.mxu0 0
      %7183 = vmatprep.subr.bf16.mxu0 0
      %7184 = vmatpush1.bf16.msra.mxu0 0
      %7185 = vmatprep.subr.bf16.mxu0 0
      %7186 = vmatpush1.bf16.msra.mxu0 0
      %7187 = vmatprep.subr.bf16.mxu0 0
      %7188 = vmatpush1.bf16.msra.mxu0 0
      %7189 = vmatprep.subr.bf16.mxu0 0
      %7190 = vmatpush1.bf16.msra.mxu0 0
      %7191 = vmatprep.subr.bf16.mxu0 0
      %7192 = vmatpush1.bf16.msra.mxu0 0
      %7193 = vmatprep.subr.bf16.mxu0 0
      %7194 = vmatpush1.bf16.msra.mxu0 0
      %7195 = vmatprep.subr.bf16.mxu0 0
      %7196 = vmatpush1.bf16.msra.mxu0 0
      %7197 = vmatprep.subr.bf16.mxu0 0
      %7198 = vmatpush1.bf16.msra.mxu0 0
      %7199 = vmatprep.subr.bf16.mxu0 0
      %7200 = vmatpush1.bf16.msra.mxu0 0
      %7201 = vmatprep.subr.bf16.mxu0 0
      %7202 = vmatpush1.bf16.msra.mxu0 0
      %7203 = vmatprep.subr.bf16.mxu0 0
      %7204 = vmatpush1.bf16.msra.mxu0 0
      %7205 = vmatprep.subr.bf16.mxu0 0
      %7206 = vmatpush1.bf16.msra.mxu0 0
      %7207 = vmatprep.subr.bf16.mxu0 0
      %7208 = vmatpush1.bf16.msra.mxu0 0
      %7209 = vmatprep.subr.bf16.mxu0 0
      %7210 = vmatpush1.bf16.msra.mxu0 0
      %7211 = vmatprep.mubr.bf16.mxu0 0
      %7212 = vmatmul.mubr.bf16.gmra.mrb[0].mxu0 %v7165
      %v7213 = vpop.f32.mrb[0].mxu0
      %v7214 = vadd.f32 %v7162, %v7213
      %v7215 = vpop.f32.mrb[0].mxu0
      %v7216 = vpop.f32.mrb[0].mxu0
      %v7217 = vadd.f32 %v7162, %v7216
      %v7218 = vpop.f32.mrb[0].mxu0
      %7219 = vmatprep.mubr.bf16.mxu0 0
      %7220 = vmatmul.mubr.bf16.gmra.mrb[0].mxu0 %v7168
      %v7221 = vpop.f32.mrb[0].mxu0
      %v7222 = vadd.f32 %v7162, %v7221
      %v7223 = vpop.f32.mrb[0].mxu0
      %v7224 = vpop.f32.mrb[0].mxu0
      %v7225 = vadd.f32 %v7162, %v7224
      %v7226 = vpop.f32.mrb[0].mxu0
      %7227 = vmatprep.mubr.bf16.mxu0 0
      %7228 = vmatmul.mubr.bf16.gmra.mrb[0].mxu0 %v7171
      %v7229 = vpop.f32.mrb[0].mxu0
      %v7230 = vadd.f32 %v7162, %v7229
      %v7231 = vpop.f32.mrb[0].mxu0
      %v7232 = vpop.f32.mrb[0].mxu0
      %v7233 = vadd.f32 %v7162, %v7232
      %v7234 = vpop.f32.mrb[0].mxu0
      %7235 = vmatprep.mubr.bf16.mxu0 0
      %7236 = vmatmul.mubr.bf16.gmra.mrb[0].mxu0 %v7174
      %v7237 = vpop.f32.mrb[0].mxu0
      %v7238 = vadd.f32 %v7162, %v7237
      %v7239 = vpop.f32.mrb[0].mxu0
      %v7240 = vpop.f32.mrb[0].mxu0
      %v7241 = vpop.f32.mrb[0].mxu0
      %7242 = vdwg.mxu0
      %v7243 = vadd.f32 %v7214, %v5277
      %v7244 = vadd.f32 %v7217, %v5278
      %v7245 = vadd.f32 %v7222, %v5279
      %v7246 = vadd.f32 %v7225, %v5280
      %v7247 = vadd.f32 %v7230, %v5281
      %v7248 = vadd.f32 %v7233, %v5282
      %v7249 = vadd.f32 %v7238, %v5283
      %v7250 = vmax.f32 %v7243, 0.0
      %v7251 = vmax.f32 %v7244, 0.0
      %v7252 = vmax.f32 %v7245, 0.0
      %v7253 = vmax.f32 %v7246, 0.0
      %v7254 = vmax.f32 %v7247, 0.0
      %v7255 = vmax.f32 %v7248, 0.0
      %v7256 = vmax.f32 %v7249, 0.0
      %7257 = vst.msk [vmem:[%s764] sm:$0xff] %vm3333, %v7250
      %7258 = vst.msk [vmem:[%s764 + $0x8] sm:$0xff] %vm3333, %v7251
      %7259 = vst.msk [vmem:[%s764 + $0x10] sm:$0xff] %vm3333, %v7252
      %7260 = vst.msk [vmem:[%s764 + $0x18] sm:$0xff] %vm3333, %v7253
      %7261 = vst.msk [vmem:[%s764 + $0x20] sm:$0xff] %vm3333, %v7254
      %7262 = vst.msk [vmem:[%s764 + $0x28] sm:$0xff] %vm3333, %v7255
      %vm7263 = vcmask 253952
      %7264 = vst.msk [vmem:[%s764 + $0x30] sm:$0x1] %vm7263, %v7256
      %p7265 = scmp.lt.s32.totalorder %s36, 1
      %s7266 = scalar_select %p7265, %s36, 1
      %s7267 = smul.addr %s7266, 7
      %s7268 = smul.addr %s7267, 8
      %s7269 = scalar_lea.vmem %s25, %s7268
      // Predicated region
      $region121: #{encoder_forward.1} parent=119 // pred_check
        %p7270 = pneg %p584
      $region122: #{encoder_forward.1} parent=119 // pred_check_branch
        %7272 = sbr.rel (%p7270) target = $region124
      $region123: #{encoder_forward.1} parent=119 // pred_region
        _
      $region124: #{encoder_forward.1} parent=119 // pred_fallthru
        _
    $region120: #{encoder_forward.1} parent=5 // pred_fallthru
      _
    %p7273 = scmp.le.s32.totalorder 2, %s31
    // Predicated region
    $region125: #{encoder_forward.1} parent=5 // pred_check
      %p7274 = pneg %p7273
    $region126: #{encoder_forward.1} parent=5 // pred_check_branch
      %7276 = sbr.rel (%p7274) target = $region128
    $region127: #{encoder_forward.1} parent=5 // pred_region
      %s7277 = ssub.s32 %s31, 2
      // Predicated region
      $region129: #{encoder_forward.1} parent=127 // pred_check
        %p7278 = pneg %p590
      $region130: #{encoder_forward.1} parent=127 // pred_check_branch
        %7280 = sbr.rel (%p7278) target = $region132
      $region131: #{encoder_forward.1} parent=127 // pred_region
        %p7281 = scmp.lt.s32.totalorder %s37, 1
        %s7282 = scalar_select %p7281, %s37, 1
        %s7283 = smul.addr %s7282, 7
        %s7284 = smul.addr %s7283, 8
        %s7285 = scalar_lea.vmem %s25, %s7284
      $region132: #{encoder_forward.1} parent=127 // pred_fallthru
        _
    $region128: #{encoder_forward.1} parent=5 // pred_fallthru
      _
  $region6: #{encoder_forward.1} parent=0 // loop_footer
    %s35 = sadd.s32 1, %s31
  $region7: #{encoder_forward.1} parent=0 // loop_footer_branch
    %30 = sbr.rel target = $region3
  $region8: #{encoder_forward.1} parent=0 // loop_exit
    _

</llo_original>
